<compile_context>
chip_gen: v7x
topology: tpu7x:2x2x1
jax: 0.10.0
libtpu: 0.0.40
codegen_flags: <defaults>
</compile_context>

<pallas_src>
import jax
import jax.numpy as jnp
from jax.experimental import pallas as pl
from jax.experimental.pallas import tpu as pltpu

B, C_IN, C_MID, C_OUT, H, W = 1, 96, 2304, 384, 7, 7
P = H * W          # 49 pixels
TC = 192           # C_OUT tile -> grid=(2,): even split for v7x's 2 TCs,
                   # only 2 grid-step overheads on single-TC v5e/v6e.
N_BLK = C_OUT // TC
BN_EPS = 1e-3


def se_conv_bn_kernel(xs_ref, w1_ref, b1_ref, x_ref, w2_ref, g_ref, bta_ref, o_ref):
    # ---- SE gate on the MXU: bf16 [2304,96] @ [96,1], f32 accumulation ----
    # Tiny (~0.4 MFLOP) and recomputed per C_OUT block so the grid axis carries
    # no state and stays fully parallel across cores.
    logits = jnp.dot(w1_ref[...], xs_ref[...],
                     preferred_element_type=jnp.float32) + b1_ref[...]       # [2304, 1]
    s = jax.nn.sigmoid(logits)                                               # f32

    # ---- scale the feature map (f32 product), feed the MXU in bf16 ----
    x_scaled = (x_ref[...] * s).astype(jnp.bfloat16)                         # [2304, 49]

    # ---- 1x1 conv 2304 -> this block's 192 output channels ----
    y = jnp.dot(w2_ref[...], x_scaled,
                preferred_element_type=jnp.float32)                          # [192, 49] f32

    # ---- BatchNorm2d: training-mode two-pass batch stats (biased var) ----
    m = jnp.mean(y, axis=1, keepdims=True)                                   # [192, 1]
    d = y - m
    var = jnp.mean(d * d, axis=1, keepdims=True)
    scale = g_ref[...] * jax.lax.rsqrt(var + BN_EPS)                         # [192, 1]
    o_ref[...] = d * scale + bta_ref[...]


_COST = pl.CostEstimate(
    flops=(N_BLK * (2 * C_MID * C_IN + 2 * C_MID)      # SE gate, recomputed per block
           + C_MID * P                                  # scale
           + 2 * C_OUT * C_MID * P                      # main matmul
           + 10 * C_OUT * P),                           # BN stats + normalize
    transcendentals=N_BLK * C_MID + C_OUT,              # sigmoid (per block) + rsqrt
    bytes_accessed=(C_IN * 2                            # xs   bf16
                    + C_MID * C_IN * 2                  # w1   bf16
                    + C_MID * 4                         # b1   f32
                    + C_MID * P * 2                     # x    bf16
                    + C_OUT * C_MID * 2                 # w2   bf16
                    + 2 * C_OUT * 4                     # gamma/beta f32
                    + C_OUT * P * 4),                   # out  f32
)


def prepare_params(w1, b1, w2, gamma, beta):
    """One-time parameter prep (layout + bf16 cast of MXU operands); kept out of
    the per-call hot path."""
    return dict(
        w1=w1.reshape(C_MID, C_IN).astype(jnp.bfloat16),
        b1=b1.reshape(C_MID, 1).astype(jnp.float32),
        w2=w2.reshape(C_OUT, C_MID).astype(jnp.bfloat16),
        gamma=gamma.reshape(C_OUT, 1).astype(jnp.float32),
        beta=beta.reshape(C_OUT, 1).astype(jnp.float32),
    )


def forward(x728, x725, params):
    """x728: [1, 96, 1, 1], x725: [1, 2304, 7, 7] (NCHW) -> [1, 384, 7, 7]."""
    xs = x728.reshape(C_IN, 1).astype(jnp.bfloat16)        # MXU-ready matvec RHS (free reshape)
    x_cm = x725.reshape(C_MID, P).astype(jnp.bfloat16)     # channels-major, bf16 stream

    out_cp = pl.pallas_call(
        se_conv_bn_kernel,
        out_shape=jax.ShapeDtypeStruct((C_OUT, P), jnp.float32),
        grid=(N_BLK,),
        in_specs=[
            pl.BlockSpec((C_IN, 1), lambda j: (0, 0)),        # xs  [96, 1]    bf16
            pl.BlockSpec((C_MID, C_IN), lambda j: (0, 0)),    # w1  [2304, 96] bf16
            pl.BlockSpec((C_MID, 1), lambda j: (0, 0)),       # b1  [2304, 1]  f32
            pl.BlockSpec((C_MID, P), lambda j: (0, 0)),       # x   [2304, 49] bf16
            pl.BlockSpec((TC, C_MID), lambda j: (j, 0)),      # w2 tile [192, 2304] bf16
            pl.BlockSpec((TC, 1), lambda j: (j, 0)),          # gamma tile
            pl.BlockSpec((TC, 1), lambda j: (j, 0)),          # beta tile
        ],
        out_specs=pl.BlockSpec((TC, P), lambda j: (j, 0)),
        compiler_params=pltpu.CompilerParams(dimension_semantics=("parallel",)),
        cost_estimate=_COST,
    )(xs, params["w1"], params["b1"], x_cm, params["w2"], params["gamma"], params["beta"])

    # [384, 49] -> [1, 384, 7, 7]: pure reshape, no transpose.
    return out_cp.reshape(B, C_OUT, H, W)


def reference_f32(x728, x725, w1, b1, w2, gamma, beta):
    """Pure-f32 reference of the module's forward pass."""
    hi = jax.lax.Precision.HIGHEST
    s = jax.nn.sigmoid(
        jnp.einsum("ck,k->c", w1.reshape(C_MID, C_IN), x728.reshape(C_IN), precision=hi) + b1)
    x_scaled = x725 * s.reshape(1, C_MID, 1, 1)
    y = jnp.einsum("oc,bchw->bohw", w2.reshape(C_OUT, C_MID), x_scaled, precision=hi)
    mean = jnp.mean(y, axis=(0, 2, 3), keepdims=True)
    var = jnp.mean((y - mean) ** 2, axis=(0, 2, 3), keepdims=True)
    y_hat = (y - mean) * jax.lax.rsqrt(var + BN_EPS)
    return y_hat * gamma.reshape(1, C_OUT, 1, 1) + beta.reshape(1, C_OUT, 1, 1)


def reference_matched(x728, x725, w1, b1, w2, gamma, beta):
    """Same math as the kernel (bf16 MXU operands, f32 accumulation / stats)."""
    w1b = w1.reshape(C_MID, C_IN).astype(jnp.bfloat16)
    xsb = x728.reshape(C_IN, 1).astype(jnp.bfloat16)
    logits = jnp.dot(w1b, xsb, preferred_element_type=jnp.float32) + b1.reshape(C_MID, 1)
    s = jax.nn.sigmoid(logits)                                               # [2304, 1]
    xb = x725.reshape(C_MID, P).astype(jnp.bfloat16)
    xsc = (xb * s).astype(jnp.bfloat16)
    w2b = w2.reshape(C_OUT, C_MID).astype(jnp.bfloat16)
    y = jnp.dot(w2b, xsc, preferred_element_type=jnp.float32)               # [384, 49]
    mean = jnp.mean(y, axis=1, keepdims=True)
    var = jnp.mean((y - mean) ** 2, axis=1, keepdims=True)
    y_hat = (y - mean) * jax.lax.rsqrt(var + BN_EPS)
    return (y_hat * gamma[:, None] + beta[:, None]).reshape(B, C_OUT, H, W)


if __name__ == "__main__":
    key = jax.random.PRNGKey(0)
    k1, k2, k3, k4, k5, k6, k7 = jax.random.split(key, 7)

    # inputs (shapes implied by the module's forward)
    x725 = jax.random.normal(k1, (B, C_MID, H, W), jnp.float32)
    x728 = jax.random.normal(k2, (B, C_IN, 1, 1), jnp.float32)

    # deterministic synthetic parameters
    w1 = jax.random.normal(k3, (C_MID, C_IN, 1, 1), jnp.float32) * 0.05   # conv2d226.weight
    b1 = jax.random.normal(k4, (C_MID,), jnp.float32) * 0.05              # conv2d226.bias
    w2 = jax.random.normal(k5, (C_OUT, C_MID, 1, 1), jnp.float32) * 0.02  # conv2d227.weight
    gamma = 1.0 + 0.1 * jax.random.normal(k6, (C_OUT,), jnp.float32)      # bn.weight
    beta = 0.1 * jax.random.normal(k7, (C_OUT,), jnp.float32)             # bn.bias

    params = prepare_params(w1, b1, w2, gamma, beta)
    out = jax.block_until_ready(jax.jit(forward)(x728, x725, params))
    assert out.shape == (B, C_OUT, H, W)

    # Tight check against a reference using the same bf16-MXU precision.
    ref_m = jax.block_until_ready(reference_matched(x728, x725, w1, b1, w2, gamma, beta))
    err_m = float(jnp.max(jnp.abs(out - ref_m)))
    assert jnp.allclose(out, ref_m, atol=2e-3, rtol=2e-3), err_m

    # Sanity check against the pure-f32 module semantics (bf16 rounding of the
    # weights/activations propagated through the BN normalization).
    ref_f = jax.block_until_ready(reference_f32(x728, x725, w1, b1, w2, gamma, beta))
    err_f = float(jnp.max(jnp.abs(out - ref_f)))
    assert jnp.allclose(out, ref_f, atol=5e-2, rtol=5e-2), err_f

    print("KERNEL_OK")
</pallas_src>

<mosaic_0001>
module attributes {stable_mosaic.version = 11 : i64} {
  func.func @se_conv_bn_kernel(%arg0: i32, %arg1: memref<96x1xbf16, #tpu.memory_space<vmem>>, %arg2: memref<2304x96xbf16, #tpu.memory_space<vmem>>, %arg3: memref<2304x1xf32, #tpu.memory_space<vmem>>, %arg4: memref<2304x49xbf16, #tpu.memory_space<vmem>>, %arg5: memref<192x2304xbf16, #tpu.memory_space<vmem>>, %arg6: memref<192x1xf32, #tpu.memory_space<vmem>>, %arg7: memref<192x1xf32, #tpu.memory_space<vmem>>, %arg8: memref<192x49xf32, #tpu.memory_space<vmem>>) attributes {dimension_semantics = [#tpu.dimension_semantics<parallel>], iteration_bounds = array<i64: 2>, scalar_prefetch = 0 : i64, scratch_operands = 0 : i64, tpu.core_type = #tpu.core_type<tc>, window_params = [{pipeline_mode = #tpu.pipeline_mode<synchronous>, transform_indices = @transform_0, window_bounds = array<i64: 96, 1>}, {pipeline_mode = #tpu.pipeline_mode<synchronous>, transform_indices = @transform_1, window_bounds = array<i64: 2304, 96>}, {pipeline_mode = #tpu.pipeline_mode<synchronous>, transform_indices = @transform_2, window_bounds = array<i64: 2304, 1>}, {pipeline_mode = #tpu.pipeline_mode<synchronous>, transform_indices = @transform_3, window_bounds = array<i64: 2304, 49>}, {transform_indices = @transform_4, window_bounds = array<i64: 192, 2304>}, {transform_indices = @transform_5, window_bounds = array<i64: 192, 1>}, {transform_indices = @transform_6, window_bounds = array<i64: 192, 1>}, {transform_indices = @transform_7, window_bounds = array<i64: 192, 49>}]} {
    %c0 = arith.constant 0 : index
    %c0_0 = arith.constant 0 : index
    %0 = vector.load %arg2[%c0, %c0_0] : memref<2304x96xbf16, #tpu.memory_space<vmem>>, vector<2304x96xbf16>
    %c0_1 = arith.constant 0 : index
    %c0_2 = arith.constant 0 : index
    %1 = vector.load %arg1[%c0_1, %c0_2] : memref<96x1xbf16, #tpu.memory_space<vmem>>, vector<96x1xbf16>
    %cst = arith.constant dense<0.000000e+00> : vector<2304x1xf32>
    %2 = tpu.matmul %0, %1, %cst {dimension_numbers = #tpu.dot_dimension_numbers<[1], [0], [0], [1], [0, 0, 1, 1], [], []>} : vector<2304x96xbf16>, vector<96x1xbf16>, vector<2304x1xf32> -> vector<2304x1xf32>
    %c0_3 = arith.constant 0 : index
    %c0_4 = arith.constant 0 : index
    %3 = vector.load %arg3[%c0_3, %c0_4] : memref<2304x1xf32, #tpu.memory_space<vmem>>, vector<2304x1xf32>
    %4 = arith.addf %2, %3 : vector<2304x1xf32>
    %5 = arith.negf %4 : vector<2304x1xf32>
    %6 = math.exp %5 : vector<2304x1xf32>
    %cst_5 = arith.constant 1.000000e+00 : f32
    %7 = vector.broadcast %cst_5 : f32 to vector<2304x1xf32>
    %8 = arith.addf %7, %6 : vector<2304x1xf32>
    %9 = arith.divf %7, %8 : vector<2304x1xf32>
    %c0_6 = arith.constant 0 : index
    %c0_7 = arith.constant 0 : index
    %10 = vector.load %arg4[%c0_6, %c0_7] : memref<2304x49xbf16, #tpu.memory_space<vmem>>, vector<2304x49xbf16>
    %11 = arith.extf %10 : vector<2304x49xbf16> to vector<2304x49xf32>
    %12 = vector.broadcast %9 : vector<2304x1xf32> to vector<2304x49xf32>
    %13 = arith.mulf %11, %12 : vector<2304x49xf32>
    %14 = arith.truncf %13 : vector<2304x49xf32> to vector<2304x49xbf16>
    %c0_8 = arith.constant 0 : index
    %c0_9 = arith.constant 0 : index
    %15 = vector.load %arg5[%c0_8, %c0_9] : memref<192x2304xbf16, #tpu.memory_space<vmem>>, vector<192x2304xbf16>
    %cst_10 = arith.constant dense<0.000000e+00> : vector<192x49xf32>
    %16 = tpu.matmul %15, %14, %cst_10 {dimension_numbers = #tpu.dot_dimension_numbers<[1], [0], [0], [1], [0, 0, 1, 1], [], []>} : vector<192x2304xbf16>, vector<2304x49xbf16>, vector<192x49xf32> -> vector<192x49xf32>
    %cst_11 = arith.constant dense<0.000000e+00> : vector<192xf32>
    %17 = vector.multi_reduction <add>, %16, %cst_11 [1] : vector<192x49xf32> to vector<192xf32>
    %18 = vector.shape_cast %17 : vector<192xf32> to vector<192x1xf32>
    %cst_12 = arith.constant 4.900000e+01 : f32
    %19 = vector.broadcast %cst_12 : f32 to vector<192x1xf32>
    %20 = arith.divf %18, %19 : vector<192x1xf32>
    %21 = vector.broadcast %20 : vector<192x1xf32> to vector<192x49xf32>
    %22 = arith.subf %16, %21 : vector<192x49xf32>
    %23 = arith.mulf %22, %22 : vector<192x49xf32>
    %cst_13 = arith.constant dense<0.000000e+00> : vector<192xf32>
    %24 = vector.multi_reduction <add>, %23, %cst_13 [1] : vector<192x49xf32> to vector<192xf32>
    %25 = vector.shape_cast %24 : vector<192xf32> to vector<192x1xf32>
    %cst_14 = arith.constant 4.900000e+01 : f32
    %26 = vector.broadcast %cst_14 : f32 to vector<192x1xf32>
    %27 = arith.divf %25, %26 : vector<192x1xf32>
    %c0_15 = arith.constant 0 : index
    %c0_16 = arith.constant 0 : index
    %28 = vector.load %arg6[%c0_15, %c0_16] : memref<192x1xf32, #tpu.memory_space<vmem>>, vector<192x1xf32>
    %cst_17 = arith.constant 1.000000e-03 : f32
    %29 = vector.broadcast %cst_17 : f32 to vector<192x1xf32>
    %30 = arith.addf %27, %29 : vector<192x1xf32>
    %31 = math.rsqrt %30 : vector<192x1xf32>
    %32 = arith.mulf %28, %31 : vector<192x1xf32>
    %33 = vector.broadcast %32 : vector<192x1xf32> to vector<192x49xf32>
    %34 = arith.mulf %22, %33 : vector<192x49xf32>
    %c0_18 = arith.constant 0 : index
    %c0_19 = arith.constant 0 : index
    %35 = vector.load %arg7[%c0_18, %c0_19] : memref<192x1xf32, #tpu.memory_space<vmem>>, vector<192x1xf32>
    %36 = vector.broadcast %35 : vector<192x1xf32> to vector<192x49xf32>
    %37 = arith.addf %34, %36 : vector<192x49xf32>
    %c0_20 = arith.constant 0 : index
    %c0_21 = arith.constant 0 : index
    %38 = vector.load %arg8[%c0_20, %c0_21] : memref<192x49xf32, #tpu.memory_space<vmem>>, vector<192x49xf32>
    tpu.vector_store %arg8[%c0_20, %c0_21], %37 {strides = array<i32>} : memref<192x49xf32, #tpu.memory_space<vmem>>, vector<192x49xf32>,
    return
  }
  func.func @transform_0(%arg0: i32) -> (i32, i32) {
    %c0_i32 = arith.constant 0 : i32
    %c0_i32_0 = arith.constant 0 : i32
    %c0_i32_1 = arith.constant 0 : i32
    return %c0_i32, %c0_i32_0 : i32, i32
  }
  func.func @transform_1(%arg0: i32) -> (i32, i32) {
    %c0_i32 = arith.constant 0 : i32
    %c0_i32_0 = arith.constant 0 : i32
    %c0_i32_1 = arith.constant 0 : i32
    return %c0_i32, %c0_i32_0 : i32, i32
  }
  func.func @transform_2(%arg0: i32) -> (i32, i32) {
    %c0_i32 = arith.constant 0 : i32
    %c0_i32_0 = arith.constant 0 : i32
    %c0_i32_1 = arith.constant 0 : i32
    return %c0_i32, %c0_i32_0 : i32, i32
  }
  func.func @transform_3(%arg0: i32) -> (i32, i32) {
    %c0_i32 = arith.constant 0 : i32
    %c0_i32_0 = arith.constant 0 : i32
    %c0_i32_1 = arith.constant 0 : i32
    return %c0_i32, %c0_i32_0 : i32, i32
  }
  func.func @transform_4(%arg0: i32) -> (i32, i32) {
    %c0_i32 = arith.constant 0 : i32
    %c0_i32_0 = arith.constant 0 : i32
    return %arg0, %c0_i32 : i32, i32
  }
  func.func @transform_5(%arg0: i32) -> (i32, i32) {
    %c0_i32 = arith.constant 0 : i32
    %c0_i32_0 = arith.constant 0 : i32
    return %arg0, %c0_i32 : i32, i32
  }
  func.func @transform_6(%arg0: i32) -> (i32, i32) {
    %c0_i32 = arith.constant 0 : i32
    %c0_i32_0 = arith.constant 0 : i32
    return %arg0, %c0_i32 : i32, i32
  }
  func.func @transform_7(%arg0: i32) -> (i32, i32) {
    %c0_i32 = arith.constant 0 : i32
    %c0_i32_0 = arith.constant 0 : i32
    return %arg0, %c0_i32 : i32, i32
  }
}

</mosaic_0001>

<llo_original>
// kernel: forward.1
$region0: #{forward.1}
  #allocation0 [shape = 'u32[]', space=smem, size = 0x4, offset = 0x4, fixed_abs, tag = 'smem constant byte address 0x4 - core index']
  #allocation1 [shape = 'u32[144,128]{1,0:T(1,128)}', space=vmem, size = 0x12000, scoped, tag = 'internal scratch']
  %s0 = inlined_call_operand.vmem [shape: bf16[96,1], index: 0, kind: input, shape index: {}]
  %s1 = inlined_call_operand.vmem [shape: bf16[2304,96], index: 1, kind: input, shape index: {}]
  %s2 = inlined_call_operand.vmem [shape: f32[2304,1], index: 2, kind: input, shape index: {}]
  %s3 = inlined_call_operand.vmem [shape: bf16[2304,49], index: 3, kind: input, shape index: {}]
  %s4 = inlined_call_operand.vmem [shape: bf16[384,2304], index: 4, kind: input, shape index: {}]
  %s5 = inlined_call_operand.vmem [shape: f32[384,1], index: 5, kind: input, shape index: {}]
  %s6 = inlined_call_operand.vmem [shape: f32[384,1], index: 6, kind: input, shape index: {}]
  %s7 = inlined_call_operand.vmem [shape: f32[384,49], index: 7, kind: output, shape index: {}]
  %s8 = sld [smem:[#allocation0]]
  $region61: #{forward.1} parent=0
    _
  %s10 = ssub.s32 1, %s8
  %s11 = scalar_select 0, %s10, %s8
  loop: start=0, step=1, limit=4
  $region2: #{forward.1} parent=0 // loop_pre_header
    _
  $region3: #{forward.1} parent=0 // loop_header
    %s13 = sphi 0, %s17
    %p14 = scmp.ge.s32.totalorder %s13, 4
    %s21 = sphi 0, %s21
    %s23 = sphi 0, %s21
    %s24 = sphi 0, %s23
    %s38 = sphi 0, %s24
    %s42 = sphi 0, %s42
    %s44 = sphi 0, %s42
    %s45 = sphi 0, %s44
    %s59 = sphi 0, %s45
    %s63 = sphi 0, %s63
    %s65 = sphi 0, %s63
    %s66 = sphi 0, %s65
    %s80 = sphi 0, %s66
    %s84 = sphi 0, %s84
    %s86 = sphi 0, %s84
    %s87 = sphi 0, %s86
    %s101 = sphi 0, %s87
    %s107 = sphi 0, %s109
    %s110 = sphi 0, %s107
    %s111 = sphi 0, %s110
    %s127 = sphi 0, %s111
    %s133 = sphi 0, %s135
    %s136 = sphi 0, %s133
    %s137 = sphi 0, %s136
    %s153 = sphi 0, %s137
    %s159 = sphi 0, %s161
    %s162 = sphi 0, %s159
    %s163 = sphi 0, %s162
    %s179 = sphi 0, %s163
    %s185 = sphi 0, %s187
    %s188 = sphi 0, %s185
    %s189 = sphi 0, %s188
    %s205 = sphi 0, %s189
  $region4: #{forward.1} parent=0 // loop_header_branch
    %16 = sbr.rel (%p14) target = $region8
  $region5: #{forward.1} parent=0 // loop_body
    %s18 = ssub.s32 %s13, 1
    %s19 = ssub.s32 %s13, 2
    %s20 = sadd.s32 %s13, 1
    %s22 = sadd.s32 %s21, 1
    %p25 = scmp.eq.s32.totalorder %s13, 1
    %p26 = scmp.ne.s32.totalorder %s21, %s23
    %p27 = scmp.eq.s32.totalorder %s13, 0
    %p28 = por %p26, %p27
    %p29 = scmp.ne.s32.totalorder %s21, %s23
    %p30 = scmp.eq.s32.totalorder %s18, 1
    %p31 = por %p29, %p30
    %p32 = scmp.ne.s32.totalorder %s23, %s24
    %p33 = scmp.eq.s32.totalorder %s18, 0
    %p34 = por %p32, %p33
    %p35 = scmp.ne.s32.totalorder %s23, %s24
    %p36 = scmp.eq.s32.totalorder %s19, 1
    %p37 = por %p35, %p36
    %p39 = scmp.ne.s32.totalorder %s24, %s38
    %p40 = scmp.eq.s32.totalorder %s19, 0
    %p41 = por %p39, %p40
    %s43 = sadd.s32 %s42, 1
    %p46 = scmp.eq.s32.totalorder %s13, 1
    %p47 = scmp.ne.s32.totalorder %s42, %s44
    %p48 = scmp.eq.s32.totalorder %s13, 0
    %p49 = por %p47, %p48
    %p50 = scmp.ne.s32.totalorder %s42, %s44
    %p51 = scmp.eq.s32.totalorder %s18, 1
    %p52 = por %p50, %p51
    %p53 = scmp.ne.s32.totalorder %s44, %s45
    %p54 = scmp.eq.s32.totalorder %s18, 0
    %p55 = por %p53, %p54
    %p56 = scmp.ne.s32.totalorder %s44, %s45
    %p57 = scmp.eq.s32.totalorder %s19, 1
    %p58 = por %p56, %p57
    %p60 = scmp.ne.s32.totalorder %s45, %s59
    %p61 = scmp.eq.s32.totalorder %s19, 0
    %p62 = por %p60, %p61
    %s64 = sadd.s32 %s63, 1
    %p67 = scmp.eq.s32.totalorder %s13, 1
    %p68 = scmp.ne.s32.totalorder %s63, %s65
    %p69 = scmp.eq.s32.totalorder %s13, 0
    %p70 = por %p68, %p69
    %p71 = scmp.ne.s32.totalorder %s63, %s65
    %p72 = scmp.eq.s32.totalorder %s18, 1
    %p73 = por %p71, %p72
    %p74 = scmp.ne.s32.totalorder %s65, %s66
    %p75 = scmp.eq.s32.totalorder %s18, 0
    %p76 = por %p74, %p75
    %p77 = scmp.ne.s32.totalorder %s65, %s66
    %p78 = scmp.eq.s32.totalorder %s19, 1
    %p79 = por %p77, %p78
    %p81 = scmp.ne.s32.totalorder %s66, %s80
    %p82 = scmp.eq.s32.totalorder %s19, 0
    %p83 = por %p81, %p82
    %s85 = sadd.s32 %s84, 1
    %p88 = scmp.eq.s32.totalorder %s13, 1
    %p89 = scmp.ne.s32.totalorder %s84, %s86
    %p90 = scmp.eq.s32.totalorder %s13, 0
    %p91 = por %p89, %p90
    %p92 = scmp.ne.s32.totalorder %s84, %s86
    %p93 = scmp.eq.s32.totalorder %s18, 1
    %p94 = por %p92, %p93
    %p95 = scmp.ne.s32.totalorder %s86, %s87
    %p96 = scmp.eq.s32.totalorder %s18, 0
    %p97 = por %p95, %p96
    %p98 = scmp.ne.s32.totalorder %s86, %s87
    %p99 = scmp.eq.s32.totalorder %s19, 1
    %p100 = por %p98, %p99
    %p102 = scmp.ne.s32.totalorder %s87, %s101
    %p103 = scmp.eq.s32.totalorder %s19, 0
    %p104 = por %p102, %p103
    %s105 = ssub.s32 %s13, %s20
    %p106 = scmp.eq.s32.totalorder %s105, 0
    %s108 = sadd.s32 %s107, 1
    %s109 = scalar_select %p106, %s107, %s108
    %p112 = pneg %p106
    %p113 = scmp.eq.s32.totalorder %s13, 1
    %p114 = por %p112, %p113
    %p115 = scmp.ne.s32.totalorder %s107, %s110
    %p116 = scmp.eq.s32.totalorder %s13, 0
    %p117 = por %p115, %p116
    %p118 = scmp.ne.s32.totalorder %s107, %s110
    %p119 = scmp.eq.s32.totalorder %s18, 1
    %p120 = por %p118, %p119
    %p121 = scmp.ne.s32.totalorder %s110, %s111
    %p122 = scmp.eq.s32.totalorder %s18, 0
    %p123 = por %p121, %p122
    %p124 = scmp.ne.s32.totalorder %s110, %s111
    %p125 = scmp.eq.s32.totalorder %s19, 1
    %p126 = por %p124, %p125
    %p128 = scmp.ne.s32.totalorder %s111, %s127
    %p129 = scmp.eq.s32.totalorder %s19, 0
    %p130 = por %p128, %p129
    %s131 = ssub.s32 %s13, %s20
    %p132 = scmp.eq.s32.totalorder %s131, 0
    %s134 = sadd.s32 %s133, 1
    %s135 = scalar_select %p132, %s133, %s134
    %p138 = pneg %p132
    %p139 = scmp.eq.s32.totalorder %s13, 1
    %p140 = por %p138, %p139
    %p141 = scmp.ne.s32.totalorder %s133, %s136
    %p142 = scmp.eq.s32.totalorder %s13, 0
    %p143 = por %p141, %p142
    %p144 = scmp.ne.s32.totalorder %s133, %s136
    %p145 = scmp.eq.s32.totalorder %s18, 1
    %p146 = por %p144, %p145
    %p147 = scmp.ne.s32.totalorder %s136, %s137
    %p148 = scmp.eq.s32.totalorder %s18, 0
    %p149 = por %p147, %p148
    %p150 = scmp.ne.s32.totalorder %s136, %s137
    %p151 = scmp.eq.s32.totalorder %s19, 1
    %p152 = por %p150, %p151
    %p154 = scmp.ne.s32.totalorder %s137, %s153
    %p155 = scmp.eq.s32.totalorder %s19, 0
    %p156 = por %p154, %p155
    %s157 = ssub.s32 %s13, %s20
    %p158 = scmp.eq.s32.totalorder %s157, 0
    %s160 = sadd.s32 %s159, 1
    %s161 = scalar_select %p158, %s159, %s160
    %p164 = pneg %p158
    %p165 = scmp.eq.s32.totalorder %s13, 1
    %p166 = por %p164, %p165
    %p167 = scmp.ne.s32.totalorder %s159, %s162
    %p168 = scmp.eq.s32.totalorder %s13, 0
    %p169 = por %p167, %p168
    %p170 = scmp.ne.s32.totalorder %s159, %s162
    %p171 = scmp.eq.s32.totalorder %s18, 1
    %p172 = por %p170, %p171
    %p173 = scmp.ne.s32.totalorder %s162, %s163
    %p174 = scmp.eq.s32.totalorder %s18, 0
    %p175 = por %p173, %p174
    %p176 = scmp.ne.s32.totalorder %s162, %s163
    %p177 = scmp.eq.s32.totalorder %s19, 1
    %p178 = por %p176, %p177
    %p180 = scmp.ne.s32.totalorder %s163, %s179
    %p181 = scmp.eq.s32.totalorder %s19, 0
    %p182 = por %p180, %p181
    %s183 = ssub.s32 %s13, %s20
    %p184 = scmp.eq.s32.totalorder %s183, 0
    %s186 = sadd.s32 %s185, 1
    %s187 = scalar_select %p184, %s185, %s186
    %p190 = pneg %p184
    %p191 = scmp.eq.s32.totalorder %s13, 1
    %p192 = por %p190, %p191
    %p193 = scmp.ne.s32.totalorder %s185, %s188
    %p194 = scmp.eq.s32.totalorder %s13, 0
    %p195 = por %p193, %p194
    %p196 = scmp.ne.s32.totalorder %s185, %s188
    %p197 = scmp.eq.s32.totalorder %s18, 1
    %p198 = por %p196, %p197
    %p199 = scmp.ne.s32.totalorder %s188, %s189
    %p200 = scmp.eq.s32.totalorder %s18, 0
    %p201 = por %p199, %p200
    %p202 = scmp.ne.s32.totalorder %s188, %s189
    %p203 = scmp.eq.s32.totalorder %s19, 1
    %p204 = por %p202, %p203
    %p206 = scmp.ne.s32.totalorder %s189, %s205
    %p207 = scmp.eq.s32.totalorder %s19, 0
    %p208 = por %p206, %p207
    %p209 = scmp.le.s32.totalorder 1, %s13
    %p210 = scmp.lt.s32.totalorder %s13, 3
    %p211 = pnand %p209, %p210
    %p212 = pneg %p211
    // Predicated region
    $region9: #{forward.1} parent=5 // pred_check
      _
    $region10: #{forward.1} parent=5 // pred_check_branch
      %214 = sbr.rel (%p211) target = $region12
    $region11: #{forward.1} parent=5 // pred_region
      %s215 = ssub.s32 %s13, 1
      // Predicated region
      $region13: #{forward.1} parent=11 // pred_check
        %p216 = pneg %p34
      $region14: #{forward.1} parent=11 // pred_check_branch
        %218 = sbr.rel (%p216) target = $region16
      $region15: #{forward.1} parent=11 // pred_region
        _
      $region16: #{forward.1} parent=11 // pred_fallthru
        _
      // Predicated region
      $region17: #{forward.1} parent=11 // pred_check
        %p219 = pneg %p55
      $region18: #{forward.1} parent=11 // pred_check_branch
        %221 = sbr.rel (%p219) target = $region20
      $region19: #{forward.1} parent=11 // pred_region
        _
      $region20: #{forward.1} parent=11 // pred_fallthru
        _
      // Predicated region
      $region21: #{forward.1} parent=11 // pred_check
        %p222 = pneg %p76
      $region22: #{forward.1} parent=11 // pred_check_branch
        %224 = sbr.rel (%p222) target = $region24
      $region23: #{forward.1} parent=11 // pred_region
        _
      $region24: #{forward.1} parent=11 // pred_fallthru
        _
      // Predicated region
      $region25: #{forward.1} parent=11 // pred_check
        %p225 = pneg %p97
      $region26: #{forward.1} parent=11 // pred_check_branch
        %227 = sbr.rel (%p225) target = $region28
      $region27: #{forward.1} parent=11 // pred_region
        _
      $region28: #{forward.1} parent=11 // pred_fallthru
        _
    $region12: #{forward.1} parent=5 // pred_fallthru
      _
    %p228 = scmp.lt.s32.totalorder %s13, 2
    // Predicated region
    $region29: #{forward.1} parent=5 // pred_check
      %p229 = pneg %p228
    $region30: #{forward.1} parent=5 // pred_check_branch
      %231 = sbr.rel (%p229) target = $region32
    $region31: #{forward.1} parent=5 // pred_region
      // Predicated region
      $region33: #{forward.1} parent=31 // pred_check
        %p232 = pneg %p117
      $region34: #{forward.1} parent=31 // pred_check_branch
        %234 = sbr.rel (%p232) target = $region36
      $region35: #{forward.1} parent=31 // pred_region
        %s235 = smul.u32 24, %s13
        %p236 = scmp.lt.s32.totalorder %s235, 47
        %s237 = scalar_select %p236, %s235, 47
        %s238 = smul.addr %s237, 18
        %s239 = smul.addr %s238, 4
        %s240 = scalar_lea.vmem %s4, %s239
        %s241 = smul.u32 24, %s13
      $region36: #{forward.1} parent=31 // pred_fallthru
        _
      // Predicated region
      $region37: #{forward.1} parent=31 // pred_check
        %p242 = pneg %p143
      $region38: #{forward.1} parent=31 // pred_check_branch
        %244 = sbr.rel (%p242) target = $region40
      $region39: #{forward.1} parent=31 // pred_region
        %s245 = smul.u32 24, %s13
        %p246 = scmp.lt.s32.totalorder %s245, 47
        %s247 = scalar_select %p246, %s245, 47
        %s248 = smul.addr %s247, 8
        %s249 = scalar_lea.vmem %s5, %s248
        %s250 = smul.u32 24, %s13
      $region40: #{forward.1} parent=31 // pred_fallthru
        _
      // Predicated region
      $region41: #{forward.1} parent=31 // pred_check
        %p251 = pneg %p169
      $region42: #{forward.1} parent=31 // pred_check_branch
        %253 = sbr.rel (%p251) target = $region44
      $region43: #{forward.1} parent=31 // pred_region
        %s254 = smul.u32 24, %s13
        %p255 = scmp.lt.s32.totalorder %s254, 47
        %s256 = scalar_select %p255, %s254, 47
        %s257 = smul.addr %s256, 8
        %s258 = scalar_lea.vmem %s6, %s257
        %s259 = smul.u32 24, %s13
      $region44: #{forward.1} parent=31 // pred_fallthru
        _
    $region32: #{forward.1} parent=5 // pred_fallthru
      _
    %p260 = scmp.le.s32.totalorder 1, %s13
    %p261 = scmp.lt.s32.totalorder %s13, 3
    %p262 = pnand %p260, %p261
    %p263 = pneg %p262
    // Predicated region
    $region45: #{forward.1} parent=5 // pred_check
      _
    $region46: #{forward.1} parent=5 // pred_check_branch
      %265 = sbr.rel (%p262) target = $region48
    $region47: #{forward.1} parent=5 // pred_region
      %s266 = ssub.s32 %s13, 1
      %p267 = pneg %p34
      %p268 = pneg %p31
      %p269 = pneg %p55
      %p270 = pneg %p52
      %p271 = pneg %p76
      %p272 = pneg %p73
      %p273 = pneg %p97
      %p274 = pneg %p94
      %s275 = smul.u32 24, %s18
      %p276 = scmp.lt.s32.totalorder %s275, 47
      %s277 = scalar_select %p276, %s275, 47
      %s278 = smul.addr %s277, 18
      %s279 = smul.addr %s278, 4
      %s280 = scalar_lea.vmem %s4, %s279
      %p281 = pneg %p123
      %p282 = pneg %p120
      %s283 = smul.u32 24, %s18
      %p284 = scmp.lt.s32.totalorder %s283, 47
      %s285 = scalar_select %p284, %s283, 47
      %s286 = smul.addr %s285, 8
      %s287 = scalar_lea.vmem %s5, %s286
      %p288 = pneg %p149
      %p289 = pneg %p146
      %s290 = smul.u32 24, %s18
      %p291 = scmp.lt.s32.totalorder %s290, 47
      %s292 = scalar_select %p291, %s290, 47
      %s293 = smul.addr %s292, 8
      %s294 = scalar_lea.vmem %s6, %s293
      %p295 = pneg %p175
      %p296 = pneg %p172
      %p297 = pneg %p201
      %p298 = pneg %p198
      %s299 = smul.u32 24, %s18
      %p300 = scmp.lt.s32.totalorder %s299, 47
      %s301 = scalar_select %p300, %s299, 47
      %s302 = smul.addr %s301, 8
      %s303 = scalar_lea.vmem %s7, %s302
      %s304 = smul.u32 24, %s18
      %p305 = scmp.lt.s32.totalorder %s304, 47
      %s306 = scalar_select %p305, %s304, 47
      %s307 = smul.addr %s306, 18
      %s308 = smul.addr %s307, 4
      %s309 = scalar_lea.vmem %s4, %s308
      %s310 = smul.u32 24, %s18
      %s311 = smul.u32 24, %s18
      %p312 = scmp.lt.s32.totalorder %s311, 47
      %s313 = scalar_select %p312, %s311, 47
      %s314 = smul.addr %s313, 8
      %s315 = scalar_lea.vmem %s5, %s314
      %s316 = smul.u32 24, %s18
      %s317 = smul.u32 24, %s18
      %p318 = scmp.lt.s32.totalorder %s317, 47
      %s319 = scalar_select %p318, %s317, 47
      %s320 = smul.addr %s319, 8
      %s321 = scalar_lea.vmem %s6, %s320
      %s322 = smul.u32 24, %s18
      %s323 = smul.u32 24, %s18
      %p324 = scmp.lt.s32.totalorder %s323, 47
      %s325 = scalar_select %p324, %s323, 47
      %s326 = smul.addr %s325, 8
      %s327 = scalar_lea.vmem %s7, %s326
      %s328 = smul.u32 24, %s18
      %v330 = vld [vmem:[%s1] sm:$0xf]
      %v331 = vld [vmem:[%s1 + $0x4] sm:$0xf]
      %v332 = vld [vmem:[%s1 + $0x8] sm:$0xf]
      %v333 = vld [vmem:[%s1 + $0xc] sm:$0xf]
      %v334 = vld [vmem:[%s1 + $0x10] sm:$0xf]
      %v335 = vld [vmem:[%s1 + $0x14] sm:$0xf]
      %v336 = vld [vmem:[%s1 + $0x18] sm:$0xf]
      %v337 = vld [vmem:[%s1 + $0x1c] sm:$0xf]
      %v338 = vld [vmem:[%s1 + $0x20] sm:$0xf]
      %v339 = vld [vmem:[%s1 + $0x24] sm:$0xf]
      %v340 = vld [vmem:[%s1 + $0x28] sm:$0xf]
      %v341 = vld [vmem:[%s1 + $0x2c] sm:$0xf]
      %v342 = vld [vmem:[%s1 + $0x30] sm:$0xf]
      %v343 = vld [vmem:[%s1 + $0x34] sm:$0xf]
      %v344 = vld [vmem:[%s1 + $0x38] sm:$0xf]
      %v345 = vld [vmem:[%s1 + $0x3c] sm:$0xf]
      %v346 = vld [vmem:[%s1 + $0x40] sm:$0xf]
      %v347 = vld [vmem:[%s1 + $0x44] sm:$0xf]
      %v348 = vld [vmem:[%s1 + $0x48] sm:$0xf]
      %v349 = vld [vmem:[%s1 + $0x4c] sm:$0xf]
      %v350 = vld [vmem:[%s1 + $0x50] sm:$0xf]
      %v351 = vld [vmem:[%s1 + $0x54] sm:$0xf]
      %v352 = vld [vmem:[%s1 + $0x58] sm:$0xf]
      %v353 = vld [vmem:[%s1 + $0x5c] sm:$0xf]
      %v354 = vld [vmem:[%s1 + $0x60] sm:$0xf]
      %v355 = vld [vmem:[%s1 + $0x64] sm:$0xf]
      %v356 = vld [vmem:[%s1 + $0x68] sm:$0xf]
      %v357 = vld [vmem:[%s1 + $0x6c] sm:$0xf]
      %v358 = vld [vmem:[%s1 + $0x70] sm:$0xf]
      %v359 = vld [vmem:[%s1 + $0x74] sm:$0xf]
      %v360 = vld [vmem:[%s1 + $0x78] sm:$0xf]
      %v361 = vld [vmem:[%s1 + $0x7c] sm:$0xf]
      %v362 = vld [vmem:[%s1 + $0x80] sm:$0xf]
      %v363 = vld [vmem:[%s1 + $0x84] sm:$0xf]
      %v364 = vld [vmem:[%s1 + $0x88] sm:$0xf]
      %v365 = vld [vmem:[%s1 + $0x8c] sm:$0xf]
      %v366 = vld [vmem:[%s1 + $0x90] sm:$0xf]
      %v367 = vld [vmem:[%s1 + $0x94] sm:$0xf]
      %v368 = vld [vmem:[%s1 + $0x98] sm:$0xf]
      %v369 = vld [vmem:[%s1 + $0x9c] sm:$0xf]
      %v370 = vld [vmem:[%s1 + $0xa0] sm:$0xf]
      %v371 = vld [vmem:[%s1 + $0xa4] sm:$0xf]
      %v372 = vld [vmem:[%s1 + $0xa8] sm:$0xf]
      %v373 = vld [vmem:[%s1 + $0xac] sm:$0xf]
      %v374 = vld [vmem:[%s1 + $0xb0] sm:$0xf]
      %v375 = vld [vmem:[%s1 + $0xb4] sm:$0xf]
      %v376 = vld [vmem:[%s1 + $0xb8] sm:$0xf]
      %v377 = vld [vmem:[%s1 + $0xbc] sm:$0xf]
      %v378 = vld [vmem:[%s1 + $0xc0] sm:$0xf]
      %v379 = vld [vmem:[%s1 + $0xc4] sm:$0xf]
      %v380 = vld [vmem:[%s1 + $0xc8] sm:$0xf]
      %v381 = vld [vmem:[%s1 + $0xcc] sm:$0xf]
      %v382 = vld [vmem:[%s1 + $0xd0] sm:$0xf]
      %v383 = vld [vmem:[%s1 + $0xd4] sm:$0xf]
      %v384 = vld [vmem:[%s1 + $0xd8] sm:$0xf]
      %v385 = vld [vmem:[%s1 + $0xdc] sm:$0xf]
      %v386 = vld [vmem:[%s1 + $0xe0] sm:$0xf]
      %v387 = vld [vmem:[%s1 + $0xe4] sm:$0xf]
      %v388 = vld [vmem:[%s1 + $0xe8] sm:$0xf]
      %v389 = vld [vmem:[%s1 + $0xec] sm:$0xf]
      %v390 = vld [vmem:[%s1 + $0xf0] sm:$0xf]
      %v391 = vld [vmem:[%s1 + $0xf4] sm:$0xf]
      %v392 = vld [vmem:[%s1 + $0xf8] sm:$0xf]
      %v393 = vld [vmem:[%s1 + $0xfc] sm:$0xf]
      %v394 = vld [vmem:[%s1 + $0x100] sm:$0xf]
      %v395 = vld [vmem:[%s1 + $0x104] sm:$0xf]
      %v396 = vld [vmem:[%s1 + $0x108] sm:$0xf]
      %v397 = vld [vmem:[%s1 + $0x10c] sm:$0xf]
      %v398 = vld [vmem:[%s1 + $0x110] sm:$0xf]
      %v399 = vld [vmem:[%s1 + $0x114] sm:$0xf]
      %v400 = vld [vmem:[%s1 + $0x118] sm:$0xf]
      %v401 = vld [vmem:[%s1 + $0x11c] sm:$0xf]
      %v402 = vld [vmem:[%s1 + $0x120] sm:$0xf]
      %v403 = vld [vmem:[%s1 + $0x124] sm:$0xf]
      %v404 = vld [vmem:[%s1 + $0x128] sm:$0xf]
      %v405 = vld [vmem:[%s1 + $0x12c] sm:$0xf]
      %v406 = vld [vmem:[%s1 + $0x130] sm:$0xf]
      %v407 = vld [vmem:[%s1 + $0x134] sm:$0xf]
      %v408 = vld [vmem:[%s1 + $0x138] sm:$0xf]
      %v409 = vld [vmem:[%s1 + $0x13c] sm:$0xf]
      %v410 = vld [vmem:[%s1 + $0x140] sm:$0xf]
      %v411 = vld [vmem:[%s1 + $0x144] sm:$0xf]
      %v412 = vld [vmem:[%s1 + $0x148] sm:$0xf]
      %v413 = vld [vmem:[%s1 + $0x14c] sm:$0xf]
      %v414 = vld [vmem:[%s1 + $0x150] sm:$0xf]
      %v415 = vld [vmem:[%s1 + $0x154] sm:$0xf]
      %v416 = vld [vmem:[%s1 + $0x158] sm:$0xf]
      %v417 = vld [vmem:[%s1 + $0x15c] sm:$0xf]
      %v418 = vld [vmem:[%s1 + $0x160] sm:$0xf]
      %v419 = vld [vmem:[%s1 + $0x164] sm:$0xf]
      %v420 = vld [vmem:[%s1 + $0x168] sm:$0xf]
      %v421 = vld [vmem:[%s1 + $0x16c] sm:$0xf]
      %v422 = vld [vmem:[%s1 + $0x170] sm:$0xf]
      %v423 = vld [vmem:[%s1 + $0x174] sm:$0xf]
      %v424 = vld [vmem:[%s1 + $0x178] sm:$0xf]
      %v425 = vld [vmem:[%s1 + $0x17c] sm:$0xf]
      %v426 = vld [vmem:[%s1 + $0x180] sm:$0xf]
      %v427 = vld [vmem:[%s1 + $0x184] sm:$0xf]
      %v428 = vld [vmem:[%s1 + $0x188] sm:$0xf]
      %v429 = vld [vmem:[%s1 + $0x18c] sm:$0xf]
      %v430 = vld [vmem:[%s1 + $0x190] sm:$0xf]
      %v431 = vld [vmem:[%s1 + $0x194] sm:$0xf]
      %v432 = vld [vmem:[%s1 + $0x198] sm:$0xf]
      %v433 = vld [vmem:[%s1 + $0x19c] sm:$0xf]
      %v434 = vld [vmem:[%s1 + $0x1a0] sm:$0xf]
      %v435 = vld [vmem:[%s1 + $0x1a4] sm:$0xf]
      %v436 = vld [vmem:[%s1 + $0x1a8] sm:$0xf]
      %v437 = vld [vmem:[%s1 + $0x1ac] sm:$0xf]
      %v438 = vld [vmem:[%s1 + $0x1b0] sm:$0xf]
      %v439 = vld [vmem:[%s1 + $0x1b4] sm:$0xf]
      %v440 = vld [vmem:[%s1 + $0x1b8] sm:$0xf]
      %v441 = vld [vmem:[%s1 + $0x1bc] sm:$0xf]
      %v442 = vld [vmem:[%s1 + $0x1c0] sm:$0xf]
      %v443 = vld [vmem:[%s1 + $0x1c4] sm:$0xf]
      %v444 = vld [vmem:[%s1 + $0x1c8] sm:$0xf]
      %v445 = vld [vmem:[%s1 + $0x1cc] sm:$0xf]
      %v446 = vld [vmem:[%s1 + $0x1d0] sm:$0xf]
      %v447 = vld [vmem:[%s1 + $0x1d4] sm:$0xf]
      %v448 = vld [vmem:[%s1 + $0x1d8] sm:$0xf]
      %v449 = vld [vmem:[%s1 + $0x1dc] sm:$0xf]
      %v450 = vld [vmem:[%s1 + $0x1e0] sm:$0xf]
      %v451 = vld [vmem:[%s1 + $0x1e4] sm:$0xf]
      %v452 = vld [vmem:[%s1 + $0x1e8] sm:$0xf]
      %v453 = vld [vmem:[%s1 + $0x1ec] sm:$0xf]
      %v454 = vld [vmem:[%s1 + $0x1f0] sm:$0xf]
      %v455 = vld [vmem:[%s1 + $0x1f4] sm:$0xf]
      %v456 = vld [vmem:[%s1 + $0x1f8] sm:$0xf]
      %v457 = vld [vmem:[%s1 + $0x1fc] sm:$0xf]
      %v458 = vld [vmem:[%s1 + $0x200] sm:$0xf]
      %v459 = vld [vmem:[%s1 + $0x204] sm:$0xf]
      %v460 = vld [vmem:[%s1 + $0x208] sm:$0xf]
      %v461 = vld [vmem:[%s1 + $0x20c] sm:$0xf]
      %v462 = vld [vmem:[%s1 + $0x210] sm:$0xf]
      %v463 = vld [vmem:[%s1 + $0x214] sm:$0xf]
      %v464 = vld [vmem:[%s1 + $0x218] sm:$0xf]
      %v465 = vld [vmem:[%s1 + $0x21c] sm:$0xf]
      %v466 = vld [vmem:[%s1 + $0x220] sm:$0xf]
      %v467 = vld [vmem:[%s1 + $0x224] sm:$0xf]
      %v468 = vld [vmem:[%s1 + $0x228] sm:$0xf]
      %v469 = vld [vmem:[%s1 + $0x22c] sm:$0xf]
      %v470 = vld [vmem:[%s1 + $0x230] sm:$0xf]
      %v471 = vld [vmem:[%s1 + $0x234] sm:$0xf]
      %v472 = vld [vmem:[%s1 + $0x238] sm:$0xf]
      %v473 = vld [vmem:[%s1 + $0x23c] sm:$0xf]
      %v474 = vld [vmem:[%s1 + $0x240] sm:$0xf]
      %v475 = vld [vmem:[%s1 + $0x244] sm:$0xf]
      %v476 = vld [vmem:[%s1 + $0x248] sm:$0xf]
      %v477 = vld [vmem:[%s1 + $0x24c] sm:$0xf]
      %v478 = vld [vmem:[%s1 + $0x250] sm:$0xf]
      %v479 = vld [vmem:[%s1 + $0x254] sm:$0xf]
      %v480 = vld [vmem:[%s1 + $0x258] sm:$0xf]
      %v481 = vld [vmem:[%s1 + $0x25c] sm:$0xf]
      %v482 = vld [vmem:[%s1 + $0x260] sm:$0xf]
      %v483 = vld [vmem:[%s1 + $0x264] sm:$0xf]
      %v484 = vld [vmem:[%s1 + $0x268] sm:$0xf]
      %v485 = vld [vmem:[%s1 + $0x26c] sm:$0xf]
      %v486 = vld [vmem:[%s1 + $0x270] sm:$0xf]
      %v487 = vld [vmem:[%s1 + $0x274] sm:$0xf]
      %v488 = vld [vmem:[%s1 + $0x278] sm:$0xf]
      %v489 = vld [vmem:[%s1 + $0x27c] sm:$0xf]
      %v490 = vld [vmem:[%s1 + $0x280] sm:$0xf]
      %v491 = vld [vmem:[%s1 + $0x284] sm:$0xf]
      %v492 = vld [vmem:[%s1 + $0x288] sm:$0xf]
      %v493 = vld [vmem:[%s1 + $0x28c] sm:$0xf]
      %v494 = vld [vmem:[%s1 + $0x290] sm:$0xf]
      %v495 = vld [vmem:[%s1 + $0x294] sm:$0xf]
      %v496 = vld [vmem:[%s1 + $0x298] sm:$0xf]
      %v497 = vld [vmem:[%s1 + $0x29c] sm:$0xf]
      %v498 = vld [vmem:[%s1 + $0x2a0] sm:$0xf]
      %v499 = vld [vmem:[%s1 + $0x2a4] sm:$0xf]
      %v500 = vld [vmem:[%s1 + $0x2a8] sm:$0xf]
      %v501 = vld [vmem:[%s1 + $0x2ac] sm:$0xf]
      %v502 = vld [vmem:[%s1 + $0x2b0] sm:$0xf]
      %v503 = vld [vmem:[%s1 + $0x2b4] sm:$0xf]
      %v504 = vld [vmem:[%s1 + $0x2b8] sm:$0xf]
      %v505 = vld [vmem:[%s1 + $0x2bc] sm:$0xf]
      %v506 = vld [vmem:[%s1 + $0x2c0] sm:$0xf]
      %v507 = vld [vmem:[%s1 + $0x2c4] sm:$0xf]
      %v508 = vld [vmem:[%s1 + $0x2c8] sm:$0xf]
      %v509 = vld [vmem:[%s1 + $0x2cc] sm:$0xf]
      %v510 = vld [vmem:[%s1 + $0x2d0] sm:$0xf]
      %v511 = vld [vmem:[%s1 + $0x2d4] sm:$0xf]
      %v512 = vld [vmem:[%s1 + $0x2d8] sm:$0xf]
      %v513 = vld [vmem:[%s1 + $0x2dc] sm:$0xf]
      %v514 = vld [vmem:[%s1 + $0x2e0] sm:$0xf]
      %v515 = vld [vmem:[%s1 + $0x2e4] sm:$0xf]
      %v516 = vld [vmem:[%s1 + $0x2e8] sm:$0xf]
      %v517 = vld [vmem:[%s1 + $0x2ec] sm:$0xf]
      %v518 = vld [vmem:[%s1 + $0x2f0] sm:$0xf]
      %v519 = vld [vmem:[%s1 + $0x2f4] sm:$0xf]
      %v520 = vld [vmem:[%s1 + $0x2f8] sm:$0xf]
      %v521 = vld [vmem:[%s1 + $0x2fc] sm:$0xf]
      %v522 = vld [vmem:[%s1 + $0x300] sm:$0xf]
      %v523 = vld [vmem:[%s1 + $0x304] sm:$0xf]
      %v524 = vld [vmem:[%s1 + $0x308] sm:$0xf]
      %v525 = vld [vmem:[%s1 + $0x30c] sm:$0xf]
      %v526 = vld [vmem:[%s1 + $0x310] sm:$0xf]
      %v527 = vld [vmem:[%s1 + $0x314] sm:$0xf]
      %v528 = vld [vmem:[%s1 + $0x318] sm:$0xf]
      %v529 = vld [vmem:[%s1 + $0x31c] sm:$0xf]
      %v530 = vld [vmem:[%s1 + $0x320] sm:$0xf]
      %v531 = vld [vmem:[%s1 + $0x324] sm:$0xf]
      %v532 = vld [vmem:[%s1 + $0x328] sm:$0xf]
      %v533 = vld [vmem:[%s1 + $0x32c] sm:$0xf]
      %v534 = vld [vmem:[%s1 + $0x330] sm:$0xf]
      %v535 = vld [vmem:[%s1 + $0x334] sm:$0xf]
      %v536 = vld [vmem:[%s1 + $0x338] sm:$0xf]
      %v537 = vld [vmem:[%s1 + $0x33c] sm:$0xf]
      %v538 = vld [vmem:[%s1 + $0x340] sm:$0xf]
      %v539 = vld [vmem:[%s1 + $0x344] sm:$0xf]
      %v540 = vld [vmem:[%s1 + $0x348] sm:$0xf]
      %v541 = vld [vmem:[%s1 + $0x34c] sm:$0xf]
      %v542 = vld [vmem:[%s1 + $0x350] sm:$0xf]
      %v543 = vld [vmem:[%s1 + $0x354] sm:$0xf]
      %v544 = vld [vmem:[%s1 + $0x358] sm:$0xf]
      %v545 = vld [vmem:[%s1 + $0x35c] sm:$0xf]
      %v546 = vld [vmem:[%s1 + $0x360] sm:$0xf]
      %v547 = vld [vmem:[%s1 + $0x364] sm:$0xf]
      %v548 = vld [vmem:[%s1 + $0x368] sm:$0xf]
      %v549 = vld [vmem:[%s1 + $0x36c] sm:$0xf]
      %v550 = vld [vmem:[%s1 + $0x370] sm:$0xf]
      %v551 = vld [vmem:[%s1 + $0x374] sm:$0xf]
      %v552 = vld [vmem:[%s1 + $0x378] sm:$0xf]
      %v553 = vld [vmem:[%s1 + $0x37c] sm:$0xf]
      %v554 = vld [vmem:[%s1 + $0x380] sm:$0xf]
      %v555 = vld [vmem:[%s1 + $0x384] sm:$0xf]
      %v556 = vld [vmem:[%s1 + $0x388] sm:$0xf]
      %v557 = vld [vmem:[%s1 + $0x38c] sm:$0xf]
      %v558 = vld [vmem:[%s1 + $0x390] sm:$0xf]
      %v559 = vld [vmem:[%s1 + $0x394] sm:$0xf]
      %v560 = vld [vmem:[%s1 + $0x398] sm:$0xf]
      %v561 = vld [vmem:[%s1 + $0x39c] sm:$0xf]
      %v562 = vld [vmem:[%s1 + $0x3a0] sm:$0xf]
      %v563 = vld [vmem:[%s1 + $0x3a4] sm:$0xf]
      %v564 = vld [vmem:[%s1 + $0x3a8] sm:$0xf]
      %v565 = vld [vmem:[%s1 + $0x3ac] sm:$0xf]
      %v566 = vld [vmem:[%s1 + $0x3b0] sm:$0xf]
      %v567 = vld [vmem:[%s1 + $0x3b4] sm:$0xf]
      %v568 = vld [vmem:[%s1 + $0x3b8] sm:$0xf]
      %v569 = vld [vmem:[%s1 + $0x3bc] sm:$0xf]
      %v570 = vld [vmem:[%s1 + $0x3c0] sm:$0xf]
      %v571 = vld [vmem:[%s1 + $0x3c4] sm:$0xf]
      %v572 = vld [vmem:[%s1 + $0x3c8] sm:$0xf]
      %v573 = vld [vmem:[%s1 + $0x3cc] sm:$0xf]
      %v574 = vld [vmem:[%s1 + $0x3d0] sm:$0xf]
      %v575 = vld [vmem:[%s1 + $0x3d4] sm:$0xf]
      %v576 = vld [vmem:[%s1 + $0x3d8] sm:$0xf]
      %v577 = vld [vmem:[%s1 + $0x3dc] sm:$0xf]
      %v578 = vld [vmem:[%s1 + $0x3e0] sm:$0xf]
      %v579 = vld [vmem:[%s1 + $0x3e4] sm:$0xf]
      %v580 = vld [vmem:[%s1 + $0x3e8] sm:$0xf]
      %v581 = vld [vmem:[%s1 + $0x3ec] sm:$0xf]
      %v582 = vld [vmem:[%s1 + $0x3f0] sm:$0xf]
      %v583 = vld [vmem:[%s1 + $0x3f4] sm:$0xf]
      %v584 = vld [vmem:[%s1 + $0x3f8] sm:$0xf]
      %v585 = vld [vmem:[%s1 + $0x3fc] sm:$0xf]
      %v586 = vld [vmem:[%s1 + $0x400] sm:$0xf]
      %v587 = vld [vmem:[%s1 + $0x404] sm:$0xf]
      %v588 = vld [vmem:[%s1 + $0x408] sm:$0xf]
      %v589 = vld [vmem:[%s1 + $0x40c] sm:$0xf]
      %v590 = vld [vmem:[%s1 + $0x410] sm:$0xf]
      %v591 = vld [vmem:[%s1 + $0x414] sm:$0xf]
      %v592 = vld [vmem:[%s1 + $0x418] sm:$0xf]
      %v593 = vld [vmem:[%s1 + $0x41c] sm:$0xf]
      %v594 = vld [vmem:[%s1 + $0x420] sm:$0xf]
      %v595 = vld [vmem:[%s1 + $0x424] sm:$0xf]
      %v596 = vld [vmem:[%s1 + $0x428] sm:$0xf]
      %v597 = vld [vmem:[%s1 + $0x42c] sm:$0xf]
      %v598 = vld [vmem:[%s1 + $0x430] sm:$0xf]
      %v599 = vld [vmem:[%s1 + $0x434] sm:$0xf]
      %v600 = vld [vmem:[%s1 + $0x438] sm:$0xf]
      %v601 = vld [vmem:[%s1 + $0x43c] sm:$0xf]
      %v602 = vld [vmem:[%s1 + $0x440] sm:$0xf]
      %v603 = vld [vmem:[%s1 + $0x444] sm:$0xf]
      %v604 = vld [vmem:[%s1 + $0x448] sm:$0xf]
      %v605 = vld [vmem:[%s1 + $0x44c] sm:$0xf]
      %v606 = vld [vmem:[%s1 + $0x450] sm:$0xf]
      %v607 = vld [vmem:[%s1 + $0x454] sm:$0xf]
      %v608 = vld [vmem:[%s1 + $0x458] sm:$0xf]
      %v609 = vld [vmem:[%s1 + $0x45c] sm:$0xf]
      %v610 = vld [vmem:[%s1 + $0x460] sm:$0xf]
      %v611 = vld [vmem:[%s1 + $0x464] sm:$0xf]
      %v612 = vld [vmem:[%s1 + $0x468] sm:$0xf]
      %v613 = vld [vmem:[%s1 + $0x46c] sm:$0xf]
      %v614 = vld [vmem:[%s1 + $0x470] sm:$0xf]
      %v615 = vld [vmem:[%s1 + $0x474] sm:$0xf]
      %v616 = vld [vmem:[%s1 + $0x478] sm:$0xf]
      %v617 = vld [vmem:[%s1 + $0x47c] sm:$0xf]
      %v618 = vld [vmem:[%s0] sm:$0xf]
      %v619 = vld [vmem:[%s0 + $0x4] sm:$0xf]
      %v620 = vld [vmem:[%s0 + $0x8] sm:$0xf]
      %v621 = vld [vmem:[%s0 + $0xc] sm:$0xf]
      %v622 = vld [vmem:[%s0 + $0x10] sm:$0xf]
      %v623 = vld [vmem:[%s0 + $0x14] sm:$0xf]
      %v624 = vld [vmem:[%s0 + $0x18] sm:$0xf]
      %v625 = vld [vmem:[%s0 + $0x1c] sm:$0xf]
      %v626 = vld [vmem:[%s0 + $0x20] sm:$0xf]
      %v627 = vld [vmem:[%s0 + $0x24] sm:$0xf]
      %v628 = vld [vmem:[%s0 + $0x28] sm:$0xf]
      %v629 = vld [vmem:[%s0 + $0x2c] sm:$0xf]
      %v630 = vld [vmem:[%s2] sm:$0xff]
      %v631 = vld [vmem:[%s2 + $0x8] sm:$0xff]
      %v632 = vld [vmem:[%s2 + $0x10] sm:$0xff]
      %v633 = vld [vmem:[%s2 + $0x18] sm:$0xff]
      %v634 = vld [vmem:[%s2 + $0x20] sm:$0xff]
      %v635 = vld [vmem:[%s2 + $0x28] sm:$0xff]
      %v636 = vld [vmem:[%s2 + $0x30] sm:$0xff]
      %v637 = vld [vmem:[%s2 + $0x38] sm:$0xff]
      %v638 = vld [vmem:[%s2 + $0x40] sm:$0xff]
      %v639 = vld [vmem:[%s2 + $0x48] sm:$0xff]
      %v640 = vld [vmem:[%s2 + $0x50] sm:$0xff]
      %v641 = vld [vmem:[%s2 + $0x58] sm:$0xff]
      %v642 = vld [vmem:[%s2 + $0x60] sm:$0xff]
      %v643 = vld [vmem:[%s2 + $0x68] sm:$0xff]
      %v644 = vld [vmem:[%s2 + $0x70] sm:$0xff]
      %v645 = vld [vmem:[%s2 + $0x78] sm:$0xff]
      %v646 = vld [vmem:[%s2 + $0x80] sm:$0xff]
      %v647 = vld [vmem:[%s2 + $0x88] sm:$0xff]
      %v648 = vld [vmem:[%s2 + $0x90] sm:$0xff]
      %v649 = vld [vmem:[%s2 + $0x98] sm:$0xff]
      %v650 = vld [vmem:[%s2 + $0xa0] sm:$0xff]
      %v651 = vld [vmem:[%s2 + $0xa8] sm:$0xff]
      %v652 = vld [vmem:[%s2 + $0xb0] sm:$0xff]
      %v653 = vld [vmem:[%s2 + $0xb8] sm:$0xff]
      %v654 = vld [vmem:[%s2 + $0xc0] sm:$0xff]
      %v655 = vld [vmem:[%s2 + $0xc8] sm:$0xff]
      %v656 = vld [vmem:[%s2 + $0xd0] sm:$0xff]
      %v657 = vld [vmem:[%s2 + $0xd8] sm:$0xff]
      %v658 = vld [vmem:[%s2 + $0xe0] sm:$0xff]
      %v659 = vld [vmem:[%s2 + $0xe8] sm:$0xff]
      %v660 = vld [vmem:[%s2 + $0xf0] sm:$0xff]
      %v661 = vld [vmem:[%s2 + $0xf8] sm:$0xff]
      %v662 = vld [vmem:[%s2 + $0x100] sm:$0xff]
      %v663 = vld [vmem:[%s2 + $0x108] sm:$0xff]
      %v664 = vld [vmem:[%s2 + $0x110] sm:$0xff]
      %v665 = vld [vmem:[%s2 + $0x118] sm:$0xff]
      %v666 = vld [vmem:[%s2 + $0x120] sm:$0xff]
      %v667 = vld [vmem:[%s2 + $0x128] sm:$0xff]
      %v668 = vld [vmem:[%s2 + $0x130] sm:$0xff]
      %v669 = vld [vmem:[%s2 + $0x138] sm:$0xff]
      %v670 = vld [vmem:[%s2 + $0x140] sm:$0xff]
      %v671 = vld [vmem:[%s2 + $0x148] sm:$0xff]
      %v672 = vld [vmem:[%s2 + $0x150] sm:$0xff]
      %v673 = vld [vmem:[%s2 + $0x158] sm:$0xff]
      %v674 = vld [vmem:[%s2 + $0x160] sm:$0xff]
      %v675 = vld [vmem:[%s2 + $0x168] sm:$0xff]
      %v676 = vld [vmem:[%s2 + $0x170] sm:$0xff]
      %v677 = vld [vmem:[%s2 + $0x178] sm:$0xff]
      %v678 = vld [vmem:[%s2 + $0x180] sm:$0xff]
      %v679 = vld [vmem:[%s2 + $0x188] sm:$0xff]
      %v680 = vld [vmem:[%s2 + $0x190] sm:$0xff]
      %v681 = vld [vmem:[%s2 + $0x198] sm:$0xff]
      %v682 = vld [vmem:[%s2 + $0x1a0] sm:$0xff]
      %v683 = vld [vmem:[%s2 + $0x1a8] sm:$0xff]
      %v684 = vld [vmem:[%s2 + $0x1b0] sm:$0xff]
      %v685 = vld [vmem:[%s2 + $0x1b8] sm:$0xff]
      %v686 = vld [vmem:[%s2 + $0x1c0] sm:$0xff]
      %v687 = vld [vmem:[%s2 + $0x1c8] sm:$0xff]
      %v688 = vld [vmem:[%s2 + $0x1d0] sm:$0xff]
      %v689 = vld [vmem:[%s2 + $0x1d8] sm:$0xff]
      %v690 = vld [vmem:[%s2 + $0x1e0] sm:$0xff]
      %v691 = vld [vmem:[%s2 + $0x1e8] sm:$0xff]
      %v692 = vld [vmem:[%s2 + $0x1f0] sm:$0xff]
      %v693 = vld [vmem:[%s2 + $0x1f8] sm:$0xff]
      %v694 = vld [vmem:[%s2 + $0x200] sm:$0xff]
      %v695 = vld [vmem:[%s2 + $0x208] sm:$0xff]
      %v696 = vld [vmem:[%s2 + $0x210] sm:$0xff]
      %v697 = vld [vmem:[%s2 + $0x218] sm:$0xff]
      %v698 = vld [vmem:[%s2 + $0x220] sm:$0xff]
      %v699 = vld [vmem:[%s2 + $0x228] sm:$0xff]
      %v700 = vld [vmem:[%s2 + $0x230] sm:$0xff]
      %v701 = vld [vmem:[%s2 + $0x238] sm:$0xff]
      %v702 = vld [vmem:[%s2 + $0x240] sm:$0xff]
      %v703 = vld [vmem:[%s2 + $0x248] sm:$0xff]
      %v704 = vld [vmem:[%s2 + $0x250] sm:$0xff]
      %v705 = vld [vmem:[%s2 + $0x258] sm:$0xff]
      %v706 = vld [vmem:[%s2 + $0x260] sm:$0xff]
      %v707 = vld [vmem:[%s2 + $0x268] sm:$0xff]
      %v708 = vld [vmem:[%s2 + $0x270] sm:$0xff]
      %v709 = vld [vmem:[%s2 + $0x278] sm:$0xff]
      %v710 = vld [vmem:[%s2 + $0x280] sm:$0xff]
      %v711 = vld [vmem:[%s2 + $0x288] sm:$0xff]
      %v712 = vld [vmem:[%s2 + $0x290] sm:$0xff]
      %v713 = vld [vmem:[%s2 + $0x298] sm:$0xff]
      %v714 = vld [vmem:[%s2 + $0x2a0] sm:$0xff]
      %v715 = vld [vmem:[%s2 + $0x2a8] sm:$0xff]
      %v716 = vld [vmem:[%s2 + $0x2b0] sm:$0xff]
      %v717 = vld [vmem:[%s2 + $0x2b8] sm:$0xff]
      %v718 = vld [vmem:[%s2 + $0x2c0] sm:$0xff]
      %v719 = vld [vmem:[%s2 + $0x2c8] sm:$0xff]
      %v720 = vld [vmem:[%s2 + $0x2d0] sm:$0xff]
      %v721 = vld [vmem:[%s2 + $0x2d8] sm:$0xff]
      %v722 = vld [vmem:[%s2 + $0x2e0] sm:$0xff]
      %v723 = vld [vmem:[%s2 + $0x2e8] sm:$0xff]
      %v724 = vld [vmem:[%s2 + $0x2f0] sm:$0xff]
      %v725 = vld [vmem:[%s2 + $0x2f8] sm:$0xff]
      %v726 = vld [vmem:[%s2 + $0x300] sm:$0xff]
      %v727 = vld [vmem:[%s2 + $0x308] sm:$0xff]
      %v728 = vld [vmem:[%s2 + $0x310] sm:$0xff]
      %v729 = vld [vmem:[%s2 + $0x318] sm:$0xff]
      %v730 = vld [vmem:[%s2 + $0x320] sm:$0xff]
      %v731 = vld [vmem:[%s2 + $0x328] sm:$0xff]
      %v732 = vld [vmem:[%s2 + $0x330] sm:$0xff]
      %v733 = vld [vmem:[%s2 + $0x338] sm:$0xff]
      %v734 = vld [vmem:[%s2 + $0x340] sm:$0xff]
      %v735 = vld [vmem:[%s2 + $0x348] sm:$0xff]
      %v736 = vld [vmem:[%s2 + $0x350] sm:$0xff]
      %v737 = vld [vmem:[%s2 + $0x358] sm:$0xff]
      %v738 = vld [vmem:[%s2 + $0x360] sm:$0xff]
      %v739 = vld [vmem:[%s2 + $0x368] sm:$0xff]
      %v740 = vld [vmem:[%s2 + $0x370] sm:$0xff]
      %v741 = vld [vmem:[%s2 + $0x378] sm:$0xff]
      %v742 = vld [vmem:[%s2 + $0x380] sm:$0xff]
      %v743 = vld [vmem:[%s2 + $0x388] sm:$0xff]
      %v744 = vld [vmem:[%s2 + $0x390] sm:$0xff]
      %v745 = vld [vmem:[%s2 + $0x398] sm:$0xff]
      %v746 = vld [vmem:[%s2 + $0x3a0] sm:$0xff]
      %v747 = vld [vmem:[%s2 + $0x3a8] sm:$0xff]
      %v748 = vld [vmem:[%s2 + $0x3b0] sm:$0xff]
      %v749 = vld [vmem:[%s2 + $0x3b8] sm:$0xff]
      %v750 = vld [vmem:[%s2 + $0x3c0] sm:$0xff]
      %v751 = vld [vmem:[%s2 + $0x3c8] sm:$0xff]
      %v752 = vld [vmem:[%s2 + $0x3d0] sm:$0xff]
      %v753 = vld [vmem:[%s2 + $0x3d8] sm:$0xff]
      %v754 = vld [vmem:[%s2 + $0x3e0] sm:$0xff]
      %v755 = vld [vmem:[%s2 + $0x3e8] sm:$0xff]
      %v756 = vld [vmem:[%s2 + $0x3f0] sm:$0xff]
      %v757 = vld [vmem:[%s2 + $0x3f8] sm:$0xff]
      %v758 = vld [vmem:[%s2 + $0x400] sm:$0xff]
      %v759 = vld [vmem:[%s2 + $0x408] sm:$0xff]
      %v760 = vld [vmem:[%s2 + $0x410] sm:$0xff]
      %v761 = vld [vmem:[%s2 + $0x418] sm:$0xff]
      %v762 = vld [vmem:[%s2 + $0x420] sm:$0xff]
      %v763 = vld [vmem:[%s2 + $0x428] sm:$0xff]
      %v764 = vld [vmem:[%s2 + $0x430] sm:$0xff]
      %v765 = vld [vmem:[%s2 + $0x438] sm:$0xff]
      %v766 = vld [vmem:[%s2 + $0x440] sm:$0xff]
      %v767 = vld [vmem:[%s2 + $0x448] sm:$0xff]
      %v768 = vld [vmem:[%s2 + $0x450] sm:$0xff]
      %v769 = vld [vmem:[%s2 + $0x458] sm:$0xff]
      %v770 = vld [vmem:[%s2 + $0x460] sm:$0xff]
      %v771 = vld [vmem:[%s2 + $0x468] sm:$0xff]
      %v772 = vld [vmem:[%s2 + $0x470] sm:$0xff]
      %v773 = vld [vmem:[%s2 + $0x478] sm:$0xff]
      %v774 = vld [vmem:[%s2 + $0x480] sm:$0xff]
      %v775 = vld [vmem:[%s2 + $0x488] sm:$0xff]
      %v776 = vld [vmem:[%s2 + $0x490] sm:$0xff]
      %v777 = vld [vmem:[%s2 + $0x498] sm:$0xff]
      %v778 = vld [vmem:[%s2 + $0x4a0] sm:$0xff]
      %v779 = vld [vmem:[%s2 + $0x4a8] sm:$0xff]
      %v780 = vld [vmem:[%s2 + $0x4b0] sm:$0xff]
      %v781 = vld [vmem:[%s2 + $0x4b8] sm:$0xff]
      %v782 = vld [vmem:[%s2 + $0x4c0] sm:$0xff]
      %v783 = vld [vmem:[%s2 + $0x4c8] sm:$0xff]
      %v784 = vld [vmem:[%s2 + $0x4d0] sm:$0xff]
      %v785 = vld [vmem:[%s2 + $0x4d8] sm:$0xff]
      %v786 = vld [vmem:[%s2 + $0x4e0] sm:$0xff]
      %v787 = vld [vmem:[%s2 + $0x4e8] sm:$0xff]
      %v788 = vld [vmem:[%s2 + $0x4f0] sm:$0xff]
      %v789 = vld [vmem:[%s2 + $0x4f8] sm:$0xff]
      %v790 = vld [vmem:[%s2 + $0x500] sm:$0xff]
      %v791 = vld [vmem:[%s2 + $0x508] sm:$0xff]
      %v792 = vld [vmem:[%s2 + $0x510] sm:$0xff]
      %v793 = vld [vmem:[%s2 + $0x518] sm:$0xff]
      %v794 = vld [vmem:[%s2 + $0x520] sm:$0xff]
      %v795 = vld [vmem:[%s2 + $0x528] sm:$0xff]
      %v796 = vld [vmem:[%s2 + $0x530] sm:$0xff]
      %v797 = vld [vmem:[%s2 + $0x538] sm:$0xff]
      %v798 = vld [vmem:[%s2 + $0x540] sm:$0xff]
      %v799 = vld [vmem:[%s2 + $0x548] sm:$0xff]
      %v800 = vld [vmem:[%s2 + $0x550] sm:$0xff]
      %v801 = vld [vmem:[%s2 + $0x558] sm:$0xff]
      %v802 = vld [vmem:[%s2 + $0x560] sm:$0xff]
      %v803 = vld [vmem:[%s2 + $0x568] sm:$0xff]
      %v804 = vld [vmem:[%s2 + $0x570] sm:$0xff]
      %v805 = vld [vmem:[%s2 + $0x578] sm:$0xff]
      %v806 = vld [vmem:[%s2 + $0x580] sm:$0xff]
      %v807 = vld [vmem:[%s2 + $0x588] sm:$0xff]
      %v808 = vld [vmem:[%s2 + $0x590] sm:$0xff]
      %v809 = vld [vmem:[%s2 + $0x598] sm:$0xff]
      %v810 = vld [vmem:[%s2 + $0x5a0] sm:$0xff]
      %v811 = vld [vmem:[%s2 + $0x5a8] sm:$0xff]
      %v812 = vld [vmem:[%s2 + $0x5b0] sm:$0xff]
      %v813 = vld [vmem:[%s2 + $0x5b8] sm:$0xff]
      %v814 = vld [vmem:[%s2 + $0x5c0] sm:$0xff]
      %v815 = vld [vmem:[%s2 + $0x5c8] sm:$0xff]
      %v816 = vld [vmem:[%s2 + $0x5d0] sm:$0xff]
      %v817 = vld [vmem:[%s2 + $0x5d8] sm:$0xff]
      %v818 = vld [vmem:[%s2 + $0x5e0] sm:$0xff]
      %v819 = vld [vmem:[%s2 + $0x5e8] sm:$0xff]
      %v820 = vld [vmem:[%s2 + $0x5f0] sm:$0xff]
      %v821 = vld [vmem:[%s2 + $0x5f8] sm:$0xff]
      %v822 = vld [vmem:[%s2 + $0x600] sm:$0xff]
      %v823 = vld [vmem:[%s2 + $0x608] sm:$0xff]
      %v824 = vld [vmem:[%s2 + $0x610] sm:$0xff]
      %v825 = vld [vmem:[%s2 + $0x618] sm:$0xff]
      %v826 = vld [vmem:[%s2 + $0x620] sm:$0xff]
      %v827 = vld [vmem:[%s2 + $0x628] sm:$0xff]
      %v828 = vld [vmem:[%s2 + $0x630] sm:$0xff]
      %v829 = vld [vmem:[%s2 + $0x638] sm:$0xff]
      %v830 = vld [vmem:[%s2 + $0x640] sm:$0xff]
      %v831 = vld [vmem:[%s2 + $0x648] sm:$0xff]
      %v832 = vld [vmem:[%s2 + $0x650] sm:$0xff]
      %v833 = vld [vmem:[%s2 + $0x658] sm:$0xff]
      %v834 = vld [vmem:[%s2 + $0x660] sm:$0xff]
      %v835 = vld [vmem:[%s2 + $0x668] sm:$0xff]
      %v836 = vld [vmem:[%s2 + $0x670] sm:$0xff]
      %v837 = vld [vmem:[%s2 + $0x678] sm:$0xff]
      %v838 = vld [vmem:[%s2 + $0x680] sm:$0xff]
      %v839 = vld [vmem:[%s2 + $0x688] sm:$0xff]
      %v840 = vld [vmem:[%s2 + $0x690] sm:$0xff]
      %v841 = vld [vmem:[%s2 + $0x698] sm:$0xff]
      %v842 = vld [vmem:[%s2 + $0x6a0] sm:$0xff]
      %v843 = vld [vmem:[%s2 + $0x6a8] sm:$0xff]
      %v844 = vld [vmem:[%s2 + $0x6b0] sm:$0xff]
      %v845 = vld [vmem:[%s2 + $0x6b8] sm:$0xff]
      %v846 = vld [vmem:[%s2 + $0x6c0] sm:$0xff]
      %v847 = vld [vmem:[%s2 + $0x6c8] sm:$0xff]
      %v848 = vld [vmem:[%s2 + $0x6d0] sm:$0xff]
      %v849 = vld [vmem:[%s2 + $0x6d8] sm:$0xff]
      %v850 = vld [vmem:[%s2 + $0x6e0] sm:$0xff]
      %v851 = vld [vmem:[%s2 + $0x6e8] sm:$0xff]
      %v852 = vld [vmem:[%s2 + $0x6f0] sm:$0xff]
      %v853 = vld [vmem:[%s2 + $0x6f8] sm:$0xff]
      %v854 = vld [vmem:[%s2 + $0x700] sm:$0xff]
      %v855 = vld [vmem:[%s2 + $0x708] sm:$0xff]
      %v856 = vld [vmem:[%s2 + $0x710] sm:$0xff]
      %v857 = vld [vmem:[%s2 + $0x718] sm:$0xff]
      %v858 = vld [vmem:[%s2 + $0x720] sm:$0xff]
      %v859 = vld [vmem:[%s2 + $0x728] sm:$0xff]
      %v860 = vld [vmem:[%s2 + $0x730] sm:$0xff]
      %v861 = vld [vmem:[%s2 + $0x738] sm:$0xff]
      %v862 = vld [vmem:[%s2 + $0x740] sm:$0xff]
      %v863 = vld [vmem:[%s2 + $0x748] sm:$0xff]
      %v864 = vld [vmem:[%s2 + $0x750] sm:$0xff]
      %v865 = vld [vmem:[%s2 + $0x758] sm:$0xff]
      %v866 = vld [vmem:[%s2 + $0x760] sm:$0xff]
      %v867 = vld [vmem:[%s2 + $0x768] sm:$0xff]
      %v868 = vld [vmem:[%s2 + $0x770] sm:$0xff]
      %v869 = vld [vmem:[%s2 + $0x778] sm:$0xff]
      %v870 = vld [vmem:[%s2 + $0x780] sm:$0xff]
      %v871 = vld [vmem:[%s2 + $0x788] sm:$0xff]
      %v872 = vld [vmem:[%s2 + $0x790] sm:$0xff]
      %v873 = vld [vmem:[%s2 + $0x798] sm:$0xff]
      %v874 = vld [vmem:[%s2 + $0x7a0] sm:$0xff]
      %v875 = vld [vmem:[%s2 + $0x7a8] sm:$0xff]
      %v876 = vld [vmem:[%s2 + $0x7b0] sm:$0xff]
      %v877 = vld [vmem:[%s2 + $0x7b8] sm:$0xff]
      %v878 = vld [vmem:[%s2 + $0x7c0] sm:$0xff]
      %v879 = vld [vmem:[%s2 + $0x7c8] sm:$0xff]
      %v880 = vld [vmem:[%s2 + $0x7d0] sm:$0xff]
      %v881 = vld [vmem:[%s2 + $0x7d8] sm:$0xff]
      %v882 = vld [vmem:[%s2 + $0x7e0] sm:$0xff]
      %v883 = vld [vmem:[%s2 + $0x7e8] sm:$0xff]
      %v884 = vld [vmem:[%s2 + $0x7f0] sm:$0xff]
      %v885 = vld [vmem:[%s2 + $0x7f8] sm:$0xff]
      %v886 = vld [vmem:[%s2 + $0x800] sm:$0xff]
      %v887 = vld [vmem:[%s2 + $0x808] sm:$0xff]
      %v888 = vld [vmem:[%s2 + $0x810] sm:$0xff]
      %v889 = vld [vmem:[%s2 + $0x818] sm:$0xff]
      %v890 = vld [vmem:[%s2 + $0x820] sm:$0xff]
      %v891 = vld [vmem:[%s2 + $0x828] sm:$0xff]
      %v892 = vld [vmem:[%s2 + $0x830] sm:$0xff]
      %v893 = vld [vmem:[%s2 + $0x838] sm:$0xff]
      %v894 = vld [vmem:[%s2 + $0x840] sm:$0xff]
      %v895 = vld [vmem:[%s2 + $0x848] sm:$0xff]
      %v896 = vld [vmem:[%s2 + $0x850] sm:$0xff]
      %v897 = vld [vmem:[%s2 + $0x858] sm:$0xff]
      %v898 = vld [vmem:[%s2 + $0x860] sm:$0xff]
      %v899 = vld [vmem:[%s2 + $0x868] sm:$0xff]
      %v900 = vld [vmem:[%s2 + $0x870] sm:$0xff]
      %v901 = vld [vmem:[%s2 + $0x878] sm:$0xff]
      %v902 = vld [vmem:[%s2 + $0x880] sm:$0xff]
      %v903 = vld [vmem:[%s2 + $0x888] sm:$0xff]
      %v904 = vld [vmem:[%s2 + $0x890] sm:$0xff]
      %v905 = vld [vmem:[%s2 + $0x898] sm:$0xff]
      %v906 = vld [vmem:[%s2 + $0x8a0] sm:$0xff]
      %v907 = vld [vmem:[%s2 + $0x8a8] sm:$0xff]
      %v908 = vld [vmem:[%s2 + $0x8b0] sm:$0xff]
      %v909 = vld [vmem:[%s2 + $0x8b8] sm:$0xff]
      %v910 = vld [vmem:[%s2 + $0x8c0] sm:$0xff]
      %v911 = vld [vmem:[%s2 + $0x8c8] sm:$0xff]
      %v912 = vld [vmem:[%s2 + $0x8d0] sm:$0xff]
      %v913 = vld [vmem:[%s2 + $0x8d8] sm:$0xff]
      %v914 = vld [vmem:[%s2 + $0x8e0] sm:$0xff]
      %v915 = vld [vmem:[%s2 + $0x8e8] sm:$0xff]
      %v916 = vld [vmem:[%s2 + $0x8f0] sm:$0xff]
      %v917 = vld [vmem:[%s2 + $0x8f8] sm:$0xff]
      %v1206 = vunpack.c.l.b16 %v330
      %v1207 = vunpack.c.l.b16 %v331
      %v1208 = vunpack.c.l.b16 %v332
      %v1209 = vunpack.c.l.b16 %v333
      %v1210 = vunpack.c.l.b16 %v334
      %v1211 = vunpack.c.l.b16 %v335
      %v1212 = vunpack.c.l.b16 %v336
      %v1213 = vunpack.c.l.b16 %v337
      %v1214 = vunpack.c.l.b16 %v338
      %v1215 = vunpack.c.l.b16 %v339
      %v1216 = vunpack.c.l.b16 %v340
      %v1217 = vunpack.c.l.b16 %v341
      %v1218 = vunpack.c.l.b16 %v342
      %v1219 = vunpack.c.l.b16 %v343
      %v1220 = vunpack.c.l.b16 %v344
      %v1221 = vunpack.c.l.b16 %v345
      %v1222 = vunpack.c.l.b16 %v346
      %v1223 = vunpack.c.l.b16 %v347
      %v1224 = vunpack.c.l.b16 %v348
      %v1225 = vunpack.c.l.b16 %v349
      %v1226 = vunpack.c.l.b16 %v350
      %v1227 = vunpack.c.l.b16 %v351
      %v1228 = vunpack.c.l.b16 %v352
      %v1229 = vunpack.c.l.b16 %v353
      %v1230 = vunpack.c.l.b16 %v354
      %v1231 = vunpack.c.l.b16 %v355
      %v1232 = vunpack.c.l.b16 %v356
      %v1233 = vunpack.c.l.b16 %v357
      %v1234 = vunpack.c.l.b16 %v358
      %v1235 = vunpack.c.l.b16 %v359
      %v1236 = vunpack.c.l.b16 %v360
      %v1237 = vunpack.c.l.b16 %v361
      %v1238 = vunpack.c.l.b16 %v362
      %v1239 = vunpack.c.l.b16 %v363
      %v1240 = vunpack.c.l.b16 %v364
      %v1241 = vunpack.c.l.b16 %v365
      %v1242 = vunpack.c.l.b16 %v366
      %v1243 = vunpack.c.l.b16 %v367
      %v1244 = vunpack.c.l.b16 %v368
      %v1245 = vunpack.c.l.b16 %v369
      %v1246 = vunpack.c.l.b16 %v370
      %v1247 = vunpack.c.l.b16 %v371
      %v1248 = vunpack.c.l.b16 %v372
      %v1249 = vunpack.c.l.b16 %v373
      %v1250 = vunpack.c.l.b16 %v374
      %v1251 = vunpack.c.l.b16 %v375
      %v1252 = vunpack.c.l.b16 %v376
      %v1253 = vunpack.c.l.b16 %v377
      %v1254 = vunpack.c.l.b16 %v378
      %v1255 = vunpack.c.l.b16 %v379
      %v1256 = vunpack.c.l.b16 %v380
      %v1257 = vunpack.c.l.b16 %v381
      %v1258 = vunpack.c.l.b16 %v382
      %v1259 = vunpack.c.l.b16 %v383
      %v1260 = vunpack.c.l.b16 %v384
      %v1261 = vunpack.c.l.b16 %v385
      %v1262 = vunpack.c.l.b16 %v386
      %v1263 = vunpack.c.l.b16 %v387
      %v1264 = vunpack.c.l.b16 %v388
      %v1265 = vunpack.c.l.b16 %v389
      %v1266 = vunpack.c.l.b16 %v390
      %v1267 = vunpack.c.l.b16 %v391
      %v1268 = vunpack.c.l.b16 %v392
      %v1269 = vunpack.c.l.b16 %v393
      %v1270 = vunpack.c.l.b16 %v394
      %v1271 = vunpack.c.l.b16 %v395
      %v1272 = vunpack.c.l.b16 %v396
      %v1273 = vunpack.c.l.b16 %v397
      %v1274 = vunpack.c.l.b16 %v398
      %v1275 = vunpack.c.l.b16 %v399
      %v1276 = vunpack.c.l.b16 %v400
      %v1277 = vunpack.c.l.b16 %v401
      %v1278 = vunpack.c.l.b16 %v402
      %v1279 = vunpack.c.l.b16 %v403
      %v1280 = vunpack.c.l.b16 %v404
      %v1281 = vunpack.c.l.b16 %v405
      %v1282 = vunpack.c.l.b16 %v406
      %v1283 = vunpack.c.l.b16 %v407
      %v1284 = vunpack.c.l.b16 %v408
      %v1285 = vunpack.c.l.b16 %v409
      %v1286 = vunpack.c.l.b16 %v410
      %v1287 = vunpack.c.l.b16 %v411
      %v1288 = vunpack.c.l.b16 %v412
      %v1289 = vunpack.c.l.b16 %v413
      %v1290 = vunpack.c.l.b16 %v414
      %v1291 = vunpack.c.l.b16 %v415
      %v1292 = vunpack.c.l.b16 %v416
      %v1293 = vunpack.c.l.b16 %v417
      %v1294 = vunpack.c.l.b16 %v418
      %v1295 = vunpack.c.l.b16 %v419
      %v1296 = vunpack.c.l.b16 %v420
      %v1297 = vunpack.c.l.b16 %v421
      %v1298 = vunpack.c.l.b16 %v422
      %v1299 = vunpack.c.l.b16 %v423
      %v1300 = vunpack.c.l.b16 %v424
      %v1301 = vunpack.c.l.b16 %v425
      %v1302 = vunpack.c.l.b16 %v426
      %v1303 = vunpack.c.l.b16 %v427
      %v1304 = vunpack.c.l.b16 %v428
      %v1305 = vunpack.c.l.b16 %v429
      %v1306 = vunpack.c.l.b16 %v430
      %v1307 = vunpack.c.l.b16 %v431
      %v1308 = vunpack.c.l.b16 %v432
      %v1309 = vunpack.c.l.b16 %v433
      %v1310 = vunpack.c.l.b16 %v434
      %v1311 = vunpack.c.l.b16 %v435
      %v1312 = vunpack.c.l.b16 %v436
      %v1313 = vunpack.c.l.b16 %v437
      %v1314 = vunpack.c.l.b16 %v438
      %v1315 = vunpack.c.l.b16 %v439
      %v1316 = vunpack.c.l.b16 %v440
      %v1317 = vunpack.c.l.b16 %v441
      %v1318 = vunpack.c.l.b16 %v442
      %v1319 = vunpack.c.l.b16 %v443
      %v1320 = vunpack.c.l.b16 %v444
      %v1321 = vunpack.c.l.b16 %v445
      %v1322 = vunpack.c.l.b16 %v446
      %v1323 = vunpack.c.l.b16 %v447
      %v1324 = vunpack.c.l.b16 %v448
      %v1325 = vunpack.c.l.b16 %v449
      %v1326 = vunpack.c.l.b16 %v450
      %v1327 = vunpack.c.l.b16 %v451
      %v1328 = vunpack.c.l.b16 %v452
      %v1329 = vunpack.c.l.b16 %v453
      %v1330 = vunpack.c.l.b16 %v454
      %v1331 = vunpack.c.l.b16 %v455
      %v1332 = vunpack.c.l.b16 %v456
      %v1333 = vunpack.c.l.b16 %v457
      %v1334 = vunpack.c.l.b16 %v458
      %v1335 = vunpack.c.l.b16 %v459
      %v1336 = vunpack.c.l.b16 %v460
      %v1337 = vunpack.c.l.b16 %v461
      %v1338 = vunpack.c.l.b16 %v462
      %v1339 = vunpack.c.l.b16 %v463
      %v1340 = vunpack.c.l.b16 %v464
      %v1341 = vunpack.c.l.b16 %v465
      %v1342 = vunpack.c.l.b16 %v466
      %v1343 = vunpack.c.l.b16 %v467
      %v1344 = vunpack.c.l.b16 %v468
      %v1345 = vunpack.c.l.b16 %v469
      %v1346 = vunpack.c.l.b16 %v470
      %v1347 = vunpack.c.l.b16 %v471
      %v1348 = vunpack.c.l.b16 %v472
      %v1349 = vunpack.c.l.b16 %v473
      %v1350 = vunpack.c.l.b16 %v474
      %v1351 = vunpack.c.l.b16 %v475
      %v1352 = vunpack.c.l.b16 %v476
      %v1353 = vunpack.c.l.b16 %v477
      %v1354 = vunpack.c.l.b16 %v478
      %v1355 = vunpack.c.l.b16 %v479
      %v1356 = vunpack.c.l.b16 %v480
      %v1357 = vunpack.c.l.b16 %v481
      %v1358 = vunpack.c.l.b16 %v482
      %v1359 = vunpack.c.l.b16 %v483
      %v1360 = vunpack.c.l.b16 %v484
      %v1361 = vunpack.c.l.b16 %v485
      %v1362 = vunpack.c.l.b16 %v486
      %v1363 = vunpack.c.l.b16 %v487
      %v1364 = vunpack.c.l.b16 %v488
      %v1365 = vunpack.c.l.b16 %v489
      %v1366 = vunpack.c.l.b16 %v490
      %v1367 = vunpack.c.l.b16 %v491
      %v1368 = vunpack.c.l.b16 %v492
      %v1369 = vunpack.c.l.b16 %v493
      %v1370 = vunpack.c.l.b16 %v494
      %v1371 = vunpack.c.l.b16 %v495
      %v1372 = vunpack.c.l.b16 %v496
      %v1373 = vunpack.c.l.b16 %v497
      %v1374 = vunpack.c.l.b16 %v498
      %v1375 = vunpack.c.l.b16 %v499
      %v1376 = vunpack.c.l.b16 %v500
      %v1377 = vunpack.c.l.b16 %v501
      %v1378 = vunpack.c.l.b16 %v502
      %v1379 = vunpack.c.l.b16 %v503
      %v1380 = vunpack.c.l.b16 %v504
      %v1381 = vunpack.c.l.b16 %v505
      %v1382 = vunpack.c.l.b16 %v506
      %v1383 = vunpack.c.l.b16 %v507
      %v1384 = vunpack.c.l.b16 %v508
      %v1385 = vunpack.c.l.b16 %v509
      %v1386 = vunpack.c.l.b16 %v510
      %v1387 = vunpack.c.l.b16 %v511
      %v1388 = vunpack.c.l.b16 %v512
      %v1389 = vunpack.c.l.b16 %v513
      %v1390 = vunpack.c.l.b16 %v514
      %v1391 = vunpack.c.l.b16 %v515
      %v1392 = vunpack.c.l.b16 %v516
      %v1393 = vunpack.c.l.b16 %v517
      %v1394 = vunpack.c.l.b16 %v518
      %v1395 = vunpack.c.l.b16 %v519
      %v1396 = vunpack.c.l.b16 %v520
      %v1397 = vunpack.c.l.b16 %v521
      %v1398 = vunpack.c.l.b16 %v522
      %v1399 = vunpack.c.l.b16 %v523
      %v1400 = vunpack.c.l.b16 %v524
      %v1401 = vunpack.c.l.b16 %v525
      %v1402 = vunpack.c.l.b16 %v526
      %v1403 = vunpack.c.l.b16 %v527
      %v1404 = vunpack.c.l.b16 %v528
      %v1405 = vunpack.c.l.b16 %v529
      %v1406 = vunpack.c.l.b16 %v530
      %v1407 = vunpack.c.l.b16 %v531
      %v1408 = vunpack.c.l.b16 %v532
      %v1409 = vunpack.c.l.b16 %v533
      %v1410 = vunpack.c.l.b16 %v534
      %v1411 = vunpack.c.l.b16 %v535
      %v1412 = vunpack.c.l.b16 %v536
      %v1413 = vunpack.c.l.b16 %v537
      %v1414 = vunpack.c.l.b16 %v538
      %v1415 = vunpack.c.l.b16 %v539
      %v1416 = vunpack.c.l.b16 %v540
      %v1417 = vunpack.c.l.b16 %v541
      %v1418 = vunpack.c.l.b16 %v542
      %v1419 = vunpack.c.l.b16 %v543
      %v1420 = vunpack.c.l.b16 %v544
      %v1421 = vunpack.c.l.b16 %v545
      %v1422 = vunpack.c.l.b16 %v546
      %v1423 = vunpack.c.l.b16 %v547
      %v1424 = vunpack.c.l.b16 %v548
      %v1425 = vunpack.c.l.b16 %v549
      %v1426 = vunpack.c.l.b16 %v550
      %v1427 = vunpack.c.l.b16 %v551
      %v1428 = vunpack.c.l.b16 %v552
      %v1429 = vunpack.c.l.b16 %v553
      %v1430 = vunpack.c.l.b16 %v554
      %v1431 = vunpack.c.l.b16 %v555
      %v1432 = vunpack.c.l.b16 %v556
      %v1433 = vunpack.c.l.b16 %v557
      %v1434 = vunpack.c.l.b16 %v558
      %v1435 = vunpack.c.l.b16 %v559
      %v1436 = vunpack.c.l.b16 %v560
      %v1437 = vunpack.c.l.b16 %v561
      %v1438 = vunpack.c.l.b16 %v562
      %v1439 = vunpack.c.l.b16 %v563
      %v1440 = vunpack.c.l.b16 %v564
      %v1441 = vunpack.c.l.b16 %v565
      %v1442 = vunpack.c.l.b16 %v566
      %v1443 = vunpack.c.l.b16 %v567
      %v1444 = vunpack.c.l.b16 %v568
      %v1445 = vunpack.c.l.b16 %v569
      %v1446 = vunpack.c.l.b16 %v570
      %v1447 = vunpack.c.l.b16 %v571
      %v1448 = vunpack.c.l.b16 %v572
      %v1449 = vunpack.c.l.b16 %v573
      %v1450 = vunpack.c.l.b16 %v574
      %v1451 = vunpack.c.l.b16 %v575
      %v1452 = vunpack.c.l.b16 %v576
      %v1453 = vunpack.c.l.b16 %v577
      %v1454 = vunpack.c.l.b16 %v578
      %v1455 = vunpack.c.l.b16 %v579
      %v1456 = vunpack.c.l.b16 %v580
      %v1457 = vunpack.c.l.b16 %v581
      %v1458 = vunpack.c.l.b16 %v582
      %v1459 = vunpack.c.l.b16 %v583
      %v1460 = vunpack.c.l.b16 %v584
      %v1461 = vunpack.c.l.b16 %v585
      %v1462 = vunpack.c.l.b16 %v586
      %v1463 = vunpack.c.l.b16 %v587
      %v1464 = vunpack.c.l.b16 %v588
      %v1465 = vunpack.c.l.b16 %v589
      %v1466 = vunpack.c.l.b16 %v590
      %v1467 = vunpack.c.l.b16 %v591
      %v1468 = vunpack.c.l.b16 %v592
      %v1469 = vunpack.c.l.b16 %v593
      %v1470 = vunpack.c.l.b16 %v594
      %v1471 = vunpack.c.l.b16 %v595
      %v1472 = vunpack.c.l.b16 %v596
      %v1473 = vunpack.c.l.b16 %v597
      %v1474 = vunpack.c.l.b16 %v598
      %v1475 = vunpack.c.l.b16 %v599
      %v1476 = vunpack.c.l.b16 %v600
      %v1477 = vunpack.c.l.b16 %v601
      %v1478 = vunpack.c.l.b16 %v602
      %v1479 = vunpack.c.l.b16 %v603
      %v1480 = vunpack.c.l.b16 %v604
      %v1481 = vunpack.c.l.b16 %v605
      %v1482 = vunpack.c.l.b16 %v606
      %v1483 = vunpack.c.l.b16 %v607
      %v1484 = vunpack.c.l.b16 %v608
      %v1485 = vunpack.c.l.b16 %v609
      %v1486 = vunpack.c.l.b16 %v610
      %v1487 = vunpack.c.l.b16 %v611
      %v1488 = vunpack.c.l.b16 %v612
      %v1489 = vunpack.c.l.b16 %v613
      %v1490 = vunpack.c.l.b16 %v614
      %v1491 = vunpack.c.l.b16 %v615
      %v1492 = vunpack.c.l.b16 %v616
      %v1493 = vunpack.c.l.b16 %v617
      %v1494 = vpack.c.b16 %v1207, %v1206
      %v1495 = vpack.c.b16 %v1209, %v1208
      %v1496 = vpack.c.b16 %v1211, %v1210
      %v1497 = vpack.c.b16 %v1213, %v1212
      %v1498 = vpack.c.b16 %v1215, %v1214
      %v1499 = vpack.c.b16 %v1217, %v1216
      %v1500 = vpack.c.b16 %v1219, %v1218
      %v1501 = vpack.c.b16 %v1221, %v1220
      %v1502 = vpack.c.b16 %v1223, %v1222
      %v1503 = vpack.c.b16 %v1225, %v1224
      %v1504 = vpack.c.b16 %v1227, %v1226
      %v1505 = vpack.c.b16 %v1229, %v1228
      %v1506 = vpack.c.b16 %v1231, %v1230
      %v1507 = vpack.c.b16 %v1233, %v1232
      %v1508 = vpack.c.b16 %v1235, %v1234
      %v1509 = vpack.c.b16 %v1237, %v1236
      %v1510 = vpack.c.b16 %v1239, %v1238
      %v1511 = vpack.c.b16 %v1241, %v1240
      %v1512 = vpack.c.b16 %v1243, %v1242
      %v1513 = vpack.c.b16 %v1245, %v1244
      %v1514 = vpack.c.b16 %v1247, %v1246
      %v1515 = vpack.c.b16 %v1249, %v1248
      %v1516 = vpack.c.b16 %v1251, %v1250
      %v1517 = vpack.c.b16 %v1253, %v1252
      %v1518 = vpack.c.b16 %v1255, %v1254
      %v1519 = vpack.c.b16 %v1257, %v1256
      %v1520 = vpack.c.b16 %v1259, %v1258
      %v1521 = vpack.c.b16 %v1261, %v1260
      %v1522 = vpack.c.b16 %v1263, %v1262
      %v1523 = vpack.c.b16 %v1265, %v1264
      %v1524 = vpack.c.b16 %v1267, %v1266
      %v1525 = vpack.c.b16 %v1269, %v1268
      %v1526 = vpack.c.b16 %v1271, %v1270
      %v1527 = vpack.c.b16 %v1273, %v1272
      %v1528 = vpack.c.b16 %v1275, %v1274
      %v1529 = vpack.c.b16 %v1277, %v1276
      %v1530 = vpack.c.b16 %v1279, %v1278
      %v1531 = vpack.c.b16 %v1281, %v1280
      %v1532 = vpack.c.b16 %v1283, %v1282
      %v1533 = vpack.c.b16 %v1285, %v1284
      %v1534 = vpack.c.b16 %v1287, %v1286
      %v1535 = vpack.c.b16 %v1289, %v1288
      %v1536 = vpack.c.b16 %v1291, %v1290
      %v1537 = vpack.c.b16 %v1293, %v1292
      %v1538 = vpack.c.b16 %v1295, %v1294
      %v1539 = vpack.c.b16 %v1297, %v1296
      %v1540 = vpack.c.b16 %v1299, %v1298
      %v1541 = vpack.c.b16 %v1301, %v1300
      %v1542 = vpack.c.b16 %v1303, %v1302
      %v1543 = vpack.c.b16 %v1305, %v1304
      %v1544 = vpack.c.b16 %v1307, %v1306
      %v1545 = vpack.c.b16 %v1309, %v1308
      %v1546 = vpack.c.b16 %v1311, %v1310
      %v1547 = vpack.c.b16 %v1313, %v1312
      %v1548 = vpack.c.b16 %v1315, %v1314
      %v1549 = vpack.c.b16 %v1317, %v1316
      %v1550 = vpack.c.b16 %v1319, %v1318
      %v1551 = vpack.c.b16 %v1321, %v1320
      %v1552 = vpack.c.b16 %v1323, %v1322
      %v1553 = vpack.c.b16 %v1325, %v1324
      %v1554 = vpack.c.b16 %v1327, %v1326
      %v1555 = vpack.c.b16 %v1329, %v1328
      %v1556 = vpack.c.b16 %v1331, %v1330
      %v1557 = vpack.c.b16 %v1333, %v1332
      %v1558 = vpack.c.b16 %v1335, %v1334
      %v1559 = vpack.c.b16 %v1337, %v1336
      %v1560 = vpack.c.b16 %v1339, %v1338
      %v1561 = vpack.c.b16 %v1341, %v1340
      %v1562 = vpack.c.b16 %v1343, %v1342
      %v1563 = vpack.c.b16 %v1345, %v1344
      %v1564 = vpack.c.b16 %v1347, %v1346
      %v1565 = vpack.c.b16 %v1349, %v1348
      %v1566 = vpack.c.b16 %v1351, %v1350
      %v1567 = vpack.c.b16 %v1353, %v1352
      %v1568 = vpack.c.b16 %v1355, %v1354
      %v1569 = vpack.c.b16 %v1357, %v1356
      %v1570 = vpack.c.b16 %v1359, %v1358
      %v1571 = vpack.c.b16 %v1361, %v1360
      %v1572 = vpack.c.b16 %v1363, %v1362
      %v1573 = vpack.c.b16 %v1365, %v1364
      %v1574 = vpack.c.b16 %v1367, %v1366
      %v1575 = vpack.c.b16 %v1369, %v1368
      %v1576 = vpack.c.b16 %v1371, %v1370
      %v1577 = vpack.c.b16 %v1373, %v1372
      %v1578 = vpack.c.b16 %v1375, %v1374
      %v1579 = vpack.c.b16 %v1377, %v1376
      %v1580 = vpack.c.b16 %v1379, %v1378
      %v1581 = vpack.c.b16 %v1381, %v1380
      %v1582 = vpack.c.b16 %v1383, %v1382
      %v1583 = vpack.c.b16 %v1385, %v1384
      %v1584 = vpack.c.b16 %v1387, %v1386
      %v1585 = vpack.c.b16 %v1389, %v1388
      %v1586 = vpack.c.b16 %v1391, %v1390
      %v1587 = vpack.c.b16 %v1393, %v1392
      %v1588 = vpack.c.b16 %v1395, %v1394
      %v1589 = vpack.c.b16 %v1397, %v1396
      %v1590 = vpack.c.b16 %v1399, %v1398
      %v1591 = vpack.c.b16 %v1401, %v1400
      %v1592 = vpack.c.b16 %v1403, %v1402
      %v1593 = vpack.c.b16 %v1405, %v1404
      %v1594 = vpack.c.b16 %v1407, %v1406
      %v1595 = vpack.c.b16 %v1409, %v1408
      %v1596 = vpack.c.b16 %v1411, %v1410
      %v1597 = vpack.c.b16 %v1413, %v1412
      %v1598 = vpack.c.b16 %v1415, %v1414
      %v1599 = vpack.c.b16 %v1417, %v1416
      %v1600 = vpack.c.b16 %v1419, %v1418
      %v1601 = vpack.c.b16 %v1421, %v1420
      %v1602 = vpack.c.b16 %v1423, %v1422
      %v1603 = vpack.c.b16 %v1425, %v1424
      %v1604 = vpack.c.b16 %v1427, %v1426
      %v1605 = vpack.c.b16 %v1429, %v1428
      %v1606 = vpack.c.b16 %v1431, %v1430
      %v1607 = vpack.c.b16 %v1433, %v1432
      %v1608 = vpack.c.b16 %v1435, %v1434
      %v1609 = vpack.c.b16 %v1437, %v1436
      %v1610 = vpack.c.b16 %v1439, %v1438
      %v1611 = vpack.c.b16 %v1441, %v1440
      %v1612 = vpack.c.b16 %v1443, %v1442
      %v1613 = vpack.c.b16 %v1445, %v1444
      %v1614 = vpack.c.b16 %v1447, %v1446
      %v1615 = vpack.c.b16 %v1449, %v1448
      %v1616 = vpack.c.b16 %v1451, %v1450
      %v1617 = vpack.c.b16 %v1453, %v1452
      %v1618 = vpack.c.b16 %v1455, %v1454
      %v1619 = vpack.c.b16 %v1457, %v1456
      %v1620 = vpack.c.b16 %v1459, %v1458
      %v1621 = vpack.c.b16 %v1461, %v1460
      %v1622 = vpack.c.b16 %v1463, %v1462
      %v1623 = vpack.c.b16 %v1465, %v1464
      %v1624 = vpack.c.b16 %v1467, %v1466
      %v1625 = vpack.c.b16 %v1469, %v1468
      %v1626 = vpack.c.b16 %v1471, %v1470
      %v1627 = vpack.c.b16 %v1473, %v1472
      %v1628 = vpack.c.b16 %v1475, %v1474
      %v1629 = vpack.c.b16 %v1477, %v1476
      %v1630 = vpack.c.b16 %v1479, %v1478
      %v1631 = vpack.c.b16 %v1481, %v1480
      %v1632 = vpack.c.b16 %v1483, %v1482
      %v1633 = vpack.c.b16 %v1485, %v1484
      %v1634 = vpack.c.b16 %v1487, %v1486
      %v1635 = vpack.c.b16 %v1489, %v1488
      %v1636 = vpack.c.b16 %v1491, %v1490
      %v1637 = vpack.c.b16 %v1493, %v1492
      %v1650 = vunpack.c.l.b16 %v618
      %v1651 = vunpack.c.l.b16 %v619
      %v1652 = vunpack.c.l.b16 %v620
      %v1653 = vunpack.c.l.b16 %v621
      %v1654 = vunpack.c.l.b16 %v622
      %v1655 = vunpack.c.l.b16 %v623
      %v1656 = vunpack.c.l.b16 %v624
      %v1657 = vunpack.c.l.b16 %v625
      %v1658 = vunpack.c.l.b16 %v626
      %v1659 = vunpack.c.l.b16 %v627
      %v1660 = vunpack.c.l.b16 %v628
      %v1661 = vunpack.c.l.b16 %v629
      %v1662 = vpack.c.b16 %v1651, %v1650
      %v1663 = vpack.c.b16 %v1653, %v1652
      %v1664 = vpack.c.b16 %v1655, %v1654
      %v1665 = vpack.c.b16 %v1657, %v1656
      %v1666 = vpack.c.b16 %v1659, %v1658
      %v1667 = vpack.c.b16 %v1661, %v1660
      %vm1674 = vcmask 785408
      %v1676 = vsel %vm1674, %v1494, 0
      %v1679 = vsel %vm1674, %v1495, 0
      %v1682 = vsel %vm1674, %v1496, 0
      %v1685 = vsel %vm1674, %v1497, 0
      %v1688 = vsel %vm1674, %v1498, 0
      %v1691 = vsel %vm1674, %v1499, 0
      %v1694 = vsel %vm1674, %v1500, 0
      %v1697 = vsel %vm1674, %v1501, 0
      %v1700 = vsel %vm1674, %v1502, 0
      %v1703 = vsel %vm1674, %v1503, 0
      %v1706 = vsel %vm1674, %v1504, 0
      %v1709 = vsel %vm1674, %v1505, 0
      %v1712 = vsel %vm1674, %v1506, 0
      %v1715 = vsel %vm1674, %v1507, 0
      %v1718 = vsel %vm1674, %v1508, 0
      %v1721 = vsel %vm1674, %v1509, 0
      %v1724 = vsel %vm1674, %v1510, 0
      %v1727 = vsel %vm1674, %v1511, 0
      %v1730 = vsel %vm1674, %v1512, 0
      %v1733 = vsel %vm1674, %v1513, 0
      %v1736 = vsel %vm1674, %v1514, 0
      %v1739 = vsel %vm1674, %v1515, 0
      %v1742 = vsel %vm1674, %v1516, 0
      %v1745 = vsel %vm1674, %v1517, 0
      %v1748 = vsel %vm1674, %v1518, 0
      %v1751 = vsel %vm1674, %v1519, 0
      %v1754 = vsel %vm1674, %v1520, 0
      %v1757 = vsel %vm1674, %v1521, 0
      %v1760 = vsel %vm1674, %v1522, 0
      %v1763 = vsel %vm1674, %v1523, 0
      %v1766 = vsel %vm1674, %v1524, 0
      %v1769 = vsel %vm1674, %v1525, 0
      %v1772 = vsel %vm1674, %v1526, 0
      %v1775 = vsel %vm1674, %v1527, 0
      %v1778 = vsel %vm1674, %v1528, 0
      %v1781 = vsel %vm1674, %v1529, 0
      %v1784 = vsel %vm1674, %v1530, 0
      %v1787 = vsel %vm1674, %v1531, 0
      %v1790 = vsel %vm1674, %v1532, 0
      %v1793 = vsel %vm1674, %v1533, 0
      %v1796 = vsel %vm1674, %v1534, 0
      %v1799 = vsel %vm1674, %v1535, 0
      %v1802 = vsel %vm1674, %v1536, 0
      %v1805 = vsel %vm1674, %v1537, 0
      %v1808 = vsel %vm1674, %v1538, 0
      %v1811 = vsel %vm1674, %v1539, 0
      %v1814 = vsel %vm1674, %v1540, 0
      %v1817 = vsel %vm1674, %v1541, 0
      %v1820 = vsel %vm1674, %v1542, 0
      %v1823 = vsel %vm1674, %v1543, 0
      %v1826 = vsel %vm1674, %v1544, 0
      %v1829 = vsel %vm1674, %v1545, 0
      %v1832 = vsel %vm1674, %v1546, 0
      %v1835 = vsel %vm1674, %v1547, 0
      %v1838 = vsel %vm1674, %v1548, 0
      %v1841 = vsel %vm1674, %v1549, 0
      %v1844 = vsel %vm1674, %v1550, 0
      %v1847 = vsel %vm1674, %v1551, 0
      %v1850 = vsel %vm1674, %v1552, 0
      %v1853 = vsel %vm1674, %v1553, 0
      %v1856 = vsel %vm1674, %v1554, 0
      %v1859 = vsel %vm1674, %v1555, 0
      %v1862 = vsel %vm1674, %v1556, 0
      %v1865 = vsel %vm1674, %v1557, 0
      %v1868 = vsel %vm1674, %v1558, 0
      %v1871 = vsel %vm1674, %v1559, 0
      %v1874 = vsel %vm1674, %v1560, 0
      %v1877 = vsel %vm1674, %v1561, 0
      %v1880 = vsel %vm1674, %v1562, 0
      %v1883 = vsel %vm1674, %v1563, 0
      %v1886 = vsel %vm1674, %v1564, 0
      %v1889 = vsel %vm1674, %v1565, 0
      %v1892 = vsel %vm1674, %v1566, 0
      %v1895 = vsel %vm1674, %v1567, 0
      %v1898 = vsel %vm1674, %v1568, 0
      %v1901 = vsel %vm1674, %v1569, 0
      %v1904 = vsel %vm1674, %v1570, 0
      %v1907 = vsel %vm1674, %v1571, 0
      %v1910 = vsel %vm1674, %v1572, 0
      %v1913 = vsel %vm1674, %v1573, 0
      %v1916 = vsel %vm1674, %v1574, 0
      %v1919 = vsel %vm1674, %v1575, 0
      %v1922 = vsel %vm1674, %v1576, 0
      %v1925 = vsel %vm1674, %v1577, 0
      %v1928 = vsel %vm1674, %v1578, 0
      %v1931 = vsel %vm1674, %v1579, 0
      %v1934 = vsel %vm1674, %v1580, 0
      %v1937 = vsel %vm1674, %v1581, 0
      %v1940 = vsel %vm1674, %v1582, 0
      %v1943 = vsel %vm1674, %v1583, 0
      %v1946 = vsel %vm1674, %v1584, 0
      %v1949 = vsel %vm1674, %v1585, 0
      %v1952 = vsel %vm1674, %v1586, 0
      %v1955 = vsel %vm1674, %v1587, 0
      %v1958 = vsel %vm1674, %v1588, 0
      %v1961 = vsel %vm1674, %v1589, 0
      %v1964 = vsel %vm1674, %v1590, 0
      %v1967 = vsel %vm1674, %v1591, 0
      %v1970 = vsel %vm1674, %v1592, 0
      %v1973 = vsel %vm1674, %v1593, 0
      %v1976 = vsel %vm1674, %v1594, 0
      %v1979 = vsel %vm1674, %v1595, 0
      %v1982 = vsel %vm1674, %v1596, 0
      %v1985 = vsel %vm1674, %v1597, 0
      %v1988 = vsel %vm1674, %v1598, 0
      %v1991 = vsel %vm1674, %v1599, 0
      %v1994 = vsel %vm1674, %v1600, 0
      %v1997 = vsel %vm1674, %v1601, 0
      %v2000 = vsel %vm1674, %v1602, 0
      %v2003 = vsel %vm1674, %v1603, 0
      %v2006 = vsel %vm1674, %v1604, 0
      %v2009 = vsel %vm1674, %v1605, 0
      %v2012 = vsel %vm1674, %v1606, 0
      %v2015 = vsel %vm1674, %v1607, 0
      %v2018 = vsel %vm1674, %v1608, 0
      %v2021 = vsel %vm1674, %v1609, 0
      %v2024 = vsel %vm1674, %v1610, 0
      %v2027 = vsel %vm1674, %v1611, 0
      %v2030 = vsel %vm1674, %v1612, 0
      %v2033 = vsel %vm1674, %v1613, 0
      %v2036 = vsel %vm1674, %v1614, 0
      %v2039 = vsel %vm1674, %v1615, 0
      %v2042 = vsel %vm1674, %v1616, 0
      %v2045 = vsel %vm1674, %v1617, 0
      %v2048 = vsel %vm1674, %v1618, 0
      %v2051 = vsel %vm1674, %v1619, 0
      %v2054 = vsel %vm1674, %v1620, 0
      %v2057 = vsel %vm1674, %v1621, 0
      %v2060 = vsel %vm1674, %v1622, 0
      %v2063 = vsel %vm1674, %v1623, 0
      %v2066 = vsel %vm1674, %v1624, 0
      %v2069 = vsel %vm1674, %v1625, 0
      %v2072 = vsel %vm1674, %v1626, 0
      %v2075 = vsel %vm1674, %v1627, 0
      %v2078 = vsel %vm1674, %v1628, 0
      %v2081 = vsel %vm1674, %v1629, 0
      %v2084 = vsel %vm1674, %v1630, 0
      %v2087 = vsel %vm1674, %v1631, 0
      %v2090 = vsel %vm1674, %v1632, 0
      %v2093 = vsel %vm1674, %v1633, 0
      %v2096 = vsel %vm1674, %v1634, 0
      %v2099 = vsel %vm1674, %v1635, 0
      %v2102 = vsel %vm1674, %v1636, 0
      %v2105 = vsel %vm1674, %v1637, 0
      %2107 = vmatprep.subr.bf16.mxu0 0
      %2108 = vmatpush1.bf16.msra.mxu0 %v1662
      %2109 = vmatprep.subr.bf16.mxu0 0
      %2110 = vmatpush1.bf16.msra.mxu0 %v1663
      %2111 = vmatprep.subr.bf16.mxu0 0
      %2112 = vmatpush1.bf16.msra.mxu0 %v1664
      %2113 = vmatprep.subr.bf16.mxu0 0
      %2114 = vmatpush1.bf16.msra.mxu0 %v1665
      %2115 = vmatprep.subr.bf16.mxu0 0
      %2116 = vmatpush1.bf16.msra.mxu0 %v1666
      %2117 = vmatprep.subr.bf16.mxu0 0
      %2118 = vmatpush1.bf16.msra.mxu0 %v1667
      %2119 = vmatprep.subr.bf16.mxu0 0
      %2120 = vmatpush1.bf16.msra.mxu0 0
      %2121 = vmatprep.subr.bf16.mxu0 0
      %2122 = vmatpush1.bf16.msra.mxu0 0
      %2123 = vmatprep.subr.bf16.mxu0 0
      %2124 = vmatpush1.bf16.msra.mxu0 0
      %2125 = vmatprep.subr.bf16.mxu0 0
      %2126 = vmatpush1.bf16.msra.mxu0 0
      %2127 = vmatprep.subr.bf16.mxu0 0
      %2128 = vmatpush1.bf16.msra.mxu0 0
      %2129 = vmatprep.subr.bf16.mxu0 0
      %2130 = vmatpush1.bf16.msra.mxu0 0
      %2131 = vmatprep.subr.bf16.mxu0 0
      %2132 = vmatpush1.bf16.msra.mxu0 0
      %2133 = vmatprep.subr.bf16.mxu0 0
      %2134 = vmatpush1.bf16.msra.mxu0 0
      %2135 = vmatprep.subr.bf16.mxu0 0
      %2136 = vmatpush1.bf16.msra.mxu0 0
      %2137 = vmatprep.subr.bf16.mxu0 0
      %2138 = vmatpush1.bf16.msra.mxu0 0
      %2139 = vmatprep.mubr.bf16.mxu0 0
      %2140 = vmatmul.mubr.bf16.gmra.mrb[0].mxu0 %v1676
      %v2141 = vpop.f32.mrb[0].mxu0
      %v2142 = vadd.f32 %v630, %v2141
      %v2143 = vpop.f32.mrb[0].mxu0
      %v2144 = vpop.f32.mrb[0].mxu0
      %v2145 = vadd.f32 %v631, %v2144
      %v2146 = vpop.f32.mrb[0].mxu0
      %2147 = vmatprep.mubr.bf16.mxu0 0
      %2148 = vmatmul.mubr.bf16.gmra.mrb[0].mxu0 %v1679
      %v2149 = vpop.f32.mrb[0].mxu0
      %v2150 = vadd.f32 %v632, %v2149
      %v2151 = vpop.f32.mrb[0].mxu0
      %v2152 = vpop.f32.mrb[0].mxu0
      %v2153 = vadd.f32 %v633, %v2152
      %v2154 = vpop.f32.mrb[0].mxu0
      %2155 = vmatprep.mubr.bf16.mxu0 0
      %2156 = vmatmul.mubr.bf16.gmra.mrb[0].mxu0 %v1682
      %v2157 = vpop.f32.mrb[0].mxu0
      %v2158 = vadd.f32 %v634, %v2157
      %v2159 = vpop.f32.mrb[0].mxu0
      %v2160 = vpop.f32.mrb[0].mxu0
      %v2161 = vadd.f32 %v635, %v2160
      %v2162 = vpop.f32.mrb[0].mxu0
      %2163 = vmatprep.mubr.bf16.mxu0 0
      %2164 = vmatmul.mubr.bf16.gmra.mrb[0].mxu0 %v1685
      %v2165 = vpop.f32.mrb[0].mxu0
      %v2166 = vadd.f32 %v636, %v2165
      %v2167 = vpop.f32.mrb[0].mxu0
      %v2168 = vpop.f32.mrb[0].mxu0
      %v2169 = vadd.f32 %v637, %v2168
      %v2170 = vpop.f32.mrb[0].mxu0
      %2171 = vmatprep.mubr.bf16.mxu0 0
      %2172 = vmatmul.mubr.bf16.gmra.mrb[0].mxu0 %v1688
      %v2173 = vpop.f32.mrb[0].mxu0
      %v2174 = vadd.f32 %v638, %v2173
      %v2175 = vpop.f32.mrb[0].mxu0
      %v2176 = vpop.f32.mrb[0].mxu0
      %v2177 = vadd.f32 %v639, %v2176
      %v2178 = vpop.f32.mrb[0].mxu0
      %2179 = vmatprep.mubr.bf16.mxu0 0
      %2180 = vmatmul.mubr.bf16.gmra.mrb[0].mxu0 %v1691
      %v2181 = vpop.f32.mrb[0].mxu0
      %v2182 = vadd.f32 %v640, %v2181
      %v2183 = vpop.f32.mrb[0].mxu0
      %v2184 = vpop.f32.mrb[0].mxu0
      %v2185 = vadd.f32 %v641, %v2184
      %v2186 = vpop.f32.mrb[0].mxu0
      %2187 = vmatprep.mubr.bf16.mxu0 0
      %2188 = vmatmul.mubr.bf16.gmra.mrb[0].mxu0 %v1694
      %v2189 = vpop.f32.mrb[0].mxu0
      %v2190 = vadd.f32 %v642, %v2189
      %v2191 = vpop.f32.mrb[0].mxu0
      %v2192 = vpop.f32.mrb[0].mxu0
      %v2193 = vadd.f32 %v643, %v2192
      %v2194 = vpop.f32.mrb[0].mxu0
      %2195 = vmatprep.mubr.bf16.mxu0 0
      %2196 = vmatmul.mubr.bf16.gmra.mrb[0].mxu0 %v1697
      %v2197 = vpop.f32.mrb[0].mxu0
      %v2198 = vadd.f32 %v644, %v2197
      %v2199 = vpop.f32.mrb[0].mxu0
      %v2200 = vpop.f32.mrb[0].mxu0
      %v2201 = vadd.f32 %v645, %v2200
      %v2202 = vpop.f32.mrb[0].mxu0
      %2203 = vmatprep.mubr.bf16.mxu0 0
      %2204 = vmatmul.mubr.bf16.gmra.mrb[0].mxu0 %v1700
      %v2205 = vpop.f32.mrb[0].mxu0
      %v2206 = vadd.f32 %v646, %v2205
      %v2207 = vpop.f32.mrb[0].mxu0
      %v2208 = vpop.f32.mrb[0].mxu0
      %v2209 = vadd.f32 %v647, %v2208
      %v2210 = vpop.f32.mrb[0].mxu0
      %2211 = vmatprep.mubr.bf16.mxu0 0
      %2212 = vmatmul.mubr.bf16.gmra.mrb[0].mxu0 %v1703
      %v2213 = vpop.f32.mrb[0].mxu0
      %v2214 = vadd.f32 %v648, %v2213
      %v2215 = vpop.f32.mrb[0].mxu0
      %v2216 = vpop.f32.mrb[0].mxu0
      %v2217 = vadd.f32 %v649, %v2216
      %v2218 = vpop.f32.mrb[0].mxu0
      %2219 = vmatprep.mubr.bf16.mxu0 0
      %2220 = vmatmul.mubr.bf16.gmra.mrb[0].mxu0 %v1706
      %v2221 = vpop.f32.mrb[0].mxu0
      %v2222 = vadd.f32 %v650, %v2221
      %v2223 = vpop.f32.mrb[0].mxu0
      %v2224 = vpop.f32.mrb[0].mxu0
      %v2225 = vadd.f32 %v651, %v2224
      %v2226 = vpop.f32.mrb[0].mxu0
      %2227 = vmatprep.mubr.bf16.mxu0 0
      %2228 = vmatmul.mubr.bf16.gmra.mrb[0].mxu0 %v1709
      %v2229 = vpop.f32.mrb[0].mxu0
      %v2230 = vadd.f32 %v652, %v2229
      %v2231 = vpop.f32.mrb[0].mxu0
      %v2232 = vpop.f32.mrb[0].mxu0
      %v2233 = vadd.f32 %v653, %v2232
      %v2234 = vpop.f32.mrb[0].mxu0
      %2235 = vmatprep.mubr.bf16.mxu0 0
      %2236 = vmatmul.mubr.bf16.gmra.mrb[0].mxu0 %v1712
      %v2237 = vpop.f32.mrb[0].mxu0
      %v2238 = vadd.f32 %v654, %v2237
      %v2239 = vpop.f32.mrb[0].mxu0
      %v2240 = vpop.f32.mrb[0].mxu0
      %v2241 = vadd.f32 %v655, %v2240
      %v2242 = vpop.f32.mrb[0].mxu0
      %2243 = vmatprep.mubr.bf16.mxu0 0
      %2244 = vmatmul.mubr.bf16.gmra.mrb[0].mxu0 %v1715
      %v2245 = vpop.f32.mrb[0].mxu0
      %v2246 = vadd.f32 %v656, %v2245
      %v2247 = vpop.f32.mrb[0].mxu0
      %v2248 = vpop.f32.mrb[0].mxu0
      %v2249 = vadd.f32 %v657, %v2248
      %v2250 = vpop.f32.mrb[0].mxu0
      %2251 = vmatprep.mubr.bf16.mxu0 0
      %2252 = vmatmul.mubr.bf16.gmra.mrb[0].mxu0 %v1718
      %v2253 = vpop.f32.mrb[0].mxu0
      %v2254 = vadd.f32 %v658, %v2253
      %v2255 = vpop.f32.mrb[0].mxu0
      %v2256 = vpop.f32.mrb[0].mxu0
      %v2257 = vadd.f32 %v659, %v2256
      %v2258 = vpop.f32.mrb[0].mxu0
      %2259 = vmatprep.mubr.bf16.mxu0 0
      %2260 = vmatmul.mubr.bf16.gmra.mrb[0].mxu0 %v1721
      %v2261 = vpop.f32.mrb[0].mxu0
      %v2262 = vadd.f32 %v660, %v2261
      %v2263 = vpop.f32.mrb[0].mxu0
      %v2264 = vpop.f32.mrb[0].mxu0
      %v2265 = vadd.f32 %v661, %v2264
      %v2266 = vpop.f32.mrb[0].mxu0
      %2267 = vmatprep.mubr.bf16.mxu0 0
      %2268 = vmatmul.mubr.bf16.gmra.mrb[0].mxu0 %v1724
      %v2269 = vpop.f32.mrb[0].mxu0
      %v2270 = vadd.f32 %v662, %v2269
      %v2271 = vpop.f32.mrb[0].mxu0
      %v2272 = vpop.f32.mrb[0].mxu0
      %v2273 = vadd.f32 %v663, %v2272
      %v2274 = vpop.f32.mrb[0].mxu0
      %2275 = vmatprep.mubr.bf16.mxu0 0
      %2276 = vmatmul.mubr.bf16.gmra.mrb[0].mxu0 %v1727
      %v2277 = vpop.f32.mrb[0].mxu0
      %v2278 = vadd.f32 %v664, %v2277
      %v2279 = vpop.f32.mrb[0].mxu0
      %v2280 = vpop.f32.mrb[0].mxu0
      %v2281 = vadd.f32 %v665, %v2280
      %v2282 = vpop.f32.mrb[0].mxu0
      %2283 = vmatprep.mubr.bf16.mxu0 0
      %2284 = vmatmul.mubr.bf16.gmra.mrb[0].mxu0 %v1730
      %v2285 = vpop.f32.mrb[0].mxu0
      %v2286 = vadd.f32 %v666, %v2285
      %v2287 = vpop.f32.mrb[0].mxu0
      %v2288 = vpop.f32.mrb[0].mxu0
      %v2289 = vadd.f32 %v667, %v2288
      %v2290 = vpop.f32.mrb[0].mxu0
      %2291 = vmatprep.mubr.bf16.mxu0 0
      %2292 = vmatmul.mubr.bf16.gmra.mrb[0].mxu0 %v1733
      %v2293 = vpop.f32.mrb[0].mxu0
      %v2294 = vadd.f32 %v668, %v2293
      %v2295 = vpop.f32.mrb[0].mxu0
      %v2296 = vpop.f32.mrb[0].mxu0
      %v2297 = vadd.f32 %v669, %v2296
      %v2298 = vpop.f32.mrb[0].mxu0
      %2299 = vmatprep.mubr.bf16.mxu0 0
      %2300 = vmatmul.mubr.bf16.gmra.mrb[0].mxu0 %v1736
      %v2301 = vpop.f32.mrb[0].mxu0
      %v2302 = vadd.f32 %v670, %v2301
      %v2303 = vpop.f32.mrb[0].mxu0
      %v2304 = vpop.f32.mrb[0].mxu0
      %v2305 = vadd.f32 %v671, %v2304
      %v2306 = vpop.f32.mrb[0].mxu0
      %2307 = vmatprep.mubr.bf16.mxu0 0
      %2308 = vmatmul.mubr.bf16.gmra.mrb[0].mxu0 %v1739
      %v2309 = vpop.f32.mrb[0].mxu0
      %v2310 = vadd.f32 %v672, %v2309
      %v2311 = vpop.f32.mrb[0].mxu0
      %v2312 = vpop.f32.mrb[0].mxu0
      %v2313 = vadd.f32 %v673, %v2312
      %v2314 = vpop.f32.mrb[0].mxu0
      %2315 = vmatprep.mubr.bf16.mxu0 0
      %2316 = vmatmul.mubr.bf16.gmra.mrb[0].mxu0 %v1742
      %v2317 = vpop.f32.mrb[0].mxu0
      %v2318 = vadd.f32 %v674, %v2317
      %v2319 = vpop.f32.mrb[0].mxu0
      %v2320 = vpop.f32.mrb[0].mxu0
      %v2321 = vadd.f32 %v675, %v2320
      %v2322 = vpop.f32.mrb[0].mxu0
      %2323 = vmatprep.mubr.bf16.mxu0 0
      %2324 = vmatmul.mubr.bf16.gmra.mrb[0].mxu0 %v1745
      %v2325 = vpop.f32.mrb[0].mxu0
      %v2326 = vadd.f32 %v676, %v2325
      %v2327 = vpop.f32.mrb[0].mxu0
      %v2328 = vpop.f32.mrb[0].mxu0
      %v2329 = vadd.f32 %v677, %v2328
      %v2330 = vpop.f32.mrb[0].mxu0
      %2331 = vmatprep.mubr.bf16.mxu0 0
      %2332 = vmatmul.mubr.bf16.gmra.mrb[0].mxu0 %v1748
      %v2333 = vpop.f32.mrb[0].mxu0
      %v2334 = vadd.f32 %v678, %v2333
      %v2335 = vpop.f32.mrb[0].mxu0
      %v2336 = vpop.f32.mrb[0].mxu0
      %v2337 = vadd.f32 %v679, %v2336
      %v2338 = vpop.f32.mrb[0].mxu0
      %2339 = vmatprep.mubr.bf16.mxu0 0
      %2340 = vmatmul.mubr.bf16.gmra.mrb[0].mxu0 %v1751
      %v2341 = vpop.f32.mrb[0].mxu0
      %v2342 = vadd.f32 %v680, %v2341
      %v2343 = vpop.f32.mrb[0].mxu0
      %v2344 = vpop.f32.mrb[0].mxu0
      %v2345 = vadd.f32 %v681, %v2344
      %v2346 = vpop.f32.mrb[0].mxu0
      %2347 = vmatprep.mubr.bf16.mxu0 0
      %2348 = vmatmul.mubr.bf16.gmra.mrb[0].mxu0 %v1754
      %v2349 = vpop.f32.mrb[0].mxu0
      %v2350 = vadd.f32 %v682, %v2349
      %v2351 = vpop.f32.mrb[0].mxu0
      %v2352 = vpop.f32.mrb[0].mxu0
      %v2353 = vadd.f32 %v683, %v2352
      %v2354 = vpop.f32.mrb[0].mxu0
      %2355 = vmatprep.mubr.bf16.mxu0 0
      %2356 = vmatmul.mubr.bf16.gmra.mrb[0].mxu0 %v1757
      %v2357 = vpop.f32.mrb[0].mxu0
      %v2358 = vadd.f32 %v684, %v2357
      %v2359 = vpop.f32.mrb[0].mxu0
      %v2360 = vpop.f32.mrb[0].mxu0
      %v2361 = vadd.f32 %v685, %v2360
      %v2362 = vpop.f32.mrb[0].mxu0
      %2363 = vmatprep.mubr.bf16.mxu0 0
      %2364 = vmatmul.mubr.bf16.gmra.mrb[0].mxu0 %v1760
      %v2365 = vpop.f32.mrb[0].mxu0
      %v2366 = vadd.f32 %v686, %v2365
      %v2367 = vpop.f32.mrb[0].mxu0
      %v2368 = vpop.f32.mrb[0].mxu0
      %v2369 = vadd.f32 %v687, %v2368
      %v2370 = vpop.f32.mrb[0].mxu0
      %2371 = vmatprep.mubr.bf16.mxu0 0
      %2372 = vmatmul.mubr.bf16.gmra.mrb[0].mxu0 %v1763
      %v2373 = vpop.f32.mrb[0].mxu0
      %v2374 = vadd.f32 %v688, %v2373
      %v2375 = vpop.f32.mrb[0].mxu0
      %v2376 = vpop.f32.mrb[0].mxu0
      %v2377 = vadd.f32 %v689, %v2376
      %v2378 = vpop.f32.mrb[0].mxu0
      %2379 = vmatprep.mubr.bf16.mxu0 0
      %2380 = vmatmul.mubr.bf16.gmra.mrb[0].mxu0 %v1766
      %v2381 = vpop.f32.mrb[0].mxu0
      %v2382 = vadd.f32 %v690, %v2381
      %v2383 = vpop.f32.mrb[0].mxu0
      %v2384 = vpop.f32.mrb[0].mxu0
      %v2385 = vadd.f32 %v691, %v2384
      %v2386 = vpop.f32.mrb[0].mxu0
      %2387 = vmatprep.mubr.bf16.mxu0 0
      %2388 = vmatmul.mubr.bf16.gmra.mrb[0].mxu0 %v1769
      %v2389 = vpop.f32.mrb[0].mxu0
      %v2390 = vadd.f32 %v692, %v2389
      %v2391 = vpop.f32.mrb[0].mxu0
      %v2392 = vpop.f32.mrb[0].mxu0
      %v2393 = vadd.f32 %v693, %v2392
      %v2394 = vpop.f32.mrb[0].mxu0
      %2395 = vmatprep.mubr.bf16.mxu0 0
      %2396 = vmatmul.mubr.bf16.gmra.mrb[0].mxu0 %v1772
      %v2397 = vpop.f32.mrb[0].mxu0
      %v2398 = vadd.f32 %v694, %v2397
      %v2399 = vpop.f32.mrb[0].mxu0
      %v2400 = vpop.f32.mrb[0].mxu0
      %v2401 = vadd.f32 %v695, %v2400
      %v2402 = vpop.f32.mrb[0].mxu0
      %2403 = vmatprep.mubr.bf16.mxu0 0
      %2404 = vmatmul.mubr.bf16.gmra.mrb[0].mxu0 %v1775
      %v2405 = vpop.f32.mrb[0].mxu0
      %v2406 = vadd.f32 %v696, %v2405
      %v2407 = vpop.f32.mrb[0].mxu0
      %v2408 = vpop.f32.mrb[0].mxu0
      %v2409 = vadd.f32 %v697, %v2408
      %v2410 = vpop.f32.mrb[0].mxu0
      %2411 = vmatprep.mubr.bf16.mxu0 0
      %2412 = vmatmul.mubr.bf16.gmra.mrb[0].mxu0 %v1778
      %v2413 = vpop.f32.mrb[0].mxu0
      %v2414 = vadd.f32 %v698, %v2413
      %v2415 = vpop.f32.mrb[0].mxu0
      %v2416 = vpop.f32.mrb[0].mxu0
      %v2417 = vadd.f32 %v699, %v2416
      %v2418 = vpop.f32.mrb[0].mxu0
      %2419 = vmatprep.mubr.bf16.mxu0 0
      %2420 = vmatmul.mubr.bf16.gmra.mrb[0].mxu0 %v1781
      %v2421 = vpop.f32.mrb[0].mxu0
      %v2422 = vadd.f32 %v700, %v2421
      %v2423 = vpop.f32.mrb[0].mxu0
      %v2424 = vpop.f32.mrb[0].mxu0
      %v2425 = vadd.f32 %v701, %v2424
      %v2426 = vpop.f32.mrb[0].mxu0
      %2427 = vmatprep.mubr.bf16.mxu0 0
      %2428 = vmatmul.mubr.bf16.gmra.mrb[0].mxu0 %v1784
      %v2429 = vpop.f32.mrb[0].mxu0
      %v2430 = vadd.f32 %v702, %v2429
      %v2431 = vpop.f32.mrb[0].mxu0
      %v2432 = vpop.f32.mrb[0].mxu0
      %v2433 = vadd.f32 %v703, %v2432
      %v2434 = vpop.f32.mrb[0].mxu0
      %2435 = vmatprep.mubr.bf16.mxu0 0
      %2436 = vmatmul.mubr.bf16.gmra.mrb[0].mxu0 %v1787
      %v2437 = vpop.f32.mrb[0].mxu0
      %v2438 = vadd.f32 %v704, %v2437
      %v2439 = vpop.f32.mrb[0].mxu0
      %v2440 = vpop.f32.mrb[0].mxu0
      %v2441 = vadd.f32 %v705, %v2440
      %v2442 = vpop.f32.mrb[0].mxu0
      %2443 = vmatprep.mubr.bf16.mxu0 0
      %2444 = vmatmul.mubr.bf16.gmra.mrb[0].mxu0 %v1790
      %v2445 = vpop.f32.mrb[0].mxu0
      %v2446 = vadd.f32 %v706, %v2445
      %v2447 = vpop.f32.mrb[0].mxu0
      %v2448 = vpop.f32.mrb[0].mxu0
      %v2449 = vadd.f32 %v707, %v2448
      %v2450 = vpop.f32.mrb[0].mxu0
      %2451 = vmatprep.mubr.bf16.mxu0 0
      %2452 = vmatmul.mubr.bf16.gmra.mrb[0].mxu0 %v1793
      %v2453 = vpop.f32.mrb[0].mxu0
      %v2454 = vadd.f32 %v708, %v2453
      %v2455 = vpop.f32.mrb[0].mxu0
      %v2456 = vpop.f32.mrb[0].mxu0
      %v2457 = vadd.f32 %v709, %v2456
      %v2458 = vpop.f32.mrb[0].mxu0
      %2459 = vmatprep.mubr.bf16.mxu0 0
      %2460 = vmatmul.mubr.bf16.gmra.mrb[0].mxu0 %v1796
      %v2461 = vpop.f32.mrb[0].mxu0
      %v2462 = vadd.f32 %v710, %v2461
      %v2463 = vpop.f32.mrb[0].mxu0
      %v2464 = vpop.f32.mrb[0].mxu0
      %v2465 = vadd.f32 %v711, %v2464
      %v2466 = vpop.f32.mrb[0].mxu0
      %2467 = vmatprep.mubr.bf16.mxu0 0
      %2468 = vmatmul.mubr.bf16.gmra.mrb[0].mxu0 %v1799
      %v2469 = vpop.f32.mrb[0].mxu0
      %v2470 = vadd.f32 %v712, %v2469
      %v2471 = vpop.f32.mrb[0].mxu0
      %v2472 = vpop.f32.mrb[0].mxu0
      %v2473 = vadd.f32 %v713, %v2472
      %v2474 = vpop.f32.mrb[0].mxu0
      %2475 = vmatprep.mubr.bf16.mxu0 0
      %2476 = vmatmul.mubr.bf16.gmra.mrb[0].mxu0 %v1802
      %v2477 = vpop.f32.mrb[0].mxu0
      %v2478 = vadd.f32 %v714, %v2477
      %v2479 = vpop.f32.mrb[0].mxu0
      %v2480 = vpop.f32.mrb[0].mxu0
      %v2481 = vadd.f32 %v715, %v2480
      %v2482 = vpop.f32.mrb[0].mxu0
      %2483 = vmatprep.mubr.bf16.mxu0 0
      %2484 = vmatmul.mubr.bf16.gmra.mrb[0].mxu0 %v1805
      %v2485 = vpop.f32.mrb[0].mxu0
      %v2486 = vadd.f32 %v716, %v2485
      %v2487 = vpop.f32.mrb[0].mxu0
      %v2488 = vpop.f32.mrb[0].mxu0
      %v2489 = vadd.f32 %v717, %v2488
      %v2490 = vpop.f32.mrb[0].mxu0
      %2491 = vmatprep.mubr.bf16.mxu0 0
      %2492 = vmatmul.mubr.bf16.gmra.mrb[0].mxu0 %v1808
      %v2493 = vpop.f32.mrb[0].mxu0
      %v2494 = vadd.f32 %v718, %v2493
      %v2495 = vpop.f32.mrb[0].mxu0
      %v2496 = vpop.f32.mrb[0].mxu0
      %v2497 = vadd.f32 %v719, %v2496
      %v2498 = vpop.f32.mrb[0].mxu0
      %2499 = vmatprep.mubr.bf16.mxu0 0
      %2500 = vmatmul.mubr.bf16.gmra.mrb[0].mxu0 %v1811
      %v2501 = vpop.f32.mrb[0].mxu0
      %v2502 = vadd.f32 %v720, %v2501
      %v2503 = vpop.f32.mrb[0].mxu0
      %v2504 = vpop.f32.mrb[0].mxu0
      %v2505 = vadd.f32 %v721, %v2504
      %v2506 = vpop.f32.mrb[0].mxu0
      %2507 = vmatprep.mubr.bf16.mxu0 0
      %2508 = vmatmul.mubr.bf16.gmra.mrb[0].mxu0 %v1814
      %v2509 = vpop.f32.mrb[0].mxu0
      %v2510 = vadd.f32 %v722, %v2509
      %v2511 = vpop.f32.mrb[0].mxu0
      %v2512 = vpop.f32.mrb[0].mxu0
      %v2513 = vadd.f32 %v723, %v2512
      %v2514 = vpop.f32.mrb[0].mxu0
      %2515 = vmatprep.mubr.bf16.mxu0 0
      %2516 = vmatmul.mubr.bf16.gmra.mrb[0].mxu0 %v1817
      %v2517 = vpop.f32.mrb[0].mxu0
      %v2518 = vadd.f32 %v724, %v2517
      %v2519 = vpop.f32.mrb[0].mxu0
      %v2520 = vpop.f32.mrb[0].mxu0
      %v2521 = vadd.f32 %v725, %v2520
      %v2522 = vpop.f32.mrb[0].mxu0
      %2523 = vmatprep.mubr.bf16.mxu0 0
      %2524 = vmatmul.mubr.bf16.gmra.mrb[0].mxu0 %v1820
      %v2525 = vpop.f32.mrb[0].mxu0
      %v2526 = vadd.f32 %v726, %v2525
      %v2527 = vpop.f32.mrb[0].mxu0
      %v2528 = vpop.f32.mrb[0].mxu0
      %v2529 = vadd.f32 %v727, %v2528
      %v2530 = vpop.f32.mrb[0].mxu0
      %2531 = vmatprep.mubr.bf16.mxu0 0
      %2532 = vmatmul.mubr.bf16.gmra.mrb[0].mxu0 %v1823
      %v2533 = vpop.f32.mrb[0].mxu0
      %v2534 = vadd.f32 %v728, %v2533
      %v2535 = vpop.f32.mrb[0].mxu0
      %v2536 = vpop.f32.mrb[0].mxu0
      %v2537 = vadd.f32 %v729, %v2536
      %v2538 = vpop.f32.mrb[0].mxu0
      %2539 = vmatprep.mubr.bf16.mxu0 0
      %2540 = vmatmul.mubr.bf16.gmra.mrb[0].mxu0 %v1826
      %v2541 = vpop.f32.mrb[0].mxu0
      %v2542 = vadd.f32 %v730, %v2541
      %v2543 = vpop.f32.mrb[0].mxu0
      %v2544 = vpop.f32.mrb[0].mxu0
      %v2545 = vadd.f32 %v731, %v2544
      %v2546 = vpop.f32.mrb[0].mxu0
      %2547 = vmatprep.mubr.bf16.mxu0 0
      %2548 = vmatmul.mubr.bf16.gmra.mrb[0].mxu0 %v1829
      %v2549 = vpop.f32.mrb[0].mxu0
      %v2550 = vadd.f32 %v732, %v2549
      %v2551 = vpop.f32.mrb[0].mxu0
      %v2552 = vpop.f32.mrb[0].mxu0
      %v2553 = vadd.f32 %v733, %v2552
      %v2554 = vpop.f32.mrb[0].mxu0
      %2555 = vmatprep.mubr.bf16.mxu0 0
      %2556 = vmatmul.mubr.bf16.gmra.mrb[0].mxu0 %v1832
      %v2557 = vpop.f32.mrb[0].mxu0
      %v2558 = vadd.f32 %v734, %v2557
      %v2559 = vpop.f32.mrb[0].mxu0
      %v2560 = vpop.f32.mrb[0].mxu0
      %v2561 = vadd.f32 %v735, %v2560
      %v2562 = vpop.f32.mrb[0].mxu0
      %2563 = vmatprep.mubr.bf16.mxu0 0
      %2564 = vmatmul.mubr.bf16.gmra.mrb[0].mxu0 %v1835
      %v2565 = vpop.f32.mrb[0].mxu0
      %v2566 = vadd.f32 %v736, %v2565
      %v2567 = vpop.f32.mrb[0].mxu0
      %v2568 = vpop.f32.mrb[0].mxu0
      %v2569 = vadd.f32 %v737, %v2568
      %v2570 = vpop.f32.mrb[0].mxu0
      %2571 = vmatprep.mubr.bf16.mxu0 0
      %2572 = vmatmul.mubr.bf16.gmra.mrb[0].mxu0 %v1838
      %v2573 = vpop.f32.mrb[0].mxu0
      %v2574 = vadd.f32 %v738, %v2573
      %v2575 = vpop.f32.mrb[0].mxu0
      %v2576 = vpop.f32.mrb[0].mxu0
      %v2577 = vadd.f32 %v739, %v2576
      %v2578 = vpop.f32.mrb[0].mxu0
      %2579 = vmatprep.mubr.bf16.mxu0 0
      %2580 = vmatmul.mubr.bf16.gmra.mrb[0].mxu0 %v1841
      %v2581 = vpop.f32.mrb[0].mxu0
      %v2582 = vadd.f32 %v740, %v2581
      %v2583 = vpop.f32.mrb[0].mxu0
      %v2584 = vpop.f32.mrb[0].mxu0
      %v2585 = vadd.f32 %v741, %v2584
      %v2586 = vpop.f32.mrb[0].mxu0
      %2587 = vmatprep.mubr.bf16.mxu0 0
      %2588 = vmatmul.mubr.bf16.gmra.mrb[0].mxu0 %v1844
      %v2589 = vpop.f32.mrb[0].mxu0
      %v2590 = vadd.f32 %v742, %v2589
      %v2591 = vpop.f32.mrb[0].mxu0
      %v2592 = vpop.f32.mrb[0].mxu0
      %v2593 = vadd.f32 %v743, %v2592
      %v2594 = vpop.f32.mrb[0].mxu0
      %2595 = vmatprep.mubr.bf16.mxu0 0
      %2596 = vmatmul.mubr.bf16.gmra.mrb[0].mxu0 %v1847
      %v2597 = vpop.f32.mrb[0].mxu0
      %v2598 = vadd.f32 %v744, %v2597
      %v2599 = vpop.f32.mrb[0].mxu0
      %v2600 = vpop.f32.mrb[0].mxu0
      %v2601 = vadd.f32 %v745, %v2600
      %v2602 = vpop.f32.mrb[0].mxu0
      %2603 = vmatprep.mubr.bf16.mxu0 0
      %2604 = vmatmul.mubr.bf16.gmra.mrb[0].mxu0 %v1850
      %v2605 = vpop.f32.mrb[0].mxu0
      %v2606 = vadd.f32 %v746, %v2605
      %v2607 = vpop.f32.mrb[0].mxu0
      %v2608 = vpop.f32.mrb[0].mxu0
      %v2609 = vadd.f32 %v747, %v2608
      %v2610 = vpop.f32.mrb[0].mxu0
      %2611 = vmatprep.mubr.bf16.mxu0 0
      %2612 = vmatmul.mubr.bf16.gmra.mrb[0].mxu0 %v1853
      %v2613 = vpop.f32.mrb[0].mxu0
      %v2614 = vadd.f32 %v748, %v2613
      %v2615 = vpop.f32.mrb[0].mxu0
      %v2616 = vpop.f32.mrb[0].mxu0
      %v2617 = vadd.f32 %v749, %v2616
      %v2618 = vpop.f32.mrb[0].mxu0
      %2619 = vmatprep.mubr.bf16.mxu0 0
      %2620 = vmatmul.mubr.bf16.gmra.mrb[0].mxu0 %v1856
      %v2621 = vpop.f32.mrb[0].mxu0
      %v2622 = vadd.f32 %v750, %v2621
      %v2623 = vpop.f32.mrb[0].mxu0
      %v2624 = vpop.f32.mrb[0].mxu0
      %v2625 = vadd.f32 %v751, %v2624
      %v2626 = vpop.f32.mrb[0].mxu0
      %2627 = vmatprep.mubr.bf16.mxu0 0
      %2628 = vmatmul.mubr.bf16.gmra.mrb[0].mxu0 %v1859
      %v2629 = vpop.f32.mrb[0].mxu0
      %v2630 = vadd.f32 %v752, %v2629
      %v2631 = vpop.f32.mrb[0].mxu0
      %v2632 = vpop.f32.mrb[0].mxu0
      %v2633 = vadd.f32 %v753, %v2632
      %v2634 = vpop.f32.mrb[0].mxu0
      %2635 = vmatprep.mubr.bf16.mxu0 0
      %2636 = vmatmul.mubr.bf16.gmra.mrb[0].mxu0 %v1862
      %v2637 = vpop.f32.mrb[0].mxu0
      %v2638 = vadd.f32 %v754, %v2637
      %v2639 = vpop.f32.mrb[0].mxu0
      %v2640 = vpop.f32.mrb[0].mxu0
      %v2641 = vadd.f32 %v755, %v2640
      %v2642 = vpop.f32.mrb[0].mxu0
      %2643 = vmatprep.mubr.bf16.mxu0 0
      %2644 = vmatmul.mubr.bf16.gmra.mrb[0].mxu0 %v1865
      %v2645 = vpop.f32.mrb[0].mxu0
      %v2646 = vadd.f32 %v756, %v2645
      %v2647 = vpop.f32.mrb[0].mxu0
      %v2648 = vpop.f32.mrb[0].mxu0
      %v2649 = vadd.f32 %v757, %v2648
      %v2650 = vpop.f32.mrb[0].mxu0
      %2651 = vmatprep.mubr.bf16.mxu0 0
      %2652 = vmatmul.mubr.bf16.gmra.mrb[0].mxu0 %v1868
      %v2653 = vpop.f32.mrb[0].mxu0
      %v2654 = vadd.f32 %v758, %v2653
      %v2655 = vpop.f32.mrb[0].mxu0
      %v2656 = vpop.f32.mrb[0].mxu0
      %v2657 = vadd.f32 %v759, %v2656
      %v2658 = vpop.f32.mrb[0].mxu0
      %2659 = vmatprep.mubr.bf16.mxu0 0
      %2660 = vmatmul.mubr.bf16.gmra.mrb[0].mxu0 %v1871
      %v2661 = vpop.f32.mrb[0].mxu0
      %v2662 = vadd.f32 %v760, %v2661
      %v2663 = vpop.f32.mrb[0].mxu0
      %v2664 = vpop.f32.mrb[0].mxu0
      %v2665 = vadd.f32 %v761, %v2664
      %v2666 = vpop.f32.mrb[0].mxu0
      %2667 = vmatprep.mubr.bf16.mxu0 0
      %2668 = vmatmul.mubr.bf16.gmra.mrb[0].mxu0 %v1874
      %v2669 = vpop.f32.mrb[0].mxu0
      %v2670 = vadd.f32 %v762, %v2669
      %v2671 = vpop.f32.mrb[0].mxu0
      %v2672 = vpop.f32.mrb[0].mxu0
      %v2673 = vadd.f32 %v763, %v2672
      %v2674 = vpop.f32.mrb[0].mxu0
      %2675 = vmatprep.mubr.bf16.mxu0 0
      %2676 = vmatmul.mubr.bf16.gmra.mrb[0].mxu0 %v1877
      %v2677 = vpop.f32.mrb[0].mxu0
      %v2678 = vadd.f32 %v764, %v2677
      %v2679 = vpop.f32.mrb[0].mxu0
      %v2680 = vpop.f32.mrb[0].mxu0
      %v2681 = vadd.f32 %v765, %v2680
      %v2682 = vpop.f32.mrb[0].mxu0
      %2683 = vmatprep.mubr.bf16.mxu0 0
      %2684 = vmatmul.mubr.bf16.gmra.mrb[0].mxu0 %v1880
      %v2685 = vpop.f32.mrb[0].mxu0
      %v2686 = vadd.f32 %v766, %v2685
      %v2687 = vpop.f32.mrb[0].mxu0
      %v2688 = vpop.f32.mrb[0].mxu0
      %v2689 = vadd.f32 %v767, %v2688
      %v2690 = vpop.f32.mrb[0].mxu0
      %2691 = vmatprep.mubr.bf16.mxu0 0
      %2692 = vmatmul.mubr.bf16.gmra.mrb[0].mxu0 %v1883
      %v2693 = vpop.f32.mrb[0].mxu0
      %v2694 = vadd.f32 %v768, %v2693
      %v2695 = vpop.f32.mrb[0].mxu0
      %v2696 = vpop.f32.mrb[0].mxu0
      %v2697 = vadd.f32 %v769, %v2696
      %v2698 = vpop.f32.mrb[0].mxu0
      %2699 = vmatprep.mubr.bf16.mxu0 0
      %2700 = vmatmul.mubr.bf16.gmra.mrb[0].mxu0 %v1886
      %v2701 = vpop.f32.mrb[0].mxu0
      %v2702 = vadd.f32 %v770, %v2701
      %v2703 = vpop.f32.mrb[0].mxu0
      %v2704 = vpop.f32.mrb[0].mxu0
      %v2705 = vadd.f32 %v771, %v2704
      %v2706 = vpop.f32.mrb[0].mxu0
      %2707 = vmatprep.mubr.bf16.mxu0 0
      %2708 = vmatmul.mubr.bf16.gmra.mrb[0].mxu0 %v1889
      %v2709 = vpop.f32.mrb[0].mxu0
      %v2710 = vadd.f32 %v772, %v2709
      %v2711 = vpop.f32.mrb[0].mxu0
      %v2712 = vpop.f32.mrb[0].mxu0
      %v2713 = vadd.f32 %v773, %v2712
      %v2714 = vpop.f32.mrb[0].mxu0
      %2715 = vmatprep.mubr.bf16.mxu0 0
      %2716 = vmatmul.mubr.bf16.gmra.mrb[0].mxu0 %v1892
      %v2717 = vpop.f32.mrb[0].mxu0
      %v2718 = vadd.f32 %v774, %v2717
      %v2719 = vpop.f32.mrb[0].mxu0
      %v2720 = vpop.f32.mrb[0].mxu0
      %v2721 = vadd.f32 %v775, %v2720
      %v2722 = vpop.f32.mrb[0].mxu0
      %2723 = vmatprep.mubr.bf16.mxu0 0
      %2724 = vmatmul.mubr.bf16.gmra.mrb[0].mxu0 %v1895
      %v2725 = vpop.f32.mrb[0].mxu0
      %v2726 = vadd.f32 %v776, %v2725
      %v2727 = vpop.f32.mrb[0].mxu0
      %v2728 = vpop.f32.mrb[0].mxu0
      %v2729 = vadd.f32 %v777, %v2728
      %v2730 = vpop.f32.mrb[0].mxu0
      %2731 = vmatprep.mubr.bf16.mxu0 0
      %2732 = vmatmul.mubr.bf16.gmra.mrb[0].mxu0 %v1898
      %v2733 = vpop.f32.mrb[0].mxu0
      %v2734 = vadd.f32 %v778, %v2733
      %v2735 = vpop.f32.mrb[0].mxu0
      %v2736 = vpop.f32.mrb[0].mxu0
      %v2737 = vadd.f32 %v779, %v2736
      %v2738 = vpop.f32.mrb[0].mxu0
      %2739 = vmatprep.mubr.bf16.mxu0 0
      %2740 = vmatmul.mubr.bf16.gmra.mrb[0].mxu0 %v1901
      %v2741 = vpop.f32.mrb[0].mxu0
      %v2742 = vadd.f32 %v780, %v2741
      %v2743 = vpop.f32.mrb[0].mxu0
      %v2744 = vpop.f32.mrb[0].mxu0
      %v2745 = vadd.f32 %v781, %v2744
      %v2746 = vpop.f32.mrb[0].mxu0
      %2747 = vmatprep.mubr.bf16.mxu0 0
      %2748 = vmatmul.mubr.bf16.gmra.mrb[0].mxu0 %v1904
      %v2749 = vpop.f32.mrb[0].mxu0
      %v2750 = vadd.f32 %v782, %v2749
      %v2751 = vpop.f32.mrb[0].mxu0
      %v2752 = vpop.f32.mrb[0].mxu0
      %v2753 = vadd.f32 %v783, %v2752
      %v2754 = vpop.f32.mrb[0].mxu0
      %2755 = vmatprep.mubr.bf16.mxu0 0
      %2756 = vmatmul.mubr.bf16.gmra.mrb[0].mxu0 %v1907
      %v2757 = vpop.f32.mrb[0].mxu0
      %v2758 = vadd.f32 %v784, %v2757
      %v2759 = vpop.f32.mrb[0].mxu0
      %v2760 = vpop.f32.mrb[0].mxu0
      %v2761 = vadd.f32 %v785, %v2760
      %v2762 = vpop.f32.mrb[0].mxu0
      %2763 = vmatprep.mubr.bf16.mxu0 0
      %2764 = vmatmul.mubr.bf16.gmra.mrb[0].mxu0 %v1910
      %v2765 = vpop.f32.mrb[0].mxu0
      %v2766 = vadd.f32 %v786, %v2765
      %v2767 = vpop.f32.mrb[0].mxu0
      %v2768 = vpop.f32.mrb[0].mxu0
      %v2769 = vadd.f32 %v787, %v2768
      %v2770 = vpop.f32.mrb[0].mxu0
      %2771 = vmatprep.mubr.bf16.mxu0 0
      %2772 = vmatmul.mubr.bf16.gmra.mrb[0].mxu0 %v1913
      %v2773 = vpop.f32.mrb[0].mxu0
      %v2774 = vadd.f32 %v788, %v2773
      %v2775 = vpop.f32.mrb[0].mxu0
      %v2776 = vpop.f32.mrb[0].mxu0
      %v2777 = vadd.f32 %v789, %v2776
      %v2778 = vpop.f32.mrb[0].mxu0
      %2779 = vmatprep.mubr.bf16.mxu0 0
      %2780 = vmatmul.mubr.bf16.gmra.mrb[0].mxu0 %v1916
      %v2781 = vpop.f32.mrb[0].mxu0
      %v2782 = vadd.f32 %v790, %v2781
      %v2783 = vpop.f32.mrb[0].mxu0
      %v2784 = vpop.f32.mrb[0].mxu0
      %v2785 = vadd.f32 %v791, %v2784
      %v2786 = vpop.f32.mrb[0].mxu0
      %2787 = vmatprep.mubr.bf16.mxu0 0
      %2788 = vmatmul.mubr.bf16.gmra.mrb[0].mxu0 %v1919
      %v2789 = vpop.f32.mrb[0].mxu0
      %v2790 = vadd.f32 %v792, %v2789
      %v2791 = vpop.f32.mrb[0].mxu0
      %v2792 = vpop.f32.mrb[0].mxu0
      %v2793 = vadd.f32 %v793, %v2792
      %v2794 = vpop.f32.mrb[0].mxu0
      %2795 = vmatprep.mubr.bf16.mxu0 0
      %2796 = vmatmul.mubr.bf16.gmra.mrb[0].mxu0 %v1922
      %v2797 = vpop.f32.mrb[0].mxu0
      %v2798 = vadd.f32 %v794, %v2797
      %v2799 = vpop.f32.mrb[0].mxu0
      %v2800 = vpop.f32.mrb[0].mxu0
      %v2801 = vadd.f32 %v795, %v2800
      %v2802 = vpop.f32.mrb[0].mxu0
      %2803 = vmatprep.mubr.bf16.mxu0 0
      %2804 = vmatmul.mubr.bf16.gmra.mrb[0].mxu0 %v1925
      %v2805 = vpop.f32.mrb[0].mxu0
      %v2806 = vadd.f32 %v796, %v2805
      %v2807 = vpop.f32.mrb[0].mxu0
      %v2808 = vpop.f32.mrb[0].mxu0
      %v2809 = vadd.f32 %v797, %v2808
      %v2810 = vpop.f32.mrb[0].mxu0
      %2811 = vmatprep.mubr.bf16.mxu0 0
      %2812 = vmatmul.mubr.bf16.gmra.mrb[0].mxu0 %v1928
      %v2813 = vpop.f32.mrb[0].mxu0
      %v2814 = vadd.f32 %v798, %v2813
      %v2815 = vpop.f32.mrb[0].mxu0
      %v2816 = vpop.f32.mrb[0].mxu0
      %v2817 = vadd.f32 %v799, %v2816
      %v2818 = vpop.f32.mrb[0].mxu0
      %2819 = vmatprep.mubr.bf16.mxu0 0
      %2820 = vmatmul.mubr.bf16.gmra.mrb[0].mxu0 %v1931
      %v2821 = vpop.f32.mrb[0].mxu0
      %v2822 = vadd.f32 %v800, %v2821
      %v2823 = vpop.f32.mrb[0].mxu0
      %v2824 = vpop.f32.mrb[0].mxu0
      %v2825 = vadd.f32 %v801, %v2824
      %v2826 = vpop.f32.mrb[0].mxu0
      %2827 = vmatprep.mubr.bf16.mxu0 0
      %2828 = vmatmul.mubr.bf16.gmra.mrb[0].mxu0 %v1934
      %v2829 = vpop.f32.mrb[0].mxu0
      %v2830 = vadd.f32 %v802, %v2829
      %v2831 = vpop.f32.mrb[0].mxu0
      %v2832 = vpop.f32.mrb[0].mxu0
      %v2833 = vadd.f32 %v803, %v2832
      %v2834 = vpop.f32.mrb[0].mxu0
      %2835 = vmatprep.mubr.bf16.mxu0 0
      %2836 = vmatmul.mubr.bf16.gmra.mrb[0].mxu0 %v1937
      %v2837 = vpop.f32.mrb[0].mxu0
      %v2838 = vadd.f32 %v804, %v2837
      %v2839 = vpop.f32.mrb[0].mxu0
      %v2840 = vpop.f32.mrb[0].mxu0
      %v2841 = vadd.f32 %v805, %v2840
      %v2842 = vpop.f32.mrb[0].mxu0
      %2843 = vmatprep.mubr.bf16.mxu0 0
      %2844 = vmatmul.mubr.bf16.gmra.mrb[0].mxu0 %v1940
      %v2845 = vpop.f32.mrb[0].mxu0
      %v2846 = vadd.f32 %v806, %v2845
      %v2847 = vpop.f32.mrb[0].mxu0
      %v2848 = vpop.f32.mrb[0].mxu0
      %v2849 = vadd.f32 %v807, %v2848
      %v2850 = vpop.f32.mrb[0].mxu0
      %2851 = vmatprep.mubr.bf16.mxu0 0
      %2852 = vmatmul.mubr.bf16.gmra.mrb[0].mxu0 %v1943
      %v2853 = vpop.f32.mrb[0].mxu0
      %v2854 = vadd.f32 %v808, %v2853
      %v2855 = vpop.f32.mrb[0].mxu0
      %v2856 = vpop.f32.mrb[0].mxu0
      %v2857 = vadd.f32 %v809, %v2856
      %v2858 = vpop.f32.mrb[0].mxu0
      %2859 = vmatprep.mubr.bf16.mxu0 0
      %2860 = vmatmul.mubr.bf16.gmra.mrb[0].mxu0 %v1946
      %v2861 = vpop.f32.mrb[0].mxu0
      %v2862 = vadd.f32 %v810, %v2861
      %v2863 = vpop.f32.mrb[0].mxu0
      %v2864 = vpop.f32.mrb[0].mxu0
      %v2865 = vadd.f32 %v811, %v2864
      %v2866 = vpop.f32.mrb[0].mxu0
      %2867 = vmatprep.mubr.bf16.mxu0 0
      %2868 = vmatmul.mubr.bf16.gmra.mrb[0].mxu0 %v1949
      %v2869 = vpop.f32.mrb[0].mxu0
      %v2870 = vadd.f32 %v812, %v2869
      %v2871 = vpop.f32.mrb[0].mxu0
      %v2872 = vpop.f32.mrb[0].mxu0
      %v2873 = vadd.f32 %v813, %v2872
      %v2874 = vpop.f32.mrb[0].mxu0
      %2875 = vmatprep.mubr.bf16.mxu0 0
      %2876 = vmatmul.mubr.bf16.gmra.mrb[0].mxu0 %v1952
      %v2877 = vpop.f32.mrb[0].mxu0
      %v2878 = vadd.f32 %v814, %v2877
      %v2879 = vpop.f32.mrb[0].mxu0
      %v2880 = vpop.f32.mrb[0].mxu0
      %v2881 = vadd.f32 %v815, %v2880
      %v2882 = vpop.f32.mrb[0].mxu0
      %2883 = vmatprep.mubr.bf16.mxu0 0
      %2884 = vmatmul.mubr.bf16.gmra.mrb[0].mxu0 %v1955
      %v2885 = vpop.f32.mrb[0].mxu0
      %v2886 = vadd.f32 %v816, %v2885
      %v2887 = vpop.f32.mrb[0].mxu0
      %v2888 = vpop.f32.mrb[0].mxu0
      %v2889 = vadd.f32 %v817, %v2888
      %v2890 = vpop.f32.mrb[0].mxu0
      %2891 = vmatprep.mubr.bf16.mxu0 0
      %2892 = vmatmul.mubr.bf16.gmra.mrb[0].mxu0 %v1958
      %v2893 = vpop.f32.mrb[0].mxu0
      %v2894 = vadd.f32 %v818, %v2893
      %v2895 = vpop.f32.mrb[0].mxu0
      %v2896 = vpop.f32.mrb[0].mxu0
      %v2897 = vadd.f32 %v819, %v2896
      %v2898 = vpop.f32.mrb[0].mxu0
      %2899 = vmatprep.mubr.bf16.mxu0 0
      %2900 = vmatmul.mubr.bf16.gmra.mrb[0].mxu0 %v1961
      %v2901 = vpop.f32.mrb[0].mxu0
      %v2902 = vadd.f32 %v820, %v2901
      %v2903 = vpop.f32.mrb[0].mxu0
      %v2904 = vpop.f32.mrb[0].mxu0
      %v2905 = vadd.f32 %v821, %v2904
      %v2906 = vpop.f32.mrb[0].mxu0
      %2907 = vmatprep.mubr.bf16.mxu0 0
      %2908 = vmatmul.mubr.bf16.gmra.mrb[0].mxu0 %v1964
      %v2909 = vpop.f32.mrb[0].mxu0
      %v2910 = vadd.f32 %v822, %v2909
      %v2911 = vpop.f32.mrb[0].mxu0
      %v2912 = vpop.f32.mrb[0].mxu0
      %v2913 = vadd.f32 %v823, %v2912
      %v2914 = vpop.f32.mrb[0].mxu0
      %2915 = vmatprep.mubr.bf16.mxu0 0
      %2916 = vmatmul.mubr.bf16.gmra.mrb[0].mxu0 %v1967
      %v2917 = vpop.f32.mrb[0].mxu0
      %v2918 = vadd.f32 %v824, %v2917
      %v2919 = vpop.f32.mrb[0].mxu0
      %v2920 = vpop.f32.mrb[0].mxu0
      %v2921 = vadd.f32 %v825, %v2920
      %v2922 = vpop.f32.mrb[0].mxu0
      %2923 = vmatprep.mubr.bf16.mxu0 0
      %2924 = vmatmul.mubr.bf16.gmra.mrb[0].mxu0 %v1970
      %v2925 = vpop.f32.mrb[0].mxu0
      %v2926 = vadd.f32 %v826, %v2925
      %v2927 = vpop.f32.mrb[0].mxu0
      %v2928 = vpop.f32.mrb[0].mxu0
      %v2929 = vadd.f32 %v827, %v2928
      %v2930 = vpop.f32.mrb[0].mxu0
      %2931 = vmatprep.mubr.bf16.mxu0 0
      %2932 = vmatmul.mubr.bf16.gmra.mrb[0].mxu0 %v1973
      %v2933 = vpop.f32.mrb[0].mxu0
      %v2934 = vadd.f32 %v828, %v2933
      %v2935 = vpop.f32.mrb[0].mxu0
      %v2936 = vpop.f32.mrb[0].mxu0
      %v2937 = vadd.f32 %v829, %v2936
      %v2938 = vpop.f32.mrb[0].mxu0
      %2939 = vmatprep.mubr.bf16.mxu0 0
      %2940 = vmatmul.mubr.bf16.gmra.mrb[0].mxu0 %v1976
      %v2941 = vpop.f32.mrb[0].mxu0
      %v2942 = vadd.f32 %v830, %v2941
      %v2943 = vpop.f32.mrb[0].mxu0
      %v2944 = vpop.f32.mrb[0].mxu0
      %v2945 = vadd.f32 %v831, %v2944
      %v2946 = vpop.f32.mrb[0].mxu0
      %2947 = vmatprep.mubr.bf16.mxu0 0
      %2948 = vmatmul.mubr.bf16.gmra.mrb[0].mxu0 %v1979
      %v2949 = vpop.f32.mrb[0].mxu0
      %v2950 = vadd.f32 %v832, %v2949
      %v2951 = vpop.f32.mrb[0].mxu0
      %v2952 = vpop.f32.mrb[0].mxu0
      %v2953 = vadd.f32 %v833, %v2952
      %v2954 = vpop.f32.mrb[0].mxu0
      %2955 = vmatprep.mubr.bf16.mxu0 0
      %2956 = vmatmul.mubr.bf16.gmra.mrb[0].mxu0 %v1982
      %v2957 = vpop.f32.mrb[0].mxu0
      %v2958 = vadd.f32 %v834, %v2957
      %v2959 = vpop.f32.mrb[0].mxu0
      %v2960 = vpop.f32.mrb[0].mxu0
      %v2961 = vadd.f32 %v835, %v2960
      %v2962 = vpop.f32.mrb[0].mxu0
      %2963 = vmatprep.mubr.bf16.mxu0 0
      %2964 = vmatmul.mubr.bf16.gmra.mrb[0].mxu0 %v1985
      %v2965 = vpop.f32.mrb[0].mxu0
      %v2966 = vadd.f32 %v836, %v2965
      %v2967 = vpop.f32.mrb[0].mxu0
      %v2968 = vpop.f32.mrb[0].mxu0
      %v2969 = vadd.f32 %v837, %v2968
      %v2970 = vpop.f32.mrb[0].mxu0
      %2971 = vmatprep.mubr.bf16.mxu0 0
      %2972 = vmatmul.mubr.bf16.gmra.mrb[0].mxu0 %v1988
      %v2973 = vpop.f32.mrb[0].mxu0
      %v2974 = vadd.f32 %v838, %v2973
      %v2975 = vpop.f32.mrb[0].mxu0
      %v2976 = vpop.f32.mrb[0].mxu0
      %v2977 = vadd.f32 %v839, %v2976
      %v2978 = vpop.f32.mrb[0].mxu0
      %2979 = vmatprep.mubr.bf16.mxu0 0
      %2980 = vmatmul.mubr.bf16.gmra.mrb[0].mxu0 %v1991
      %v2981 = vpop.f32.mrb[0].mxu0
      %v2982 = vadd.f32 %v840, %v2981
      %v2983 = vpop.f32.mrb[0].mxu0
      %v2984 = vpop.f32.mrb[0].mxu0
      %v2985 = vadd.f32 %v841, %v2984
      %v2986 = vpop.f32.mrb[0].mxu0
      %2987 = vmatprep.mubr.bf16.mxu0 0
      %2988 = vmatmul.mubr.bf16.gmra.mrb[0].mxu0 %v1994
      %v2989 = vpop.f32.mrb[0].mxu0
      %v2990 = vadd.f32 %v842, %v2989
      %v2991 = vpop.f32.mrb[0].mxu0
      %v2992 = vpop.f32.mrb[0].mxu0
      %v2993 = vadd.f32 %v843, %v2992
      %v2994 = vpop.f32.mrb[0].mxu0
      %2995 = vmatprep.mubr.bf16.mxu0 0
      %2996 = vmatmul.mubr.bf16.gmra.mrb[0].mxu0 %v1997
      %v2997 = vpop.f32.mrb[0].mxu0
      %v2998 = vadd.f32 %v844, %v2997
      %v2999 = vpop.f32.mrb[0].mxu0
      %v3000 = vpop.f32.mrb[0].mxu0
      %v3001 = vadd.f32 %v845, %v3000
      %v3002 = vpop.f32.mrb[0].mxu0
      %3003 = vmatprep.mubr.bf16.mxu0 0
      %3004 = vmatmul.mubr.bf16.gmra.mrb[0].mxu0 %v2000
      %v3005 = vpop.f32.mrb[0].mxu0
      %v3006 = vadd.f32 %v846, %v3005
      %v3007 = vpop.f32.mrb[0].mxu0
      %v3008 = vpop.f32.mrb[0].mxu0
      %v3009 = vadd.f32 %v847, %v3008
      %v3010 = vpop.f32.mrb[0].mxu0
      %3011 = vmatprep.mubr.bf16.mxu0 0
      %3012 = vmatmul.mubr.bf16.gmra.mrb[0].mxu0 %v2003
      %v3013 = vpop.f32.mrb[0].mxu0
      %v3014 = vadd.f32 %v848, %v3013
      %v3015 = vpop.f32.mrb[0].mxu0
      %v3016 = vpop.f32.mrb[0].mxu0
      %v3017 = vadd.f32 %v849, %v3016
      %v3018 = vpop.f32.mrb[0].mxu0
      %3019 = vmatprep.mubr.bf16.mxu0 0
      %3020 = vmatmul.mubr.bf16.gmra.mrb[0].mxu0 %v2006
      %v3021 = vpop.f32.mrb[0].mxu0
      %v3022 = vadd.f32 %v850, %v3021
      %v3023 = vpop.f32.mrb[0].mxu0
      %v3024 = vpop.f32.mrb[0].mxu0
      %v3025 = vadd.f32 %v851, %v3024
      %v3026 = vpop.f32.mrb[0].mxu0
      %3027 = vmatprep.mubr.bf16.mxu0 0
      %3028 = vmatmul.mubr.bf16.gmra.mrb[0].mxu0 %v2009
      %v3029 = vpop.f32.mrb[0].mxu0
      %v3030 = vadd.f32 %v852, %v3029
      %v3031 = vpop.f32.mrb[0].mxu0
      %v3032 = vpop.f32.mrb[0].mxu0
      %v3033 = vadd.f32 %v853, %v3032
      %v3034 = vpop.f32.mrb[0].mxu0
      %3035 = vmatprep.mubr.bf16.mxu0 0
      %3036 = vmatmul.mubr.bf16.gmra.mrb[0].mxu0 %v2012
      %v3037 = vpop.f32.mrb[0].mxu0
      %v3038 = vadd.f32 %v854, %v3037
      %v3039 = vpop.f32.mrb[0].mxu0
      %v3040 = vpop.f32.mrb[0].mxu0
      %v3041 = vadd.f32 %v855, %v3040
      %v3042 = vpop.f32.mrb[0].mxu0
      %3043 = vmatprep.mubr.bf16.mxu0 0
      %3044 = vmatmul.mubr.bf16.gmra.mrb[0].mxu0 %v2015
      %v3045 = vpop.f32.mrb[0].mxu0
      %v3046 = vadd.f32 %v856, %v3045
      %v3047 = vpop.f32.mrb[0].mxu0
      %v3048 = vpop.f32.mrb[0].mxu0
      %v3049 = vadd.f32 %v857, %v3048
      %v3050 = vpop.f32.mrb[0].mxu0
      %3051 = vmatprep.mubr.bf16.mxu0 0
      %3052 = vmatmul.mubr.bf16.gmra.mrb[0].mxu0 %v2018
      %v3053 = vpop.f32.mrb[0].mxu0
      %v3054 = vadd.f32 %v858, %v3053
      %v3055 = vpop.f32.mrb[0].mxu0
      %v3056 = vpop.f32.mrb[0].mxu0
      %v3057 = vadd.f32 %v859, %v3056
      %v3058 = vpop.f32.mrb[0].mxu0
      %3059 = vmatprep.mubr.bf16.mxu0 0
      %3060 = vmatmul.mubr.bf16.gmra.mrb[0].mxu0 %v2021
      %v3061 = vpop.f32.mrb[0].mxu0
      %v3062 = vadd.f32 %v860, %v3061
      %v3063 = vpop.f32.mrb[0].mxu0
      %v3064 = vpop.f32.mrb[0].mxu0
      %v3065 = vadd.f32 %v861, %v3064
      %v3066 = vpop.f32.mrb[0].mxu0
      %3067 = vmatprep.mubr.bf16.mxu0 0
      %3068 = vmatmul.mubr.bf16.gmra.mrb[0].mxu0 %v2024
      %v3069 = vpop.f32.mrb[0].mxu0
      %v3070 = vadd.f32 %v862, %v3069
      %v3071 = vpop.f32.mrb[0].mxu0
      %v3072 = vpop.f32.mrb[0].mxu0
      %v3073 = vadd.f32 %v863, %v3072
      %v3074 = vpop.f32.mrb[0].mxu0
      %3075 = vmatprep.mubr.bf16.mxu0 0
      %3076 = vmatmul.mubr.bf16.gmra.mrb[0].mxu0 %v2027
      %v3077 = vpop.f32.mrb[0].mxu0
      %v3078 = vadd.f32 %v864, %v3077
      %v3079 = vpop.f32.mrb[0].mxu0
      %v3080 = vpop.f32.mrb[0].mxu0
      %v3081 = vadd.f32 %v865, %v3080
      %v3082 = vpop.f32.mrb[0].mxu0
      %3083 = vmatprep.mubr.bf16.mxu0 0
      %3084 = vmatmul.mubr.bf16.gmra.mrb[0].mxu0 %v2030
      %v3085 = vpop.f32.mrb[0].mxu0
      %v3086 = vadd.f32 %v866, %v3085
      %v3087 = vpop.f32.mrb[0].mxu0
      %v3088 = vpop.f32.mrb[0].mxu0
      %v3089 = vadd.f32 %v867, %v3088
      %v3090 = vpop.f32.mrb[0].mxu0
      %3091 = vmatprep.mubr.bf16.mxu0 0
      %3092 = vmatmul.mubr.bf16.gmra.mrb[0].mxu0 %v2033
      %v3093 = vpop.f32.mrb[0].mxu0
      %v3094 = vadd.f32 %v868, %v3093
      %v3095 = vpop.f32.mrb[0].mxu0
      %v3096 = vpop.f32.mrb[0].mxu0
      %v3097 = vadd.f32 %v869, %v3096
      %v3098 = vpop.f32.mrb[0].mxu0
      %3099 = vmatprep.mubr.bf16.mxu0 0
      %3100 = vmatmul.mubr.bf16.gmra.mrb[0].mxu0 %v2036
      %v3101 = vpop.f32.mrb[0].mxu0
      %v3102 = vadd.f32 %v870, %v3101
      %v3103 = vpop.f32.mrb[0].mxu0
      %v3104 = vpop.f32.mrb[0].mxu0
      %v3105 = vadd.f32 %v871, %v3104
      %v3106 = vpop.f32.mrb[0].mxu0
      %3107 = vmatprep.mubr.bf16.mxu0 0
      %3108 = vmatmul.mubr.bf16.gmra.mrb[0].mxu0 %v2039
      %v3109 = vpop.f32.mrb[0].mxu0
      %v3110 = vadd.f32 %v872, %v3109
      %v3111 = vpop.f32.mrb[0].mxu0
      %v3112 = vpop.f32.mrb[0].mxu0
      %v3113 = vadd.f32 %v873, %v3112
      %v3114 = vpop.f32.mrb[0].mxu0
      %3115 = vmatprep.mubr.bf16.mxu0 0
      %3116 = vmatmul.mubr.bf16.gmra.mrb[0].mxu0 %v2042
      %v3117 = vpop.f32.mrb[0].mxu0
      %v3118 = vadd.f32 %v874, %v3117
      %v3119 = vpop.f32.mrb[0].mxu0
      %v3120 = vpop.f32.mrb[0].mxu0
      %v3121 = vadd.f32 %v875, %v3120
      %v3122 = vpop.f32.mrb[0].mxu0
      %3123 = vmatprep.mubr.bf16.mxu0 0
      %3124 = vmatmul.mubr.bf16.gmra.mrb[0].mxu0 %v2045
      %v3125 = vpop.f32.mrb[0].mxu0
      %v3126 = vadd.f32 %v876, %v3125
      %v3127 = vpop.f32.mrb[0].mxu0
      %v3128 = vpop.f32.mrb[0].mxu0
      %v3129 = vadd.f32 %v877, %v3128
      %v3130 = vpop.f32.mrb[0].mxu0
      %3131 = vmatprep.mubr.bf16.mxu0 0
      %3132 = vmatmul.mubr.bf16.gmra.mrb[0].mxu0 %v2048
      %v3133 = vpop.f32.mrb[0].mxu0
      %v3134 = vadd.f32 %v878, %v3133
      %v3135 = vpop.f32.mrb[0].mxu0
      %v3136 = vpop.f32.mrb[0].mxu0
      %v3137 = vadd.f32 %v879, %v3136
      %v3138 = vpop.f32.mrb[0].mxu0
      %3139 = vmatprep.mubr.bf16.mxu0 0
      %3140 = vmatmul.mubr.bf16.gmra.mrb[0].mxu0 %v2051
      %v3141 = vpop.f32.mrb[0].mxu0
      %v3142 = vadd.f32 %v880, %v3141
      %v3143 = vpop.f32.mrb[0].mxu0
      %v3144 = vpop.f32.mrb[0].mxu0
      %v3145 = vadd.f32 %v881, %v3144
      %v3146 = vpop.f32.mrb[0].mxu0
      %3147 = vmatprep.mubr.bf16.mxu0 0
      %3148 = vmatmul.mubr.bf16.gmra.mrb[0].mxu0 %v2054
      %v3149 = vpop.f32.mrb[0].mxu0
      %v3150 = vadd.f32 %v882, %v3149
      %v3151 = vpop.f32.mrb[0].mxu0
      %v3152 = vpop.f32.mrb[0].mxu0
      %v3153 = vadd.f32 %v883, %v3152
      %v3154 = vpop.f32.mrb[0].mxu0
      %3155 = vmatprep.mubr.bf16.mxu0 0
      %3156 = vmatmul.mubr.bf16.gmra.mrb[0].mxu0 %v2057
      %v3157 = vpop.f32.mrb[0].mxu0
      %v3158 = vadd.f32 %v884, %v3157
      %v3159 = vpop.f32.mrb[0].mxu0
      %v3160 = vpop.f32.mrb[0].mxu0
      %v3161 = vadd.f32 %v885, %v3160
      %v3162 = vpop.f32.mrb[0].mxu0
      %3163 = vmatprep.mubr.bf16.mxu0 0
      %3164 = vmatmul.mubr.bf16.gmra.mrb[0].mxu0 %v2060
      %v3165 = vpop.f32.mrb[0].mxu0
      %v3166 = vadd.f32 %v886, %v3165
      %v3167 = vpop.f32.mrb[0].mxu0
      %v3168 = vpop.f32.mrb[0].mxu0
      %v3169 = vadd.f32 %v887, %v3168
      %v3170 = vpop.f32.mrb[0].mxu0
      %3171 = vmatprep.mubr.bf16.mxu0 0
      %3172 = vmatmul.mubr.bf16.gmra.mrb[0].mxu0 %v2063
      %v3173 = vpop.f32.mrb[0].mxu0
      %v3174 = vadd.f32 %v888, %v3173
      %v3175 = vpop.f32.mrb[0].mxu0
      %v3176 = vpop.f32.mrb[0].mxu0
      %v3177 = vadd.f32 %v889, %v3176
      %v3178 = vpop.f32.mrb[0].mxu0
      %3179 = vmatprep.mubr.bf16.mxu0 0
      %3180 = vmatmul.mubr.bf16.gmra.mrb[0].mxu0 %v2066
      %v3181 = vpop.f32.mrb[0].mxu0
      %v3182 = vadd.f32 %v890, %v3181
      %v3183 = vpop.f32.mrb[0].mxu0
      %v3184 = vpop.f32.mrb[0].mxu0
      %v3185 = vadd.f32 %v891, %v3184
      %v3186 = vpop.f32.mrb[0].mxu0
      %3187 = vmatprep.mubr.bf16.mxu0 0
      %3188 = vmatmul.mubr.bf16.gmra.mrb[0].mxu0 %v2069
      %v3189 = vpop.f32.mrb[0].mxu0
      %v3190 = vadd.f32 %v892, %v3189
      %v3191 = vpop.f32.mrb[0].mxu0
      %v3192 = vpop.f32.mrb[0].mxu0
      %v3193 = vadd.f32 %v893, %v3192
      %v3194 = vpop.f32.mrb[0].mxu0
      %3195 = vmatprep.mubr.bf16.mxu0 0
      %3196 = vmatmul.mubr.bf16.gmra.mrb[0].mxu0 %v2072
      %v3197 = vpop.f32.mrb[0].mxu0
      %v3198 = vadd.f32 %v894, %v3197
      %v3199 = vpop.f32.mrb[0].mxu0
      %v3200 = vpop.f32.mrb[0].mxu0
      %v3201 = vadd.f32 %v895, %v3200
      %v3202 = vpop.f32.mrb[0].mxu0
      %3203 = vmatprep.mubr.bf16.mxu0 0
      %3204 = vmatmul.mubr.bf16.gmra.mrb[0].mxu0 %v2075
      %v3205 = vpop.f32.mrb[0].mxu0
      %v3206 = vadd.f32 %v896, %v3205
      %v3207 = vpop.f32.mrb[0].mxu0
      %v3208 = vpop.f32.mrb[0].mxu0
      %v3209 = vadd.f32 %v897, %v3208
      %v3210 = vpop.f32.mrb[0].mxu0
      %3211 = vmatprep.mubr.bf16.mxu0 0
      %3212 = vmatmul.mubr.bf16.gmra.mrb[0].mxu0 %v2078
      %v3213 = vpop.f32.mrb[0].mxu0
      %v3214 = vadd.f32 %v898, %v3213
      %v3215 = vpop.f32.mrb[0].mxu0
      %v3216 = vpop.f32.mrb[0].mxu0
      %v3217 = vadd.f32 %v899, %v3216
      %v3218 = vpop.f32.mrb[0].mxu0
      %3219 = vmatprep.mubr.bf16.mxu0 0
      %3220 = vmatmul.mubr.bf16.gmra.mrb[0].mxu0 %v2081
      %v3221 = vpop.f32.mrb[0].mxu0
      %v3222 = vadd.f32 %v900, %v3221
      %v3223 = vpop.f32.mrb[0].mxu0
      %v3224 = vpop.f32.mrb[0].mxu0
      %v3225 = vadd.f32 %v901, %v3224
      %v3226 = vpop.f32.mrb[0].mxu0
      %3227 = vmatprep.mubr.bf16.mxu0 0
      %3228 = vmatmul.mubr.bf16.gmra.mrb[0].mxu0 %v2084
      %v3229 = vpop.f32.mrb[0].mxu0
      %v3230 = vadd.f32 %v902, %v3229
      %v3231 = vpop.f32.mrb[0].mxu0
      %v3232 = vpop.f32.mrb[0].mxu0
      %v3233 = vadd.f32 %v903, %v3232
      %v3234 = vpop.f32.mrb[0].mxu0
      %3235 = vmatprep.mubr.bf16.mxu0 0
      %3236 = vmatmul.mubr.bf16.gmra.mrb[0].mxu0 %v2087
      %v3237 = vpop.f32.mrb[0].mxu0
      %v3238 = vadd.f32 %v904, %v3237
      %v3239 = vpop.f32.mrb[0].mxu0
      %v3240 = vpop.f32.mrb[0].mxu0
      %v3241 = vadd.f32 %v905, %v3240
      %v3242 = vpop.f32.mrb[0].mxu0
      %3243 = vmatprep.mubr.bf16.mxu0 0
      %3244 = vmatmul.mubr.bf16.gmra.mrb[0].mxu0 %v2090
      %v3245 = vpop.f32.mrb[0].mxu0
      %v3246 = vadd.f32 %v906, %v3245
      %v3247 = vpop.f32.mrb[0].mxu0
      %v3248 = vpop.f32.mrb[0].mxu0
      %v3249 = vadd.f32 %v907, %v3248
      %v3250 = vpop.f32.mrb[0].mxu0
      %3251 = vmatprep.mubr.bf16.mxu0 0
      %3252 = vmatmul.mubr.bf16.gmra.mrb[0].mxu0 %v2093
      %v3253 = vpop.f32.mrb[0].mxu0
      %v3254 = vadd.f32 %v908, %v3253
      %v3255 = vpop.f32.mrb[0].mxu0
      %v3256 = vpop.f32.mrb[0].mxu0
      %v3257 = vadd.f32 %v909, %v3256
      %v3258 = vpop.f32.mrb[0].mxu0
      %3259 = vmatprep.mubr.bf16.mxu0 0
      %3260 = vmatmul.mubr.bf16.gmra.mrb[0].mxu0 %v2096
      %v3261 = vpop.f32.mrb[0].mxu0
      %v3262 = vadd.f32 %v910, %v3261
      %v3263 = vpop.f32.mrb[0].mxu0
      %v3264 = vpop.f32.mrb[0].mxu0
      %v3265 = vadd.f32 %v911, %v3264
      %v3266 = vpop.f32.mrb[0].mxu0
      %3267 = vmatprep.mubr.bf16.mxu0 0
      %3268 = vmatmul.mubr.bf16.gmra.mrb[0].mxu0 %v2099
      %v3269 = vpop.f32.mrb[0].mxu0
      %v3270 = vadd.f32 %v912, %v3269
      %v3271 = vpop.f32.mrb[0].mxu0
      %v3272 = vpop.f32.mrb[0].mxu0
      %v3273 = vadd.f32 %v913, %v3272
      %v3274 = vpop.f32.mrb[0].mxu0
      %3275 = vmatprep.mubr.bf16.mxu0 0
      %3276 = vmatmul.mubr.bf16.gmra.mrb[0].mxu0 %v2102
      %v3277 = vpop.f32.mrb[0].mxu0
      %v3278 = vadd.f32 %v914, %v3277
      %v3279 = vpop.f32.mrb[0].mxu0
      %v3280 = vpop.f32.mrb[0].mxu0
      %v3281 = vadd.f32 %v915, %v3280
      %v3282 = vpop.f32.mrb[0].mxu0
      %3283 = vmatprep.mubr.bf16.mxu0 0
      %3284 = vmatmul.mubr.bf16.gmra.mrb[0].mxu0 %v2105
      %v3285 = vpop.f32.mrb[0].mxu0
      %v3286 = vadd.f32 %v916, %v3285
      %v3287 = vpop.f32.mrb[0].mxu0
      %v3288 = vpop.f32.mrb[0].mxu0
      %v3289 = vadd.f32 %v917, %v3288
      %v3290 = vpop.f32.mrb[0].mxu0
      %3291 = vdwg.mxu0
      %v3292 = vxor.u32 %v2142, 2147483648
      %v3293 = vxor.u32 %v2145, 2147483648
      %v3294 = vxor.u32 %v2150, 2147483648
      %v3295 = vxor.u32 %v2153, 2147483648
      %v3296 = vxor.u32 %v2158, 2147483648
      %v3297 = vxor.u32 %v2161, 2147483648
      %v3298 = vxor.u32 %v2166, 2147483648
      %v3299 = vxor.u32 %v2169, 2147483648
      %v3300 = vxor.u32 %v2174, 2147483648
      %v3301 = vxor.u32 %v2177, 2147483648
      %v3302 = vxor.u32 %v2182, 2147483648
      %v3303 = vxor.u32 %v2185, 2147483648
      %v3304 = vxor.u32 %v2190, 2147483648
      %v3305 = vxor.u32 %v2193, 2147483648
      %v3306 = vxor.u32 %v2198, 2147483648
      %v3307 = vxor.u32 %v2201, 2147483648
      %v3308 = vxor.u32 %v2206, 2147483648
      %v3309 = vxor.u32 %v2209, 2147483648
      %v3310 = vxor.u32 %v2214, 2147483648
      %v3311 = vxor.u32 %v2217, 2147483648
      %v3312 = vxor.u32 %v2222, 2147483648
      %v3313 = vxor.u32 %v2225, 2147483648
      %v3314 = vxor.u32 %v2230, 2147483648
      %v3315 = vxor.u32 %v2233, 2147483648
      %v3316 = vxor.u32 %v2238, 2147483648
      %v3317 = vxor.u32 %v2241, 2147483648
      %v3318 = vxor.u32 %v2246, 2147483648
      %v3319 = vxor.u32 %v2249, 2147483648
      %v3320 = vxor.u32 %v2254, 2147483648
      %v3321 = vxor.u32 %v2257, 2147483648
      %v3322 = vxor.u32 %v2262, 2147483648
      %v3323 = vxor.u32 %v2265, 2147483648
      %v3324 = vxor.u32 %v2270, 2147483648
      %v3325 = vxor.u32 %v2273, 2147483648
      %v3326 = vxor.u32 %v2278, 2147483648
      %v3327 = vxor.u32 %v2281, 2147483648
      %v3328 = vxor.u32 %v2286, 2147483648
      %v3329 = vxor.u32 %v2289, 2147483648
      %v3330 = vxor.u32 %v2294, 2147483648
      %v3331 = vxor.u32 %v2297, 2147483648
      %v3332 = vxor.u32 %v2302, 2147483648
      %v3333 = vxor.u32 %v2305, 2147483648
      %v3334 = vxor.u32 %v2310, 2147483648
      %v3335 = vxor.u32 %v2313, 2147483648
      %v3336 = vxor.u32 %v2318, 2147483648
      %v3337 = vxor.u32 %v2321, 2147483648
      %v3338 = vxor.u32 %v2326, 2147483648
      %v3339 = vxor.u32 %v2329, 2147483648
      %v3340 = vxor.u32 %v2334, 2147483648
      %v3341 = vxor.u32 %v2337, 2147483648
      %v3342 = vxor.u32 %v2342, 2147483648
      %v3343 = vxor.u32 %v2345, 2147483648
      %v3344 = vxor.u32 %v2350, 2147483648
      %v3345 = vxor.u32 %v2353, 2147483648
      %v3346 = vxor.u32 %v2358, 2147483648
      %v3347 = vxor.u32 %v2361, 2147483648
      %v3348 = vxor.u32 %v2366, 2147483648
      %v3349 = vxor.u32 %v2369, 2147483648
      %v3350 = vxor.u32 %v2374, 2147483648
      %v3351 = vxor.u32 %v2377, 2147483648
      %v3352 = vxor.u32 %v2382, 2147483648
      %v3353 = vxor.u32 %v2385, 2147483648
      %v3354 = vxor.u32 %v2390, 2147483648
      %v3355 = vxor.u32 %v2393, 2147483648
      %v3356 = vxor.u32 %v2398, 2147483648
      %v3357 = vxor.u32 %v2401, 2147483648
      %v3358 = vxor.u32 %v2406, 2147483648
      %v3359 = vxor.u32 %v2409, 2147483648
      %v3360 = vxor.u32 %v2414, 2147483648
      %v3361 = vxor.u32 %v2417, 2147483648
      %v3362 = vxor.u32 %v2422, 2147483648
      %v3363 = vxor.u32 %v2425, 2147483648
      %v3364 = vxor.u32 %v2430, 2147483648
      %v3365 = vxor.u32 %v2433, 2147483648
      %v3366 = vxor.u32 %v2438, 2147483648
      %v3367 = vxor.u32 %v2441, 2147483648
      %v3368 = vxor.u32 %v2446, 2147483648
      %v3369 = vxor.u32 %v2449, 2147483648
      %v3370 = vxor.u32 %v2454, 2147483648
      %v3371 = vxor.u32 %v2457, 2147483648
      %v3372 = vxor.u32 %v2462, 2147483648
      %v3373 = vxor.u32 %v2465, 2147483648
      %v3374 = vxor.u32 %v2470, 2147483648
      %v3375 = vxor.u32 %v2473, 2147483648
      %v3376 = vxor.u32 %v2478, 2147483648
      %v3377 = vxor.u32 %v2481, 2147483648
      %v3378 = vxor.u32 %v2486, 2147483648
      %v3379 = vxor.u32 %v2489, 2147483648
      %v3380 = vxor.u32 %v2494, 2147483648
      %v3381 = vxor.u32 %v2497, 2147483648
      %v3382 = vxor.u32 %v2502, 2147483648
      %v3383 = vxor.u32 %v2505, 2147483648
      %v3384 = vxor.u32 %v2510, 2147483648
      %v3385 = vxor.u32 %v2513, 2147483648
      %v3386 = vxor.u32 %v2518, 2147483648
      %v3387 = vxor.u32 %v2521, 2147483648
      %v3388 = vxor.u32 %v2526, 2147483648
      %v3389 = vxor.u32 %v2529, 2147483648
      %v3390 = vxor.u32 %v2534, 2147483648
      %v3391 = vxor.u32 %v2537, 2147483648
      %v3392 = vxor.u32 %v2542, 2147483648
      %v3393 = vxor.u32 %v2545, 2147483648
      %v3394 = vxor.u32 %v2550, 2147483648
      %v3395 = vxor.u32 %v2553, 2147483648
      %v3396 = vxor.u32 %v2558, 2147483648
      %v3397 = vxor.u32 %v2561, 2147483648
      %v3398 = vxor.u32 %v2566, 2147483648
      %v3399 = vxor.u32 %v2569, 2147483648
      %v3400 = vxor.u32 %v2574, 2147483648
      %v3401 = vxor.u32 %v2577, 2147483648
      %v3402 = vxor.u32 %v2582, 2147483648
      %v3403 = vxor.u32 %v2585, 2147483648
      %v3404 = vxor.u32 %v2590, 2147483648
      %v3405 = vxor.u32 %v2593, 2147483648
      %v3406 = vxor.u32 %v2598, 2147483648
      %v3407 = vxor.u32 %v2601, 2147483648
      %v3408 = vxor.u32 %v2606, 2147483648
      %v3409 = vxor.u32 %v2609, 2147483648
      %v3410 = vxor.u32 %v2614, 2147483648
      %v3411 = vxor.u32 %v2617, 2147483648
      %v3412 = vxor.u32 %v2622, 2147483648
      %v3413 = vxor.u32 %v2625, 2147483648
      %v3414 = vxor.u32 %v2630, 2147483648
      %v3415 = vxor.u32 %v2633, 2147483648
      %v3416 = vxor.u32 %v2638, 2147483648
      %v3417 = vxor.u32 %v2641, 2147483648
      %v3418 = vxor.u32 %v2646, 2147483648
      %v3419 = vxor.u32 %v2649, 2147483648
      %v3420 = vxor.u32 %v2654, 2147483648
      %v3421 = vxor.u32 %v2657, 2147483648
      %v3422 = vxor.u32 %v2662, 2147483648
      %v3423 = vxor.u32 %v2665, 2147483648
      %v3424 = vxor.u32 %v2670, 2147483648
      %v3425 = vxor.u32 %v2673, 2147483648
      %v3426 = vxor.u32 %v2678, 2147483648
      %v3427 = vxor.u32 %v2681, 2147483648
      %v3428 = vxor.u32 %v2686, 2147483648
      %v3429 = vxor.u32 %v2689, 2147483648
      %v3430 = vxor.u32 %v2694, 2147483648
      %v3431 = vxor.u32 %v2697, 2147483648
      %v3432 = vxor.u32 %v2702, 2147483648
      %v3433 = vxor.u32 %v2705, 2147483648
      %v3434 = vxor.u32 %v2710, 2147483648
      %v3435 = vxor.u32 %v2713, 2147483648
      %v3436 = vxor.u32 %v2718, 2147483648
      %v3437 = vxor.u32 %v2721, 2147483648
      %v3438 = vxor.u32 %v2726, 2147483648
      %v3439 = vxor.u32 %v2729, 2147483648
      %v3440 = vxor.u32 %v2734, 2147483648
      %v3441 = vxor.u32 %v2737, 2147483648
      %v3442 = vxor.u32 %v2742, 2147483648
      %v3443 = vxor.u32 %v2745, 2147483648
      %v3444 = vxor.u32 %v2750, 2147483648
      %v3445 = vxor.u32 %v2753, 2147483648
      %v3446 = vxor.u32 %v2758, 2147483648
      %v3447 = vxor.u32 %v2761, 2147483648
      %v3448 = vxor.u32 %v2766, 2147483648
      %v3449 = vxor.u32 %v2769, 2147483648
      %v3450 = vxor.u32 %v2774, 2147483648
      %v3451 = vxor.u32 %v2777, 2147483648
      %v3452 = vxor.u32 %v2782, 2147483648
      %v3453 = vxor.u32 %v2785, 2147483648
      %v3454 = vxor.u32 %v2790, 2147483648
      %v3455 = vxor.u32 %v2793, 2147483648
      %v3456 = vxor.u32 %v2798, 2147483648
      %v3457 = vxor.u32 %v2801, 2147483648
      %v3458 = vxor.u32 %v2806, 2147483648
      %v3459 = vxor.u32 %v2809, 2147483648
      %v3460 = vxor.u32 %v2814, 2147483648
      %v3461 = vxor.u32 %v2817, 2147483648
      %v3462 = vxor.u32 %v2822, 2147483648
      %v3463 = vxor.u32 %v2825, 2147483648
      %v3464 = vxor.u32 %v2830, 2147483648
      %v3465 = vxor.u32 %v2833, 2147483648
      %v3466 = vxor.u32 %v2838, 2147483648
      %v3467 = vxor.u32 %v2841, 2147483648
      %v3468 = vxor.u32 %v2846, 2147483648
      %v3469 = vxor.u32 %v2849, 2147483648
      %v3470 = vxor.u32 %v2854, 2147483648
      %v3471 = vxor.u32 %v2857, 2147483648
      %v3472 = vxor.u32 %v2862, 2147483648
      %v3473 = vxor.u32 %v2865, 2147483648
      %v3474 = vxor.u32 %v2870, 2147483648
      %v3475 = vxor.u32 %v2873, 2147483648
      %v3476 = vxor.u32 %v2878, 2147483648
      %v3477 = vxor.u32 %v2881, 2147483648
      %v3478 = vxor.u32 %v2886, 2147483648
      %v3479 = vxor.u32 %v2889, 2147483648
      %v3480 = vxor.u32 %v2894, 2147483648
      %v3481 = vxor.u32 %v2897, 2147483648
      %v3482 = vxor.u32 %v2902, 2147483648
      %v3483 = vxor.u32 %v2905, 2147483648
      %v3484 = vxor.u32 %v2910, 2147483648
      %v3485 = vxor.u32 %v2913, 2147483648
      %v3486 = vxor.u32 %v2918, 2147483648
      %v3487 = vxor.u32 %v2921, 2147483648
      %v3488 = vxor.u32 %v2926, 2147483648
      %v3489 = vxor.u32 %v2929, 2147483648
      %v3490 = vxor.u32 %v2934, 2147483648
      %v3491 = vxor.u32 %v2937, 2147483648
      %v3492 = vxor.u32 %v2942, 2147483648
      %v3493 = vxor.u32 %v2945, 2147483648
      %v3494 = vxor.u32 %v2950, 2147483648
      %v3495 = vxor.u32 %v2953, 2147483648
      %v3496 = vxor.u32 %v2958, 2147483648
      %v3497 = vxor.u32 %v2961, 2147483648
      %v3498 = vxor.u32 %v2966, 2147483648
      %v3499 = vxor.u32 %v2969, 2147483648
      %v3500 = vxor.u32 %v2974, 2147483648
      %v3501 = vxor.u32 %v2977, 2147483648
      %v3502 = vxor.u32 %v2982, 2147483648
      %v3503 = vxor.u32 %v2985, 2147483648
      %v3504 = vxor.u32 %v2990, 2147483648
      %v3505 = vxor.u32 %v2993, 2147483648
      %v3506 = vxor.u32 %v2998, 2147483648
      %v3507 = vxor.u32 %v3001, 2147483648
      %v3508 = vxor.u32 %v3006, 2147483648
      %v3509 = vxor.u32 %v3009, 2147483648
      %v3510 = vxor.u32 %v3014, 2147483648
      %v3511 = vxor.u32 %v3017, 2147483648
      %v3512 = vxor.u32 %v3022, 2147483648
      %v3513 = vxor.u32 %v3025, 2147483648
      %v3514 = vxor.u32 %v3030, 2147483648
      %v3515 = vxor.u32 %v3033, 2147483648
      %v3516 = vxor.u32 %v3038, 2147483648
      %v3517 = vxor.u32 %v3041, 2147483648
      %v3518 = vxor.u32 %v3046, 2147483648
      %v3519 = vxor.u32 %v3049, 2147483648
      %v3520 = vxor.u32 %v3054, 2147483648
      %v3521 = vxor.u32 %v3057, 2147483648
      %v3522 = vxor.u32 %v3062, 2147483648
      %v3523 = vxor.u32 %v3065, 2147483648
      %v3524 = vxor.u32 %v3070, 2147483648
      %v3525 = vxor.u32 %v3073, 2147483648
      %v3526 = vxor.u32 %v3078, 2147483648
      %v3527 = vxor.u32 %v3081, 2147483648
      %v3528 = vxor.u32 %v3086, 2147483648
      %v3529 = vxor.u32 %v3089, 2147483648
      %v3530 = vxor.u32 %v3094, 2147483648
      %v3531 = vxor.u32 %v3097, 2147483648
      %v3532 = vxor.u32 %v3102, 2147483648
      %v3533 = vxor.u32 %v3105, 2147483648
      %v3534 = vxor.u32 %v3110, 2147483648
      %v3535 = vxor.u32 %v3113, 2147483648
      %v3536 = vxor.u32 %v3118, 2147483648
      %v3537 = vxor.u32 %v3121, 2147483648
      %v3538 = vxor.u32 %v3126, 2147483648
      %v3539 = vxor.u32 %v3129, 2147483648
      %v3540 = vxor.u32 %v3134, 2147483648
      %v3541 = vxor.u32 %v3137, 2147483648
      %v3542 = vxor.u32 %v3142, 2147483648
      %v3543 = vxor.u32 %v3145, 2147483648
      %v3544 = vxor.u32 %v3150, 2147483648
      %v3545 = vxor.u32 %v3153, 2147483648
      %v3546 = vxor.u32 %v3158, 2147483648
      %v3547 = vxor.u32 %v3161, 2147483648
      %v3548 = vxor.u32 %v3166, 2147483648
      %v3549 = vxor.u32 %v3169, 2147483648
      %v3550 = vxor.u32 %v3174, 2147483648
      %v3551 = vxor.u32 %v3177, 2147483648
      %v3552 = vxor.u32 %v3182, 2147483648
      %v3553 = vxor.u32 %v3185, 2147483648
      %v3554 = vxor.u32 %v3190, 2147483648
      %v3555 = vxor.u32 %v3193, 2147483648
      %v3556 = vxor.u32 %v3198, 2147483648
      %v3557 = vxor.u32 %v3201, 2147483648
      %v3558 = vxor.u32 %v3206, 2147483648
      %v3559 = vxor.u32 %v3209, 2147483648
      %v3560 = vxor.u32 %v3214, 2147483648
      %v3561 = vxor.u32 %v3217, 2147483648
      %v3562 = vxor.u32 %v3222, 2147483648
      %v3563 = vxor.u32 %v3225, 2147483648
      %v3564 = vxor.u32 %v3230, 2147483648
      %v3565 = vxor.u32 %v3233, 2147483648
      %v3566 = vxor.u32 %v3238, 2147483648
      %v3567 = vxor.u32 %v3241, 2147483648
      %v3568 = vxor.u32 %v3246, 2147483648
      %v3569 = vxor.u32 %v3249, 2147483648
      %v3570 = vxor.u32 %v3254, 2147483648
      %v3571 = vxor.u32 %v3257, 2147483648
      %v3572 = vxor.u32 %v3262, 2147483648
      %v3573 = vxor.u32 %v3265, 2147483648
      %v3574 = vxor.u32 %v3270, 2147483648
      %v3575 = vxor.u32 %v3273, 2147483648
      %v3576 = vxor.u32 %v3278, 2147483648
      %v3577 = vxor.u32 %v3281, 2147483648
      %v3578 = vxor.u32 %v3286, 2147483648
      %v3579 = vxor.u32 %v3289, 2147483648
      %v3580 = vmul.f32 %v3292, 1.442695
      %v3581 = vpow.pop %v3580
      %v3582 = vmul.f32 %v3293, 1.442695
      %v3583 = vpow.pop %v3582
      %v3584 = vmul.f32 %v3294, 1.442695
      %v3585 = vpow.pop %v3584
      %v3586 = vmul.f32 %v3295, 1.442695
      %v3587 = vpow.pop %v3586
      %v3588 = vmul.f32 %v3296, 1.442695
      %v3589 = vpow.pop %v3588
      %v3590 = vmul.f32 %v3297, 1.442695
      %v3591 = vpow.pop %v3590
      %v3592 = vmul.f32 %v3298, 1.442695
      %v3593 = vpow.pop %v3592
      %v3594 = vmul.f32 %v3299, 1.442695
      %v3595 = vpow.pop %v3594
      %v3596 = vmul.f32 %v3300, 1.442695
      %v3597 = vpow.pop %v3596
      %v3598 = vmul.f32 %v3301, 1.442695
      %v3599 = vpow.pop %v3598
      %v3600 = vmul.f32 %v3302, 1.442695
      %v3601 = vpow.pop %v3600
      %v3602 = vmul.f32 %v3303, 1.442695
      %v3603 = vpow.pop %v3602
      %v3604 = vmul.f32 %v3304, 1.442695
      %v3605 = vpow.pop %v3604
      %v3606 = vmul.f32 %v3305, 1.442695
      %v3607 = vpow.pop %v3606
      %v3608 = vmul.f32 %v3306, 1.442695
      %v3609 = vpow.pop %v3608
      %v3610 = vmul.f32 %v3307, 1.442695
      %v3611 = vpow.pop %v3610
      %v3612 = vmul.f32 %v3308, 1.442695
      %v3613 = vpow.pop %v3612
      %v3614 = vmul.f32 %v3309, 1.442695
      %v3615 = vpow.pop %v3614
      %v3616 = vmul.f32 %v3310, 1.442695
      %v3617 = vpow.pop %v3616
      %v3618 = vmul.f32 %v3311, 1.442695
      %v3619 = vpow.pop %v3618
      %v3620 = vmul.f32 %v3312, 1.442695
      %v3621 = vpow.pop %v3620
      %v3622 = vmul.f32 %v3313, 1.442695
      %v3623 = vpow.pop %v3622
      %v3624 = vmul.f32 %v3314, 1.442695
      %v3625 = vpow.pop %v3624
      %v3626 = vmul.f32 %v3315, 1.442695
      %v3627 = vpow.pop %v3626
      %v3628 = vmul.f32 %v3316, 1.442695
      %v3629 = vpow.pop %v3628
      %v3630 = vmul.f32 %v3317, 1.442695
      %v3631 = vpow.pop %v3630
      %v3632 = vmul.f32 %v3318, 1.442695
      %v3633 = vpow.pop %v3632
      %v3634 = vmul.f32 %v3319, 1.442695
      %v3635 = vpow.pop %v3634
      %v3636 = vmul.f32 %v3320, 1.442695
      %v3637 = vpow.pop %v3636
      %v3638 = vmul.f32 %v3321, 1.442695
      %v3639 = vpow.pop %v3638
      %v3640 = vmul.f32 %v3322, 1.442695
      %v3641 = vpow.pop %v3640
      %v3642 = vmul.f32 %v3323, 1.442695
      %v3643 = vpow.pop %v3642
      %v3644 = vmul.f32 %v3324, 1.442695
      %v3645 = vpow.pop %v3644
      %v3646 = vmul.f32 %v3325, 1.442695
      %v3647 = vpow.pop %v3646
      %v3648 = vmul.f32 %v3326, 1.442695
      %v3649 = vpow.pop %v3648
      %v3650 = vmul.f32 %v3327, 1.442695
      %v3651 = vpow.pop %v3650
      %v3652 = vmul.f32 %v3328, 1.442695
      %v3653 = vpow.pop %v3652
      %v3654 = vmul.f32 %v3329, 1.442695
      %v3655 = vpow.pop %v3654
      %v3656 = vmul.f32 %v3330, 1.442695
      %v3657 = vpow.pop %v3656
      %v3658 = vmul.f32 %v3331, 1.442695
      %v3659 = vpow.pop %v3658
      %v3660 = vmul.f32 %v3332, 1.442695
      %v3661 = vpow.pop %v3660
      %v3662 = vmul.f32 %v3333, 1.442695
      %v3663 = vpow.pop %v3662
      %v3664 = vmul.f32 %v3334, 1.442695
      %v3665 = vpow.pop %v3664
      %v3666 = vmul.f32 %v3335, 1.442695
      %v3667 = vpow.pop %v3666
      %v3668 = vmul.f32 %v3336, 1.442695
      %v3669 = vpow.pop %v3668
      %v3670 = vmul.f32 %v3337, 1.442695
      %v3671 = vpow.pop %v3670
      %v3672 = vmul.f32 %v3338, 1.442695
      %v3673 = vpow.pop %v3672
      %v3674 = vmul.f32 %v3339, 1.442695
      %v3675 = vpow.pop %v3674
      %v3676 = vmul.f32 %v3340, 1.442695
      %v3677 = vpow.pop %v3676
      %v3678 = vmul.f32 %v3341, 1.442695
      %v3679 = vpow.pop %v3678
      %v3680 = vmul.f32 %v3342, 1.442695
      %v3681 = vpow.pop %v3680
      %v3682 = vmul.f32 %v3343, 1.442695
      %v3683 = vpow.pop %v3682
      %v3684 = vmul.f32 %v3344, 1.442695
      %v3685 = vpow.pop %v3684
      %v3686 = vmul.f32 %v3345, 1.442695
      %v3687 = vpow.pop %v3686
      %v3688 = vmul.f32 %v3346, 1.442695
      %v3689 = vpow.pop %v3688
      %v3690 = vmul.f32 %v3347, 1.442695
      %v3691 = vpow.pop %v3690
      %v3692 = vmul.f32 %v3348, 1.442695
      %v3693 = vpow.pop %v3692
      %v3694 = vmul.f32 %v3349, 1.442695
      %v3695 = vpow.pop %v3694
      %v3696 = vmul.f32 %v3350, 1.442695
      %v3697 = vpow.pop %v3696
      %v3698 = vmul.f32 %v3351, 1.442695
      %v3699 = vpow.pop %v3698
      %v3700 = vmul.f32 %v3352, 1.442695
      %v3701 = vpow.pop %v3700
      %v3702 = vmul.f32 %v3353, 1.442695
      %v3703 = vpow.pop %v3702
      %v3704 = vmul.f32 %v3354, 1.442695
      %v3705 = vpow.pop %v3704
      %v3706 = vmul.f32 %v3355, 1.442695
      %v3707 = vpow.pop %v3706
      %v3708 = vmul.f32 %v3356, 1.442695
      %v3709 = vpow.pop %v3708
      %v3710 = vmul.f32 %v3357, 1.442695
      %v3711 = vpow.pop %v3710
      %v3712 = vmul.f32 %v3358, 1.442695
      %v3713 = vpow.pop %v3712
      %v3714 = vmul.f32 %v3359, 1.442695
      %v3715 = vpow.pop %v3714
      %v3716 = vmul.f32 %v3360, 1.442695
      %v3717 = vpow.pop %v3716
      %v3718 = vmul.f32 %v3361, 1.442695
      %v3719 = vpow.pop %v3718
      %v3720 = vmul.f32 %v3362, 1.442695
      %v3721 = vpow.pop %v3720
      %v3722 = vmul.f32 %v3363, 1.442695
      %v3723 = vpow.pop %v3722
      %v3724 = vmul.f32 %v3364, 1.442695
      %v3725 = vpow.pop %v3724
      %v3726 = vmul.f32 %v3365, 1.442695
      %v3727 = vpow.pop %v3726
      %v3728 = vmul.f32 %v3366, 1.442695
      %v3729 = vpow.pop %v3728
      %v3730 = vmul.f32 %v3367, 1.442695
      %v3731 = vpow.pop %v3730
      %v3732 = vmul.f32 %v3368, 1.442695
      %v3733 = vpow.pop %v3732
      %v3734 = vmul.f32 %v3369, 1.442695
      %v3735 = vpow.pop %v3734
      %v3736 = vmul.f32 %v3370, 1.442695
      %v3737 = vpow.pop %v3736
      %v3738 = vmul.f32 %v3371, 1.442695
      %v3739 = vpow.pop %v3738
      %v3740 = vmul.f32 %v3372, 1.442695
      %v3741 = vpow.pop %v3740
      %v3742 = vmul.f32 %v3373, 1.442695
      %v3743 = vpow.pop %v3742
      %v3744 = vmul.f32 %v3374, 1.442695
      %v3745 = vpow.pop %v3744
      %v3746 = vmul.f32 %v3375, 1.442695
      %v3747 = vpow.pop %v3746
      %v3748 = vmul.f32 %v3376, 1.442695
      %v3749 = vpow.pop %v3748
      %v3750 = vmul.f32 %v3377, 1.442695
      %v3751 = vpow.pop %v3750
      %v3752 = vmul.f32 %v3378, 1.442695
      %v3753 = vpow.pop %v3752
      %v3754 = vmul.f32 %v3379, 1.442695
      %v3755 = vpow.pop %v3754
      %v3756 = vmul.f32 %v3380, 1.442695
      %v3757 = vpow.pop %v3756
      %v3758 = vmul.f32 %v3381, 1.442695
      %v3759 = vpow.pop %v3758
      %v3760 = vmul.f32 %v3382, 1.442695
      %v3761 = vpow.pop %v3760
      %v3762 = vmul.f32 %v3383, 1.442695
      %v3763 = vpow.pop %v3762
      %v3764 = vmul.f32 %v3384, 1.442695
      %v3765 = vpow.pop %v3764
      %v3766 = vmul.f32 %v3385, 1.442695
      %v3767 = vpow.pop %v3766
      %v3768 = vmul.f32 %v3386, 1.442695
      %v3769 = vpow.pop %v3768
      %v3770 = vmul.f32 %v3387, 1.442695
      %v3771 = vpow.pop %v3770
      %v3772 = vmul.f32 %v3388, 1.442695
      %v3773 = vpow.pop %v3772
      %v3774 = vmul.f32 %v3389, 1.442695
      %v3775 = vpow.pop %v3774
      %v3776 = vmul.f32 %v3390, 1.442695
      %v3777 = vpow.pop %v3776
      %v3778 = vmul.f32 %v3391, 1.442695
      %v3779 = vpow.pop %v3778
      %v3780 = vmul.f32 %v3392, 1.442695
      %v3781 = vpow.pop %v3780
      %v3782 = vmul.f32 %v3393, 1.442695
      %v3783 = vpow.pop %v3782
      %v3784 = vmul.f32 %v3394, 1.442695
      %v3785 = vpow.pop %v3784
      %v3786 = vmul.f32 %v3395, 1.442695
      %v3787 = vpow.pop %v3786
      %v3788 = vmul.f32 %v3396, 1.442695
      %v3789 = vpow.pop %v3788
      %v3790 = vmul.f32 %v3397, 1.442695
      %v3791 = vpow.pop %v3790
      %v3792 = vmul.f32 %v3398, 1.442695
      %v3793 = vpow.pop %v3792
      %v3794 = vmul.f32 %v3399, 1.442695
      %v3795 = vpow.pop %v3794
      %v3796 = vmul.f32 %v3400, 1.442695
      %v3797 = vpow.pop %v3796
      %v3798 = vmul.f32 %v3401, 1.442695
      %v3799 = vpow.pop %v3798
      %v3800 = vmul.f32 %v3402, 1.442695
      %v3801 = vpow.pop %v3800
      %v3802 = vmul.f32 %v3403, 1.442695
      %v3803 = vpow.pop %v3802
      %v3804 = vmul.f32 %v3404, 1.442695
      %v3805 = vpow.pop %v3804
      %v3806 = vmul.f32 %v3405, 1.442695
      %v3807 = vpow.pop %v3806
      %v3808 = vmul.f32 %v3406, 1.442695
      %v3809 = vpow.pop %v3808
      %v3810 = vmul.f32 %v3407, 1.442695
      %v3811 = vpow.pop %v3810
      %v3812 = vmul.f32 %v3408, 1.442695
      %v3813 = vpow.pop %v3812
      %v3814 = vmul.f32 %v3409, 1.442695
      %v3815 = vpow.pop %v3814
      %v3816 = vmul.f32 %v3410, 1.442695
      %v3817 = vpow.pop %v3816
      %v3818 = vmul.f32 %v3411, 1.442695
      %v3819 = vpow.pop %v3818
      %v3820 = vmul.f32 %v3412, 1.442695
      %v3821 = vpow.pop %v3820
      %v3822 = vmul.f32 %v3413, 1.442695
      %v3823 = vpow.pop %v3822
      %v3824 = vmul.f32 %v3414, 1.442695
      %v3825 = vpow.pop %v3824
      %v3826 = vmul.f32 %v3415, 1.442695
      %v3827 = vpow.pop %v3826
      %v3828 = vmul.f32 %v3416, 1.442695
      %v3829 = vpow.pop %v3828
      %v3830 = vmul.f32 %v3417, 1.442695
      %v3831 = vpow.pop %v3830
      %v3832 = vmul.f32 %v3418, 1.442695
      %v3833 = vpow.pop %v3832
      %v3834 = vmul.f32 %v3419, 1.442695
      %v3835 = vpow.pop %v3834
      %v3836 = vmul.f32 %v3420, 1.442695
      %v3837 = vpow.pop %v3836
      %v3838 = vmul.f32 %v3421, 1.442695
      %v3839 = vpow.pop %v3838
      %v3840 = vmul.f32 %v3422, 1.442695
      %v3841 = vpow.pop %v3840
      %v3842 = vmul.f32 %v3423, 1.442695
      %v3843 = vpow.pop %v3842
      %v3844 = vmul.f32 %v3424, 1.442695
      %v3845 = vpow.pop %v3844
      %v3846 = vmul.f32 %v3425, 1.442695
      %v3847 = vpow.pop %v3846
      %v3848 = vmul.f32 %v3426, 1.442695
      %v3849 = vpow.pop %v3848
      %v3850 = vmul.f32 %v3427, 1.442695
      %v3851 = vpow.pop %v3850
      %v3852 = vmul.f32 %v3428, 1.442695
      %v3853 = vpow.pop %v3852
      %v3854 = vmul.f32 %v3429, 1.442695
      %v3855 = vpow.pop %v3854
      %v3856 = vmul.f32 %v3430, 1.442695
      %v3857 = vpow.pop %v3856
      %v3858 = vmul.f32 %v3431, 1.442695
      %v3859 = vpow.pop %v3858
      %v3860 = vmul.f32 %v3432, 1.442695
      %v3861 = vpow.pop %v3860
      %v3862 = vmul.f32 %v3433, 1.442695
      %v3863 = vpow.pop %v3862
      %v3864 = vmul.f32 %v3434, 1.442695
      %v3865 = vpow.pop %v3864
      %v3866 = vmul.f32 %v3435, 1.442695
      %v3867 = vpow.pop %v3866
      %v3868 = vmul.f32 %v3436, 1.442695
      %v3869 = vpow.pop %v3868
      %v3870 = vmul.f32 %v3437, 1.442695
      %v3871 = vpow.pop %v3870
      %v3872 = vmul.f32 %v3438, 1.442695
      %v3873 = vpow.pop %v3872
      %v3874 = vmul.f32 %v3439, 1.442695
      %v3875 = vpow.pop %v3874
      %v3876 = vmul.f32 %v3440, 1.442695
      %v3877 = vpow.pop %v3876
      %v3878 = vmul.f32 %v3441, 1.442695
      %v3879 = vpow.pop %v3878
      %v3880 = vmul.f32 %v3442, 1.442695
      %v3881 = vpow.pop %v3880
      %v3882 = vmul.f32 %v3443, 1.442695
      %v3883 = vpow.pop %v3882
      %v3884 = vmul.f32 %v3444, 1.442695
      %v3885 = vpow.pop %v3884
      %v3886 = vmul.f32 %v3445, 1.442695
      %v3887 = vpow.pop %v3886
      %v3888 = vmul.f32 %v3446, 1.442695
      %v3889 = vpow.pop %v3888
      %v3890 = vmul.f32 %v3447, 1.442695
      %v3891 = vpow.pop %v3890
      %v3892 = vmul.f32 %v3448, 1.442695
      %v3893 = vpow.pop %v3892
      %v3894 = vmul.f32 %v3449, 1.442695
      %v3895 = vpow.pop %v3894
      %v3896 = vmul.f32 %v3450, 1.442695
      %v3897 = vpow.pop %v3896
      %v3898 = vmul.f32 %v3451, 1.442695
      %v3899 = vpow.pop %v3898
      %v3900 = vmul.f32 %v3452, 1.442695
      %v3901 = vpow.pop %v3900
      %v3902 = vmul.f32 %v3453, 1.442695
      %v3903 = vpow.pop %v3902
      %v3904 = vmul.f32 %v3454, 1.442695
      %v3905 = vpow.pop %v3904
      %v3906 = vmul.f32 %v3455, 1.442695
      %v3907 = vpow.pop %v3906
      %v3908 = vmul.f32 %v3456, 1.442695
      %v3909 = vpow.pop %v3908
      %v3910 = vmul.f32 %v3457, 1.442695
      %v3911 = vpow.pop %v3910
      %v3912 = vmul.f32 %v3458, 1.442695
      %v3913 = vpow.pop %v3912
      %v3914 = vmul.f32 %v3459, 1.442695
      %v3915 = vpow.pop %v3914
      %v3916 = vmul.f32 %v3460, 1.442695
      %v3917 = vpow.pop %v3916
      %v3918 = vmul.f32 %v3461, 1.442695
      %v3919 = vpow.pop %v3918
      %v3920 = vmul.f32 %v3462, 1.442695
      %v3921 = vpow.pop %v3920
      %v3922 = vmul.f32 %v3463, 1.442695
      %v3923 = vpow.pop %v3922
      %v3924 = vmul.f32 %v3464, 1.442695
      %v3925 = vpow.pop %v3924
      %v3926 = vmul.f32 %v3465, 1.442695
      %v3927 = vpow.pop %v3926
      %v3928 = vmul.f32 %v3466, 1.442695
      %v3929 = vpow.pop %v3928
      %v3930 = vmul.f32 %v3467, 1.442695
      %v3931 = vpow.pop %v3930
      %v3932 = vmul.f32 %v3468, 1.442695
      %v3933 = vpow.pop %v3932
      %v3934 = vmul.f32 %v3469, 1.442695
      %v3935 = vpow.pop %v3934
      %v3936 = vmul.f32 %v3470, 1.442695
      %v3937 = vpow.pop %v3936
      %v3938 = vmul.f32 %v3471, 1.442695
      %v3939 = vpow.pop %v3938
      %v3940 = vmul.f32 %v3472, 1.442695
      %v3941 = vpow.pop %v3940
      %v3942 = vmul.f32 %v3473, 1.442695
      %v3943 = vpow.pop %v3942
      %v3944 = vmul.f32 %v3474, 1.442695
      %v3945 = vpow.pop %v3944
      %v3946 = vmul.f32 %v3475, 1.442695
      %v3947 = vpow.pop %v3946
      %v3948 = vmul.f32 %v3476, 1.442695
      %v3949 = vpow.pop %v3948
      %v3950 = vmul.f32 %v3477, 1.442695
      %v3951 = vpow.pop %v3950
      %v3952 = vmul.f32 %v3478, 1.442695
      %v3953 = vpow.pop %v3952
      %v3954 = vmul.f32 %v3479, 1.442695
      %v3955 = vpow.pop %v3954
      %v3956 = vmul.f32 %v3480, 1.442695
      %v3957 = vpow.pop %v3956
      %v3958 = vmul.f32 %v3481, 1.442695
      %v3959 = vpow.pop %v3958
      %v3960 = vmul.f32 %v3482, 1.442695
      %v3961 = vpow.pop %v3960
      %v3962 = vmul.f32 %v3483, 1.442695
      %v3963 = vpow.pop %v3962
      %v3964 = vmul.f32 %v3484, 1.442695
      %v3965 = vpow.pop %v3964
      %v3966 = vmul.f32 %v3485, 1.442695
      %v3967 = vpow.pop %v3966
      %v3968 = vmul.f32 %v3486, 1.442695
      %v3969 = vpow.pop %v3968
      %v3970 = vmul.f32 %v3487, 1.442695
      %v3971 = vpow.pop %v3970
      %v3972 = vmul.f32 %v3488, 1.442695
      %v3973 = vpow.pop %v3972
      %v3974 = vmul.f32 %v3489, 1.442695
      %v3975 = vpow.pop %v3974
      %v3976 = vmul.f32 %v3490, 1.442695
      %v3977 = vpow.pop %v3976
      %v3978 = vmul.f32 %v3491, 1.442695
      %v3979 = vpow.pop %v3978
      %v3980 = vmul.f32 %v3492, 1.442695
      %v3981 = vpow.pop %v3980
      %v3982 = vmul.f32 %v3493, 1.442695
      %v3983 = vpow.pop %v3982
      %v3984 = vmul.f32 %v3494, 1.442695
      %v3985 = vpow.pop %v3984
      %v3986 = vmul.f32 %v3495, 1.442695
      %v3987 = vpow.pop %v3986
      %v3988 = vmul.f32 %v3496, 1.442695
      %v3989 = vpow.pop %v3988
      %v3990 = vmul.f32 %v3497, 1.442695
      %v3991 = vpow.pop %v3990
      %v3992 = vmul.f32 %v3498, 1.442695
      %v3993 = vpow.pop %v3992
      %v3994 = vmul.f32 %v3499, 1.442695
      %v3995 = vpow.pop %v3994
      %v3996 = vmul.f32 %v3500, 1.442695
      %v3997 = vpow.pop %v3996
      %v3998 = vmul.f32 %v3501, 1.442695
      %v3999 = vpow.pop %v3998
      %v4000 = vmul.f32 %v3502, 1.442695
      %v4001 = vpow.pop %v4000
      %v4002 = vmul.f32 %v3503, 1.442695
      %v4003 = vpow.pop %v4002
      %v4004 = vmul.f32 %v3504, 1.442695
      %v4005 = vpow.pop %v4004
      %v4006 = vmul.f32 %v3505, 1.442695
      %v4007 = vpow.pop %v4006
      %v4008 = vmul.f32 %v3506, 1.442695
      %v4009 = vpow.pop %v4008
      %v4010 = vmul.f32 %v3507, 1.442695
      %v4011 = vpow.pop %v4010
      %v4012 = vmul.f32 %v3508, 1.442695
      %v4013 = vpow.pop %v4012
      %v4014 = vmul.f32 %v3509, 1.442695
      %v4015 = vpow.pop %v4014
      %v4016 = vmul.f32 %v3510, 1.442695
      %v4017 = vpow.pop %v4016
      %v4018 = vmul.f32 %v3511, 1.442695
      %v4019 = vpow.pop %v4018
      %v4020 = vmul.f32 %v3512, 1.442695
      %v4021 = vpow.pop %v4020
      %v4022 = vmul.f32 %v3513, 1.442695
      %v4023 = vpow.pop %v4022
      %v4024 = vmul.f32 %v3514, 1.442695
      %v4025 = vpow.pop %v4024
      %v4026 = vmul.f32 %v3515, 1.442695
      %v4027 = vpow.pop %v4026
      %v4028 = vmul.f32 %v3516, 1.442695
      %v4029 = vpow.pop %v4028
      %v4030 = vmul.f32 %v3517, 1.442695
      %v4031 = vpow.pop %v4030
      %v4032 = vmul.f32 %v3518, 1.442695
      %v4033 = vpow.pop %v4032
      %v4034 = vmul.f32 %v3519, 1.442695
      %v4035 = vpow.pop %v4034
      %v4036 = vmul.f32 %v3520, 1.442695
      %v4037 = vpow.pop %v4036
      %v4038 = vmul.f32 %v3521, 1.442695
      %v4039 = vpow.pop %v4038
      %v4040 = vmul.f32 %v3522, 1.442695
      %v4041 = vpow.pop %v4040
      %v4042 = vmul.f32 %v3523, 1.442695
      %v4043 = vpow.pop %v4042
      %v4044 = vmul.f32 %v3524, 1.442695
      %v4045 = vpow.pop %v4044
      %v4046 = vmul.f32 %v3525, 1.442695
      %v4047 = vpow.pop %v4046
      %v4048 = vmul.f32 %v3526, 1.442695
      %v4049 = vpow.pop %v4048
      %v4050 = vmul.f32 %v3527, 1.442695
      %v4051 = vpow.pop %v4050
      %v4052 = vmul.f32 %v3528, 1.442695
      %v4053 = vpow.pop %v4052
      %v4054 = vmul.f32 %v3529, 1.442695
      %v4055 = vpow.pop %v4054
      %v4056 = vmul.f32 %v3530, 1.442695
      %v4057 = vpow.pop %v4056
      %v4058 = vmul.f32 %v3531, 1.442695
      %v4059 = vpow.pop %v4058
      %v4060 = vmul.f32 %v3532, 1.442695
      %v4061 = vpow.pop %v4060
      %v4062 = vmul.f32 %v3533, 1.442695
      %v4063 = vpow.pop %v4062
      %v4064 = vmul.f32 %v3534, 1.442695
      %v4065 = vpow.pop %v4064
      %v4066 = vmul.f32 %v3535, 1.442695
      %v4067 = vpow.pop %v4066
      %v4068 = vmul.f32 %v3536, 1.442695
      %v4069 = vpow.pop %v4068
      %v4070 = vmul.f32 %v3537, 1.442695
      %v4071 = vpow.pop %v4070
      %v4072 = vmul.f32 %v3538, 1.442695
      %v4073 = vpow.pop %v4072
      %v4074 = vmul.f32 %v3539, 1.442695
      %v4075 = vpow.pop %v4074
      %v4076 = vmul.f32 %v3540, 1.442695
      %v4077 = vpow.pop %v4076
      %v4078 = vmul.f32 %v3541, 1.442695
      %v4079 = vpow.pop %v4078
      %v4080 = vmul.f32 %v3542, 1.442695
      %v4081 = vpow.pop %v4080
      %v4082 = vmul.f32 %v3543, 1.442695
      %v4083 = vpow.pop %v4082
      %v4084 = vmul.f32 %v3544, 1.442695
      %v4085 = vpow.pop %v4084
      %v4086 = vmul.f32 %v3545, 1.442695
      %v4087 = vpow.pop %v4086
      %v4088 = vmul.f32 %v3546, 1.442695
      %v4089 = vpow.pop %v4088
      %v4090 = vmul.f32 %v3547, 1.442695
      %v4091 = vpow.pop %v4090
      %v4092 = vmul.f32 %v3548, 1.442695
      %v4093 = vpow.pop %v4092
      %v4094 = vmul.f32 %v3549, 1.442695
      %v4095 = vpow.pop %v4094
      %v4096 = vmul.f32 %v3550, 1.442695
      %v4097 = vpow.pop %v4096
      %v4098 = vmul.f32 %v3551, 1.442695
      %v4099 = vpow.pop %v4098
      %v4100 = vmul.f32 %v3552, 1.442695
      %v4101 = vpow.pop %v4100
      %v4102 = vmul.f32 %v3553, 1.442695
      %v4103 = vpow.pop %v4102
      %v4104 = vmul.f32 %v3554, 1.442695
      %v4105 = vpow.pop %v4104
      %v4106 = vmul.f32 %v3555, 1.442695
      %v4107 = vpow.pop %v4106
      %v4108 = vmul.f32 %v3556, 1.442695
      %v4109 = vpow.pop %v4108
      %v4110 = vmul.f32 %v3557, 1.442695
      %v4111 = vpow.pop %v4110
      %v4112 = vmul.f32 %v3558, 1.442695
      %v4113 = vpow.pop %v4112
      %v4114 = vmul.f32 %v3559, 1.442695
      %v4115 = vpow.pop %v4114
      %v4116 = vmul.f32 %v3560, 1.442695
      %v4117 = vpow.pop %v4116
      %v4118 = vmul.f32 %v3561, 1.442695
      %v4119 = vpow.pop %v4118
      %v4120 = vmul.f32 %v3562, 1.442695
      %v4121 = vpow.pop %v4120
      %v4122 = vmul.f32 %v3563, 1.442695
      %v4123 = vpow.pop %v4122
      %v4124 = vmul.f32 %v3564, 1.442695
      %v4125 = vpow.pop %v4124
      %v4126 = vmul.f32 %v3565, 1.442695
      %v4127 = vpow.pop %v4126
      %v4128 = vmul.f32 %v3566, 1.442695
      %v4129 = vpow.pop %v4128
      %v4130 = vmul.f32 %v3567, 1.442695
      %v4131 = vpow.pop %v4130
      %v4132 = vmul.f32 %v3568, 1.442695
      %v4133 = vpow.pop %v4132
      %v4134 = vmul.f32 %v3569, 1.442695
      %v4135 = vpow.pop %v4134
      %v4136 = vmul.f32 %v3570, 1.442695
      %v4137 = vpow.pop %v4136
      %v4138 = vmul.f32 %v3571, 1.442695
      %v4139 = vpow.pop %v4138
      %v4140 = vmul.f32 %v3572, 1.442695
      %v4141 = vpow.pop %v4140
      %v4142 = vmul.f32 %v3573, 1.442695
      %v4143 = vpow.pop %v4142
      %v4144 = vmul.f32 %v3574, 1.442695
      %v4145 = vpow.pop %v4144
      %v4146 = vmul.f32 %v3575, 1.442695
      %v4147 = vpow.pop %v4146
      %v4148 = vmul.f32 %v3576, 1.442695
      %v4149 = vpow.pop %v4148
      %v4150 = vmul.f32 %v3577, 1.442695
      %v4151 = vpow.pop %v4150
      %v4152 = vmul.f32 %v3578, 1.442695
      %v4153 = vpow.pop %v4152
      %v4154 = vmul.f32 %v3579, 1.442695
      %v4155 = vpow.pop %v4154
      %v4156 = vadd.f32 %v3581, 1.0
      %v4157 = vadd.f32 %v3583, 1.0
      %v4158 = vadd.f32 %v3585, 1.0
      %v4159 = vadd.f32 %v3587, 1.0
      %v4160 = vadd.f32 %v3589, 1.0
      %v4161 = vadd.f32 %v3591, 1.0
      %v4162 = vadd.f32 %v3593, 1.0
      %v4163 = vadd.f32 %v3595, 1.0
      %v4164 = vadd.f32 %v3597, 1.0
      %v4165 = vadd.f32 %v3599, 1.0
      %v4166 = vadd.f32 %v3601, 1.0
      %v4167 = vadd.f32 %v3603, 1.0
      %v4168 = vadd.f32 %v3605, 1.0
      %v4169 = vadd.f32 %v3607, 1.0
      %v4170 = vadd.f32 %v3609, 1.0
      %v4171 = vadd.f32 %v3611, 1.0
      %v4172 = vadd.f32 %v3613, 1.0
      %v4173 = vadd.f32 %v3615, 1.0
      %v4174 = vadd.f32 %v3617, 1.0
      %v4175 = vadd.f32 %v3619, 1.0
      %v4176 = vadd.f32 %v3621, 1.0
      %v4177 = vadd.f32 %v3623, 1.0
      %v4178 = vadd.f32 %v3625, 1.0
      %v4179 = vadd.f32 %v3627, 1.0
      %v4180 = vadd.f32 %v3629, 1.0
      %v4181 = vadd.f32 %v3631, 1.0
      %v4182 = vadd.f32 %v3633, 1.0
      %v4183 = vadd.f32 %v3635, 1.0
      %v4184 = vadd.f32 %v3637, 1.0
      %v4185 = vadd.f32 %v3639, 1.0
      %v4186 = vadd.f32 %v3641, 1.0
      %v4187 = vadd.f32 %v3643, 1.0
      %v4188 = vadd.f32 %v3645, 1.0
      %v4189 = vadd.f32 %v3647, 1.0
      %v4190 = vadd.f32 %v3649, 1.0
      %v4191 = vadd.f32 %v3651, 1.0
      %v4192 = vadd.f32 %v3653, 1.0
      %v4193 = vadd.f32 %v3655, 1.0
      %v4194 = vadd.f32 %v3657, 1.0
      %v4195 = vadd.f32 %v3659, 1.0
      %v4196 = vadd.f32 %v3661, 1.0
      %v4197 = vadd.f32 %v3663, 1.0
      %v4198 = vadd.f32 %v3665, 1.0
      %v4199 = vadd.f32 %v3667, 1.0
      %v4200 = vadd.f32 %v3669, 1.0
      %v4201 = vadd.f32 %v3671, 1.0
      %v4202 = vadd.f32 %v3673, 1.0
      %v4203 = vadd.f32 %v3675, 1.0
      %v4204 = vadd.f32 %v3677, 1.0
      %v4205 = vadd.f32 %v3679, 1.0
      %v4206 = vadd.f32 %v3681, 1.0
      %v4207 = vadd.f32 %v3683, 1.0
      %v4208 = vadd.f32 %v3685, 1.0
      %v4209 = vadd.f32 %v3687, 1.0
      %v4210 = vadd.f32 %v3689, 1.0
      %v4211 = vadd.f32 %v3691, 1.0
      %v4212 = vadd.f32 %v3693, 1.0
      %v4213 = vadd.f32 %v3695, 1.0
      %v4214 = vadd.f32 %v3697, 1.0
      %v4215 = vadd.f32 %v3699, 1.0
      %v4216 = vadd.f32 %v3701, 1.0
      %v4217 = vadd.f32 %v3703, 1.0
      %v4218 = vadd.f32 %v3705, 1.0
      %v4219 = vadd.f32 %v3707, 1.0
      %v4220 = vadd.f32 %v3709, 1.0
      %v4221 = vadd.f32 %v3711, 1.0
      %v4222 = vadd.f32 %v3713, 1.0
      %v4223 = vadd.f32 %v3715, 1.0
      %v4224 = vadd.f32 %v3717, 1.0
      %v4225 = vadd.f32 %v3719, 1.0
      %v4226 = vadd.f32 %v3721, 1.0
      %v4227 = vadd.f32 %v3723, 1.0
      %v4228 = vadd.f32 %v3725, 1.0
      %v4229 = vadd.f32 %v3727, 1.0
      %v4230 = vadd.f32 %v3729, 1.0
      %v4231 = vadd.f32 %v3731, 1.0
      %v4232 = vadd.f32 %v3733, 1.0
      %v4233 = vadd.f32 %v3735, 1.0
      %v4234 = vadd.f32 %v3737, 1.0
      %v4235 = vadd.f32 %v3739, 1.0
      %v4236 = vadd.f32 %v3741, 1.0
      %v4237 = vadd.f32 %v3743, 1.0
      %v4238 = vadd.f32 %v3745, 1.0
      %v4239 = vadd.f32 %v3747, 1.0
      %v4240 = vadd.f32 %v3749, 1.0
      %v4241 = vadd.f32 %v3751, 1.0
      %v4242 = vadd.f32 %v3753, 1.0
      %v4243 = vadd.f32 %v3755, 1.0
      %v4244 = vadd.f32 %v3757, 1.0
      %v4245 = vadd.f32 %v3759, 1.0
      %v4246 = vadd.f32 %v3761, 1.0
      %v4247 = vadd.f32 %v3763, 1.0
      %v4248 = vadd.f32 %v3765, 1.0
      %v4249 = vadd.f32 %v3767, 1.0
      %v4250 = vadd.f32 %v3769, 1.0
      %v4251 = vadd.f32 %v3771, 1.0
      %v4252 = vadd.f32 %v3773, 1.0
      %v4253 = vadd.f32 %v3775, 1.0
      %v4254 = vadd.f32 %v3777, 1.0
      %v4255 = vadd.f32 %v3779, 1.0
      %v4256 = vadd.f32 %v3781, 1.0
      %v4257 = vadd.f32 %v3783, 1.0
      %v4258 = vadd.f32 %v3785, 1.0
      %v4259 = vadd.f32 %v3787, 1.0
      %v4260 = vadd.f32 %v3789, 1.0
      %v4261 = vadd.f32 %v3791, 1.0
      %v4262 = vadd.f32 %v3793, 1.0
      %v4263 = vadd.f32 %v3795, 1.0
      %v4264 = vadd.f32 %v3797, 1.0
      %v4265 = vadd.f32 %v3799, 1.0
      %v4266 = vadd.f32 %v3801, 1.0
      %v4267 = vadd.f32 %v3803, 1.0
      %v4268 = vadd.f32 %v3805, 1.0
      %v4269 = vadd.f32 %v3807, 1.0
      %v4270 = vadd.f32 %v3809, 1.0
      %v4271 = vadd.f32 %v3811, 1.0
      %v4272 = vadd.f32 %v3813, 1.0
      %v4273 = vadd.f32 %v3815, 1.0
      %v4274 = vadd.f32 %v3817, 1.0
      %v4275 = vadd.f32 %v3819, 1.0
      %v4276 = vadd.f32 %v3821, 1.0
      %v4277 = vadd.f32 %v3823, 1.0
      %v4278 = vadd.f32 %v3825, 1.0
      %v4279 = vadd.f32 %v3827, 1.0
      %v4280 = vadd.f32 %v3829, 1.0
      %v4281 = vadd.f32 %v3831, 1.0
      %v4282 = vadd.f32 %v3833, 1.0
      %v4283 = vadd.f32 %v3835, 1.0
      %v4284 = vadd.f32 %v3837, 1.0
      %v4285 = vadd.f32 %v3839, 1.0
      %v4286 = vadd.f32 %v3841, 1.0
      %v4287 = vadd.f32 %v3843, 1.0
      %v4288 = vadd.f32 %v3845, 1.0
      %v4289 = vadd.f32 %v3847, 1.0
      %v4290 = vadd.f32 %v3849, 1.0
      %v4291 = vadd.f32 %v3851, 1.0
      %v4292 = vadd.f32 %v3853, 1.0
      %v4293 = vadd.f32 %v3855, 1.0
      %v4294 = vadd.f32 %v3857, 1.0
      %v4295 = vadd.f32 %v3859, 1.0
      %v4296 = vadd.f32 %v3861, 1.0
      %v4297 = vadd.f32 %v3863, 1.0
      %v4298 = vadd.f32 %v3865, 1.0
      %v4299 = vadd.f32 %v3867, 1.0
      %v4300 = vadd.f32 %v3869, 1.0
      %v4301 = vadd.f32 %v3871, 1.0
      %v4302 = vadd.f32 %v3873, 1.0
      %v4303 = vadd.f32 %v3875, 1.0
      %v4304 = vadd.f32 %v3877, 1.0
      %v4305 = vadd.f32 %v3879, 1.0
      %v4306 = vadd.f32 %v3881, 1.0
      %v4307 = vadd.f32 %v3883, 1.0
      %v4308 = vadd.f32 %v3885, 1.0
      %v4309 = vadd.f32 %v3887, 1.0
      %v4310 = vadd.f32 %v3889, 1.0
      %v4311 = vadd.f32 %v3891, 1.0
      %v4312 = vadd.f32 %v3893, 1.0
      %v4313 = vadd.f32 %v3895, 1.0
      %v4314 = vadd.f32 %v3897, 1.0
      %v4315 = vadd.f32 %v3899, 1.0
      %v4316 = vadd.f32 %v3901, 1.0
      %v4317 = vadd.f32 %v3903, 1.0
      %v4318 = vadd.f32 %v3905, 1.0
      %v4319 = vadd.f32 %v3907, 1.0
      %v4320 = vadd.f32 %v3909, 1.0
      %v4321 = vadd.f32 %v3911, 1.0
      %v4322 = vadd.f32 %v3913, 1.0
      %v4323 = vadd.f32 %v3915, 1.0
      %v4324 = vadd.f32 %v3917, 1.0
      %v4325 = vadd.f32 %v3919, 1.0
      %v4326 = vadd.f32 %v3921, 1.0
      %v4327 = vadd.f32 %v3923, 1.0
      %v4328 = vadd.f32 %v3925, 1.0
      %v4329 = vadd.f32 %v3927, 1.0
      %v4330 = vadd.f32 %v3929, 1.0
      %v4331 = vadd.f32 %v3931, 1.0
      %v4332 = vadd.f32 %v3933, 1.0
      %v4333 = vadd.f32 %v3935, 1.0
      %v4334 = vadd.f32 %v3937, 1.0
      %v4335 = vadd.f32 %v3939, 1.0
      %v4336 = vadd.f32 %v3941, 1.0
      %v4337 = vadd.f32 %v3943, 1.0
      %v4338 = vadd.f32 %v3945, 1.0
      %v4339 = vadd.f32 %v3947, 1.0
      %v4340 = vadd.f32 %v3949, 1.0
      %v4341 = vadd.f32 %v3951, 1.0
      %v4342 = vadd.f32 %v3953, 1.0
      %v4343 = vadd.f32 %v3955, 1.0
      %v4344 = vadd.f32 %v3957, 1.0
      %v4345 = vadd.f32 %v3959, 1.0
      %v4346 = vadd.f32 %v3961, 1.0
      %v4347 = vadd.f32 %v3963, 1.0
      %v4348 = vadd.f32 %v3965, 1.0
      %v4349 = vadd.f32 %v3967, 1.0
      %v4350 = vadd.f32 %v3969, 1.0
      %v4351 = vadd.f32 %v3971, 1.0
      %v4352 = vadd.f32 %v3973, 1.0
      %v4353 = vadd.f32 %v3975, 1.0
      %v4354 = vadd.f32 %v3977, 1.0
      %v4355 = vadd.f32 %v3979, 1.0
      %v4356 = vadd.f32 %v3981, 1.0
      %v4357 = vadd.f32 %v3983, 1.0
      %v4358 = vadd.f32 %v3985, 1.0
      %v4359 = vadd.f32 %v3987, 1.0
      %v4360 = vadd.f32 %v3989, 1.0
      %v4361 = vadd.f32 %v3991, 1.0
      %v4362 = vadd.f32 %v3993, 1.0
      %v4363 = vadd.f32 %v3995, 1.0
      %v4364 = vadd.f32 %v3997, 1.0
      %v4365 = vadd.f32 %v3999, 1.0
      %v4366 = vadd.f32 %v4001, 1.0
      %v4367 = vadd.f32 %v4003, 1.0
      %v4368 = vadd.f32 %v4005, 1.0
      %v4369 = vadd.f32 %v4007, 1.0
      %v4370 = vadd.f32 %v4009, 1.0
      %v4371 = vadd.f32 %v4011, 1.0
      %v4372 = vadd.f32 %v4013, 1.0
      %v4373 = vadd.f32 %v4015, 1.0
      %v4374 = vadd.f32 %v4017, 1.0
      %v4375 = vadd.f32 %v4019, 1.0
      %v4376 = vadd.f32 %v4021, 1.0
      %v4377 = vadd.f32 %v4023, 1.0
      %v4378 = vadd.f32 %v4025, 1.0
      %v4379 = vadd.f32 %v4027, 1.0
      %v4380 = vadd.f32 %v4029, 1.0
      %v4381 = vadd.f32 %v4031, 1.0
      %v4382 = vadd.f32 %v4033, 1.0
      %v4383 = vadd.f32 %v4035, 1.0
      %v4384 = vadd.f32 %v4037, 1.0
      %v4385 = vadd.f32 %v4039, 1.0
      %v4386 = vadd.f32 %v4041, 1.0
      %v4387 = vadd.f32 %v4043, 1.0
      %v4388 = vadd.f32 %v4045, 1.0
      %v4389 = vadd.f32 %v4047, 1.0
      %v4390 = vadd.f32 %v4049, 1.0
      %v4391 = vadd.f32 %v4051, 1.0
      %v4392 = vadd.f32 %v4053, 1.0
      %v4393 = vadd.f32 %v4055, 1.0
      %v4394 = vadd.f32 %v4057, 1.0
      %v4395 = vadd.f32 %v4059, 1.0
      %v4396 = vadd.f32 %v4061, 1.0
      %v4397 = vadd.f32 %v4063, 1.0
      %v4398 = vadd.f32 %v4065, 1.0
      %v4399 = vadd.f32 %v4067, 1.0
      %v4400 = vadd.f32 %v4069, 1.0
      %v4401 = vadd.f32 %v4071, 1.0
      %v4402 = vadd.f32 %v4073, 1.0
      %v4403 = vadd.f32 %v4075, 1.0
      %v4404 = vadd.f32 %v4077, 1.0
      %v4405 = vadd.f32 %v4079, 1.0
      %v4406 = vadd.f32 %v4081, 1.0
      %v4407 = vadd.f32 %v4083, 1.0
      %v4408 = vadd.f32 %v4085, 1.0
      %v4409 = vadd.f32 %v4087, 1.0
      %v4410 = vadd.f32 %v4089, 1.0
      %v4411 = vadd.f32 %v4091, 1.0
      %v4412 = vadd.f32 %v4093, 1.0
      %v4413 = vadd.f32 %v4095, 1.0
      %v4414 = vadd.f32 %v4097, 1.0
      %v4415 = vadd.f32 %v4099, 1.0
      %v4416 = vadd.f32 %v4101, 1.0
      %v4417 = vadd.f32 %v4103, 1.0
      %v4418 = vadd.f32 %v4105, 1.0
      %v4419 = vadd.f32 %v4107, 1.0
      %v4420 = vadd.f32 %v4109, 1.0
      %v4421 = vadd.f32 %v4111, 1.0
      %v4422 = vadd.f32 %v4113, 1.0
      %v4423 = vadd.f32 %v4115, 1.0
      %v4424 = vadd.f32 %v4117, 1.0
      %v4425 = vadd.f32 %v4119, 1.0
      %v4426 = vadd.f32 %v4121, 1.0
      %v4427 = vadd.f32 %v4123, 1.0
      %v4428 = vadd.f32 %v4125, 1.0
      %v4429 = vadd.f32 %v4127, 1.0
      %v4430 = vadd.f32 %v4129, 1.0
      %v4431 = vadd.f32 %v4131, 1.0
      %v4432 = vadd.f32 %v4133, 1.0
      %v4433 = vadd.f32 %v4135, 1.0
      %v4434 = vadd.f32 %v4137, 1.0
      %v4435 = vadd.f32 %v4139, 1.0
      %v4436 = vadd.f32 %v4141, 1.0
      %v4437 = vadd.f32 %v4143, 1.0
      %v4438 = vadd.f32 %v4145, 1.0
      %v4439 = vadd.f32 %v4147, 1.0
      %v4440 = vadd.f32 %v4149, 1.0
      %v4441 = vadd.f32 %v4151, 1.0
      %v4442 = vadd.f32 %v4153, 1.0
      %v4443 = vadd.f32 %v4155, 1.0
      %v4444 = vrcp.pop %v4156
      %v4445 = vmul.f32 1.0, %v4444
      %v4446 = vrcp.pop %v4157
      %v4447 = vmul.f32 1.0, %v4446
      %v4448 = vrcp.pop %v4158
      %v4449 = vmul.f32 1.0, %v4448
      %v4450 = vrcp.pop %v4159
      %v4451 = vmul.f32 1.0, %v4450
      %v4452 = vrcp.pop %v4160
      %v4453 = vmul.f32 1.0, %v4452
      %v4454 = vrcp.pop %v4161
      %v4455 = vmul.f32 1.0, %v4454
      %v4456 = vrcp.pop %v4162
      %v4457 = vmul.f32 1.0, %v4456
      %v4458 = vrcp.pop %v4163
      %v4459 = vmul.f32 1.0, %v4458
      %v4460 = vrcp.pop %v4164
      %v4461 = vmul.f32 1.0, %v4460
      %v4462 = vrcp.pop %v4165
      %v4463 = vmul.f32 1.0, %v4462
      %v4464 = vrcp.pop %v4166
      %v4465 = vmul.f32 1.0, %v4464
      %v4466 = vrcp.pop %v4167
      %v4467 = vmul.f32 1.0, %v4466
      %v4468 = vrcp.pop %v4168
      %v4469 = vmul.f32 1.0, %v4468
      %v4470 = vrcp.pop %v4169
      %v4471 = vmul.f32 1.0, %v4470
      %v4472 = vrcp.pop %v4170
      %v4473 = vmul.f32 1.0, %v4472
      %v4474 = vrcp.pop %v4171
      %v4475 = vmul.f32 1.0, %v4474
      %v4476 = vrcp.pop %v4172
      %v4477 = vmul.f32 1.0, %v4476
      %v4478 = vrcp.pop %v4173
      %v4479 = vmul.f32 1.0, %v4478
      %v4480 = vrcp.pop %v4174
      %v4481 = vmul.f32 1.0, %v4480
      %v4482 = vrcp.pop %v4175
      %v4483 = vmul.f32 1.0, %v4482
      %v4484 = vrcp.pop %v4176
      %v4485 = vmul.f32 1.0, %v4484
      %v4486 = vrcp.pop %v4177
      %v4487 = vmul.f32 1.0, %v4486
      %v4488 = vrcp.pop %v4178
      %v4489 = vmul.f32 1.0, %v4488
      %v4490 = vrcp.pop %v4179
      %v4491 = vmul.f32 1.0, %v4490
      %v4492 = vrcp.pop %v4180
      %v4493 = vmul.f32 1.0, %v4492
      %v4494 = vrcp.pop %v4181
      %v4495 = vmul.f32 1.0, %v4494
      %v4496 = vrcp.pop %v4182
      %v4497 = vmul.f32 1.0, %v4496
      %v4498 = vrcp.pop %v4183
      %v4499 = vmul.f32 1.0, %v4498
      %v4500 = vrcp.pop %v4184
      %v4501 = vmul.f32 1.0, %v4500
      %v4502 = vrcp.pop %v4185
      %v4503 = vmul.f32 1.0, %v4502
      %v4504 = vrcp.pop %v4186
      %v4505 = vmul.f32 1.0, %v4504
      %v4506 = vrcp.pop %v4187
      %v4507 = vmul.f32 1.0, %v4506
      %v4508 = vrcp.pop %v4188
      %v4509 = vmul.f32 1.0, %v4508
      %v4510 = vrcp.pop %v4189
      %v4511 = vmul.f32 1.0, %v4510
      %v4512 = vrcp.pop %v4190
      %v4513 = vmul.f32 1.0, %v4512
      %v4514 = vrcp.pop %v4191
      %v4515 = vmul.f32 1.0, %v4514
      %v4516 = vrcp.pop %v4192
      %v4517 = vmul.f32 1.0, %v4516
      %v4518 = vrcp.pop %v4193
      %v4519 = vmul.f32 1.0, %v4518
      %v4520 = vrcp.pop %v4194
      %v4521 = vmul.f32 1.0, %v4520
      %v4522 = vrcp.pop %v4195
      %v4523 = vmul.f32 1.0, %v4522
      %v4524 = vrcp.pop %v4196
      %v4525 = vmul.f32 1.0, %v4524
      %v4526 = vrcp.pop %v4197
      %v4527 = vmul.f32 1.0, %v4526
      %v4528 = vrcp.pop %v4198
      %v4529 = vmul.f32 1.0, %v4528
      %v4530 = vrcp.pop %v4199
      %v4531 = vmul.f32 1.0, %v4530
      %v4532 = vrcp.pop %v4200
      %v4533 = vmul.f32 1.0, %v4532
      %v4534 = vrcp.pop %v4201
      %v4535 = vmul.f32 1.0, %v4534
      %v4536 = vrcp.pop %v4202
      %v4537 = vmul.f32 1.0, %v4536
      %v4538 = vrcp.pop %v4203
      %v4539 = vmul.f32 1.0, %v4538
      %v4540 = vrcp.pop %v4204
      %v4541 = vmul.f32 1.0, %v4540
      %v4542 = vrcp.pop %v4205
      %v4543 = vmul.f32 1.0, %v4542
      %v4544 = vrcp.pop %v4206
      %v4545 = vmul.f32 1.0, %v4544
      %v4546 = vrcp.pop %v4207
      %v4547 = vmul.f32 1.0, %v4546
      %v4548 = vrcp.pop %v4208
      %v4549 = vmul.f32 1.0, %v4548
      %v4550 = vrcp.pop %v4209
      %v4551 = vmul.f32 1.0, %v4550
      %v4552 = vrcp.pop %v4210
      %v4553 = vmul.f32 1.0, %v4552
      %v4554 = vrcp.pop %v4211
      %v4555 = vmul.f32 1.0, %v4554
      %v4556 = vrcp.pop %v4212
      %v4557 = vmul.f32 1.0, %v4556
      %v4558 = vrcp.pop %v4213
      %v4559 = vmul.f32 1.0, %v4558
      %v4560 = vrcp.pop %v4214
      %v4561 = vmul.f32 1.0, %v4560
      %v4562 = vrcp.pop %v4215
      %v4563 = vmul.f32 1.0, %v4562
      %v4564 = vrcp.pop %v4216
      %v4565 = vmul.f32 1.0, %v4564
      %v4566 = vrcp.pop %v4217
      %v4567 = vmul.f32 1.0, %v4566
      %v4568 = vrcp.pop %v4218
      %v4569 = vmul.f32 1.0, %v4568
      %v4570 = vrcp.pop %v4219
      %v4571 = vmul.f32 1.0, %v4570
      %v4572 = vrcp.pop %v4220
      %v4573 = vmul.f32 1.0, %v4572
      %v4574 = vrcp.pop %v4221
      %v4575 = vmul.f32 1.0, %v4574
      %v4576 = vrcp.pop %v4222
      %v4577 = vmul.f32 1.0, %v4576
      %v4578 = vrcp.pop %v4223
      %v4579 = vmul.f32 1.0, %v4578
      %v4580 = vrcp.pop %v4224
      %v4581 = vmul.f32 1.0, %v4580
      %v4582 = vrcp.pop %v4225
      %v4583 = vmul.f32 1.0, %v4582
      %v4584 = vrcp.pop %v4226
      %v4585 = vmul.f32 1.0, %v4584
      %v4586 = vrcp.pop %v4227
      %v4587 = vmul.f32 1.0, %v4586
      %v4588 = vrcp.pop %v4228
      %v4589 = vmul.f32 1.0, %v4588
      %v4590 = vrcp.pop %v4229
      %v4591 = vmul.f32 1.0, %v4590
      %v4592 = vrcp.pop %v4230
      %v4593 = vmul.f32 1.0, %v4592
      %v4594 = vrcp.pop %v4231
      %v4595 = vmul.f32 1.0, %v4594
      %v4596 = vrcp.pop %v4232
      %v4597 = vmul.f32 1.0, %v4596
      %v4598 = vrcp.pop %v4233
      %v4599 = vmul.f32 1.0, %v4598
      %v4600 = vrcp.pop %v4234
      %v4601 = vmul.f32 1.0, %v4600
      %v4602 = vrcp.pop %v4235
      %v4603 = vmul.f32 1.0, %v4602
      %v4604 = vrcp.pop %v4236
      %v4605 = vmul.f32 1.0, %v4604
      %v4606 = vrcp.pop %v4237
      %v4607 = vmul.f32 1.0, %v4606
      %v4608 = vrcp.pop %v4238
      %v4609 = vmul.f32 1.0, %v4608
      %v4610 = vrcp.pop %v4239
      %v4611 = vmul.f32 1.0, %v4610
      %v4612 = vrcp.pop %v4240
      %v4613 = vmul.f32 1.0, %v4612
      %v4614 = vrcp.pop %v4241
      %v4615 = vmul.f32 1.0, %v4614
      %v4616 = vrcp.pop %v4242
      %v4617 = vmul.f32 1.0, %v4616
      %v4618 = vrcp.pop %v4243
      %v4619 = vmul.f32 1.0, %v4618
      %v4620 = vrcp.pop %v4244
      %v4621 = vmul.f32 1.0, %v4620
      %v4622 = vrcp.pop %v4245
      %v4623 = vmul.f32 1.0, %v4622
      %v4624 = vrcp.pop %v4246
      %v4625 = vmul.f32 1.0, %v4624
      %v4626 = vrcp.pop %v4247
      %v4627 = vmul.f32 1.0, %v4626
      %v4628 = vrcp.pop %v4248
      %v4629 = vmul.f32 1.0, %v4628
      %v4630 = vrcp.pop %v4249
      %v4631 = vmul.f32 1.0, %v4630
      %v4632 = vrcp.pop %v4250
      %v4633 = vmul.f32 1.0, %v4632
      %v4634 = vrcp.pop %v4251
      %v4635 = vmul.f32 1.0, %v4634
      %v4636 = vrcp.pop %v4252
      %v4637 = vmul.f32 1.0, %v4636
      %v4638 = vrcp.pop %v4253
      %v4639 = vmul.f32 1.0, %v4638
      %v4640 = vrcp.pop %v4254
      %v4641 = vmul.f32 1.0, %v4640
      %v4642 = vrcp.pop %v4255
      %v4643 = vmul.f32 1.0, %v4642
      %v4644 = vrcp.pop %v4256
      %v4645 = vmul.f32 1.0, %v4644
      %v4646 = vrcp.pop %v4257
      %v4647 = vmul.f32 1.0, %v4646
      %v4648 = vrcp.pop %v4258
      %v4649 = vmul.f32 1.0, %v4648
      %v4650 = vrcp.pop %v4259
      %v4651 = vmul.f32 1.0, %v4650
      %v4652 = vrcp.pop %v4260
      %v4653 = vmul.f32 1.0, %v4652
      %v4654 = vrcp.pop %v4261
      %v4655 = vmul.f32 1.0, %v4654
      %v4656 = vrcp.pop %v4262
      %v4657 = vmul.f32 1.0, %v4656
      %v4658 = vrcp.pop %v4263
      %v4659 = vmul.f32 1.0, %v4658
      %v4660 = vrcp.pop %v4264
      %v4661 = vmul.f32 1.0, %v4660
      %v4662 = vrcp.pop %v4265
      %v4663 = vmul.f32 1.0, %v4662
      %v4664 = vrcp.pop %v4266
      %v4665 = vmul.f32 1.0, %v4664
      %v4666 = vrcp.pop %v4267
      %v4667 = vmul.f32 1.0, %v4666
      %v4668 = vrcp.pop %v4268
      %v4669 = vmul.f32 1.0, %v4668
      %v4670 = vrcp.pop %v4269
      %v4671 = vmul.f32 1.0, %v4670
      %v4672 = vrcp.pop %v4270
      %v4673 = vmul.f32 1.0, %v4672
      %v4674 = vrcp.pop %v4271
      %v4675 = vmul.f32 1.0, %v4674
      %v4676 = vrcp.pop %v4272
      %v4677 = vmul.f32 1.0, %v4676
      %v4678 = vrcp.pop %v4273
      %v4679 = vmul.f32 1.0, %v4678
      %v4680 = vrcp.pop %v4274
      %v4681 = vmul.f32 1.0, %v4680
      %v4682 = vrcp.pop %v4275
      %v4683 = vmul.f32 1.0, %v4682
      %v4684 = vrcp.pop %v4276
      %v4685 = vmul.f32 1.0, %v4684
      %v4686 = vrcp.pop %v4277
      %v4687 = vmul.f32 1.0, %v4686
      %v4688 = vrcp.pop %v4278
      %v4689 = vmul.f32 1.0, %v4688
      %v4690 = vrcp.pop %v4279
      %v4691 = vmul.f32 1.0, %v4690
      %v4692 = vrcp.pop %v4280
      %v4693 = vmul.f32 1.0, %v4692
      %v4694 = vrcp.pop %v4281
      %v4695 = vmul.f32 1.0, %v4694
      %v4696 = vrcp.pop %v4282
      %v4697 = vmul.f32 1.0, %v4696
      %v4698 = vrcp.pop %v4283
      %v4699 = vmul.f32 1.0, %v4698
      %v4700 = vrcp.pop %v4284
      %v4701 = vmul.f32 1.0, %v4700
      %v4702 = vrcp.pop %v4285
      %v4703 = vmul.f32 1.0, %v4702
      %v4704 = vrcp.pop %v4286
      %v4705 = vmul.f32 1.0, %v4704
      %v4706 = vrcp.pop %v4287
      %v4707 = vmul.f32 1.0, %v4706
      %v4708 = vrcp.pop %v4288
      %v4709 = vmul.f32 1.0, %v4708
      %v4710 = vrcp.pop %v4289
      %v4711 = vmul.f32 1.0, %v4710
      %v4712 = vrcp.pop %v4290
      %v4713 = vmul.f32 1.0, %v4712
      %v4714 = vrcp.pop %v4291
      %v4715 = vmul.f32 1.0, %v4714
      %v4716 = vrcp.pop %v4292
      %v4717 = vmul.f32 1.0, %v4716
      %v4718 = vrcp.pop %v4293
      %v4719 = vmul.f32 1.0, %v4718
      %v4720 = vrcp.pop %v4294
      %v4721 = vmul.f32 1.0, %v4720
      %v4722 = vrcp.pop %v4295
      %v4723 = vmul.f32 1.0, %v4722
      %v4724 = vrcp.pop %v4296
      %v4725 = vmul.f32 1.0, %v4724
      %v4726 = vrcp.pop %v4297
      %v4727 = vmul.f32 1.0, %v4726
      %v4728 = vrcp.pop %v4298
      %v4729 = vmul.f32 1.0, %v4728
      %v4730 = vrcp.pop %v4299
      %v4731 = vmul.f32 1.0, %v4730
      %v4732 = vrcp.pop %v4300
      %v4733 = vmul.f32 1.0, %v4732
      %v4734 = vrcp.pop %v4301
      %v4735 = vmul.f32 1.0, %v4734
      %v4736 = vrcp.pop %v4302
      %v4737 = vmul.f32 1.0, %v4736
      %v4738 = vrcp.pop %v4303
      %v4739 = vmul.f32 1.0, %v4738
      %v4740 = vrcp.pop %v4304
      %v4741 = vmul.f32 1.0, %v4740
      %v4742 = vrcp.pop %v4305
      %v4743 = vmul.f32 1.0, %v4742
      %v4744 = vrcp.pop %v4306
      %v4745 = vmul.f32 1.0, %v4744
      %v4746 = vrcp.pop %v4307
      %v4747 = vmul.f32 1.0, %v4746
      %v4748 = vrcp.pop %v4308
      %v4749 = vmul.f32 1.0, %v4748
      %v4750 = vrcp.pop %v4309
      %v4751 = vmul.f32 1.0, %v4750
      %v4752 = vrcp.pop %v4310
      %v4753 = vmul.f32 1.0, %v4752
      %v4754 = vrcp.pop %v4311
      %v4755 = vmul.f32 1.0, %v4754
      %v4756 = vrcp.pop %v4312
      %v4757 = vmul.f32 1.0, %v4756
      %v4758 = vrcp.pop %v4313
      %v4759 = vmul.f32 1.0, %v4758
      %v4760 = vrcp.pop %v4314
      %v4761 = vmul.f32 1.0, %v4760
      %v4762 = vrcp.pop %v4315
      %v4763 = vmul.f32 1.0, %v4762
      %v4764 = vrcp.pop %v4316
      %v4765 = vmul.f32 1.0, %v4764
      %v4766 = vrcp.pop %v4317
      %v4767 = vmul.f32 1.0, %v4766
      %v4768 = vrcp.pop %v4318
      %v4769 = vmul.f32 1.0, %v4768
      %v4770 = vrcp.pop %v4319
      %v4771 = vmul.f32 1.0, %v4770
      %v4772 = vrcp.pop %v4320
      %v4773 = vmul.f32 1.0, %v4772
      %v4774 = vrcp.pop %v4321
      %v4775 = vmul.f32 1.0, %v4774
      %v4776 = vrcp.pop %v4322
      %v4777 = vmul.f32 1.0, %v4776
      %v4778 = vrcp.pop %v4323
      %v4779 = vmul.f32 1.0, %v4778
      %v4780 = vrcp.pop %v4324
      %v4781 = vmul.f32 1.0, %v4780
      %v4782 = vrcp.pop %v4325
      %v4783 = vmul.f32 1.0, %v4782
      %v4784 = vrcp.pop %v4326
      %v4785 = vmul.f32 1.0, %v4784
      %v4786 = vrcp.pop %v4327
      %v4787 = vmul.f32 1.0, %v4786
      %v4788 = vrcp.pop %v4328
      %v4789 = vmul.f32 1.0, %v4788
      %v4790 = vrcp.pop %v4329
      %v4791 = vmul.f32 1.0, %v4790
      %v4792 = vrcp.pop %v4330
      %v4793 = vmul.f32 1.0, %v4792
      %v4794 = vrcp.pop %v4331
      %v4795 = vmul.f32 1.0, %v4794
      %v4796 = vrcp.pop %v4332
      %v4797 = vmul.f32 1.0, %v4796
      %v4798 = vrcp.pop %v4333
      %v4799 = vmul.f32 1.0, %v4798
      %v4800 = vrcp.pop %v4334
      %v4801 = vmul.f32 1.0, %v4800
      %v4802 = vrcp.pop %v4335
      %v4803 = vmul.f32 1.0, %v4802
      %v4804 = vrcp.pop %v4336
      %v4805 = vmul.f32 1.0, %v4804
      %v4806 = vrcp.pop %v4337
      %v4807 = vmul.f32 1.0, %v4806
      %v4808 = vrcp.pop %v4338
      %v4809 = vmul.f32 1.0, %v4808
      %v4810 = vrcp.pop %v4339
      %v4811 = vmul.f32 1.0, %v4810
      %v4812 = vrcp.pop %v4340
      %v4813 = vmul.f32 1.0, %v4812
      %v4814 = vrcp.pop %v4341
      %v4815 = vmul.f32 1.0, %v4814
      %v4816 = vrcp.pop %v4342
      %v4817 = vmul.f32 1.0, %v4816
      %v4818 = vrcp.pop %v4343
      %v4819 = vmul.f32 1.0, %v4818
      %v4820 = vrcp.pop %v4344
      %v4821 = vmul.f32 1.0, %v4820
      %v4822 = vrcp.pop %v4345
      %v4823 = vmul.f32 1.0, %v4822
      %v4824 = vrcp.pop %v4346
      %v4825 = vmul.f32 1.0, %v4824
      %v4826 = vrcp.pop %v4347
      %v4827 = vmul.f32 1.0, %v4826
      %v4828 = vrcp.pop %v4348
      %v4829 = vmul.f32 1.0, %v4828
      %v4830 = vrcp.pop %v4349
      %v4831 = vmul.f32 1.0, %v4830
      %v4832 = vrcp.pop %v4350
      %v4833 = vmul.f32 1.0, %v4832
      %v4834 = vrcp.pop %v4351
      %v4835 = vmul.f32 1.0, %v4834
      %v4836 = vrcp.pop %v4352
      %v4837 = vmul.f32 1.0, %v4836
      %v4838 = vrcp.pop %v4353
      %v4839 = vmul.f32 1.0, %v4838
      %v4840 = vrcp.pop %v4354
      %v4841 = vmul.f32 1.0, %v4840
      %v4842 = vrcp.pop %v4355
      %v4843 = vmul.f32 1.0, %v4842
      %v4844 = vrcp.pop %v4356
      %v4845 = vmul.f32 1.0, %v4844
      %v4846 = vrcp.pop %v4357
      %v4847 = vmul.f32 1.0, %v4846
      %v4848 = vrcp.pop %v4358
      %v4849 = vmul.f32 1.0, %v4848
      %v4850 = vrcp.pop %v4359
      %v4851 = vmul.f32 1.0, %v4850
      %v4852 = vrcp.pop %v4360
      %v4853 = vmul.f32 1.0, %v4852
      %v4854 = vrcp.pop %v4361
      %v4855 = vmul.f32 1.0, %v4854
      %v4856 = vrcp.pop %v4362
      %v4857 = vmul.f32 1.0, %v4856
      %v4858 = vrcp.pop %v4363
      %v4859 = vmul.f32 1.0, %v4858
      %v4860 = vrcp.pop %v4364
      %v4861 = vmul.f32 1.0, %v4860
      %v4862 = vrcp.pop %v4365
      %v4863 = vmul.f32 1.0, %v4862
      %v4864 = vrcp.pop %v4366
      %v4865 = vmul.f32 1.0, %v4864
      %v4866 = vrcp.pop %v4367
      %v4867 = vmul.f32 1.0, %v4866
      %v4868 = vrcp.pop %v4368
      %v4869 = vmul.f32 1.0, %v4868
      %v4870 = vrcp.pop %v4369
      %v4871 = vmul.f32 1.0, %v4870
      %v4872 = vrcp.pop %v4370
      %v4873 = vmul.f32 1.0, %v4872
      %v4874 = vrcp.pop %v4371
      %v4875 = vmul.f32 1.0, %v4874
      %v4876 = vrcp.pop %v4372
      %v4877 = vmul.f32 1.0, %v4876
      %v4878 = vrcp.pop %v4373
      %v4879 = vmul.f32 1.0, %v4878
      %v4880 = vrcp.pop %v4374
      %v4881 = vmul.f32 1.0, %v4880
      %v4882 = vrcp.pop %v4375
      %v4883 = vmul.f32 1.0, %v4882
      %v4884 = vrcp.pop %v4376
      %v4885 = vmul.f32 1.0, %v4884
      %v4886 = vrcp.pop %v4377
      %v4887 = vmul.f32 1.0, %v4886
      %v4888 = vrcp.pop %v4378
      %v4889 = vmul.f32 1.0, %v4888
      %v4890 = vrcp.pop %v4379
      %v4891 = vmul.f32 1.0, %v4890
      %v4892 = vrcp.pop %v4380
      %v4893 = vmul.f32 1.0, %v4892
      %v4894 = vrcp.pop %v4381
      %v4895 = vmul.f32 1.0, %v4894
      %v4896 = vrcp.pop %v4382
      %v4897 = vmul.f32 1.0, %v4896
      %v4898 = vrcp.pop %v4383
      %v4899 = vmul.f32 1.0, %v4898
      %v4900 = vrcp.pop %v4384
      %v4901 = vmul.f32 1.0, %v4900
      %v4902 = vrcp.pop %v4385
      %v4903 = vmul.f32 1.0, %v4902
      %v4904 = vrcp.pop %v4386
      %v4905 = vmul.f32 1.0, %v4904
      %v4906 = vrcp.pop %v4387
      %v4907 = vmul.f32 1.0, %v4906
      %v4908 = vrcp.pop %v4388
      %v4909 = vmul.f32 1.0, %v4908
      %v4910 = vrcp.pop %v4389
      %v4911 = vmul.f32 1.0, %v4910
      %v4912 = vrcp.pop %v4390
      %v4913 = vmul.f32 1.0, %v4912
      %v4914 = vrcp.pop %v4391
      %v4915 = vmul.f32 1.0, %v4914
      %v4916 = vrcp.pop %v4392
      %v4917 = vmul.f32 1.0, %v4916
      %v4918 = vrcp.pop %v4393
      %v4919 = vmul.f32 1.0, %v4918
      %v4920 = vrcp.pop %v4394
      %v4921 = vmul.f32 1.0, %v4920
      %v4922 = vrcp.pop %v4395
      %v4923 = vmul.f32 1.0, %v4922
      %v4924 = vrcp.pop %v4396
      %v4925 = vmul.f32 1.0, %v4924
      %v4926 = vrcp.pop %v4397
      %v4927 = vmul.f32 1.0, %v4926
      %v4928 = vrcp.pop %v4398
      %v4929 = vmul.f32 1.0, %v4928
      %v4930 = vrcp.pop %v4399
      %v4931 = vmul.f32 1.0, %v4930
      %v4932 = vrcp.pop %v4400
      %v4933 = vmul.f32 1.0, %v4932
      %v4934 = vrcp.pop %v4401
      %v4935 = vmul.f32 1.0, %v4934
      %v4936 = vrcp.pop %v4402
      %v4937 = vmul.f32 1.0, %v4936
      %v4938 = vrcp.pop %v4403
      %v4939 = vmul.f32 1.0, %v4938
      %v4940 = vrcp.pop %v4404
      %v4941 = vmul.f32 1.0, %v4940
      %v4942 = vrcp.pop %v4405
      %v4943 = vmul.f32 1.0, %v4942
      %v4944 = vrcp.pop %v4406
      %v4945 = vmul.f32 1.0, %v4944
      %v4946 = vrcp.pop %v4407
      %v4947 = vmul.f32 1.0, %v4946
      %v4948 = vrcp.pop %v4408
      %v4949 = vmul.f32 1.0, %v4948
      %v4950 = vrcp.pop %v4409
      %v4951 = vmul.f32 1.0, %v4950
      %v4952 = vrcp.pop %v4410
      %v4953 = vmul.f32 1.0, %v4952
      %v4954 = vrcp.pop %v4411
      %v4955 = vmul.f32 1.0, %v4954
      %v4956 = vrcp.pop %v4412
      %v4957 = vmul.f32 1.0, %v4956
      %v4958 = vrcp.pop %v4413
      %v4959 = vmul.f32 1.0, %v4958
      %v4960 = vrcp.pop %v4414
      %v4961 = vmul.f32 1.0, %v4960
      %v4962 = vrcp.pop %v4415
      %v4963 = vmul.f32 1.0, %v4962
      %v4964 = vrcp.pop %v4416
      %v4965 = vmul.f32 1.0, %v4964
      %v4966 = vrcp.pop %v4417
      %v4967 = vmul.f32 1.0, %v4966
      %v4968 = vrcp.pop %v4418
      %v4969 = vmul.f32 1.0, %v4968
      %v4970 = vrcp.pop %v4419
      %v4971 = vmul.f32 1.0, %v4970
      %v4972 = vrcp.pop %v4420
      %v4973 = vmul.f32 1.0, %v4972
      %v4974 = vrcp.pop %v4421
      %v4975 = vmul.f32 1.0, %v4974
      %v4976 = vrcp.pop %v4422
      %v4977 = vmul.f32 1.0, %v4976
      %v4978 = vrcp.pop %v4423
      %v4979 = vmul.f32 1.0, %v4978
      %v4980 = vrcp.pop %v4424
      %v4981 = vmul.f32 1.0, %v4980
      %v4982 = vrcp.pop %v4425
      %v4983 = vmul.f32 1.0, %v4982
      %v4984 = vrcp.pop %v4426
      %v4985 = vmul.f32 1.0, %v4984
      %v4986 = vrcp.pop %v4427
      %v4987 = vmul.f32 1.0, %v4986
      %v4988 = vrcp.pop %v4428
      %v4989 = vmul.f32 1.0, %v4988
      %v4990 = vrcp.pop %v4429
      %v4991 = vmul.f32 1.0, %v4990
      %v4992 = vrcp.pop %v4430
      %v4993 = vmul.f32 1.0, %v4992
      %v4994 = vrcp.pop %v4431
      %v4995 = vmul.f32 1.0, %v4994
      %v4996 = vrcp.pop %v4432
      %v4997 = vmul.f32 1.0, %v4996
      %v4998 = vrcp.pop %v4433
      %v4999 = vmul.f32 1.0, %v4998
      %v5000 = vrcp.pop %v4434
      %v5001 = vmul.f32 1.0, %v5000
      %v5002 = vrcp.pop %v4435
      %v5003 = vmul.f32 1.0, %v5002
      %v5004 = vrcp.pop %v4436
      %v5005 = vmul.f32 1.0, %v5004
      %v5006 = vrcp.pop %v4437
      %v5007 = vmul.f32 1.0, %v5006
      %v5008 = vrcp.pop %v4438
      %v5009 = vmul.f32 1.0, %v5008
      %v5010 = vrcp.pop %v4439
      %v5011 = vmul.f32 1.0, %v5010
      %v5012 = vrcp.pop %v4440
      %v5013 = vmul.f32 1.0, %v5012
      %v5014 = vrcp.pop %v4441
      %v5015 = vmul.f32 1.0, %v5014
      %v5016 = vrcp.pop %v4442
      %v5017 = vmul.f32 1.0, %v5016
      %v5018 = vrcp.pop %v4443
      %v5019 = vmul.f32 1.0, %v5018
      %v5020 = vld [vmem:[%s3] sm:$0xf]
      %v5021 = vld [vmem:[%s3 + $0x4] sm:$0xf]
      %v5022 = vld [vmem:[%s3 + $0x8] sm:$0xf]
      %v5023 = vld [vmem:[%s3 + $0xc] sm:$0xf]
      %v5024 = vld [vmem:[%s3 + $0x10] sm:$0xf]
      %v5025 = vld [vmem:[%s3 + $0x14] sm:$0xf]
      %v5026 = vld [vmem:[%s3 + $0x18] sm:$0xf]
      %v5027 = vld [vmem:[%s3 + $0x1c] sm:$0xf]
      %v5028 = vld [vmem:[%s3 + $0x20] sm:$0xf]
      %v5029 = vld [vmem:[%s3 + $0x24] sm:$0xf]
      %v5030 = vld [vmem:[%s3 + $0x28] sm:$0xf]
      %v5031 = vld [vmem:[%s3 + $0x2c] sm:$0xf]
      %v5032 = vld [vmem:[%s3 + $0x30] sm:$0xf]
      %v5033 = vld [vmem:[%s3 + $0x34] sm:$0xf]
      %v5034 = vld [vmem:[%s3 + $0x38] sm:$0xf]
      %v5035 = vld [vmem:[%s3 + $0x3c] sm:$0xf]
      %v5036 = vld [vmem:[%s3 + $0x40] sm:$0xf]
      %v5037 = vld [vmem:[%s3 + $0x44] sm:$0xf]
      %v5038 = vld [vmem:[%s3 + $0x48] sm:$0xf]
      %v5039 = vld [vmem:[%s3 + $0x4c] sm:$0xf]
      %v5040 = vld [vmem:[%s3 + $0x50] sm:$0xf]
      %v5041 = vld [vmem:[%s3 + $0x54] sm:$0xf]
      %v5042 = vld [vmem:[%s3 + $0x58] sm:$0xf]
      %v5043 = vld [vmem:[%s3 + $0x5c] sm:$0xf]
      %v5044 = vld [vmem:[%s3 + $0x60] sm:$0xf]
      %v5045 = vld [vmem:[%s3 + $0x64] sm:$0xf]
      %v5046 = vld [vmem:[%s3 + $0x68] sm:$0xf]
      %v5047 = vld [vmem:[%s3 + $0x6c] sm:$0xf]
      %v5048 = vld [vmem:[%s3 + $0x70] sm:$0xf]
      %v5049 = vld [vmem:[%s3 + $0x74] sm:$0xf]
      %v5050 = vld [vmem:[%s3 + $0x78] sm:$0xf]
      %v5051 = vld [vmem:[%s3 + $0x7c] sm:$0xf]
      %v5052 = vld [vmem:[%s3 + $0x80] sm:$0xf]
      %v5053 = vld [vmem:[%s3 + $0x84] sm:$0xf]
      %v5054 = vld [vmem:[%s3 + $0x88] sm:$0xf]
      %v5055 = vld [vmem:[%s3 + $0x8c] sm:$0xf]
      %v5056 = vld [vmem:[%s3 + $0x90] sm:$0xf]
      %v5057 = vld [vmem:[%s3 + $0x94] sm:$0xf]
      %v5058 = vld [vmem:[%s3 + $0x98] sm:$0xf]
      %v5059 = vld [vmem:[%s3 + $0x9c] sm:$0xf]
      %v5060 = vld [vmem:[%s3 + $0xa0] sm:$0xf]
      %v5061 = vld [vmem:[%s3 + $0xa4] sm:$0xf]
      %v5062 = vld [vmem:[%s3 + $0xa8] sm:$0xf]
      %v5063 = vld [vmem:[%s3 + $0xac] sm:$0xf]
      %v5064 = vld [vmem:[%s3 + $0xb0] sm:$0xf]
      %v5065 = vld [vmem:[%s3 + $0xb4] sm:$0xf]
      %v5066 = vld [vmem:[%s3 + $0xb8] sm:$0xf]
      %v5067 = vld [vmem:[%s3 + $0xbc] sm:$0xf]
      %v5068 = vld [vmem:[%s3 + $0xc0] sm:$0xf]
      %v5069 = vld [vmem:[%s3 + $0xc4] sm:$0xf]
      %v5070 = vld [vmem:[%s3 + $0xc8] sm:$0xf]
      %v5071 = vld [vmem:[%s3 + $0xcc] sm:$0xf]
      %v5072 = vld [vmem:[%s3 + $0xd0] sm:$0xf]
      %v5073 = vld [vmem:[%s3 + $0xd4] sm:$0xf]
      %v5074 = vld [vmem:[%s3 + $0xd8] sm:$0xf]
      %v5075 = vld [vmem:[%s3 + $0xdc] sm:$0xf]
      %v5076 = vld [vmem:[%s3 + $0xe0] sm:$0xf]
      %v5077 = vld [vmem:[%s3 + $0xe4] sm:$0xf]
      %v5078 = vld [vmem:[%s3 + $0xe8] sm:$0xf]
      %v5079 = vld [vmem:[%s3 + $0xec] sm:$0xf]
      %v5080 = vld [vmem:[%s3 + $0xf0] sm:$0xf]
      %v5081 = vld [vmem:[%s3 + $0xf4] sm:$0xf]
      %v5082 = vld [vmem:[%s3 + $0xf8] sm:$0xf]
      %v5083 = vld [vmem:[%s3 + $0xfc] sm:$0xf]
      %v5084 = vld [vmem:[%s3 + $0x100] sm:$0xf]
      %v5085 = vld [vmem:[%s3 + $0x104] sm:$0xf]
      %v5086 = vld [vmem:[%s3 + $0x108] sm:$0xf]
      %v5087 = vld [vmem:[%s3 + $0x10c] sm:$0xf]
      %v5088 = vld [vmem:[%s3 + $0x110] sm:$0xf]
      %v5089 = vld [vmem:[%s3 + $0x114] sm:$0xf]
      %v5090 = vld [vmem:[%s3 + $0x118] sm:$0xf]
      %v5091 = vld [vmem:[%s3 + $0x11c] sm:$0xf]
      %v5092 = vld [vmem:[%s3 + $0x120] sm:$0xf]
      %v5093 = vld [vmem:[%s3 + $0x124] sm:$0xf]
      %v5094 = vld [vmem:[%s3 + $0x128] sm:$0xf]
      %v5095 = vld [vmem:[%s3 + $0x12c] sm:$0xf]
      %v5096 = vld [vmem:[%s3 + $0x130] sm:$0xf]
      %v5097 = vld [vmem:[%s3 + $0x134] sm:$0xf]
      %v5098 = vld [vmem:[%s3 + $0x138] sm:$0xf]
      %v5099 = vld [vmem:[%s3 + $0x13c] sm:$0xf]
      %v5100 = vld [vmem:[%s3 + $0x140] sm:$0xf]
      %v5101 = vld [vmem:[%s3 + $0x144] sm:$0xf]
      %v5102 = vld [vmem:[%s3 + $0x148] sm:$0xf]
      %v5103 = vld [vmem:[%s3 + $0x14c] sm:$0xf]
      %v5104 = vld [vmem:[%s3 + $0x150] sm:$0xf]
      %v5105 = vld [vmem:[%s3 + $0x154] sm:$0xf]
      %v5106 = vld [vmem:[%s3 + $0x158] sm:$0xf]
      %v5107 = vld [vmem:[%s3 + $0x15c] sm:$0xf]
      %v5108 = vld [vmem:[%s3 + $0x160] sm:$0xf]
      %v5109 = vld [vmem:[%s3 + $0x164] sm:$0xf]
      %v5110 = vld [vmem:[%s3 + $0x168] sm:$0xf]
      %v5111 = vld [vmem:[%s3 + $0x16c] sm:$0xf]
      %v5112 = vld [vmem:[%s3 + $0x170] sm:$0xf]
      %v5113 = vld [vmem:[%s3 + $0x174] sm:$0xf]
      %v5114 = vld [vmem:[%s3 + $0x178] sm:$0xf]
      %v5115 = vld [vmem:[%s3 + $0x17c] sm:$0xf]
      %v5116 = vld [vmem:[%s3 + $0x180] sm:$0xf]
      %v5117 = vld [vmem:[%s3 + $0x184] sm:$0xf]
      %v5118 = vld [vmem:[%s3 + $0x188] sm:$0xf]
      %v5119 = vld [vmem:[%s3 + $0x18c] sm:$0xf]
      %v5120 = vld [vmem:[%s3 + $0x190] sm:$0xf]
      %v5121 = vld [vmem:[%s3 + $0x194] sm:$0xf]
      %v5122 = vld [vmem:[%s3 + $0x198] sm:$0xf]
      %v5123 = vld [vmem:[%s3 + $0x19c] sm:$0xf]
      %v5124 = vld [vmem:[%s3 + $0x1a0] sm:$0xf]
      %v5125 = vld [vmem:[%s3 + $0x1a4] sm:$0xf]
      %v5126 = vld [vmem:[%s3 + $0x1a8] sm:$0xf]
      %v5127 = vld [vmem:[%s3 + $0x1ac] sm:$0xf]
      %v5128 = vld [vmem:[%s3 + $0x1b0] sm:$0xf]
      %v5129 = vld [vmem:[%s3 + $0x1b4] sm:$0xf]
      %v5130 = vld [vmem:[%s3 + $0x1b8] sm:$0xf]
      %v5131 = vld [vmem:[%s3 + $0x1bc] sm:$0xf]
      %v5132 = vld [vmem:[%s3 + $0x1c0] sm:$0xf]
      %v5133 = vld [vmem:[%s3 + $0x1c4] sm:$0xf]
      %v5134 = vld [vmem:[%s3 + $0x1c8] sm:$0xf]
      %v5135 = vld [vmem:[%s3 + $0x1cc] sm:$0xf]
      %v5136 = vld [vmem:[%s3 + $0x1d0] sm:$0xf]
      %v5137 = vld [vmem:[%s3 + $0x1d4] sm:$0xf]
      %v5138 = vld [vmem:[%s3 + $0x1d8] sm:$0xf]
      %v5139 = vld [vmem:[%s3 + $0x1dc] sm:$0xf]
      %v5140 = vld [vmem:[%s3 + $0x1e0] sm:$0xf]
      %v5141 = vld [vmem:[%s3 + $0x1e4] sm:$0xf]
      %v5142 = vld [vmem:[%s3 + $0x1e8] sm:$0xf]
      %v5143 = vld [vmem:[%s3 + $0x1ec] sm:$0xf]
      %v5144 = vld [vmem:[%s3 + $0x1f0] sm:$0xf]
      %v5145 = vld [vmem:[%s3 + $0x1f4] sm:$0xf]
      %v5146 = vld [vmem:[%s3 + $0x1f8] sm:$0xf]
      %v5147 = vld [vmem:[%s3 + $0x1fc] sm:$0xf]
      %v5148 = vld [vmem:[%s3 + $0x200] sm:$0xf]
      %v5149 = vld [vmem:[%s3 + $0x204] sm:$0xf]
      %v5150 = vld [vmem:[%s3 + $0x208] sm:$0xf]
      %v5151 = vld [vmem:[%s3 + $0x20c] sm:$0xf]
      %v5152 = vld [vmem:[%s3 + $0x210] sm:$0xf]
      %v5153 = vld [vmem:[%s3 + $0x214] sm:$0xf]
      %v5154 = vld [vmem:[%s3 + $0x218] sm:$0xf]
      %v5155 = vld [vmem:[%s3 + $0x21c] sm:$0xf]
      %v5156 = vld [vmem:[%s3 + $0x220] sm:$0xf]
      %v5157 = vld [vmem:[%s3 + $0x224] sm:$0xf]
      %v5158 = vld [vmem:[%s3 + $0x228] sm:$0xf]
      %v5159 = vld [vmem:[%s3 + $0x22c] sm:$0xf]
      %v5160 = vld [vmem:[%s3 + $0x230] sm:$0xf]
      %v5161 = vld [vmem:[%s3 + $0x234] sm:$0xf]
      %v5162 = vld [vmem:[%s3 + $0x238] sm:$0xf]
      %v5163 = vld [vmem:[%s3 + $0x23c] sm:$0xf]
      %v5164 = vld [vmem:[%s3 + $0x240] sm:$0xf]
      %v5165 = vld [vmem:[%s3 + $0x244] sm:$0xf]
      %v5166 = vld [vmem:[%s3 + $0x248] sm:$0xf]
      %v5167 = vld [vmem:[%s3 + $0x24c] sm:$0xf]
      %v5168 = vld [vmem:[%s3 + $0x250] sm:$0xf]
      %v5169 = vld [vmem:[%s3 + $0x254] sm:$0xf]
      %v5170 = vld [vmem:[%s3 + $0x258] sm:$0xf]
      %v5171 = vld [vmem:[%s3 + $0x25c] sm:$0xf]
      %v5172 = vld [vmem:[%s3 + $0x260] sm:$0xf]
      %v5173 = vld [vmem:[%s3 + $0x264] sm:$0xf]
      %v5174 = vld [vmem:[%s3 + $0x268] sm:$0xf]
      %v5175 = vld [vmem:[%s3 + $0x26c] sm:$0xf]
      %v5176 = vld [vmem:[%s3 + $0x270] sm:$0xf]
      %v5177 = vld [vmem:[%s3 + $0x274] sm:$0xf]
      %v5178 = vld [vmem:[%s3 + $0x278] sm:$0xf]
      %v5179 = vld [vmem:[%s3 + $0x27c] sm:$0xf]
      %v5180 = vld [vmem:[%s3 + $0x280] sm:$0xf]
      %v5181 = vld [vmem:[%s3 + $0x284] sm:$0xf]
      %v5182 = vld [vmem:[%s3 + $0x288] sm:$0xf]
      %v5183 = vld [vmem:[%s3 + $0x28c] sm:$0xf]
      %v5184 = vld [vmem:[%s3 + $0x290] sm:$0xf]
      %v5185 = vld [vmem:[%s3 + $0x294] sm:$0xf]
      %v5186 = vld [vmem:[%s3 + $0x298] sm:$0xf]
      %v5187 = vld [vmem:[%s3 + $0x29c] sm:$0xf]
      %v5188 = vld [vmem:[%s3 + $0x2a0] sm:$0xf]
      %v5189 = vld [vmem:[%s3 + $0x2a4] sm:$0xf]
      %v5190 = vld [vmem:[%s3 + $0x2a8] sm:$0xf]
      %v5191 = vld [vmem:[%s3 + $0x2ac] sm:$0xf]
      %v5192 = vld [vmem:[%s3 + $0x2b0] sm:$0xf]
      %v5193 = vld [vmem:[%s3 + $0x2b4] sm:$0xf]
      %v5194 = vld [vmem:[%s3 + $0x2b8] sm:$0xf]
      %v5195 = vld [vmem:[%s3 + $0x2bc] sm:$0xf]
      %v5196 = vld [vmem:[%s3 + $0x2c0] sm:$0xf]
      %v5197 = vld [vmem:[%s3 + $0x2c4] sm:$0xf]
      %v5198 = vld [vmem:[%s3 + $0x2c8] sm:$0xf]
      %v5199 = vld [vmem:[%s3 + $0x2cc] sm:$0xf]
      %v5200 = vld [vmem:[%s3 + $0x2d0] sm:$0xf]
      %v5201 = vld [vmem:[%s3 + $0x2d4] sm:$0xf]
      %v5202 = vld [vmem:[%s3 + $0x2d8] sm:$0xf]
      %v5203 = vld [vmem:[%s3 + $0x2dc] sm:$0xf]
      %v5204 = vld [vmem:[%s3 + $0x2e0] sm:$0xf]
      %v5205 = vld [vmem:[%s3 + $0x2e4] sm:$0xf]
      %v5206 = vld [vmem:[%s3 + $0x2e8] sm:$0xf]
      %v5207 = vld [vmem:[%s3 + $0x2ec] sm:$0xf]
      %v5208 = vld [vmem:[%s3 + $0x2f0] sm:$0xf]
      %v5209 = vld [vmem:[%s3 + $0x2f4] sm:$0xf]
      %v5210 = vld [vmem:[%s3 + $0x2f8] sm:$0xf]
      %v5211 = vld [vmem:[%s3 + $0x2fc] sm:$0xf]
      %v5212 = vld [vmem:[%s3 + $0x300] sm:$0xf]
      %v5213 = vld [vmem:[%s3 + $0x304] sm:$0xf]
      %v5214 = vld [vmem:[%s3 + $0x308] sm:$0xf]
      %v5215 = vld [vmem:[%s3 + $0x30c] sm:$0xf]
      %v5216 = vld [vmem:[%s3 + $0x310] sm:$0xf]
      %v5217 = vld [vmem:[%s3 + $0x314] sm:$0xf]
      %v5218 = vld [vmem:[%s3 + $0x318] sm:$0xf]
      %v5219 = vld [vmem:[%s3 + $0x31c] sm:$0xf]
      %v5220 = vld [vmem:[%s3 + $0x320] sm:$0xf]
      %v5221 = vld [vmem:[%s3 + $0x324] sm:$0xf]
      %v5222 = vld [vmem:[%s3 + $0x328] sm:$0xf]
      %v5223 = vld [vmem:[%s3 + $0x32c] sm:$0xf]
      %v5224 = vld [vmem:[%s3 + $0x330] sm:$0xf]
      %v5225 = vld [vmem:[%s3 + $0x334] sm:$0xf]
      %v5226 = vld [vmem:[%s3 + $0x338] sm:$0xf]
      %v5227 = vld [vmem:[%s3 + $0x33c] sm:$0xf]
      %v5228 = vld [vmem:[%s3 + $0x340] sm:$0xf]
      %v5229 = vld [vmem:[%s3 + $0x344] sm:$0xf]
      %v5230 = vld [vmem:[%s3 + $0x348] sm:$0xf]
      %v5231 = vld [vmem:[%s3 + $0x34c] sm:$0xf]
      %v5232 = vld [vmem:[%s3 + $0x350] sm:$0xf]
      %v5233 = vld [vmem:[%s3 + $0x354] sm:$0xf]
      %v5234 = vld [vmem:[%s3 + $0x358] sm:$0xf]
      %v5235 = vld [vmem:[%s3 + $0x35c] sm:$0xf]
      %v5236 = vld [vmem:[%s3 + $0x360] sm:$0xf]
      %v5237 = vld [vmem:[%s3 + $0x364] sm:$0xf]
      %v5238 = vld [vmem:[%s3 + $0x368] sm:$0xf]
      %v5239 = vld [vmem:[%s3 + $0x36c] sm:$0xf]
      %v5240 = vld [vmem:[%s3 + $0x370] sm:$0xf]
      %v5241 = vld [vmem:[%s3 + $0x374] sm:$0xf]
      %v5242 = vld [vmem:[%s3 + $0x378] sm:$0xf]
      %v5243 = vld [vmem:[%s3 + $0x37c] sm:$0xf]
      %v5244 = vld [vmem:[%s3 + $0x380] sm:$0xf]
      %v5245 = vld [vmem:[%s3 + $0x384] sm:$0xf]
      %v5246 = vld [vmem:[%s3 + $0x388] sm:$0xf]
      %v5247 = vld [vmem:[%s3 + $0x38c] sm:$0xf]
      %v5248 = vld [vmem:[%s3 + $0x390] sm:$0xf]
      %v5249 = vld [vmem:[%s3 + $0x394] sm:$0xf]
      %v5250 = vld [vmem:[%s3 + $0x398] sm:$0xf]
      %v5251 = vld [vmem:[%s3 + $0x39c] sm:$0xf]
      %v5252 = vld [vmem:[%s3 + $0x3a0] sm:$0xf]
      %v5253 = vld [vmem:[%s3 + $0x3a4] sm:$0xf]
      %v5254 = vld [vmem:[%s3 + $0x3a8] sm:$0xf]
      %v5255 = vld [vmem:[%s3 + $0x3ac] sm:$0xf]
      %v5256 = vld [vmem:[%s3 + $0x3b0] sm:$0xf]
      %v5257 = vld [vmem:[%s3 + $0x3b4] sm:$0xf]
      %v5258 = vld [vmem:[%s3 + $0x3b8] sm:$0xf]
      %v5259 = vld [vmem:[%s3 + $0x3bc] sm:$0xf]
      %v5260 = vld [vmem:[%s3 + $0x3c0] sm:$0xf]
      %v5261 = vld [vmem:[%s3 + $0x3c4] sm:$0xf]
      %v5262 = vld [vmem:[%s3 + $0x3c8] sm:$0xf]
      %v5263 = vld [vmem:[%s3 + $0x3cc] sm:$0xf]
      %v5264 = vld [vmem:[%s3 + $0x3d0] sm:$0xf]
      %v5265 = vld [vmem:[%s3 + $0x3d4] sm:$0xf]
      %v5266 = vld [vmem:[%s3 + $0x3d8] sm:$0xf]
      %v5267 = vld [vmem:[%s3 + $0x3dc] sm:$0xf]
      %v5268 = vld [vmem:[%s3 + $0x3e0] sm:$0xf]
      %v5269 = vld [vmem:[%s3 + $0x3e4] sm:$0xf]
      %v5270 = vld [vmem:[%s3 + $0x3e8] sm:$0xf]
      %v5271 = vld [vmem:[%s3 + $0x3ec] sm:$0xf]
      %v5272 = vld [vmem:[%s3 + $0x3f0] sm:$0xf]
      %v5273 = vld [vmem:[%s3 + $0x3f4] sm:$0xf]
      %v5274 = vld [vmem:[%s3 + $0x3f8] sm:$0xf]
      %v5275 = vld [vmem:[%s3 + $0x3fc] sm:$0xf]
      %v5276 = vld [vmem:[%s3 + $0x400] sm:$0xf]
      %v5277 = vld [vmem:[%s3 + $0x404] sm:$0xf]
      %v5278 = vld [vmem:[%s3 + $0x408] sm:$0xf]
      %v5279 = vld [vmem:[%s3 + $0x40c] sm:$0xf]
      %v5280 = vld [vmem:[%s3 + $0x410] sm:$0xf]
      %v5281 = vld [vmem:[%s3 + $0x414] sm:$0xf]
      %v5282 = vld [vmem:[%s3 + $0x418] sm:$0xf]
      %v5283 = vld [vmem:[%s3 + $0x41c] sm:$0xf]
      %v5284 = vld [vmem:[%s3 + $0x420] sm:$0xf]
      %v5285 = vld [vmem:[%s3 + $0x424] sm:$0xf]
      %v5286 = vld [vmem:[%s3 + $0x428] sm:$0xf]
      %v5287 = vld [vmem:[%s3 + $0x42c] sm:$0xf]
      %v5288 = vld [vmem:[%s3 + $0x430] sm:$0xf]
      %v5289 = vld [vmem:[%s3 + $0x434] sm:$0xf]
      %v5290 = vld [vmem:[%s3 + $0x438] sm:$0xf]
      %v5291 = vld [vmem:[%s3 + $0x43c] sm:$0xf]
      %v5292 = vld [vmem:[%s3 + $0x440] sm:$0xf]
      %v5293 = vld [vmem:[%s3 + $0x444] sm:$0xf]
      %v5294 = vld [vmem:[%s3 + $0x448] sm:$0xf]
      %v5295 = vld [vmem:[%s3 + $0x44c] sm:$0xf]
      %v5296 = vld [vmem:[%s3 + $0x450] sm:$0xf]
      %v5297 = vld [vmem:[%s3 + $0x454] sm:$0xf]
      %v5298 = vld [vmem:[%s3 + $0x458] sm:$0xf]
      %v5299 = vld [vmem:[%s3 + $0x45c] sm:$0xf]
      %v5300 = vld [vmem:[%s3 + $0x460] sm:$0xf]
      %v5301 = vld [vmem:[%s3 + $0x464] sm:$0xf]
      %v5302 = vld [vmem:[%s3 + $0x468] sm:$0xf]
      %v5303 = vld [vmem:[%s3 + $0x46c] sm:$0xf]
      %v5304 = vld [vmem:[%s3 + $0x470] sm:$0xf]
      %v5305 = vld [vmem:[%s3 + $0x474] sm:$0xf]
      %v5306 = vld [vmem:[%s3 + $0x478] sm:$0xf]
      %v5307 = vld [vmem:[%s3 + $0x47c] sm:$0xf]
      %v5308 = vunpack.c.l.bf16 %v5020
      %v5309 = vunpack.c.l.bf16 %v5021
      %v5310 = vunpack.c.l.bf16 %v5022
      %v5311 = vunpack.c.l.bf16 %v5023
      %v5312 = vunpack.c.l.bf16 %v5024
      %v5313 = vunpack.c.l.bf16 %v5025
      %v5314 = vunpack.c.l.bf16 %v5026
      %v5315 = vunpack.c.l.bf16 %v5027
      %v5316 = vunpack.c.l.bf16 %v5028
      %v5317 = vunpack.c.l.bf16 %v5029
      %v5318 = vunpack.c.l.bf16 %v5030
      %v5319 = vunpack.c.l.bf16 %v5031
      %v5320 = vunpack.c.l.bf16 %v5032
      %v5321 = vunpack.c.l.bf16 %v5033
      %v5322 = vunpack.c.l.bf16 %v5034
      %v5323 = vunpack.c.l.bf16 %v5035
      %v5324 = vunpack.c.l.bf16 %v5036
      %v5325 = vunpack.c.l.bf16 %v5037
      %v5326 = vunpack.c.l.bf16 %v5038
      %v5327 = vunpack.c.l.bf16 %v5039
      %v5328 = vunpack.c.l.bf16 %v5040
      %v5329 = vunpack.c.l.bf16 %v5041
      %v5330 = vunpack.c.l.bf16 %v5042
      %v5331 = vunpack.c.l.bf16 %v5043
      %v5332 = vunpack.c.l.bf16 %v5044
      %v5333 = vunpack.c.l.bf16 %v5045
      %v5334 = vunpack.c.l.bf16 %v5046
      %v5335 = vunpack.c.l.bf16 %v5047
      %v5336 = vunpack.c.l.bf16 %v5048
      %v5337 = vunpack.c.l.bf16 %v5049
      %v5338 = vunpack.c.l.bf16 %v5050
      %v5339 = vunpack.c.l.bf16 %v5051
      %v5340 = vunpack.c.l.bf16 %v5052
      %v5341 = vunpack.c.l.bf16 %v5053
      %v5342 = vunpack.c.l.bf16 %v5054
      %v5343 = vunpack.c.l.bf16 %v5055
      %v5344 = vunpack.c.l.bf16 %v5056
      %v5345 = vunpack.c.l.bf16 %v5057
      %v5346 = vunpack.c.l.bf16 %v5058
      %v5347 = vunpack.c.l.bf16 %v5059
      %v5348 = vunpack.c.l.bf16 %v5060
      %v5349 = vunpack.c.l.bf16 %v5061
      %v5350 = vunpack.c.l.bf16 %v5062
      %v5351 = vunpack.c.l.bf16 %v5063
      %v5352 = vunpack.c.l.bf16 %v5064
      %v5353 = vunpack.c.l.bf16 %v5065
      %v5354 = vunpack.c.l.bf16 %v5066
      %v5355 = vunpack.c.l.bf16 %v5067
      %v5356 = vunpack.c.l.bf16 %v5068
      %v5357 = vunpack.c.l.bf16 %v5069
      %v5358 = vunpack.c.l.bf16 %v5070
      %v5359 = vunpack.c.l.bf16 %v5071
      %v5360 = vunpack.c.l.bf16 %v5072
      %v5361 = vunpack.c.l.bf16 %v5073
      %v5362 = vunpack.c.l.bf16 %v5074
      %v5363 = vunpack.c.l.bf16 %v5075
      %v5364 = vunpack.c.l.bf16 %v5076
      %v5365 = vunpack.c.l.bf16 %v5077
      %v5366 = vunpack.c.l.bf16 %v5078
      %v5367 = vunpack.c.l.bf16 %v5079
      %v5368 = vunpack.c.l.bf16 %v5080
      %v5369 = vunpack.c.l.bf16 %v5081
      %v5370 = vunpack.c.l.bf16 %v5082
      %v5371 = vunpack.c.l.bf16 %v5083
      %v5372 = vunpack.c.l.bf16 %v5084
      %v5373 = vunpack.c.l.bf16 %v5085
      %v5374 = vunpack.c.l.bf16 %v5086
      %v5375 = vunpack.c.l.bf16 %v5087
      %v5376 = vunpack.c.l.bf16 %v5088
      %v5377 = vunpack.c.l.bf16 %v5089
      %v5378 = vunpack.c.l.bf16 %v5090
      %v5379 = vunpack.c.l.bf16 %v5091
      %v5380 = vunpack.c.l.bf16 %v5092
      %v5381 = vunpack.c.l.bf16 %v5093
      %v5382 = vunpack.c.l.bf16 %v5094
      %v5383 = vunpack.c.l.bf16 %v5095
      %v5384 = vunpack.c.l.bf16 %v5096
      %v5385 = vunpack.c.l.bf16 %v5097
      %v5386 = vunpack.c.l.bf16 %v5098
      %v5387 = vunpack.c.l.bf16 %v5099
      %v5388 = vunpack.c.l.bf16 %v5100
      %v5389 = vunpack.c.l.bf16 %v5101
      %v5390 = vunpack.c.l.bf16 %v5102
      %v5391 = vunpack.c.l.bf16 %v5103
      %v5392 = vunpack.c.l.bf16 %v5104
      %v5393 = vunpack.c.l.bf16 %v5105
      %v5394 = vunpack.c.l.bf16 %v5106
      %v5395 = vunpack.c.l.bf16 %v5107
      %v5396 = vunpack.c.l.bf16 %v5108
      %v5397 = vunpack.c.l.bf16 %v5109
      %v5398 = vunpack.c.l.bf16 %v5110
      %v5399 = vunpack.c.l.bf16 %v5111
      %v5400 = vunpack.c.l.bf16 %v5112
      %v5401 = vunpack.c.l.bf16 %v5113
      %v5402 = vunpack.c.l.bf16 %v5114
      %v5403 = vunpack.c.l.bf16 %v5115
      %v5404 = vunpack.c.l.bf16 %v5116
      %v5405 = vunpack.c.l.bf16 %v5117
      %v5406 = vunpack.c.l.bf16 %v5118
      %v5407 = vunpack.c.l.bf16 %v5119
      %v5408 = vunpack.c.l.bf16 %v5120
      %v5409 = vunpack.c.l.bf16 %v5121
      %v5410 = vunpack.c.l.bf16 %v5122
      %v5411 = vunpack.c.l.bf16 %v5123
      %v5412 = vunpack.c.l.bf16 %v5124
      %v5413 = vunpack.c.l.bf16 %v5125
      %v5414 = vunpack.c.l.bf16 %v5126
      %v5415 = vunpack.c.l.bf16 %v5127
      %v5416 = vunpack.c.l.bf16 %v5128
      %v5417 = vunpack.c.l.bf16 %v5129
      %v5418 = vunpack.c.l.bf16 %v5130
      %v5419 = vunpack.c.l.bf16 %v5131
      %v5420 = vunpack.c.l.bf16 %v5132
      %v5421 = vunpack.c.l.bf16 %v5133
      %v5422 = vunpack.c.l.bf16 %v5134
      %v5423 = vunpack.c.l.bf16 %v5135
      %v5424 = vunpack.c.l.bf16 %v5136
      %v5425 = vunpack.c.l.bf16 %v5137
      %v5426 = vunpack.c.l.bf16 %v5138
      %v5427 = vunpack.c.l.bf16 %v5139
      %v5428 = vunpack.c.l.bf16 %v5140
      %v5429 = vunpack.c.l.bf16 %v5141
      %v5430 = vunpack.c.l.bf16 %v5142
      %v5431 = vunpack.c.l.bf16 %v5143
      %v5432 = vunpack.c.l.bf16 %v5144
      %v5433 = vunpack.c.l.bf16 %v5145
      %v5434 = vunpack.c.l.bf16 %v5146
      %v5435 = vunpack.c.l.bf16 %v5147
      %v5436 = vunpack.c.l.bf16 %v5148
      %v5437 = vunpack.c.l.bf16 %v5149
      %v5438 = vunpack.c.l.bf16 %v5150
      %v5439 = vunpack.c.l.bf16 %v5151
      %v5440 = vunpack.c.l.bf16 %v5152
      %v5441 = vunpack.c.l.bf16 %v5153
      %v5442 = vunpack.c.l.bf16 %v5154
      %v5443 = vunpack.c.l.bf16 %v5155
      %v5444 = vunpack.c.l.bf16 %v5156
      %v5445 = vunpack.c.l.bf16 %v5157
      %v5446 = vunpack.c.l.bf16 %v5158
      %v5447 = vunpack.c.l.bf16 %v5159
      %v5448 = vunpack.c.l.bf16 %v5160
      %v5449 = vunpack.c.l.bf16 %v5161
      %v5450 = vunpack.c.l.bf16 %v5162
      %v5451 = vunpack.c.l.bf16 %v5163
      %v5452 = vunpack.c.l.bf16 %v5164
      %v5453 = vunpack.c.l.bf16 %v5165
      %v5454 = vunpack.c.l.bf16 %v5166
      %v5455 = vunpack.c.l.bf16 %v5167
      %v5456 = vunpack.c.l.bf16 %v5168
      %v5457 = vunpack.c.l.bf16 %v5169
      %v5458 = vunpack.c.l.bf16 %v5170
      %v5459 = vunpack.c.l.bf16 %v5171
      %v5460 = vunpack.c.l.bf16 %v5172
      %v5461 = vunpack.c.l.bf16 %v5173
      %v5462 = vunpack.c.l.bf16 %v5174
      %v5463 = vunpack.c.l.bf16 %v5175
      %v5464 = vunpack.c.l.bf16 %v5176
      %v5465 = vunpack.c.l.bf16 %v5177
      %v5466 = vunpack.c.l.bf16 %v5178
      %v5467 = vunpack.c.l.bf16 %v5179
      %v5468 = vunpack.c.l.bf16 %v5180
      %v5469 = vunpack.c.l.bf16 %v5181
      %v5470 = vunpack.c.l.bf16 %v5182
      %v5471 = vunpack.c.l.bf16 %v5183
      %v5472 = vunpack.c.l.bf16 %v5184
      %v5473 = vunpack.c.l.bf16 %v5185
      %v5474 = vunpack.c.l.bf16 %v5186
      %v5475 = vunpack.c.l.bf16 %v5187
      %v5476 = vunpack.c.l.bf16 %v5188
      %v5477 = vunpack.c.l.bf16 %v5189
      %v5478 = vunpack.c.l.bf16 %v5190
      %v5479 = vunpack.c.l.bf16 %v5191
      %v5480 = vunpack.c.l.bf16 %v5192
      %v5481 = vunpack.c.l.bf16 %v5193
      %v5482 = vunpack.c.l.bf16 %v5194
      %v5483 = vunpack.c.l.bf16 %v5195
      %v5484 = vunpack.c.l.bf16 %v5196
      %v5485 = vunpack.c.l.bf16 %v5197
      %v5486 = vunpack.c.l.bf16 %v5198
      %v5487 = vunpack.c.l.bf16 %v5199
      %v5488 = vunpack.c.l.bf16 %v5200
      %v5489 = vunpack.c.l.bf16 %v5201
      %v5490 = vunpack.c.l.bf16 %v5202
      %v5491 = vunpack.c.l.bf16 %v5203
      %v5492 = vunpack.c.l.bf16 %v5204
      %v5493 = vunpack.c.l.bf16 %v5205
      %v5494 = vunpack.c.l.bf16 %v5206
      %v5495 = vunpack.c.l.bf16 %v5207
      %v5496 = vunpack.c.l.bf16 %v5208
      %v5497 = vunpack.c.l.bf16 %v5209
      %v5498 = vunpack.c.l.bf16 %v5210
      %v5499 = vunpack.c.l.bf16 %v5211
      %v5500 = vunpack.c.l.bf16 %v5212
      %v5501 = vunpack.c.l.bf16 %v5213
      %v5502 = vunpack.c.l.bf16 %v5214
      %v5503 = vunpack.c.l.bf16 %v5215
      %v5504 = vunpack.c.l.bf16 %v5216
      %v5505 = vunpack.c.l.bf16 %v5217
      %v5506 = vunpack.c.l.bf16 %v5218
      %v5507 = vunpack.c.l.bf16 %v5219
      %v5508 = vunpack.c.l.bf16 %v5220
      %v5509 = vunpack.c.l.bf16 %v5221
      %v5510 = vunpack.c.l.bf16 %v5222
      %v5511 = vunpack.c.l.bf16 %v5223
      %v5512 = vunpack.c.l.bf16 %v5224
      %v5513 = vunpack.c.l.bf16 %v5225
      %v5514 = vunpack.c.l.bf16 %v5226
      %v5515 = vunpack.c.l.bf16 %v5227
      %v5516 = vunpack.c.l.bf16 %v5228
      %v5517 = vunpack.c.l.bf16 %v5229
      %v5518 = vunpack.c.l.bf16 %v5230
      %v5519 = vunpack.c.l.bf16 %v5231
      %v5520 = vunpack.c.l.bf16 %v5232
      %v5521 = vunpack.c.l.bf16 %v5233
      %v5522 = vunpack.c.l.bf16 %v5234
      %v5523 = vunpack.c.l.bf16 %v5235
      %v5524 = vunpack.c.l.bf16 %v5236
      %v5525 = vunpack.c.l.bf16 %v5237
      %v5526 = vunpack.c.l.bf16 %v5238
      %v5527 = vunpack.c.l.bf16 %v5239
      %v5528 = vunpack.c.l.bf16 %v5240
      %v5529 = vunpack.c.l.bf16 %v5241
      %v5530 = vunpack.c.l.bf16 %v5242
      %v5531 = vunpack.c.l.bf16 %v5243
      %v5532 = vunpack.c.l.bf16 %v5244
      %v5533 = vunpack.c.l.bf16 %v5245
      %v5534 = vunpack.c.l.bf16 %v5246
      %v5535 = vunpack.c.l.bf16 %v5247
      %v5536 = vunpack.c.l.bf16 %v5248
      %v5537 = vunpack.c.l.bf16 %v5249
      %v5538 = vunpack.c.l.bf16 %v5250
      %v5539 = vunpack.c.l.bf16 %v5251
      %v5540 = vunpack.c.l.bf16 %v5252
      %v5541 = vunpack.c.l.bf16 %v5253
      %v5542 = vunpack.c.l.bf16 %v5254
      %v5543 = vunpack.c.l.bf16 %v5255
      %v5544 = vunpack.c.l.bf16 %v5256
      %v5545 = vunpack.c.l.bf16 %v5257
      %v5546 = vunpack.c.l.bf16 %v5258
      %v5547 = vunpack.c.l.bf16 %v5259
      %v5548 = vunpack.c.l.bf16 %v5260
      %v5549 = vunpack.c.l.bf16 %v5261
      %v5550 = vunpack.c.l.bf16 %v5262
      %v5551 = vunpack.c.l.bf16 %v5263
      %v5552 = vunpack.c.l.bf16 %v5264
      %v5553 = vunpack.c.l.bf16 %v5265
      %v5554 = vunpack.c.l.bf16 %v5266
      %v5555 = vunpack.c.l.bf16 %v5267
      %v5556 = vunpack.c.l.bf16 %v5268
      %v5557 = vunpack.c.l.bf16 %v5269
      %v5558 = vunpack.c.l.bf16 %v5270
      %v5559 = vunpack.c.l.bf16 %v5271
      %v5560 = vunpack.c.l.bf16 %v5272
      %v5561 = vunpack.c.l.bf16 %v5273
      %v5562 = vunpack.c.l.bf16 %v5274
      %v5563 = vunpack.c.l.bf16 %v5275
      %v5564 = vunpack.c.l.bf16 %v5276
      %v5565 = vunpack.c.l.bf16 %v5277
      %v5566 = vunpack.c.l.bf16 %v5278
      %v5567 = vunpack.c.l.bf16 %v5279
      %v5568 = vunpack.c.l.bf16 %v5280
      %v5569 = vunpack.c.l.bf16 %v5281
      %v5570 = vunpack.c.l.bf16 %v5282
      %v5571 = vunpack.c.l.bf16 %v5283
      %v5572 = vunpack.c.l.bf16 %v5284
      %v5573 = vunpack.c.l.bf16 %v5285
      %v5574 = vunpack.c.l.bf16 %v5286
      %v5575 = vunpack.c.l.bf16 %v5287
      %v5576 = vunpack.c.l.bf16 %v5288
      %v5577 = vunpack.c.l.bf16 %v5289
      %v5578 = vunpack.c.l.bf16 %v5290
      %v5579 = vunpack.c.l.bf16 %v5291
      %v5580 = vunpack.c.l.bf16 %v5292
      %v5581 = vunpack.c.l.bf16 %v5293
      %v5582 = vunpack.c.l.bf16 %v5294
      %v5583 = vunpack.c.l.bf16 %v5295
      %v5584 = vunpack.c.l.bf16 %v5296
      %v5585 = vunpack.c.l.bf16 %v5297
      %v5586 = vunpack.c.l.bf16 %v5298
      %v5587 = vunpack.c.l.bf16 %v5299
      %v5588 = vunpack.c.l.bf16 %v5300
      %v5589 = vunpack.c.l.bf16 %v5301
      %v5590 = vunpack.c.l.bf16 %v5302
      %v5591 = vunpack.c.l.bf16 %v5303
      %v5592 = vunpack.c.l.bf16 %v5304
      %v5593 = vunpack.c.l.bf16 %v5305
      %v5594 = vunpack.c.l.bf16 %v5306
      %v5595 = vunpack.c.l.bf16 %v5307
      %5597 = vset.pattern.permute.xlu0 0
      %5598 = vperm.xlu0 %5597, %v4445
      %v5599 = vpop.permute.xlu0 %5598
      %5602 = vset.pattern.permute.xlu0 0
      %5603 = vperm.xlu0 %5602, %v4447
      %v5604 = vpop.permute.xlu0 %5603
      %5607 = vset.pattern.permute.xlu0 0
      %5608 = vperm.xlu0 %5607, %v4449
      %v5609 = vpop.permute.xlu0 %5608
      %5612 = vset.pattern.permute.xlu0 0
      %5613 = vperm.xlu0 %5612, %v4451
      %v5614 = vpop.permute.xlu0 %5613
      %5617 = vset.pattern.permute.xlu0 0
      %5618 = vperm.xlu0 %5617, %v4453
      %v5619 = vpop.permute.xlu0 %5618
      %5622 = vset.pattern.permute.xlu0 0
      %5623 = vperm.xlu0 %5622, %v4455
      %v5624 = vpop.permute.xlu0 %5623
      %5627 = vset.pattern.permute.xlu0 0
      %5628 = vperm.xlu0 %5627, %v4457
      %v5629 = vpop.permute.xlu0 %5628
      %5632 = vset.pattern.permute.xlu0 0
      %5633 = vperm.xlu0 %5632, %v4459
      %v5634 = vpop.permute.xlu0 %5633
      %5637 = vset.pattern.permute.xlu0 0
      %5638 = vperm.xlu0 %5637, %v4461
      %v5639 = vpop.permute.xlu0 %5638
      %5642 = vset.pattern.permute.xlu0 0
      %5643 = vperm.xlu0 %5642, %v4463
      %v5644 = vpop.permute.xlu0 %5643
      %5647 = vset.pattern.permute.xlu0 0
      %5648 = vperm.xlu0 %5647, %v4465
      %v5649 = vpop.permute.xlu0 %5648
      %5652 = vset.pattern.permute.xlu0 0
      %5653 = vperm.xlu0 %5652, %v4467
      %v5654 = vpop.permute.xlu0 %5653
      %5657 = vset.pattern.permute.xlu0 0
      %5658 = vperm.xlu0 %5657, %v4469
      %v5659 = vpop.permute.xlu0 %5658
      %5662 = vset.pattern.permute.xlu0 0
      %5663 = vperm.xlu0 %5662, %v4471
      %v5664 = vpop.permute.xlu0 %5663
      %5667 = vset.pattern.permute.xlu0 0
      %5668 = vperm.xlu0 %5667, %v4473
      %v5669 = vpop.permute.xlu0 %5668
      %5672 = vset.pattern.permute.xlu0 0
      %5673 = vperm.xlu0 %5672, %v4475
      %v5674 = vpop.permute.xlu0 %5673
      %5677 = vset.pattern.permute.xlu0 0
      %5678 = vperm.xlu0 %5677, %v4477
      %v5679 = vpop.permute.xlu0 %5678
      %5682 = vset.pattern.permute.xlu0 0
      %5683 = vperm.xlu0 %5682, %v4479
      %v5684 = vpop.permute.xlu0 %5683
      %5687 = vset.pattern.permute.xlu0 0
      %5688 = vperm.xlu0 %5687, %v4481
      %v5689 = vpop.permute.xlu0 %5688
      %5692 = vset.pattern.permute.xlu0 0
      %5693 = vperm.xlu0 %5692, %v4483
      %v5694 = vpop.permute.xlu0 %5693
      %5697 = vset.pattern.permute.xlu0 0
      %5698 = vperm.xlu0 %5697, %v4485
      %v5699 = vpop.permute.xlu0 %5698
      %5702 = vset.pattern.permute.xlu0 0
      %5703 = vperm.xlu0 %5702, %v4487
      %v5704 = vpop.permute.xlu0 %5703
      %5707 = vset.pattern.permute.xlu0 0
      %5708 = vperm.xlu0 %5707, %v4489
      %v5709 = vpop.permute.xlu0 %5708
      %5712 = vset.pattern.permute.xlu0 0
      %5713 = vperm.xlu0 %5712, %v4491
      %v5714 = vpop.permute.xlu0 %5713
      %5717 = vset.pattern.permute.xlu0 0
      %5718 = vperm.xlu0 %5717, %v4493
      %v5719 = vpop.permute.xlu0 %5718
      %5722 = vset.pattern.permute.xlu0 0
      %5723 = vperm.xlu0 %5722, %v4495
      %v5724 = vpop.permute.xlu0 %5723
      %5727 = vset.pattern.permute.xlu0 0
      %5728 = vperm.xlu0 %5727, %v4497
      %v5729 = vpop.permute.xlu0 %5728
      %5732 = vset.pattern.permute.xlu0 0
      %5733 = vperm.xlu0 %5732, %v4499
      %v5734 = vpop.permute.xlu0 %5733
      %5737 = vset.pattern.permute.xlu0 0
      %5738 = vperm.xlu0 %5737, %v4501
      %v5739 = vpop.permute.xlu0 %5738
      %5742 = vset.pattern.permute.xlu0 0
      %5743 = vperm.xlu0 %5742, %v4503
      %v5744 = vpop.permute.xlu0 %5743
      %5747 = vset.pattern.permute.xlu0 0
      %5748 = vperm.xlu0 %5747, %v4505
      %v5749 = vpop.permute.xlu0 %5748
      %5752 = vset.pattern.permute.xlu0 0
      %5753 = vperm.xlu0 %5752, %v4507
      %v5754 = vpop.permute.xlu0 %5753
      %5757 = vset.pattern.permute.xlu0 0
      %5758 = vperm.xlu0 %5757, %v4509
      %v5759 = vpop.permute.xlu0 %5758
      %5762 = vset.pattern.permute.xlu0 0
      %5763 = vperm.xlu0 %5762, %v4511
      %v5764 = vpop.permute.xlu0 %5763
      %5767 = vset.pattern.permute.xlu0 0
      %5768 = vperm.xlu0 %5767, %v4513
      %v5769 = vpop.permute.xlu0 %5768
      %5772 = vset.pattern.permute.xlu0 0
      %5773 = vperm.xlu0 %5772, %v4515
      %v5774 = vpop.permute.xlu0 %5773
      %5777 = vset.pattern.permute.xlu0 0
      %5778 = vperm.xlu0 %5777, %v4517
      %v5779 = vpop.permute.xlu0 %5778
      %5782 = vset.pattern.permute.xlu0 0
      %5783 = vperm.xlu0 %5782, %v4519
      %v5784 = vpop.permute.xlu0 %5783
      %5787 = vset.pattern.permute.xlu0 0
      %5788 = vperm.xlu0 %5787, %v4521
      %v5789 = vpop.permute.xlu0 %5788
      %5792 = vset.pattern.permute.xlu0 0
      %5793 = vperm.xlu0 %5792, %v4523
      %v5794 = vpop.permute.xlu0 %5793
      %5797 = vset.pattern.permute.xlu0 0
      %5798 = vperm.xlu0 %5797, %v4525
      %v5799 = vpop.permute.xlu0 %5798
      %5802 = vset.pattern.permute.xlu0 0
      %5803 = vperm.xlu0 %5802, %v4527
      %v5804 = vpop.permute.xlu0 %5803
      %5807 = vset.pattern.permute.xlu0 0
      %5808 = vperm.xlu0 %5807, %v4529
      %v5809 = vpop.permute.xlu0 %5808
      %5812 = vset.pattern.permute.xlu0 0
      %5813 = vperm.xlu0 %5812, %v4531
      %v5814 = vpop.permute.xlu0 %5813
      %5817 = vset.pattern.permute.xlu0 0
      %5818 = vperm.xlu0 %5817, %v4533
      %v5819 = vpop.permute.xlu0 %5818
      %5822 = vset.pattern.permute.xlu0 0
      %5823 = vperm.xlu0 %5822, %v4535
      %v5824 = vpop.permute.xlu0 %5823
      %5827 = vset.pattern.permute.xlu0 0
      %5828 = vperm.xlu0 %5827, %v4537
      %v5829 = vpop.permute.xlu0 %5828
      %5832 = vset.pattern.permute.xlu0 0
      %5833 = vperm.xlu0 %5832, %v4539
      %v5834 = vpop.permute.xlu0 %5833
      %5837 = vset.pattern.permute.xlu0 0
      %5838 = vperm.xlu0 %5837, %v4541
      %v5839 = vpop.permute.xlu0 %5838
      %5842 = vset.pattern.permute.xlu0 0
      %5843 = vperm.xlu0 %5842, %v4543
      %v5844 = vpop.permute.xlu0 %5843
      %5847 = vset.pattern.permute.xlu0 0
      %5848 = vperm.xlu0 %5847, %v4545
      %v5849 = vpop.permute.xlu0 %5848
      %5852 = vset.pattern.permute.xlu0 0
      %5853 = vperm.xlu0 %5852, %v4547
      %v5854 = vpop.permute.xlu0 %5853
      %5857 = vset.pattern.permute.xlu0 0
      %5858 = vperm.xlu0 %5857, %v4549
      %v5859 = vpop.permute.xlu0 %5858
      %5862 = vset.pattern.permute.xlu0 0
      %5863 = vperm.xlu0 %5862, %v4551
      %v5864 = vpop.permute.xlu0 %5863
      %5867 = vset.pattern.permute.xlu0 0
      %5868 = vperm.xlu0 %5867, %v4553
      %v5869 = vpop.permute.xlu0 %5868
      %5872 = vset.pattern.permute.xlu0 0
      %5873 = vperm.xlu0 %5872, %v4555
      %v5874 = vpop.permute.xlu0 %5873
      %5877 = vset.pattern.permute.xlu0 0
      %5878 = vperm.xlu0 %5877, %v4557
      %v5879 = vpop.permute.xlu0 %5878
      %5882 = vset.pattern.permute.xlu0 0
      %5883 = vperm.xlu0 %5882, %v4559
      %v5884 = vpop.permute.xlu0 %5883
      %5887 = vset.pattern.permute.xlu0 0
      %5888 = vperm.xlu0 %5887, %v4561
      %v5889 = vpop.permute.xlu0 %5888
      %5892 = vset.pattern.permute.xlu0 0
      %5893 = vperm.xlu0 %5892, %v4563
      %v5894 = vpop.permute.xlu0 %5893
      %5897 = vset.pattern.permute.xlu0 0
      %5898 = vperm.xlu0 %5897, %v4565
      %v5899 = vpop.permute.xlu0 %5898
      %5902 = vset.pattern.permute.xlu0 0
      %5903 = vperm.xlu0 %5902, %v4567
      %v5904 = vpop.permute.xlu0 %5903
      %5907 = vset.pattern.permute.xlu0 0
      %5908 = vperm.xlu0 %5907, %v4569
      %v5909 = vpop.permute.xlu0 %5908
      %5912 = vset.pattern.permute.xlu0 0
      %5913 = vperm.xlu0 %5912, %v4571
      %v5914 = vpop.permute.xlu0 %5913
      %5917 = vset.pattern.permute.xlu0 0
      %5918 = vperm.xlu0 %5917, %v4573
      %v5919 = vpop.permute.xlu0 %5918
      %5922 = vset.pattern.permute.xlu0 0
      %5923 = vperm.xlu0 %5922, %v4575
      %v5924 = vpop.permute.xlu0 %5923
      %5927 = vset.pattern.permute.xlu0 0
      %5928 = vperm.xlu0 %5927, %v4577
      %v5929 = vpop.permute.xlu0 %5928
      %5932 = vset.pattern.permute.xlu0 0
      %5933 = vperm.xlu0 %5932, %v4579
      %v5934 = vpop.permute.xlu0 %5933
      %5937 = vset.pattern.permute.xlu0 0
      %5938 = vperm.xlu0 %5937, %v4581
      %v5939 = vpop.permute.xlu0 %5938
      %5942 = vset.pattern.permute.xlu0 0
      %5943 = vperm.xlu0 %5942, %v4583
      %v5944 = vpop.permute.xlu0 %5943
      %5947 = vset.pattern.permute.xlu0 0
      %5948 = vperm.xlu0 %5947, %v4585
      %v5949 = vpop.permute.xlu0 %5948
      %5952 = vset.pattern.permute.xlu0 0
      %5953 = vperm.xlu0 %5952, %v4587
      %v5954 = vpop.permute.xlu0 %5953
      %5957 = vset.pattern.permute.xlu0 0
      %5958 = vperm.xlu0 %5957, %v4589
      %v5959 = vpop.permute.xlu0 %5958
      %5962 = vset.pattern.permute.xlu0 0
      %5963 = vperm.xlu0 %5962, %v4591
      %v5964 = vpop.permute.xlu0 %5963
      %5967 = vset.pattern.permute.xlu0 0
      %5968 = vperm.xlu0 %5967, %v4593
      %v5969 = vpop.permute.xlu0 %5968
      %5972 = vset.pattern.permute.xlu0 0
      %5973 = vperm.xlu0 %5972, %v4595
      %v5974 = vpop.permute.xlu0 %5973
      %5977 = vset.pattern.permute.xlu0 0
      %5978 = vperm.xlu0 %5977, %v4597
      %v5979 = vpop.permute.xlu0 %5978
      %5982 = vset.pattern.permute.xlu0 0
      %5983 = vperm.xlu0 %5982, %v4599
      %v5984 = vpop.permute.xlu0 %5983
      %5987 = vset.pattern.permute.xlu0 0
      %5988 = vperm.xlu0 %5987, %v4601
      %v5989 = vpop.permute.xlu0 %5988
      %5992 = vset.pattern.permute.xlu0 0
      %5993 = vperm.xlu0 %5992, %v4603
      %v5994 = vpop.permute.xlu0 %5993
      %5997 = vset.pattern.permute.xlu0 0
      %5998 = vperm.xlu0 %5997, %v4605
      %v5999 = vpop.permute.xlu0 %5998
      %6002 = vset.pattern.permute.xlu0 0
      %6003 = vperm.xlu0 %6002, %v4607
      %v6004 = vpop.permute.xlu0 %6003
      %6007 = vset.pattern.permute.xlu0 0
      %6008 = vperm.xlu0 %6007, %v4609
      %v6009 = vpop.permute.xlu0 %6008
      %6012 = vset.pattern.permute.xlu0 0
      %6013 = vperm.xlu0 %6012, %v4611
      %v6014 = vpop.permute.xlu0 %6013
      %6017 = vset.pattern.permute.xlu0 0
      %6018 = vperm.xlu0 %6017, %v4613
      %v6019 = vpop.permute.xlu0 %6018
      %6022 = vset.pattern.permute.xlu0 0
      %6023 = vperm.xlu0 %6022, %v4615
      %v6024 = vpop.permute.xlu0 %6023
      %6027 = vset.pattern.permute.xlu0 0
      %6028 = vperm.xlu0 %6027, %v4617
      %v6029 = vpop.permute.xlu0 %6028
      %6032 = vset.pattern.permute.xlu0 0
      %6033 = vperm.xlu0 %6032, %v4619
      %v6034 = vpop.permute.xlu0 %6033
      %6037 = vset.pattern.permute.xlu0 0
      %6038 = vperm.xlu0 %6037, %v4621
      %v6039 = vpop.permute.xlu0 %6038
      %6042 = vset.pattern.permute.xlu0 0
      %6043 = vperm.xlu0 %6042, %v4623
      %v6044 = vpop.permute.xlu0 %6043
      %6047 = vset.pattern.permute.xlu0 0
      %6048 = vperm.xlu0 %6047, %v4625
      %v6049 = vpop.permute.xlu0 %6048
      %6052 = vset.pattern.permute.xlu0 0
      %6053 = vperm.xlu0 %6052, %v4627
      %v6054 = vpop.permute.xlu0 %6053
      %6057 = vset.pattern.permute.xlu0 0
      %6058 = vperm.xlu0 %6057, %v4629
      %v6059 = vpop.permute.xlu0 %6058
      %6062 = vset.pattern.permute.xlu0 0
      %6063 = vperm.xlu0 %6062, %v4631
      %v6064 = vpop.permute.xlu0 %6063
      %6067 = vset.pattern.permute.xlu0 0
      %6068 = vperm.xlu0 %6067, %v4633
      %v6069 = vpop.permute.xlu0 %6068
      %6072 = vset.pattern.permute.xlu0 0
      %6073 = vperm.xlu0 %6072, %v4635
      %v6074 = vpop.permute.xlu0 %6073
      %6077 = vset.pattern.permute.xlu0 0
      %6078 = vperm.xlu0 %6077, %v4637
      %v6079 = vpop.permute.xlu0 %6078
      %6082 = vset.pattern.permute.xlu0 0
      %6083 = vperm.xlu0 %6082, %v4639
      %v6084 = vpop.permute.xlu0 %6083
      %6087 = vset.pattern.permute.xlu0 0
      %6088 = vperm.xlu0 %6087, %v4641
      %v6089 = vpop.permute.xlu0 %6088
      %6092 = vset.pattern.permute.xlu0 0
      %6093 = vperm.xlu0 %6092, %v4643
      %v6094 = vpop.permute.xlu0 %6093
      %6097 = vset.pattern.permute.xlu0 0
      %6098 = vperm.xlu0 %6097, %v4645
      %v6099 = vpop.permute.xlu0 %6098
      %6102 = vset.pattern.permute.xlu0 0
      %6103 = vperm.xlu0 %6102, %v4647
      %v6104 = vpop.permute.xlu0 %6103
      %6107 = vset.pattern.permute.xlu0 0
      %6108 = vperm.xlu0 %6107, %v4649
      %v6109 = vpop.permute.xlu0 %6108
      %6112 = vset.pattern.permute.xlu0 0
      %6113 = vperm.xlu0 %6112, %v4651
      %v6114 = vpop.permute.xlu0 %6113
      %6117 = vset.pattern.permute.xlu0 0
      %6118 = vperm.xlu0 %6117, %v4653
      %v6119 = vpop.permute.xlu0 %6118
      %6122 = vset.pattern.permute.xlu0 0
      %6123 = vperm.xlu0 %6122, %v4655
      %v6124 = vpop.permute.xlu0 %6123
      %6127 = vset.pattern.permute.xlu0 0
      %6128 = vperm.xlu0 %6127, %v4657
      %v6129 = vpop.permute.xlu0 %6128
      %6132 = vset.pattern.permute.xlu0 0
      %6133 = vperm.xlu0 %6132, %v4659
      %v6134 = vpop.permute.xlu0 %6133
      %6137 = vset.pattern.permute.xlu0 0
      %6138 = vperm.xlu0 %6137, %v4661
      %v6139 = vpop.permute.xlu0 %6138
      %6142 = vset.pattern.permute.xlu0 0
      %6143 = vperm.xlu0 %6142, %v4663
      %v6144 = vpop.permute.xlu0 %6143
      %6147 = vset.pattern.permute.xlu0 0
      %6148 = vperm.xlu0 %6147, %v4665
      %v6149 = vpop.permute.xlu0 %6148
      %6152 = vset.pattern.permute.xlu0 0
      %6153 = vperm.xlu0 %6152, %v4667
      %v6154 = vpop.permute.xlu0 %6153
      %6157 = vset.pattern.permute.xlu0 0
      %6158 = vperm.xlu0 %6157, %v4669
      %v6159 = vpop.permute.xlu0 %6158
      %6162 = vset.pattern.permute.xlu0 0
      %6163 = vperm.xlu0 %6162, %v4671
      %v6164 = vpop.permute.xlu0 %6163
      %6167 = vset.pattern.permute.xlu0 0
      %6168 = vperm.xlu0 %6167, %v4673
      %v6169 = vpop.permute.xlu0 %6168
      %6172 = vset.pattern.permute.xlu0 0
      %6173 = vperm.xlu0 %6172, %v4675
      %v6174 = vpop.permute.xlu0 %6173
      %6177 = vset.pattern.permute.xlu0 0
      %6178 = vperm.xlu0 %6177, %v4677
      %v6179 = vpop.permute.xlu0 %6178
      %6182 = vset.pattern.permute.xlu0 0
      %6183 = vperm.xlu0 %6182, %v4679
      %v6184 = vpop.permute.xlu0 %6183
      %6187 = vset.pattern.permute.xlu0 0
      %6188 = vperm.xlu0 %6187, %v4681
      %v6189 = vpop.permute.xlu0 %6188
      %6192 = vset.pattern.permute.xlu0 0
      %6193 = vperm.xlu0 %6192, %v4683
      %v6194 = vpop.permute.xlu0 %6193
      %6197 = vset.pattern.permute.xlu0 0
      %6198 = vperm.xlu0 %6197, %v4685
      %v6199 = vpop.permute.xlu0 %6198
      %6202 = vset.pattern.permute.xlu0 0
      %6203 = vperm.xlu0 %6202, %v4687
      %v6204 = vpop.permute.xlu0 %6203
      %6207 = vset.pattern.permute.xlu0 0
      %6208 = vperm.xlu0 %6207, %v4689
      %v6209 = vpop.permute.xlu0 %6208
      %6212 = vset.pattern.permute.xlu0 0
      %6213 = vperm.xlu0 %6212, %v4691
      %v6214 = vpop.permute.xlu0 %6213
      %6217 = vset.pattern.permute.xlu0 0
      %6218 = vperm.xlu0 %6217, %v4693
      %v6219 = vpop.permute.xlu0 %6218
      %6222 = vset.pattern.permute.xlu0 0
      %6223 = vperm.xlu0 %6222, %v4695
      %v6224 = vpop.permute.xlu0 %6223
      %6227 = vset.pattern.permute.xlu0 0
      %6228 = vperm.xlu0 %6227, %v4697
      %v6229 = vpop.permute.xlu0 %6228
      %6232 = vset.pattern.permute.xlu0 0
      %6233 = vperm.xlu0 %6232, %v4699
      %v6234 = vpop.permute.xlu0 %6233
      %6237 = vset.pattern.permute.xlu0 0
      %6238 = vperm.xlu0 %6237, %v4701
      %v6239 = vpop.permute.xlu0 %6238
      %6242 = vset.pattern.permute.xlu0 0
      %6243 = vperm.xlu0 %6242, %v4703
      %v6244 = vpop.permute.xlu0 %6243
      %6247 = vset.pattern.permute.xlu0 0
      %6248 = vperm.xlu0 %6247, %v4705
      %v6249 = vpop.permute.xlu0 %6248
      %6252 = vset.pattern.permute.xlu0 0
      %6253 = vperm.xlu0 %6252, %v4707
      %v6254 = vpop.permute.xlu0 %6253
      %6257 = vset.pattern.permute.xlu0 0
      %6258 = vperm.xlu0 %6257, %v4709
      %v6259 = vpop.permute.xlu0 %6258
      %6262 = vset.pattern.permute.xlu0 0
      %6263 = vperm.xlu0 %6262, %v4711
      %v6264 = vpop.permute.xlu0 %6263
      %6267 = vset.pattern.permute.xlu0 0
      %6268 = vperm.xlu0 %6267, %v4713
      %v6269 = vpop.permute.xlu0 %6268
      %6272 = vset.pattern.permute.xlu0 0
      %6273 = vperm.xlu0 %6272, %v4715
      %v6274 = vpop.permute.xlu0 %6273
      %6277 = vset.pattern.permute.xlu0 0
      %6278 = vperm.xlu0 %6277, %v4717
      %v6279 = vpop.permute.xlu0 %6278
      %6282 = vset.pattern.permute.xlu0 0
      %6283 = vperm.xlu0 %6282, %v4719
      %v6284 = vpop.permute.xlu0 %6283
      %6287 = vset.pattern.permute.xlu0 0
      %6288 = vperm.xlu0 %6287, %v4721
      %v6289 = vpop.permute.xlu0 %6288
      %6292 = vset.pattern.permute.xlu0 0
      %6293 = vperm.xlu0 %6292, %v4723
      %v6294 = vpop.permute.xlu0 %6293
      %6297 = vset.pattern.permute.xlu0 0
      %6298 = vperm.xlu0 %6297, %v4725
      %v6299 = vpop.permute.xlu0 %6298
      %6302 = vset.pattern.permute.xlu0 0
      %6303 = vperm.xlu0 %6302, %v4727
      %v6304 = vpop.permute.xlu0 %6303
      %6307 = vset.pattern.permute.xlu0 0
      %6308 = vperm.xlu0 %6307, %v4729
      %v6309 = vpop.permute.xlu0 %6308
      %6312 = vset.pattern.permute.xlu0 0
      %6313 = vperm.xlu0 %6312, %v4731
      %v6314 = vpop.permute.xlu0 %6313
      %6317 = vset.pattern.permute.xlu0 0
      %6318 = vperm.xlu0 %6317, %v4733
      %v6319 = vpop.permute.xlu0 %6318
      %6322 = vset.pattern.permute.xlu0 0
      %6323 = vperm.xlu0 %6322, %v4735
      %v6324 = vpop.permute.xlu0 %6323
      %6327 = vset.pattern.permute.xlu0 0
      %6328 = vperm.xlu0 %6327, %v4737
      %v6329 = vpop.permute.xlu0 %6328
      %6332 = vset.pattern.permute.xlu0 0
      %6333 = vperm.xlu0 %6332, %v4739
      %v6334 = vpop.permute.xlu0 %6333
      %6337 = vset.pattern.permute.xlu0 0
      %6338 = vperm.xlu0 %6337, %v4741
      %v6339 = vpop.permute.xlu0 %6338
      %6342 = vset.pattern.permute.xlu0 0
      %6343 = vperm.xlu0 %6342, %v4743
      %v6344 = vpop.permute.xlu0 %6343
      %6347 = vset.pattern.permute.xlu0 0
      %6348 = vperm.xlu0 %6347, %v4745
      %v6349 = vpop.permute.xlu0 %6348
      %6352 = vset.pattern.permute.xlu0 0
      %6353 = vperm.xlu0 %6352, %v4747
      %v6354 = vpop.permute.xlu0 %6353
      %6357 = vset.pattern.permute.xlu0 0
      %6358 = vperm.xlu0 %6357, %v4749
      %v6359 = vpop.permute.xlu0 %6358
      %6362 = vset.pattern.permute.xlu0 0
      %6363 = vperm.xlu0 %6362, %v4751
      %v6364 = vpop.permute.xlu0 %6363
      %6367 = vset.pattern.permute.xlu0 0
      %6368 = vperm.xlu0 %6367, %v4753
      %v6369 = vpop.permute.xlu0 %6368
      %6372 = vset.pattern.permute.xlu0 0
      %6373 = vperm.xlu0 %6372, %v4755
      %v6374 = vpop.permute.xlu0 %6373
      %6377 = vset.pattern.permute.xlu0 0
      %6378 = vperm.xlu0 %6377, %v4757
      %v6379 = vpop.permute.xlu0 %6378
      %6382 = vset.pattern.permute.xlu0 0
      %6383 = vperm.xlu0 %6382, %v4759
      %v6384 = vpop.permute.xlu0 %6383
      %6387 = vset.pattern.permute.xlu0 0
      %6388 = vperm.xlu0 %6387, %v4761
      %v6389 = vpop.permute.xlu0 %6388
      %6392 = vset.pattern.permute.xlu0 0
      %6393 = vperm.xlu0 %6392, %v4763
      %v6394 = vpop.permute.xlu0 %6393
      %6397 = vset.pattern.permute.xlu0 0
      %6398 = vperm.xlu0 %6397, %v4765
      %v6399 = vpop.permute.xlu0 %6398
      %6402 = vset.pattern.permute.xlu0 0
      %6403 = vperm.xlu0 %6402, %v4767
      %v6404 = vpop.permute.xlu0 %6403
      %6407 = vset.pattern.permute.xlu0 0
      %6408 = vperm.xlu0 %6407, %v4769
      %v6409 = vpop.permute.xlu0 %6408
      %6412 = vset.pattern.permute.xlu0 0
      %6413 = vperm.xlu0 %6412, %v4771
      %v6414 = vpop.permute.xlu0 %6413
      %6417 = vset.pattern.permute.xlu0 0
      %6418 = vperm.xlu0 %6417, %v4773
      %v6419 = vpop.permute.xlu0 %6418
      %6422 = vset.pattern.permute.xlu0 0
      %6423 = vperm.xlu0 %6422, %v4775
      %v6424 = vpop.permute.xlu0 %6423
      %6427 = vset.pattern.permute.xlu0 0
      %6428 = vperm.xlu0 %6427, %v4777
      %v6429 = vpop.permute.xlu0 %6428
      %6432 = vset.pattern.permute.xlu0 0
      %6433 = vperm.xlu0 %6432, %v4779
      %v6434 = vpop.permute.xlu0 %6433
      %6437 = vset.pattern.permute.xlu0 0
      %6438 = vperm.xlu0 %6437, %v4781
      %v6439 = vpop.permute.xlu0 %6438
      %6442 = vset.pattern.permute.xlu0 0
      %6443 = vperm.xlu0 %6442, %v4783
      %v6444 = vpop.permute.xlu0 %6443
      %6447 = vset.pattern.permute.xlu0 0
      %6448 = vperm.xlu0 %6447, %v4785
      %v6449 = vpop.permute.xlu0 %6448
      %6452 = vset.pattern.permute.xlu0 0
      %6453 = vperm.xlu0 %6452, %v4787
      %v6454 = vpop.permute.xlu0 %6453
      %6457 = vset.pattern.permute.xlu0 0
      %6458 = vperm.xlu0 %6457, %v4789
      %v6459 = vpop.permute.xlu0 %6458
      %6462 = vset.pattern.permute.xlu0 0
      %6463 = vperm.xlu0 %6462, %v4791
      %v6464 = vpop.permute.xlu0 %6463
      %6467 = vset.pattern.permute.xlu0 0
      %6468 = vperm.xlu0 %6467, %v4793
      %v6469 = vpop.permute.xlu0 %6468
      %6472 = vset.pattern.permute.xlu0 0
      %6473 = vperm.xlu0 %6472, %v4795
      %v6474 = vpop.permute.xlu0 %6473
      %6477 = vset.pattern.permute.xlu0 0
      %6478 = vperm.xlu0 %6477, %v4797
      %v6479 = vpop.permute.xlu0 %6478
      %6482 = vset.pattern.permute.xlu0 0
      %6483 = vperm.xlu0 %6482, %v4799
      %v6484 = vpop.permute.xlu0 %6483
      %6487 = vset.pattern.permute.xlu0 0
      %6488 = vperm.xlu0 %6487, %v4801
      %v6489 = vpop.permute.xlu0 %6488
      %6492 = vset.pattern.permute.xlu0 0
      %6493 = vperm.xlu0 %6492, %v4803
      %v6494 = vpop.permute.xlu0 %6493
      %6497 = vset.pattern.permute.xlu0 0
      %6498 = vperm.xlu0 %6497, %v4805
      %v6499 = vpop.permute.xlu0 %6498
      %6502 = vset.pattern.permute.xlu0 0
      %6503 = vperm.xlu0 %6502, %v4807
      %v6504 = vpop.permute.xlu0 %6503
      %6507 = vset.pattern.permute.xlu0 0
      %6508 = vperm.xlu0 %6507, %v4809
      %v6509 = vpop.permute.xlu0 %6508
      %6512 = vset.pattern.permute.xlu0 0
      %6513 = vperm.xlu0 %6512, %v4811
      %v6514 = vpop.permute.xlu0 %6513
      %6517 = vset.pattern.permute.xlu0 0
      %6518 = vperm.xlu0 %6517, %v4813
      %v6519 = vpop.permute.xlu0 %6518
      %6522 = vset.pattern.permute.xlu0 0
      %6523 = vperm.xlu0 %6522, %v4815
      %v6524 = vpop.permute.xlu0 %6523
      %6527 = vset.pattern.permute.xlu0 0
      %6528 = vperm.xlu0 %6527, %v4817
      %v6529 = vpop.permute.xlu0 %6528
      %6532 = vset.pattern.permute.xlu0 0
      %6533 = vperm.xlu0 %6532, %v4819
      %v6534 = vpop.permute.xlu0 %6533
      %6537 = vset.pattern.permute.xlu0 0
      %6538 = vperm.xlu0 %6537, %v4821
      %v6539 = vpop.permute.xlu0 %6538
      %6542 = vset.pattern.permute.xlu0 0
      %6543 = vperm.xlu0 %6542, %v4823
      %v6544 = vpop.permute.xlu0 %6543
      %6547 = vset.pattern.permute.xlu0 0
      %6548 = vperm.xlu0 %6547, %v4825
      %v6549 = vpop.permute.xlu0 %6548
      %6552 = vset.pattern.permute.xlu0 0
      %6553 = vperm.xlu0 %6552, %v4827
      %v6554 = vpop.permute.xlu0 %6553
      %6557 = vset.pattern.permute.xlu0 0
      %6558 = vperm.xlu0 %6557, %v4829
      %v6559 = vpop.permute.xlu0 %6558
      %6562 = vset.pattern.permute.xlu0 0
      %6563 = vperm.xlu0 %6562, %v4831
      %v6564 = vpop.permute.xlu0 %6563
      %6567 = vset.pattern.permute.xlu0 0
      %6568 = vperm.xlu0 %6567, %v4833
      %v6569 = vpop.permute.xlu0 %6568
      %6572 = vset.pattern.permute.xlu0 0
      %6573 = vperm.xlu0 %6572, %v4835
      %v6574 = vpop.permute.xlu0 %6573
      %6577 = vset.pattern.permute.xlu0 0
      %6578 = vperm.xlu0 %6577, %v4837
      %v6579 = vpop.permute.xlu0 %6578
      %6582 = vset.pattern.permute.xlu0 0
      %6583 = vperm.xlu0 %6582, %v4839
      %v6584 = vpop.permute.xlu0 %6583
      %6587 = vset.pattern.permute.xlu0 0
      %6588 = vperm.xlu0 %6587, %v4841
      %v6589 = vpop.permute.xlu0 %6588
      %6592 = vset.pattern.permute.xlu0 0
      %6593 = vperm.xlu0 %6592, %v4843
      %v6594 = vpop.permute.xlu0 %6593
      %6597 = vset.pattern.permute.xlu0 0
      %6598 = vperm.xlu0 %6597, %v4845
      %v6599 = vpop.permute.xlu0 %6598
      %6602 = vset.pattern.permute.xlu0 0
      %6603 = vperm.xlu0 %6602, %v4847
      %v6604 = vpop.permute.xlu0 %6603
      %6607 = vset.pattern.permute.xlu0 0
      %6608 = vperm.xlu0 %6607, %v4849
      %v6609 = vpop.permute.xlu0 %6608
      %6612 = vset.pattern.permute.xlu0 0
      %6613 = vperm.xlu0 %6612, %v4851
      %v6614 = vpop.permute.xlu0 %6613
      %6617 = vset.pattern.permute.xlu0 0
      %6618 = vperm.xlu0 %6617, %v4853
      %v6619 = vpop.permute.xlu0 %6618
      %6622 = vset.pattern.permute.xlu0 0
      %6623 = vperm.xlu0 %6622, %v4855
      %v6624 = vpop.permute.xlu0 %6623
      %6627 = vset.pattern.permute.xlu0 0
      %6628 = vperm.xlu0 %6627, %v4857
      %v6629 = vpop.permute.xlu0 %6628
      %6632 = vset.pattern.permute.xlu0 0
      %6633 = vperm.xlu0 %6632, %v4859
      %v6634 = vpop.permute.xlu0 %6633
      %6637 = vset.pattern.permute.xlu0 0
      %6638 = vperm.xlu0 %6637, %v4861
      %v6639 = vpop.permute.xlu0 %6638
      %6642 = vset.pattern.permute.xlu0 0
      %6643 = vperm.xlu0 %6642, %v4863
      %v6644 = vpop.permute.xlu0 %6643
      %6647 = vset.pattern.permute.xlu0 0
      %6648 = vperm.xlu0 %6647, %v4865
      %v6649 = vpop.permute.xlu0 %6648
      %6652 = vset.pattern.permute.xlu0 0
      %6653 = vperm.xlu0 %6652, %v4867
      %v6654 = vpop.permute.xlu0 %6653
      %6657 = vset.pattern.permute.xlu0 0
      %6658 = vperm.xlu0 %6657, %v4869
      %v6659 = vpop.permute.xlu0 %6658
      %6662 = vset.pattern.permute.xlu0 0
      %6663 = vperm.xlu0 %6662, %v4871
      %v6664 = vpop.permute.xlu0 %6663
      %6667 = vset.pattern.permute.xlu0 0
      %6668 = vperm.xlu0 %6667, %v4873
      %v6669 = vpop.permute.xlu0 %6668
      %6672 = vset.pattern.permute.xlu0 0
      %6673 = vperm.xlu0 %6672, %v4875
      %v6674 = vpop.permute.xlu0 %6673
      %6677 = vset.pattern.permute.xlu0 0
      %6678 = vperm.xlu0 %6677, %v4877
      %v6679 = vpop.permute.xlu0 %6678
      %6682 = vset.pattern.permute.xlu0 0
      %6683 = vperm.xlu0 %6682, %v4879
      %v6684 = vpop.permute.xlu0 %6683
      %6687 = vset.pattern.permute.xlu0 0
      %6688 = vperm.xlu0 %6687, %v4881
      %v6689 = vpop.permute.xlu0 %6688
      %6692 = vset.pattern.permute.xlu0 0
      %6693 = vperm.xlu0 %6692, %v4883
      %v6694 = vpop.permute.xlu0 %6693
      %6697 = vset.pattern.permute.xlu0 0
      %6698 = vperm.xlu0 %6697, %v4885
      %v6699 = vpop.permute.xlu0 %6698
      %6702 = vset.pattern.permute.xlu0 0
      %6703 = vperm.xlu0 %6702, %v4887
      %v6704 = vpop.permute.xlu0 %6703
      %6707 = vset.pattern.permute.xlu0 0
      %6708 = vperm.xlu0 %6707, %v4889
      %v6709 = vpop.permute.xlu0 %6708
      %6712 = vset.pattern.permute.xlu0 0
      %6713 = vperm.xlu0 %6712, %v4891
      %v6714 = vpop.permute.xlu0 %6713
      %6717 = vset.pattern.permute.xlu0 0
      %6718 = vperm.xlu0 %6717, %v4893
      %v6719 = vpop.permute.xlu0 %6718
      %6722 = vset.pattern.permute.xlu0 0
      %6723 = vperm.xlu0 %6722, %v4895
      %v6724 = vpop.permute.xlu0 %6723
      %6727 = vset.pattern.permute.xlu0 0
      %6728 = vperm.xlu0 %6727, %v4897
      %v6729 = vpop.permute.xlu0 %6728
      %6732 = vset.pattern.permute.xlu0 0
      %6733 = vperm.xlu0 %6732, %v4899
      %v6734 = vpop.permute.xlu0 %6733
      %6737 = vset.pattern.permute.xlu0 0
      %6738 = vperm.xlu0 %6737, %v4901
      %v6739 = vpop.permute.xlu0 %6738
      %6742 = vset.pattern.permute.xlu0 0
      %6743 = vperm.xlu0 %6742, %v4903
      %v6744 = vpop.permute.xlu0 %6743
      %6747 = vset.pattern.permute.xlu0 0
      %6748 = vperm.xlu0 %6747, %v4905
      %v6749 = vpop.permute.xlu0 %6748
      %6752 = vset.pattern.permute.xlu0 0
      %6753 = vperm.xlu0 %6752, %v4907
      %v6754 = vpop.permute.xlu0 %6753
      %6757 = vset.pattern.permute.xlu0 0
      %6758 = vperm.xlu0 %6757, %v4909
      %v6759 = vpop.permute.xlu0 %6758
      %6762 = vset.pattern.permute.xlu0 0
      %6763 = vperm.xlu0 %6762, %v4911
      %v6764 = vpop.permute.xlu0 %6763
      %6767 = vset.pattern.permute.xlu0 0
      %6768 = vperm.xlu0 %6767, %v4913
      %v6769 = vpop.permute.xlu0 %6768
      %6772 = vset.pattern.permute.xlu0 0
      %6773 = vperm.xlu0 %6772, %v4915
      %v6774 = vpop.permute.xlu0 %6773
      %6777 = vset.pattern.permute.xlu0 0
      %6778 = vperm.xlu0 %6777, %v4917
      %v6779 = vpop.permute.xlu0 %6778
      %6782 = vset.pattern.permute.xlu0 0
      %6783 = vperm.xlu0 %6782, %v4919
      %v6784 = vpop.permute.xlu0 %6783
      %6787 = vset.pattern.permute.xlu0 0
      %6788 = vperm.xlu0 %6787, %v4921
      %v6789 = vpop.permute.xlu0 %6788
      %6792 = vset.pattern.permute.xlu0 0
      %6793 = vperm.xlu0 %6792, %v4923
      %v6794 = vpop.permute.xlu0 %6793
      %6797 = vset.pattern.permute.xlu0 0
      %6798 = vperm.xlu0 %6797, %v4925
      %v6799 = vpop.permute.xlu0 %6798
      %6802 = vset.pattern.permute.xlu0 0
      %6803 = vperm.xlu0 %6802, %v4927
      %v6804 = vpop.permute.xlu0 %6803
      %6807 = vset.pattern.permute.xlu0 0
      %6808 = vperm.xlu0 %6807, %v4929
      %v6809 = vpop.permute.xlu0 %6808
      %6812 = vset.pattern.permute.xlu0 0
      %6813 = vperm.xlu0 %6812, %v4931
      %v6814 = vpop.permute.xlu0 %6813
      %6817 = vset.pattern.permute.xlu0 0
      %6818 = vperm.xlu0 %6817, %v4933
      %v6819 = vpop.permute.xlu0 %6818
      %6822 = vset.pattern.permute.xlu0 0
      %6823 = vperm.xlu0 %6822, %v4935
      %v6824 = vpop.permute.xlu0 %6823
      %6827 = vset.pattern.permute.xlu0 0
      %6828 = vperm.xlu0 %6827, %v4937
      %v6829 = vpop.permute.xlu0 %6828
      %6832 = vset.pattern.permute.xlu0 0
      %6833 = vperm.xlu0 %6832, %v4939
      %v6834 = vpop.permute.xlu0 %6833
      %6837 = vset.pattern.permute.xlu0 0
      %6838 = vperm.xlu0 %6837, %v4941
      %v6839 = vpop.permute.xlu0 %6838
      %6842 = vset.pattern.permute.xlu0 0
      %6843 = vperm.xlu0 %6842, %v4943
      %v6844 = vpop.permute.xlu0 %6843
      %6847 = vset.pattern.permute.xlu0 0
      %6848 = vperm.xlu0 %6847, %v4945
      %v6849 = vpop.permute.xlu0 %6848
      %6852 = vset.pattern.permute.xlu0 0
      %6853 = vperm.xlu0 %6852, %v4947
      %v6854 = vpop.permute.xlu0 %6853
      %6857 = vset.pattern.permute.xlu0 0
      %6858 = vperm.xlu0 %6857, %v4949
      %v6859 = vpop.permute.xlu0 %6858
      %6862 = vset.pattern.permute.xlu0 0
      %6863 = vperm.xlu0 %6862, %v4951
      %v6864 = vpop.permute.xlu0 %6863
      %6867 = vset.pattern.permute.xlu0 0
      %6868 = vperm.xlu0 %6867, %v4953
      %v6869 = vpop.permute.xlu0 %6868
      %6872 = vset.pattern.permute.xlu0 0
      %6873 = vperm.xlu0 %6872, %v4955
      %v6874 = vpop.permute.xlu0 %6873
      %6877 = vset.pattern.permute.xlu0 0
      %6878 = vperm.xlu0 %6877, %v4957
      %v6879 = vpop.permute.xlu0 %6878
      %6882 = vset.pattern.permute.xlu0 0
      %6883 = vperm.xlu0 %6882, %v4959
      %v6884 = vpop.permute.xlu0 %6883
      %6887 = vset.pattern.permute.xlu0 0
      %6888 = vperm.xlu0 %6887, %v4961
      %v6889 = vpop.permute.xlu0 %6888
      %6892 = vset.pattern.permute.xlu0 0
      %6893 = vperm.xlu0 %6892, %v4963
      %v6894 = vpop.permute.xlu0 %6893
      %6897 = vset.pattern.permute.xlu0 0
      %6898 = vperm.xlu0 %6897, %v4965
      %v6899 = vpop.permute.xlu0 %6898
      %6902 = vset.pattern.permute.xlu0 0
      %6903 = vperm.xlu0 %6902, %v4967
      %v6904 = vpop.permute.xlu0 %6903
      %6907 = vset.pattern.permute.xlu0 0
      %6908 = vperm.xlu0 %6907, %v4969
      %v6909 = vpop.permute.xlu0 %6908
      %6912 = vset.pattern.permute.xlu0 0
      %6913 = vperm.xlu0 %6912, %v4971
      %v6914 = vpop.permute.xlu0 %6913
      %6917 = vset.pattern.permute.xlu0 0
      %6918 = vperm.xlu0 %6917, %v4973
      %v6919 = vpop.permute.xlu0 %6918
      %6922 = vset.pattern.permute.xlu0 0
      %6923 = vperm.xlu0 %6922, %v4975
      %v6924 = vpop.permute.xlu0 %6923
      %6927 = vset.pattern.permute.xlu0 0
      %6928 = vperm.xlu0 %6927, %v4977
      %v6929 = vpop.permute.xlu0 %6928
      %6932 = vset.pattern.permute.xlu0 0
      %6933 = vperm.xlu0 %6932, %v4979
      %v6934 = vpop.permute.xlu0 %6933
      %6937 = vset.pattern.permute.xlu0 0
      %6938 = vperm.xlu0 %6937, %v4981
      %v6939 = vpop.permute.xlu0 %6938
      %6942 = vset.pattern.permute.xlu0 0
      %6943 = vperm.xlu0 %6942, %v4983
      %v6944 = vpop.permute.xlu0 %6943
      %6947 = vset.pattern.permute.xlu0 0
      %6948 = vperm.xlu0 %6947, %v4985
      %v6949 = vpop.permute.xlu0 %6948
      %6952 = vset.pattern.permute.xlu0 0
      %6953 = vperm.xlu0 %6952, %v4987
      %v6954 = vpop.permute.xlu0 %6953
      %6957 = vset.pattern.permute.xlu0 0
      %6958 = vperm.xlu0 %6957, %v4989
      %v6959 = vpop.permute.xlu0 %6958
      %6962 = vset.pattern.permute.xlu0 0
      %6963 = vperm.xlu0 %6962, %v4991
      %v6964 = vpop.permute.xlu0 %6963
      %6967 = vset.pattern.permute.xlu0 0
      %6968 = vperm.xlu0 %6967, %v4993
      %v6969 = vpop.permute.xlu0 %6968
      %6972 = vset.pattern.permute.xlu0 0
      %6973 = vperm.xlu0 %6972, %v4995
      %v6974 = vpop.permute.xlu0 %6973
      %6977 = vset.pattern.permute.xlu0 0
      %6978 = vperm.xlu0 %6977, %v4997
      %v6979 = vpop.permute.xlu0 %6978
      %6982 = vset.pattern.permute.xlu0 0
      %6983 = vperm.xlu0 %6982, %v4999
      %v6984 = vpop.permute.xlu0 %6983
      %6987 = vset.pattern.permute.xlu0 0
      %6988 = vperm.xlu0 %6987, %v5001
      %v6989 = vpop.permute.xlu0 %6988
      %6992 = vset.pattern.permute.xlu0 0
      %6993 = vperm.xlu0 %6992, %v5003
      %v6994 = vpop.permute.xlu0 %6993
      %6997 = vset.pattern.permute.xlu0 0
      %6998 = vperm.xlu0 %6997, %v5005
      %v6999 = vpop.permute.xlu0 %6998
      %7002 = vset.pattern.permute.xlu0 0
      %7003 = vperm.xlu0 %7002, %v5007
      %v7004 = vpop.permute.xlu0 %7003
      %7007 = vset.pattern.permute.xlu0 0
      %7008 = vperm.xlu0 %7007, %v5009
      %v7009 = vpop.permute.xlu0 %7008
      %7012 = vset.pattern.permute.xlu0 0
      %7013 = vperm.xlu0 %7012, %v5011
      %v7014 = vpop.permute.xlu0 %7013
      %7017 = vset.pattern.permute.xlu0 0
      %7018 = vperm.xlu0 %7017, %v5013
      %v7019 = vpop.permute.xlu0 %7018
      %7022 = vset.pattern.permute.xlu0 0
      %7023 = vperm.xlu0 %7022, %v5015
      %v7024 = vpop.permute.xlu0 %7023
      %7027 = vset.pattern.permute.xlu0 0
      %7028 = vperm.xlu0 %7027, %v5017
      %v7029 = vpop.permute.xlu0 %7028
      %7032 = vset.pattern.permute.xlu0 0
      %7033 = vperm.xlu0 %7032, %v5019
      %v7034 = vpop.permute.xlu0 %7033
      %v7036 = vmul.f32 %v5308, %v5599
      %v7037 = vmul.f32 %v5309, %v5604
      %v7038 = vmul.f32 %v5310, %v5609
      %v7039 = vmul.f32 %v5311, %v5614
      %v7040 = vmul.f32 %v5312, %v5619
      %v7041 = vmul.f32 %v5313, %v5624
      %v7042 = vmul.f32 %v5314, %v5629
      %v7043 = vmul.f32 %v5315, %v5634
      %v7044 = vmul.f32 %v5316, %v5639
      %v7045 = vmul.f32 %v5317, %v5644
      %v7046 = vmul.f32 %v5318, %v5649
      %v7047 = vmul.f32 %v5319, %v5654
      %v7048 = vmul.f32 %v5320, %v5659
      %v7049 = vmul.f32 %v5321, %v5664
      %v7050 = vmul.f32 %v5322, %v5669
      %v7051 = vmul.f32 %v5323, %v5674
      %v7052 = vmul.f32 %v5324, %v5679
      %v7053 = vmul.f32 %v5325, %v5684
      %v7054 = vmul.f32 %v5326, %v5689
      %v7055 = vmul.f32 %v5327, %v5694
      %v7056 = vmul.f32 %v5328, %v5699
      %v7057 = vmul.f32 %v5329, %v5704
      %v7058 = vmul.f32 %v5330, %v5709
      %v7059 = vmul.f32 %v5331, %v5714
      %v7060 = vmul.f32 %v5332, %v5719
      %v7061 = vmul.f32 %v5333, %v5724
      %v7062 = vmul.f32 %v5334, %v5729
      %v7063 = vmul.f32 %v5335, %v5734
      %v7064 = vmul.f32 %v5336, %v5739
      %v7065 = vmul.f32 %v5337, %v5744
      %v7066 = vmul.f32 %v5338, %v5749
      %v7067 = vmul.f32 %v5339, %v5754
      %v7068 = vmul.f32 %v5340, %v5759
      %v7069 = vmul.f32 %v5341, %v5764
      %v7070 = vmul.f32 %v5342, %v5769
      %v7071 = vmul.f32 %v5343, %v5774
      %v7072 = vmul.f32 %v5344, %v5779
      %v7073 = vmul.f32 %v5345, %v5784
      %v7074 = vmul.f32 %v5346, %v5789
      %v7075 = vmul.f32 %v5347, %v5794
      %v7076 = vmul.f32 %v5348, %v5799
      %v7077 = vmul.f32 %v5349, %v5804
      %v7078 = vmul.f32 %v5350, %v5809
      %v7079 = vmul.f32 %v5351, %v5814
      %v7080 = vmul.f32 %v5352, %v5819
      %v7081 = vmul.f32 %v5353, %v5824
      %v7082 = vmul.f32 %v5354, %v5829
      %v7083 = vmul.f32 %v5355, %v5834
      %v7084 = vmul.f32 %v5356, %v5839
      %v7085 = vmul.f32 %v5357, %v5844
      %v7086 = vmul.f32 %v5358, %v5849
      %v7087 = vmul.f32 %v5359, %v5854
      %v7088 = vmul.f32 %v5360, %v5859
      %v7089 = vmul.f32 %v5361, %v5864
      %v7090 = vmul.f32 %v5362, %v5869
      %v7091 = vmul.f32 %v5363, %v5874
      %v7092 = vmul.f32 %v5364, %v5879
      %v7093 = vmul.f32 %v5365, %v5884
      %v7094 = vmul.f32 %v5366, %v5889
      %v7095 = vmul.f32 %v5367, %v5894
      %v7096 = vmul.f32 %v5368, %v5899
      %v7097 = vmul.f32 %v5369, %v5904
      %v7098 = vmul.f32 %v5370, %v5909
      %v7099 = vmul.f32 %v5371, %v5914
      %v7100 = vmul.f32 %v5372, %v5919
      %v7101 = vmul.f32 %v5373, %v5924
      %v7102 = vmul.f32 %v5374, %v5929
      %v7103 = vmul.f32 %v5375, %v5934
      %v7104 = vmul.f32 %v5376, %v5939
      %v7105 = vmul.f32 %v5377, %v5944
      %v7106 = vmul.f32 %v5378, %v5949
      %v7107 = vmul.f32 %v5379, %v5954
      %v7108 = vmul.f32 %v5380, %v5959
      %v7109 = vmul.f32 %v5381, %v5964
      %v7110 = vmul.f32 %v5382, %v5969
      %v7111 = vmul.f32 %v5383, %v5974
      %v7112 = vmul.f32 %v5384, %v5979
      %v7113 = vmul.f32 %v5385, %v5984
      %v7114 = vmul.f32 %v5386, %v5989
      %v7115 = vmul.f32 %v5387, %v5994
      %v7116 = vmul.f32 %v5388, %v5999
      %v7117 = vmul.f32 %v5389, %v6004
      %v7118 = vmul.f32 %v5390, %v6009
      %v7119 = vmul.f32 %v5391, %v6014
      %v7120 = vmul.f32 %v5392, %v6019
      %v7121 = vmul.f32 %v5393, %v6024
      %v7122 = vmul.f32 %v5394, %v6029
      %v7123 = vmul.f32 %v5395, %v6034
      %v7124 = vmul.f32 %v5396, %v6039
      %v7125 = vmul.f32 %v5397, %v6044
      %v7126 = vmul.f32 %v5398, %v6049
      %v7127 = vmul.f32 %v5399, %v6054
      %v7128 = vmul.f32 %v5400, %v6059
      %v7129 = vmul.f32 %v5401, %v6064
      %v7130 = vmul.f32 %v5402, %v6069
      %v7131 = vmul.f32 %v5403, %v6074
      %v7132 = vmul.f32 %v5404, %v6079
      %v7133 = vmul.f32 %v5405, %v6084
      %v7134 = vmul.f32 %v5406, %v6089
      %v7135 = vmul.f32 %v5407, %v6094
      %v7136 = vmul.f32 %v5408, %v6099
      %v7137 = vmul.f32 %v5409, %v6104
      %v7138 = vmul.f32 %v5410, %v6109
      %v7139 = vmul.f32 %v5411, %v6114
      %v7140 = vmul.f32 %v5412, %v6119
      %v7141 = vmul.f32 %v5413, %v6124
      %v7142 = vmul.f32 %v5414, %v6129
      %v7143 = vmul.f32 %v5415, %v6134
      %v7144 = vmul.f32 %v5416, %v6139
      %v7145 = vmul.f32 %v5417, %v6144
      %v7146 = vmul.f32 %v5418, %v6149
      %v7147 = vmul.f32 %v5419, %v6154
      %v7148 = vmul.f32 %v5420, %v6159
      %v7149 = vmul.f32 %v5421, %v6164
      %v7150 = vmul.f32 %v5422, %v6169
      %v7151 = vmul.f32 %v5423, %v6174
      %v7152 = vmul.f32 %v5424, %v6179
      %v7153 = vmul.f32 %v5425, %v6184
      %v7154 = vmul.f32 %v5426, %v6189
      %v7155 = vmul.f32 %v5427, %v6194
      %v7156 = vmul.f32 %v5428, %v6199
      %v7157 = vmul.f32 %v5429, %v6204
      %v7158 = vmul.f32 %v5430, %v6209
      %v7159 = vmul.f32 %v5431, %v6214
      %v7160 = vmul.f32 %v5432, %v6219
      %v7161 = vmul.f32 %v5433, %v6224
      %v7162 = vmul.f32 %v5434, %v6229
      %v7163 = vmul.f32 %v5435, %v6234
      %v7164 = vmul.f32 %v5436, %v6239
      %v7165 = vmul.f32 %v5437, %v6244
      %v7166 = vmul.f32 %v5438, %v6249
      %v7167 = vmul.f32 %v5439, %v6254
      %v7168 = vmul.f32 %v5440, %v6259
      %v7169 = vmul.f32 %v5441, %v6264
      %v7170 = vmul.f32 %v5442, %v6269
      %v7171 = vmul.f32 %v5443, %v6274
      %v7172 = vmul.f32 %v5444, %v6279
      %v7173 = vmul.f32 %v5445, %v6284
      %v7174 = vmul.f32 %v5446, %v6289
      %v7175 = vmul.f32 %v5447, %v6294
      %v7176 = vmul.f32 %v5448, %v6299
      %v7177 = vmul.f32 %v5449, %v6304
      %v7178 = vmul.f32 %v5450, %v6309
      %v7179 = vmul.f32 %v5451, %v6314
      %v7180 = vmul.f32 %v5452, %v6319
      %v7181 = vmul.f32 %v5453, %v6324
      %v7182 = vmul.f32 %v5454, %v6329
      %v7183 = vmul.f32 %v5455, %v6334
      %v7184 = vmul.f32 %v5456, %v6339
      %v7185 = vmul.f32 %v5457, %v6344
      %v7186 = vmul.f32 %v5458, %v6349
      %v7187 = vmul.f32 %v5459, %v6354
      %v7188 = vmul.f32 %v5460, %v6359
      %v7189 = vmul.f32 %v5461, %v6364
      %v7190 = vmul.f32 %v5462, %v6369
      %v7191 = vmul.f32 %v5463, %v6374
      %v7192 = vmul.f32 %v5464, %v6379
      %v7193 = vmul.f32 %v5465, %v6384
      %v7194 = vmul.f32 %v5466, %v6389
      %v7195 = vmul.f32 %v5467, %v6394
      %v7196 = vmul.f32 %v5468, %v6399
      %v7197 = vmul.f32 %v5469, %v6404
      %v7198 = vmul.f32 %v5470, %v6409
      %v7199 = vmul.f32 %v5471, %v6414
      %v7200 = vmul.f32 %v5472, %v6419
      %v7201 = vmul.f32 %v5473, %v6424
      %v7202 = vmul.f32 %v5474, %v6429
      %v7203 = vmul.f32 %v5475, %v6434
      %v7204 = vmul.f32 %v5476, %v6439
      %v7205 = vmul.f32 %v5477, %v6444
      %v7206 = vmul.f32 %v5478, %v6449
      %v7207 = vmul.f32 %v5479, %v6454
      %v7208 = vmul.f32 %v5480, %v6459
      %v7209 = vmul.f32 %v5481, %v6464
      %v7210 = vmul.f32 %v5482, %v6469
      %v7211 = vmul.f32 %v5483, %v6474
      %v7212 = vmul.f32 %v5484, %v6479
      %v7213 = vmul.f32 %v5485, %v6484
      %v7214 = vmul.f32 %v5486, %v6489
      %v7215 = vmul.f32 %v5487, %v6494
      %v7216 = vmul.f32 %v5488, %v6499
      %v7217 = vmul.f32 %v5489, %v6504
      %v7218 = vmul.f32 %v5490, %v6509
      %v7219 = vmul.f32 %v5491, %v6514
      %v7220 = vmul.f32 %v5492, %v6519
      %v7221 = vmul.f32 %v5493, %v6524
      %v7222 = vmul.f32 %v5494, %v6529
      %v7223 = vmul.f32 %v5495, %v6534
      %v7224 = vmul.f32 %v5496, %v6539
      %v7225 = vmul.f32 %v5497, %v6544
      %v7226 = vmul.f32 %v5498, %v6549
      %v7227 = vmul.f32 %v5499, %v6554
      %v7228 = vmul.f32 %v5500, %v6559
      %v7229 = vmul.f32 %v5501, %v6564
      %v7230 = vmul.f32 %v5502, %v6569
      %v7231 = vmul.f32 %v5503, %v6574
      %v7232 = vmul.f32 %v5504, %v6579
      %v7233 = vmul.f32 %v5505, %v6584
      %v7234 = vmul.f32 %v5506, %v6589
      %v7235 = vmul.f32 %v5507, %v6594
      %v7236 = vmul.f32 %v5508, %v6599
      %v7237 = vmul.f32 %v5509, %v6604
      %v7238 = vmul.f32 %v5510, %v6609
      %v7239 = vmul.f32 %v5511, %v6614
      %v7240 = vmul.f32 %v5512, %v6619
      %v7241 = vmul.f32 %v5513, %v6624
      %v7242 = vmul.f32 %v5514, %v6629
      %v7243 = vmul.f32 %v5515, %v6634
      %v7244 = vmul.f32 %v5516, %v6639
      %v7245 = vmul.f32 %v5517, %v6644
      %v7246 = vmul.f32 %v5518, %v6649
      %v7247 = vmul.f32 %v5519, %v6654
      %v7248 = vmul.f32 %v5520, %v6659
      %v7249 = vmul.f32 %v5521, %v6664
      %v7250 = vmul.f32 %v5522, %v6669
      %v7251 = vmul.f32 %v5523, %v6674
      %v7252 = vmul.f32 %v5524, %v6679
      %v7253 = vmul.f32 %v5525, %v6684
      %v7254 = vmul.f32 %v5526, %v6689
      %v7255 = vmul.f32 %v5527, %v6694
      %v7256 = vmul.f32 %v5528, %v6699
      %v7257 = vmul.f32 %v5529, %v6704
      %v7258 = vmul.f32 %v5530, %v6709
      %v7259 = vmul.f32 %v5531, %v6714
      %v7260 = vmul.f32 %v5532, %v6719
      %v7261 = vmul.f32 %v5533, %v6724
      %v7262 = vmul.f32 %v5534, %v6729
      %v7263 = vmul.f32 %v5535, %v6734
      %v7264 = vmul.f32 %v5536, %v6739
      %v7265 = vmul.f32 %v5537, %v6744
      %v7266 = vmul.f32 %v5538, %v6749
      %v7267 = vmul.f32 %v5539, %v6754
      %v7268 = vmul.f32 %v5540, %v6759
      %v7269 = vmul.f32 %v5541, %v6764
      %v7270 = vmul.f32 %v5542, %v6769
      %v7271 = vmul.f32 %v5543, %v6774
      %v7272 = vmul.f32 %v5544, %v6779
      %v7273 = vmul.f32 %v5545, %v6784
      %v7274 = vmul.f32 %v5546, %v6789
      %v7275 = vmul.f32 %v5547, %v6794
      %v7276 = vmul.f32 %v5548, %v6799
      %v7277 = vmul.f32 %v5549, %v6804
      %v7278 = vmul.f32 %v5550, %v6809
      %v7279 = vmul.f32 %v5551, %v6814
      %v7280 = vmul.f32 %v5552, %v6819
      %v7281 = vmul.f32 %v5553, %v6824
      %v7282 = vmul.f32 %v5554, %v6829
      %v7283 = vmul.f32 %v5555, %v6834
      %v7284 = vmul.f32 %v5556, %v6839
      %v7285 = vmul.f32 %v5557, %v6844
      %v7286 = vmul.f32 %v5558, %v6849
      %v7287 = vmul.f32 %v5559, %v6854
      %v7288 = vmul.f32 %v5560, %v6859
      %v7289 = vmul.f32 %v5561, %v6864
      %v7290 = vmul.f32 %v5562, %v6869
      %v7291 = vmul.f32 %v5563, %v6874
      %v7292 = vmul.f32 %v5564, %v6879
      %v7293 = vmul.f32 %v5565, %v6884
      %v7294 = vmul.f32 %v5566, %v6889
      %v7295 = vmul.f32 %v5567, %v6894
      %v7296 = vmul.f32 %v5568, %v6899
      %v7297 = vmul.f32 %v5569, %v6904
      %v7298 = vmul.f32 %v5570, %v6909
      %v7299 = vmul.f32 %v5571, %v6914
      %v7300 = vmul.f32 %v5572, %v6919
      %v7301 = vmul.f32 %v5573, %v6924
      %v7302 = vmul.f32 %v5574, %v6929
      %v7303 = vmul.f32 %v5575, %v6934
      %v7304 = vmul.f32 %v5576, %v6939
      %v7305 = vmul.f32 %v5577, %v6944
      %v7306 = vmul.f32 %v5578, %v6949
      %v7307 = vmul.f32 %v5579, %v6954
      %v7308 = vmul.f32 %v5580, %v6959
      %v7309 = vmul.f32 %v5581, %v6964
      %v7310 = vmul.f32 %v5582, %v6969
      %v7311 = vmul.f32 %v5583, %v6974
      %v7312 = vmul.f32 %v5584, %v6979
      %v7313 = vmul.f32 %v5585, %v6984
      %v7314 = vmul.f32 %v5586, %v6989
      %v7315 = vmul.f32 %v5587, %v6994
      %v7316 = vmul.f32 %v5588, %v6999
      %v7317 = vmul.f32 %v5589, %v7004
      %v7318 = vmul.f32 %v5590, %v7009
      %v7319 = vmul.f32 %v5591, %v7014
      %v7320 = vmul.f32 %v5592, %v7019
      %v7321 = vmul.f32 %v5593, %v7024
      %v7322 = vmul.f32 %v5594, %v7029
      %v7323 = vmul.f32 %v5595, %v7034
      %v7324 = vpack.c.bf16 %v7037, %v7036
      %v7325 = vpack.c.bf16 %v7039, %v7038
      %v7326 = vpack.c.bf16 %v7041, %v7040
      %v7327 = vpack.c.bf16 %v7043, %v7042
      %v7328 = vpack.c.bf16 %v7045, %v7044
      %v7329 = vpack.c.bf16 %v7047, %v7046
      %v7330 = vpack.c.bf16 %v7049, %v7048
      %v7331 = vpack.c.bf16 %v7051, %v7050
      %v7332 = vpack.c.bf16 %v7053, %v7052
      %v7333 = vpack.c.bf16 %v7055, %v7054
      %v7334 = vpack.c.bf16 %v7057, %v7056
      %v7335 = vpack.c.bf16 %v7059, %v7058
      %v7336 = vpack.c.bf16 %v7061, %v7060
      %v7337 = vpack.c.bf16 %v7063, %v7062
      %v7338 = vpack.c.bf16 %v7065, %v7064
      %v7339 = vpack.c.bf16 %v7067, %v7066
      %v7340 = vpack.c.bf16 %v7069, %v7068
      %v7341 = vpack.c.bf16 %v7071, %v7070
      %v7342 = vpack.c.bf16 %v7073, %v7072
      %v7343 = vpack.c.bf16 %v7075, %v7074
      %v7344 = vpack.c.bf16 %v7077, %v7076
      %v7345 = vpack.c.bf16 %v7079, %v7078
      %v7346 = vpack.c.bf16 %v7081, %v7080
      %v7347 = vpack.c.bf16 %v7083, %v7082
      %v7348 = vpack.c.bf16 %v7085, %v7084
      %v7349 = vpack.c.bf16 %v7087, %v7086
      %v7350 = vpack.c.bf16 %v7089, %v7088
      %v7351 = vpack.c.bf16 %v7091, %v7090
      %v7352 = vpack.c.bf16 %v7093, %v7092
      %v7353 = vpack.c.bf16 %v7095, %v7094
      %v7354 = vpack.c.bf16 %v7097, %v7096
      %v7355 = vpack.c.bf16 %v7099, %v7098
      %v7356 = vpack.c.bf16 %v7101, %v7100
      %v7357 = vpack.c.bf16 %v7103, %v7102
      %v7358 = vpack.c.bf16 %v7105, %v7104
      %v7359 = vpack.c.bf16 %v7107, %v7106
      %v7360 = vpack.c.bf16 %v7109, %v7108
      %v7361 = vpack.c.bf16 %v7111, %v7110
      %v7362 = vpack.c.bf16 %v7113, %v7112
      %v7363 = vpack.c.bf16 %v7115, %v7114
      %v7364 = vpack.c.bf16 %v7117, %v7116
      %v7365 = vpack.c.bf16 %v7119, %v7118
      %v7366 = vpack.c.bf16 %v7121, %v7120
      %v7367 = vpack.c.bf16 %v7123, %v7122
      %v7368 = vpack.c.bf16 %v7125, %v7124
      %v7369 = vpack.c.bf16 %v7127, %v7126
      %v7370 = vpack.c.bf16 %v7129, %v7128
      %v7371 = vpack.c.bf16 %v7131, %v7130
      %v7372 = vpack.c.bf16 %v7133, %v7132
      %v7373 = vpack.c.bf16 %v7135, %v7134
      %v7374 = vpack.c.bf16 %v7137, %v7136
      %v7375 = vpack.c.bf16 %v7139, %v7138
      %v7376 = vpack.c.bf16 %v7141, %v7140
      %v7377 = vpack.c.bf16 %v7143, %v7142
      %v7378 = vpack.c.bf16 %v7145, %v7144
      %v7379 = vpack.c.bf16 %v7147, %v7146
      %v7380 = vpack.c.bf16 %v7149, %v7148
      %v7381 = vpack.c.bf16 %v7151, %v7150
      %v7382 = vpack.c.bf16 %v7153, %v7152
      %v7383 = vpack.c.bf16 %v7155, %v7154
      %v7384 = vpack.c.bf16 %v7157, %v7156
      %v7385 = vpack.c.bf16 %v7159, %v7158
      %v7386 = vpack.c.bf16 %v7161, %v7160
      %v7387 = vpack.c.bf16 %v7163, %v7162
      %v7388 = vpack.c.bf16 %v7165, %v7164
      %v7389 = vpack.c.bf16 %v7167, %v7166
      %v7390 = vpack.c.bf16 %v7169, %v7168
      %v7391 = vpack.c.bf16 %v7171, %v7170
      %v7392 = vpack.c.bf16 %v7173, %v7172
      %v7393 = vpack.c.bf16 %v7175, %v7174
      %v7394 = vpack.c.bf16 %v7177, %v7176
      %v7395 = vpack.c.bf16 %v7179, %v7178
      %v7396 = vpack.c.bf16 %v7181, %v7180
      %v7397 = vpack.c.bf16 %v7183, %v7182
      %v7398 = vpack.c.bf16 %v7185, %v7184
      %v7399 = vpack.c.bf16 %v7187, %v7186
      %v7400 = vpack.c.bf16 %v7189, %v7188
      %v7401 = vpack.c.bf16 %v7191, %v7190
      %v7402 = vpack.c.bf16 %v7193, %v7192
      %v7403 = vpack.c.bf16 %v7195, %v7194
      %v7404 = vpack.c.bf16 %v7197, %v7196
      %v7405 = vpack.c.bf16 %v7199, %v7198
      %v7406 = vpack.c.bf16 %v7201, %v7200
      %v7407 = vpack.c.bf16 %v7203, %v7202
      %v7408 = vpack.c.bf16 %v7205, %v7204
      %v7409 = vpack.c.bf16 %v7207, %v7206
      %v7410 = vpack.c.bf16 %v7209, %v7208
      %v7411 = vpack.c.bf16 %v7211, %v7210
      %v7412 = vpack.c.bf16 %v7213, %v7212
      %v7413 = vpack.c.bf16 %v7215, %v7214
      %v7414 = vpack.c.bf16 %v7217, %v7216
      %v7415 = vpack.c.bf16 %v7219, %v7218
      %v7416 = vpack.c.bf16 %v7221, %v7220
      %v7417 = vpack.c.bf16 %v7223, %v7222
      %v7418 = vpack.c.bf16 %v7225, %v7224
      %v7419 = vpack.c.bf16 %v7227, %v7226
      %v7420 = vpack.c.bf16 %v7229, %v7228
      %v7421 = vpack.c.bf16 %v7231, %v7230
      %v7422 = vpack.c.bf16 %v7233, %v7232
      %v7423 = vpack.c.bf16 %v7235, %v7234
      %v7424 = vpack.c.bf16 %v7237, %v7236
      %v7425 = vpack.c.bf16 %v7239, %v7238
      %v7426 = vpack.c.bf16 %v7241, %v7240
      %v7427 = vpack.c.bf16 %v7243, %v7242
      %v7428 = vpack.c.bf16 %v7245, %v7244
      %v7429 = vpack.c.bf16 %v7247, %v7246
      %v7430 = vpack.c.bf16 %v7249, %v7248
      %v7431 = vpack.c.bf16 %v7251, %v7250
      %v7432 = vpack.c.bf16 %v7253, %v7252
      %v7433 = vpack.c.bf16 %v7255, %v7254
      %v7434 = vpack.c.bf16 %v7257, %v7256
      %v7435 = vpack.c.bf16 %v7259, %v7258
      %v7436 = vpack.c.bf16 %v7261, %v7260
      %v7437 = vpack.c.bf16 %v7263, %v7262
      %v7438 = vpack.c.bf16 %v7265, %v7264
      %v7439 = vpack.c.bf16 %v7267, %v7266
      %v7440 = vpack.c.bf16 %v7269, %v7268
      %v7441 = vpack.c.bf16 %v7271, %v7270
      %v7442 = vpack.c.bf16 %v7273, %v7272
      %v7443 = vpack.c.bf16 %v7275, %v7274
      %v7444 = vpack.c.bf16 %v7277, %v7276
      %v7445 = vpack.c.bf16 %v7279, %v7278
      %v7446 = vpack.c.bf16 %v7281, %v7280
      %v7447 = vpack.c.bf16 %v7283, %v7282
      %v7448 = vpack.c.bf16 %v7285, %v7284
      %v7449 = vpack.c.bf16 %v7287, %v7286
      %v7450 = vpack.c.bf16 %v7289, %v7288
      %v7451 = vpack.c.bf16 %v7291, %v7290
      %v7452 = vpack.c.bf16 %v7293, %v7292
      %v7453 = vpack.c.bf16 %v7295, %v7294
      %v7454 = vpack.c.bf16 %v7297, %v7296
      %v7455 = vpack.c.bf16 %v7299, %v7298
      %v7456 = vpack.c.bf16 %v7301, %v7300
      %v7457 = vpack.c.bf16 %v7303, %v7302
      %v7458 = vpack.c.bf16 %v7305, %v7304
      %v7459 = vpack.c.bf16 %v7307, %v7306
      %v7460 = vpack.c.bf16 %v7309, %v7308
      %v7461 = vpack.c.bf16 %v7311, %v7310
      %v7462 = vpack.c.bf16 %v7313, %v7312
      %v7463 = vpack.c.bf16 %v7315, %v7314
      %v7464 = vpack.c.bf16 %v7317, %v7316
      %v7465 = vpack.c.bf16 %v7319, %v7318
      %v7466 = vpack.c.bf16 %v7321, %v7320
      %v7467 = vpack.c.bf16 %v7323, %v7322
      %v7468 = vld [vmem:[%s309] sm:$0xff]
      %v7469 = vld [vmem:[%s309 + $0x8] sm:$0xff]
      %v7470 = vld [vmem:[%s309 + $0x10] sm:$0xff]
      %v7471 = vld [vmem:[%s309 + $0x18] sm:$0xff]
      %v7472 = vld [vmem:[%s309 + $0x20] sm:$0xff]
      %v7473 = vld [vmem:[%s309 + $0x28] sm:$0xff]
      %v7474 = vld [vmem:[%s309 + $0x30] sm:$0xff]
      %v7475 = vld [vmem:[%s309 + $0x38] sm:$0xff]
      %v7476 = vld [vmem:[%s309 + $0x40] sm:$0xff]
      %v7477 = vld [vmem:[%s309 + $0x48] sm:$0xff]
      %v7478 = vld [vmem:[%s309 + $0x50] sm:$0xff]
      %v7479 = vld [vmem:[%s309 + $0x58] sm:$0xff]
      %v7480 = vld [vmem:[%s309 + $0x60] sm:$0xff]
      %v7481 = vld [vmem:[%s309 + $0x68] sm:$0xff]
      %v7482 = vld [vmem:[%s309 + $0x70] sm:$0xff]
      %v7483 = vld [vmem:[%s309 + $0x78] sm:$0xff]
      %v7484 = vld [vmem:[%s309 + $0x80] sm:$0xff]
      %v7485 = vld [vmem:[%s309 + $0x88] sm:$0xff]
      %v7486 = vld [vmem:[%s309 + $0x90] sm:$0xff]
      %v7487 = vld [vmem:[%s309 + $0x98] sm:$0xff]
      %v7488 = vld [vmem:[%s309 + $0xa0] sm:$0xff]
      %v7489 = vld [vmem:[%s309 + $0xa8] sm:$0xff]
      %v7490 = vld [vmem:[%s309 + $0xb0] sm:$0xff]
      %v7491 = vld [vmem:[%s309 + $0xb8] sm:$0xff]
      %v7492 = vld [vmem:[%s309 + $0xc0] sm:$0xff]
      %v7493 = vld [vmem:[%s309 + $0xc8] sm:$0xff]
      %v7494 = vld [vmem:[%s309 + $0xd0] sm:$0xff]
      %v7495 = vld [vmem:[%s309 + $0xd8] sm:$0xff]
      %v7496 = vld [vmem:[%s309 + $0xe0] sm:$0xff]
      %v7497 = vld [vmem:[%s309 + $0xe8] sm:$0xff]
      %v7498 = vld [vmem:[%s309 + $0xf0] sm:$0xff]
      %v7499 = vld [vmem:[%s309 + $0xf8] sm:$0xff]
      %v7500 = vld [vmem:[%s309 + $0x100] sm:$0xff]
      %v7501 = vld [vmem:[%s309 + $0x108] sm:$0xff]
      %v7502 = vld [vmem:[%s309 + $0x110] sm:$0xff]
      %v7503 = vld [vmem:[%s309 + $0x118] sm:$0xff]
      %v7504 = vld [vmem:[%s309 + $0x120] sm:$0xff]
      %v7505 = vld [vmem:[%s309 + $0x128] sm:$0xff]
      %v7506 = vld [vmem:[%s309 + $0x130] sm:$0xff]
      %v7507 = vld [vmem:[%s309 + $0x138] sm:$0xff]
      %v7508 = vld [vmem:[%s309 + $0x140] sm:$0xff]
      %v7509 = vld [vmem:[%s309 + $0x148] sm:$0xff]
      %v7510 = vld [vmem:[%s309 + $0x150] sm:$0xff]
      %v7511 = vld [vmem:[%s309 + $0x158] sm:$0xff]
      %v7512 = vld [vmem:[%s309 + $0x160] sm:$0xff]
      %v7513 = vld [vmem:[%s309 + $0x168] sm:$0xff]
      %v7514 = vld [vmem:[%s309 + $0x170] sm:$0xff]
      %v7515 = vld [vmem:[%s309 + $0x178] sm:$0xff]
      %v7516 = vld [vmem:[%s309 + $0x180] sm:$0xff]
      %v7517 = vld [vmem:[%s309 + $0x188] sm:$0xff]
      %v7518 = vld [vmem:[%s309 + $0x190] sm:$0xff]
      %v7519 = vld [vmem:[%s309 + $0x198] sm:$0xff]
      %v7520 = vld [vmem:[%s309 + $0x1a0] sm:$0xff]
      %v7521 = vld [vmem:[%s309 + $0x1a8] sm:$0xff]
      %v7522 = vld [vmem:[%s309 + $0x1b0] sm:$0xff]
      %v7523 = vld [vmem:[%s309 + $0x1b8] sm:$0xff]
      %v7524 = vld [vmem:[%s309 + $0x1c0] sm:$0xff]
      %v7525 = vld [vmem:[%s309 + $0x1c8] sm:$0xff]
      %v7526 = vld [vmem:[%s309 + $0x1d0] sm:$0xff]
      %v7527 = vld [vmem:[%s309 + $0x1d8] sm:$0xff]
      %v7528 = vld [vmem:[%s309 + $0x1e0] sm:$0xff]
      %v7529 = vld [vmem:[%s309 + $0x1e8] sm:$0xff]
      %v7530 = vld [vmem:[%s309 + $0x1f0] sm:$0xff]
      %v7531 = vld [vmem:[%s309 + $0x1f8] sm:$0xff]
      %v7532 = vld [vmem:[%s309 + $0x200] sm:$0xff]
      %v7533 = vld [vmem:[%s309 + $0x208] sm:$0xff]
      %v7534 = vld [vmem:[%s309 + $0x210] sm:$0xff]
      %v7535 = vld [vmem:[%s309 + $0x218] sm:$0xff]
      %v7536 = vld [vmem:[%s309 + $0x220] sm:$0xff]
      %v7537 = vld [vmem:[%s309 + $0x228] sm:$0xff]
      %v7538 = vld [vmem:[%s309 + $0x230] sm:$0xff]
      %v7539 = vld [vmem:[%s309 + $0x238] sm:$0xff]
      %v7540 = vld [vmem:[%s309 + $0x240] sm:$0xff]
      %v7541 = vld [vmem:[%s309 + $0x248] sm:$0xff]
      %v7542 = vld [vmem:[%s309 + $0x250] sm:$0xff]
      %v7543 = vld [vmem:[%s309 + $0x258] sm:$0xff]
      %v7544 = vld [vmem:[%s309 + $0x260] sm:$0xff]
      %v7545 = vld [vmem:[%s309 + $0x268] sm:$0xff]
      %v7546 = vld [vmem:[%s309 + $0x270] sm:$0xff]
      %v7547 = vld [vmem:[%s309 + $0x278] sm:$0xff]
      %v7548 = vld [vmem:[%s309 + $0x280] sm:$0xff]
      %v7549 = vld [vmem:[%s309 + $0x288] sm:$0xff]
      %v7550 = vld [vmem:[%s309 + $0x290] sm:$0xff]
      %v7551 = vld [vmem:[%s309 + $0x298] sm:$0xff]
      %v7552 = vld [vmem:[%s309 + $0x2a0] sm:$0xff]
      %v7553 = vld [vmem:[%s309 + $0x2a8] sm:$0xff]
      %v7554 = vld [vmem:[%s309 + $0x2b0] sm:$0xff]
      %v7555 = vld [vmem:[%s309 + $0x2b8] sm:$0xff]
      %v7556 = vld [vmem:[%s309 + $0x2c0] sm:$0xff]
      %v7557 = vld [vmem:[%s309 + $0x2c8] sm:$0xff]
      %v7558 = vld [vmem:[%s309 + $0x2d0] sm:$0xff]
      %v7559 = vld [vmem:[%s309 + $0x2d8] sm:$0xff]
      %v7560 = vld [vmem:[%s309 + $0x2e0] sm:$0xff]
      %v7561 = vld [vmem:[%s309 + $0x2e8] sm:$0xff]
      %v7562 = vld [vmem:[%s309 + $0x2f0] sm:$0xff]
      %v7563 = vld [vmem:[%s309 + $0x2f8] sm:$0xff]
      %v7564 = vld [vmem:[%s309 + $0x300] sm:$0xff]
      %v7565 = vld [vmem:[%s309 + $0x308] sm:$0xff]
      %v7566 = vld [vmem:[%s309 + $0x310] sm:$0xff]
      %v7567 = vld [vmem:[%s309 + $0x318] sm:$0xff]
      %v7568 = vld [vmem:[%s309 + $0x320] sm:$0xff]
      %v7569 = vld [vmem:[%s309 + $0x328] sm:$0xff]
      %v7570 = vld [vmem:[%s309 + $0x330] sm:$0xff]
      %v7571 = vld [vmem:[%s309 + $0x338] sm:$0xff]
      %v7572 = vld [vmem:[%s309 + $0x340] sm:$0xff]
      %v7573 = vld [vmem:[%s309 + $0x348] sm:$0xff]
      %v7574 = vld [vmem:[%s309 + $0x350] sm:$0xff]
      %v7575 = vld [vmem:[%s309 + $0x358] sm:$0xff]
      %v7576 = vld [vmem:[%s309 + $0x360] sm:$0xff]
      %v7577 = vld [vmem:[%s309 + $0x368] sm:$0xff]
      %v7578 = vld [vmem:[%s309 + $0x370] sm:$0xff]
      %v7579 = vld [vmem:[%s309 + $0x378] sm:$0xff]
      %v7580 = vld [vmem:[%s309 + $0x380] sm:$0xff]
      %v7581 = vld [vmem:[%s309 + $0x388] sm:$0xff]
      %v7582 = vld [vmem:[%s309 + $0x390] sm:$0xff]
      %v7583 = vld [vmem:[%s309 + $0x398] sm:$0xff]
      %v7584 = vld [vmem:[%s309 + $0x3a0] sm:$0xff]
      %v7585 = vld [vmem:[%s309 + $0x3a8] sm:$0xff]
      %v7586 = vld [vmem:[%s309 + $0x3b0] sm:$0xff]
      %v7587 = vld [vmem:[%s309 + $0x3b8] sm:$0xff]
      %v7588 = vld [vmem:[%s309 + $0x3c0] sm:$0xff]
      %v7589 = vld [vmem:[%s309 + $0x3c8] sm:$0xff]
      %v7590 = vld [vmem:[%s309 + $0x3d0] sm:$0xff]
      %v7591 = vld [vmem:[%s309 + $0x3d8] sm:$0xff]
      %v7592 = vld [vmem:[%s309 + $0x3e0] sm:$0xff]
      %v7593 = vld [vmem:[%s309 + $0x3e8] sm:$0xff]
      %v7594 = vld [vmem:[%s309 + $0x3f0] sm:$0xff]
      %v7595 = vld [vmem:[%s309 + $0x3f8] sm:$0xff]
      %v7596 = vld [vmem:[%s309 + $0x400] sm:$0xff]
      %v7597 = vld [vmem:[%s309 + $0x408] sm:$0xff]
      %v7598 = vld [vmem:[%s309 + $0x410] sm:$0xff]
      %v7599 = vld [vmem:[%s309 + $0x418] sm:$0xff]
      %v7600 = vld [vmem:[%s309 + $0x420] sm:$0xff]
      %v7601 = vld [vmem:[%s309 + $0x428] sm:$0xff]
      %v7602 = vld [vmem:[%s309 + $0x430] sm:$0xff]
      %v7603 = vld [vmem:[%s309 + $0x438] sm:$0xff]
      %v7604 = vld [vmem:[%s309 + $0x440] sm:$0xff]
      %v7605 = vld [vmem:[%s309 + $0x448] sm:$0xff]
      %v7606 = vld [vmem:[%s309 + $0x450] sm:$0xff]
      %v7607 = vld [vmem:[%s309 + $0x458] sm:$0xff]
      %v7608 = vld [vmem:[%s309 + $0x460] sm:$0xff]
      %v7609 = vld [vmem:[%s309 + $0x468] sm:$0xff]
      %v7610 = vld [vmem:[%s309 + $0x470] sm:$0xff]
      %v7611 = vld [vmem:[%s309 + $0x478] sm:$0xff]
      %v7612 = vld [vmem:[%s309 + $0x480] sm:$0xff]
      %v7613 = vld [vmem:[%s309 + $0x488] sm:$0xff]
      %v7614 = vld [vmem:[%s309 + $0x490] sm:$0xff]
      %v7615 = vld [vmem:[%s309 + $0x498] sm:$0xff]
      %v7616 = vld [vmem:[%s309 + $0x4a0] sm:$0xff]
      %v7617 = vld [vmem:[%s309 + $0x4a8] sm:$0xff]
      %v7618 = vld [vmem:[%s309 + $0x4b0] sm:$0xff]
      %v7619 = vld [vmem:[%s309 + $0x4b8] sm:$0xff]
      %v7620 = vld [vmem:[%s309 + $0x4c0] sm:$0xff]
      %v7621 = vld [vmem:[%s309 + $0x4c8] sm:$0xff]
      %v7622 = vld [vmem:[%s309 + $0x4d0] sm:$0xff]
      %v7623 = vld [vmem:[%s309 + $0x4d8] sm:$0xff]
      %v7624 = vld [vmem:[%s309 + $0x4e0] sm:$0xff]
      %v7625 = vld [vmem:[%s309 + $0x4e8] sm:$0xff]
      %v7626 = vld [vmem:[%s309 + $0x4f0] sm:$0xff]
      %v7627 = vld [vmem:[%s309 + $0x4f8] sm:$0xff]
      %v7628 = vld [vmem:[%s309 + $0x500] sm:$0xff]
      %v7629 = vld [vmem:[%s309 + $0x508] sm:$0xff]
      %v7630 = vld [vmem:[%s309 + $0x510] sm:$0xff]
      %v7631 = vld [vmem:[%s309 + $0x518] sm:$0xff]
      %v7632 = vld [vmem:[%s309 + $0x520] sm:$0xff]
      %v7633 = vld [vmem:[%s309 + $0x528] sm:$0xff]
      %v7634 = vld [vmem:[%s309 + $0x530] sm:$0xff]
      %v7635 = vld [vmem:[%s309 + $0x538] sm:$0xff]
      %v7636 = vld [vmem:[%s309 + $0x540] sm:$0xff]
      %v7637 = vld [vmem:[%s309 + $0x548] sm:$0xff]
      %v7638 = vld [vmem:[%s309 + $0x550] sm:$0xff]
      %v7639 = vld [vmem:[%s309 + $0x558] sm:$0xff]
      %v7640 = vld [vmem:[%s309 + $0x560] sm:$0xff]
      %v7641 = vld [vmem:[%s309 + $0x568] sm:$0xff]
      %v7642 = vld [vmem:[%s309 + $0x570] sm:$0xff]
      %v7643 = vld [vmem:[%s309 + $0x578] sm:$0xff]
      %v7644 = vld [vmem:[%s309 + $0x580] sm:$0xff]
      %v7645 = vld [vmem:[%s309 + $0x588] sm:$0xff]
      %v7646 = vld [vmem:[%s309 + $0x590] sm:$0xff]
      %v7647 = vld [vmem:[%s309 + $0x598] sm:$0xff]
      %v7648 = vld [vmem:[%s309 + $0x5a0] sm:$0xff]
      %v7649 = vld [vmem:[%s309 + $0x5a8] sm:$0xff]
      %v7650 = vld [vmem:[%s309 + $0x5b0] sm:$0xff]
      %v7651 = vld [vmem:[%s309 + $0x5b8] sm:$0xff]
      %v7652 = vld [vmem:[%s309 + $0x5c0] sm:$0xff]
      %v7653 = vld [vmem:[%s309 + $0x5c8] sm:$0xff]
      %v7654 = vld [vmem:[%s309 + $0x5d0] sm:$0xff]
      %v7655 = vld [vmem:[%s309 + $0x5d8] sm:$0xff]
      %v7656 = vld [vmem:[%s309 + $0x5e0] sm:$0xff]
      %v7657 = vld [vmem:[%s309 + $0x5e8] sm:$0xff]
      %v7658 = vld [vmem:[%s309 + $0x5f0] sm:$0xff]
      %v7659 = vld [vmem:[%s309 + $0x5f8] sm:$0xff]
      %v7660 = vld [vmem:[%s309 + $0x600] sm:$0xff]
      %v7661 = vld [vmem:[%s309 + $0x608] sm:$0xff]
      %v7662 = vld [vmem:[%s309 + $0x610] sm:$0xff]
      %v7663 = vld [vmem:[%s309 + $0x618] sm:$0xff]
      %v7664 = vld [vmem:[%s309 + $0x620] sm:$0xff]
      %v7665 = vld [vmem:[%s309 + $0x628] sm:$0xff]
      %v7666 = vld [vmem:[%s309 + $0x630] sm:$0xff]
      %v7667 = vld [vmem:[%s309 + $0x638] sm:$0xff]
      %v7668 = vld [vmem:[%s309 + $0x640] sm:$0xff]
      %v7669 = vld [vmem:[%s309 + $0x648] sm:$0xff]
      %v7670 = vld [vmem:[%s309 + $0x650] sm:$0xff]
      %v7671 = vld [vmem:[%s309 + $0x658] sm:$0xff]
      %v7672 = vld [vmem:[%s309 + $0x660] sm:$0xff]
      %v7673 = vld [vmem:[%s309 + $0x668] sm:$0xff]
      %v7674 = vld [vmem:[%s309 + $0x670] sm:$0xff]
      %v7675 = vld [vmem:[%s309 + $0x678] sm:$0xff]
      %v7676 = vld [vmem:[%s309 + $0x680] sm:$0xff]
      %v7677 = vld [vmem:[%s309 + $0x688] sm:$0xff]
      %v7678 = vld [vmem:[%s309 + $0x690] sm:$0xff]
      %v7679 = vld [vmem:[%s309 + $0x698] sm:$0xff]
      %v7680 = vld [vmem:[%s309 + $0x6a0] sm:$0xff]
      %v7681 = vld [vmem:[%s309 + $0x6a8] sm:$0xff]
      %v7682 = vld [vmem:[%s309 + $0x6b0] sm:$0xff]
      %v7683 = vld [vmem:[%s309 + $0x6b8] sm:$0xff]
      %v7900 = vunpack.c.l.b16 %v7468
      %v7901 = vunpack.c.h.b16 %v7468
      %v7902 = vunpack.c.l.b16 %v7469
      %v7903 = vunpack.c.h.b16 %v7469
      %v7904 = vunpack.c.l.b16 %v7470
      %v7905 = vunpack.c.h.b16 %v7470
      %v7906 = vunpack.c.l.b16 %v7471
      %v7907 = vunpack.c.h.b16 %v7471
      %v7908 = vunpack.c.l.b16 %v7472
      %v7909 = vunpack.c.h.b16 %v7472
      %v7910 = vunpack.c.l.b16 %v7473
      %v7911 = vunpack.c.h.b16 %v7473
      %v7912 = vunpack.c.l.b16 %v7474
      %v7913 = vunpack.c.h.b16 %v7474
      %v7914 = vunpack.c.l.b16 %v7475
      %v7915 = vunpack.c.h.b16 %v7475
      %v7916 = vunpack.c.l.b16 %v7476
      %v7917 = vunpack.c.h.b16 %v7476
      %v7918 = vunpack.c.l.b16 %v7477
      %v7919 = vunpack.c.h.b16 %v7477
      %v7920 = vunpack.c.l.b16 %v7478
      %v7921 = vunpack.c.h.b16 %v7478
      %v7922 = vunpack.c.l.b16 %v7479
      %v7923 = vunpack.c.h.b16 %v7479
      %v7924 = vunpack.c.l.b16 %v7480
      %v7925 = vunpack.c.h.b16 %v7480
      %v7926 = vunpack.c.l.b16 %v7481
      %v7927 = vunpack.c.h.b16 %v7481
      %v7928 = vunpack.c.l.b16 %v7482
      %v7929 = vunpack.c.h.b16 %v7482
      %v7930 = vunpack.c.l.b16 %v7483
      %v7931 = vunpack.c.h.b16 %v7483
      %v7932 = vunpack.c.l.b16 %v7484
      %v7933 = vunpack.c.h.b16 %v7484
      %v7934 = vunpack.c.l.b16 %v7485
      %v7935 = vunpack.c.h.b16 %v7485
      %v7936 = vunpack.c.l.b16 %v7486
      %v7937 = vunpack.c.h.b16 %v7486
      %v7938 = vunpack.c.l.b16 %v7487
      %v7939 = vunpack.c.h.b16 %v7487
      %v7940 = vunpack.c.l.b16 %v7488
      %v7941 = vunpack.c.h.b16 %v7488
      %v7942 = vunpack.c.l.b16 %v7489
      %v7943 = vunpack.c.h.b16 %v7489
      %v7944 = vunpack.c.l.b16 %v7490
      %v7945 = vunpack.c.h.b16 %v7490
      %v7946 = vunpack.c.l.b16 %v7491
      %v7947 = vunpack.c.h.b16 %v7491
      %v7948 = vunpack.c.l.b16 %v7492
      %v7949 = vunpack.c.h.b16 %v7492
      %v7950 = vunpack.c.l.b16 %v7493
      %v7951 = vunpack.c.h.b16 %v7493
      %v7952 = vunpack.c.l.b16 %v7494
      %v7953 = vunpack.c.h.b16 %v7494
      %v7954 = vunpack.c.l.b16 %v7495
      %v7955 = vunpack.c.h.b16 %v7495
      %v7956 = vunpack.c.l.b16 %v7496
      %v7957 = vunpack.c.h.b16 %v7496
      %v7958 = vunpack.c.l.b16 %v7497
      %v7959 = vunpack.c.h.b16 %v7497
      %v7960 = vunpack.c.l.b16 %v7498
      %v7961 = vunpack.c.h.b16 %v7498
      %v7962 = vunpack.c.l.b16 %v7499
      %v7963 = vunpack.c.h.b16 %v7499
      %v7964 = vunpack.c.l.b16 %v7500
      %v7965 = vunpack.c.h.b16 %v7500
      %v7966 = vunpack.c.l.b16 %v7501
      %v7967 = vunpack.c.h.b16 %v7501
      %v7968 = vunpack.c.l.b16 %v7502
      %v7969 = vunpack.c.h.b16 %v7502
      %v7970 = vunpack.c.l.b16 %v7503
      %v7971 = vunpack.c.h.b16 %v7503
      %v7972 = vunpack.c.l.b16 %v7504
      %v7973 = vunpack.c.h.b16 %v7504
      %v7974 = vunpack.c.l.b16 %v7505
      %v7975 = vunpack.c.h.b16 %v7505
      %v7976 = vunpack.c.l.b16 %v7506
      %v7977 = vunpack.c.h.b16 %v7506
      %v7978 = vunpack.c.l.b16 %v7507
      %v7979 = vunpack.c.h.b16 %v7507
      %v7980 = vunpack.c.l.b16 %v7508
      %v7981 = vunpack.c.h.b16 %v7508
      %v7982 = vunpack.c.l.b16 %v7509
      %v7983 = vunpack.c.h.b16 %v7509
      %v7984 = vunpack.c.l.b16 %v7510
      %v7985 = vunpack.c.h.b16 %v7510
      %v7986 = vunpack.c.l.b16 %v7511
      %v7987 = vunpack.c.h.b16 %v7511
      %v7988 = vunpack.c.l.b16 %v7512
      %v7989 = vunpack.c.h.b16 %v7512
      %v7990 = vunpack.c.l.b16 %v7513
      %v7991 = vunpack.c.h.b16 %v7513
      %v7992 = vunpack.c.l.b16 %v7514
      %v7993 = vunpack.c.h.b16 %v7514
      %v7994 = vunpack.c.l.b16 %v7515
      %v7995 = vunpack.c.h.b16 %v7515
      %v7996 = vunpack.c.l.b16 %v7516
      %v7997 = vunpack.c.h.b16 %v7516
      %v7998 = vunpack.c.l.b16 %v7517
      %v7999 = vunpack.c.h.b16 %v7517
      %v8000 = vunpack.c.l.b16 %v7518
      %v8001 = vunpack.c.h.b16 %v7518
      %v8002 = vunpack.c.l.b16 %v7519
      %v8003 = vunpack.c.h.b16 %v7519
      %v8004 = vunpack.c.l.b16 %v7520
      %v8005 = vunpack.c.h.b16 %v7520
      %v8006 = vunpack.c.l.b16 %v7521
      %v8007 = vunpack.c.h.b16 %v7521
      %v8008 = vunpack.c.l.b16 %v7522
      %v8009 = vunpack.c.h.b16 %v7522
      %v8010 = vunpack.c.l.b16 %v7523
      %v8011 = vunpack.c.h.b16 %v7523
      %v8012 = vunpack.c.l.b16 %v7524
      %v8013 = vunpack.c.h.b16 %v7524
      %v8014 = vunpack.c.l.b16 %v7525
      %v8015 = vunpack.c.h.b16 %v7525
      %v8016 = vunpack.c.l.b16 %v7526
      %v8017 = vunpack.c.h.b16 %v7526
      %v8018 = vunpack.c.l.b16 %v7527
      %v8019 = vunpack.c.h.b16 %v7527
      %v8020 = vunpack.c.l.b16 %v7528
      %v8021 = vunpack.c.h.b16 %v7528
      %v8022 = vunpack.c.l.b16 %v7529
      %v8023 = vunpack.c.h.b16 %v7529
      %v8024 = vunpack.c.l.b16 %v7530
      %v8025 = vunpack.c.h.b16 %v7530
      %v8026 = vunpack.c.l.b16 %v7531
      %v8027 = vunpack.c.h.b16 %v7531
      %v8028 = vunpack.c.l.b16 %v7532
      %v8029 = vunpack.c.h.b16 %v7532
      %v8030 = vunpack.c.l.b16 %v7533
      %v8031 = vunpack.c.h.b16 %v7533
      %v8032 = vunpack.c.l.b16 %v7534
      %v8033 = vunpack.c.h.b16 %v7534
      %v8034 = vunpack.c.l.b16 %v7535
      %v8035 = vunpack.c.h.b16 %v7535
      %v8036 = vunpack.c.l.b16 %v7536
      %v8037 = vunpack.c.h.b16 %v7536
      %v8038 = vunpack.c.l.b16 %v7537
      %v8039 = vunpack.c.h.b16 %v7537
      %v8040 = vunpack.c.l.b16 %v7538
      %v8041 = vunpack.c.h.b16 %v7538
      %v8042 = vunpack.c.l.b16 %v7539
      %v8043 = vunpack.c.h.b16 %v7539
      %v8044 = vunpack.c.l.b16 %v7540
      %v8045 = vunpack.c.h.b16 %v7540
      %v8046 = vunpack.c.l.b16 %v7541
      %v8047 = vunpack.c.h.b16 %v7541
      %v8048 = vunpack.c.l.b16 %v7542
      %v8049 = vunpack.c.h.b16 %v7542
      %v8050 = vunpack.c.l.b16 %v7543
      %v8051 = vunpack.c.h.b16 %v7543
      %v8052 = vunpack.c.l.b16 %v7544
      %v8053 = vunpack.c.h.b16 %v7544
      %v8054 = vunpack.c.l.b16 %v7545
      %v8055 = vunpack.c.h.b16 %v7545
      %v8056 = vunpack.c.l.b16 %v7546
      %v8057 = vunpack.c.h.b16 %v7546
      %v8058 = vunpack.c.l.b16 %v7547
      %v8059 = vunpack.c.h.b16 %v7547
      %v8060 = vunpack.c.l.b16 %v7548
      %v8061 = vunpack.c.h.b16 %v7548
      %v8062 = vunpack.c.l.b16 %v7549
      %v8063 = vunpack.c.h.b16 %v7549
      %v8064 = vunpack.c.l.b16 %v7550
      %v8065 = vunpack.c.h.b16 %v7550
      %v8066 = vunpack.c.l.b16 %v7551
      %v8067 = vunpack.c.h.b16 %v7551
      %v8068 = vunpack.c.l.b16 %v7552
      %v8069 = vunpack.c.h.b16 %v7552
      %v8070 = vunpack.c.l.b16 %v7553
      %v8071 = vunpack.c.h.b16 %v7553
      %v8072 = vunpack.c.l.b16 %v7554
      %v8073 = vunpack.c.h.b16 %v7554
      %v8074 = vunpack.c.l.b16 %v7555
      %v8075 = vunpack.c.h.b16 %v7555
      %v8076 = vunpack.c.l.b16 %v7556
      %v8077 = vunpack.c.h.b16 %v7556
      %v8078 = vunpack.c.l.b16 %v7557
      %v8079 = vunpack.c.h.b16 %v7557
      %v8080 = vunpack.c.l.b16 %v7558
      %v8081 = vunpack.c.h.b16 %v7558
      %v8082 = vunpack.c.l.b16 %v7559
      %v8083 = vunpack.c.h.b16 %v7559
      %v8084 = vunpack.c.l.b16 %v7560
      %v8085 = vunpack.c.h.b16 %v7560
      %v8086 = vunpack.c.l.b16 %v7561
      %v8087 = vunpack.c.h.b16 %v7561
      %v8088 = vunpack.c.l.b16 %v7562
      %v8089 = vunpack.c.h.b16 %v7562
      %v8090 = vunpack.c.l.b16 %v7563
      %v8091 = vunpack.c.h.b16 %v7563
      %v8092 = vunpack.c.l.b16 %v7564
      %v8093 = vunpack.c.h.b16 %v7564
      %v8094 = vunpack.c.l.b16 %v7565
      %v8095 = vunpack.c.h.b16 %v7565
      %v8096 = vunpack.c.l.b16 %v7566
      %v8097 = vunpack.c.h.b16 %v7566
      %v8098 = vunpack.c.l.b16 %v7567
      %v8099 = vunpack.c.h.b16 %v7567
      %v8100 = vunpack.c.l.b16 %v7568
      %v8101 = vunpack.c.h.b16 %v7568
      %v8102 = vunpack.c.l.b16 %v7569
      %v8103 = vunpack.c.h.b16 %v7569
      %v8104 = vunpack.c.l.b16 %v7570
      %v8105 = vunpack.c.h.b16 %v7570
      %v8106 = vunpack.c.l.b16 %v7571
      %v8107 = vunpack.c.h.b16 %v7571
      %v8108 = vunpack.c.l.b16 %v7572
      %v8109 = vunpack.c.h.b16 %v7572
      %v8110 = vunpack.c.l.b16 %v7573
      %v8111 = vunpack.c.h.b16 %v7573
      %v8112 = vunpack.c.l.b16 %v7574
      %v8113 = vunpack.c.h.b16 %v7574
      %v8114 = vunpack.c.l.b16 %v7575
      %v8115 = vunpack.c.h.b16 %v7575
      %v8116 = vunpack.c.l.b16 %v7576
      %v8117 = vunpack.c.h.b16 %v7576
      %v8118 = vunpack.c.l.b16 %v7577
      %v8119 = vunpack.c.h.b16 %v7577
      %v8120 = vunpack.c.l.b16 %v7578
      %v8121 = vunpack.c.h.b16 %v7578
      %v8122 = vunpack.c.l.b16 %v7579
      %v8123 = vunpack.c.h.b16 %v7579
      %v8124 = vunpack.c.l.b16 %v7580
      %v8125 = vunpack.c.h.b16 %v7580
      %v8126 = vunpack.c.l.b16 %v7581
      %v8127 = vunpack.c.h.b16 %v7581
      %v8128 = vunpack.c.l.b16 %v7582
      %v8129 = vunpack.c.h.b16 %v7582
      %v8130 = vunpack.c.l.b16 %v7583
      %v8131 = vunpack.c.h.b16 %v7583
      %v8132 = vunpack.c.l.b16 %v7584
      %v8133 = vunpack.c.h.b16 %v7584
      %v8134 = vunpack.c.l.b16 %v7585
      %v8135 = vunpack.c.h.b16 %v7585
      %v8136 = vunpack.c.l.b16 %v7586
      %v8137 = vunpack.c.h.b16 %v7586
      %v8138 = vunpack.c.l.b16 %v7587
      %v8139 = vunpack.c.h.b16 %v7587
      %v8140 = vunpack.c.l.b16 %v7588
      %v8141 = vunpack.c.h.b16 %v7588
      %v8142 = vunpack.c.l.b16 %v7589
      %v8143 = vunpack.c.h.b16 %v7589
      %v8144 = vunpack.c.l.b16 %v7590
      %v8145 = vunpack.c.h.b16 %v7590
      %v8146 = vunpack.c.l.b16 %v7591
      %v8147 = vunpack.c.h.b16 %v7591
      %v8148 = vunpack.c.l.b16 %v7592
      %v8149 = vunpack.c.h.b16 %v7592
      %v8150 = vunpack.c.l.b16 %v7593
      %v8151 = vunpack.c.h.b16 %v7593
      %v8152 = vunpack.c.l.b16 %v7594
      %v8153 = vunpack.c.h.b16 %v7594
      %v8154 = vunpack.c.l.b16 %v7595
      %v8155 = vunpack.c.h.b16 %v7595
      %v8156 = vunpack.c.l.b16 %v7596
      %v8157 = vunpack.c.h.b16 %v7596
      %v8158 = vunpack.c.l.b16 %v7597
      %v8159 = vunpack.c.h.b16 %v7597
      %v8160 = vunpack.c.l.b16 %v7598
      %v8161 = vunpack.c.h.b16 %v7598
      %v8162 = vunpack.c.l.b16 %v7599
      %v8163 = vunpack.c.h.b16 %v7599
      %v8164 = vunpack.c.l.b16 %v7600
      %v8165 = vunpack.c.h.b16 %v7600
      %v8166 = vunpack.c.l.b16 %v7601
      %v8167 = vunpack.c.h.b16 %v7601
      %v8168 = vunpack.c.l.b16 %v7602
      %v8169 = vunpack.c.h.b16 %v7602
      %v8170 = vunpack.c.l.b16 %v7603
      %v8171 = vunpack.c.h.b16 %v7603
      %v8172 = vunpack.c.l.b16 %v7604
      %v8173 = vunpack.c.h.b16 %v7604
      %v8174 = vunpack.c.l.b16 %v7605
      %v8175 = vunpack.c.h.b16 %v7605
      %v8176 = vunpack.c.l.b16 %v7606
      %v8177 = vunpack.c.h.b16 %v7606
      %v8178 = vunpack.c.l.b16 %v7607
      %v8179 = vunpack.c.h.b16 %v7607
      %v8180 = vunpack.c.l.b16 %v7608
      %v8181 = vunpack.c.h.b16 %v7608
      %v8182 = vunpack.c.l.b16 %v7609
      %v8183 = vunpack.c.h.b16 %v7609
      %v8184 = vunpack.c.l.b16 %v7610
      %v8185 = vunpack.c.h.b16 %v7610
      %v8186 = vunpack.c.l.b16 %v7611
      %v8187 = vunpack.c.h.b16 %v7611
      %v8188 = vunpack.c.l.b16 %v7612
      %v8189 = vunpack.c.h.b16 %v7612
      %v8190 = vunpack.c.l.b16 %v7613
      %v8191 = vunpack.c.h.b16 %v7613
      %v8192 = vunpack.c.l.b16 %v7614
      %v8193 = vunpack.c.h.b16 %v7614
      %v8194 = vunpack.c.l.b16 %v7615
      %v8195 = vunpack.c.h.b16 %v7615
      %v8196 = vunpack.c.l.b16 %v7616
      %v8197 = vunpack.c.h.b16 %v7616
      %v8198 = vunpack.c.l.b16 %v7617
      %v8199 = vunpack.c.h.b16 %v7617
      %v8200 = vunpack.c.l.b16 %v7618
      %v8201 = vunpack.c.h.b16 %v7618
      %v8202 = vunpack.c.l.b16 %v7619
      %v8203 = vunpack.c.h.b16 %v7619
      %v8204 = vunpack.c.l.b16 %v7620
      %v8205 = vunpack.c.h.b16 %v7620
      %v8206 = vunpack.c.l.b16 %v7621
      %v8207 = vunpack.c.h.b16 %v7621
      %v8208 = vunpack.c.l.b16 %v7622
      %v8209 = vunpack.c.h.b16 %v7622
      %v8210 = vunpack.c.l.b16 %v7623
      %v8211 = vunpack.c.h.b16 %v7623
      %v8212 = vunpack.c.l.b16 %v7624
      %v8213 = vunpack.c.h.b16 %v7624
      %v8214 = vunpack.c.l.b16 %v7625
      %v8215 = vunpack.c.h.b16 %v7625
      %v8216 = vunpack.c.l.b16 %v7626
      %v8217 = vunpack.c.h.b16 %v7626
      %v8218 = vunpack.c.l.b16 %v7627
      %v8219 = vunpack.c.h.b16 %v7627
      %v8220 = vunpack.c.l.b16 %v7628
      %v8221 = vunpack.c.h.b16 %v7628
      %v8222 = vunpack.c.l.b16 %v7629
      %v8223 = vunpack.c.h.b16 %v7629
      %v8224 = vunpack.c.l.b16 %v7630
      %v8225 = vunpack.c.h.b16 %v7630
      %v8226 = vunpack.c.l.b16 %v7631
      %v8227 = vunpack.c.h.b16 %v7631
      %v8228 = vunpack.c.l.b16 %v7632
      %v8229 = vunpack.c.h.b16 %v7632
      %v8230 = vunpack.c.l.b16 %v7633
      %v8231 = vunpack.c.h.b16 %v7633
      %v8232 = vunpack.c.l.b16 %v7634
      %v8233 = vunpack.c.h.b16 %v7634
      %v8234 = vunpack.c.l.b16 %v7635
      %v8235 = vunpack.c.h.b16 %v7635
      %v8236 = vunpack.c.l.b16 %v7636
      %v8237 = vunpack.c.h.b16 %v7636
      %v8238 = vunpack.c.l.b16 %v7637
      %v8239 = vunpack.c.h.b16 %v7637
      %v8240 = vunpack.c.l.b16 %v7638
      %v8241 = vunpack.c.h.b16 %v7638
      %v8242 = vunpack.c.l.b16 %v7639
      %v8243 = vunpack.c.h.b16 %v7639
      %v8244 = vunpack.c.l.b16 %v7640
      %v8245 = vunpack.c.h.b16 %v7640
      %v8246 = vunpack.c.l.b16 %v7641
      %v8247 = vunpack.c.h.b16 %v7641
      %v8248 = vunpack.c.l.b16 %v7642
      %v8249 = vunpack.c.h.b16 %v7642
      %v8250 = vunpack.c.l.b16 %v7643
      %v8251 = vunpack.c.h.b16 %v7643
      %v8252 = vunpack.c.l.b16 %v7644
      %v8253 = vunpack.c.h.b16 %v7644
      %v8254 = vunpack.c.l.b16 %v7645
      %v8255 = vunpack.c.h.b16 %v7645
      %v8256 = vunpack.c.l.b16 %v7646
      %v8257 = vunpack.c.h.b16 %v7646
      %v8258 = vunpack.c.l.b16 %v7647
      %v8259 = vunpack.c.h.b16 %v7647
      %v8260 = vunpack.c.l.b16 %v7648
      %v8261 = vunpack.c.h.b16 %v7648
      %v8262 = vunpack.c.l.b16 %v7649
      %v8263 = vunpack.c.h.b16 %v7649
      %v8264 = vunpack.c.l.b16 %v7650
      %v8265 = vunpack.c.h.b16 %v7650
      %v8266 = vunpack.c.l.b16 %v7651
      %v8267 = vunpack.c.h.b16 %v7651
      %v8268 = vunpack.c.l.b16 %v7652
      %v8269 = vunpack.c.h.b16 %v7652
      %v8270 = vunpack.c.l.b16 %v7653
      %v8271 = vunpack.c.h.b16 %v7653
      %v8272 = vunpack.c.l.b16 %v7654
      %v8273 = vunpack.c.h.b16 %v7654
      %v8274 = vunpack.c.l.b16 %v7655
      %v8275 = vunpack.c.h.b16 %v7655
      %v8276 = vunpack.c.l.b16 %v7656
      %v8277 = vunpack.c.h.b16 %v7656
      %v8278 = vunpack.c.l.b16 %v7657
      %v8279 = vunpack.c.h.b16 %v7657
      %v8280 = vunpack.c.l.b16 %v7658
      %v8281 = vunpack.c.h.b16 %v7658
      %v8282 = vunpack.c.l.b16 %v7659
      %v8283 = vunpack.c.h.b16 %v7659
      %v8284 = vunpack.c.l.b16 %v7660
      %v8285 = vunpack.c.h.b16 %v7660
      %v8286 = vunpack.c.l.b16 %v7661
      %v8287 = vunpack.c.h.b16 %v7661
      %v8288 = vunpack.c.l.b16 %v7662
      %v8289 = vunpack.c.h.b16 %v7662
      %v8290 = vunpack.c.l.b16 %v7663
      %v8291 = vunpack.c.h.b16 %v7663
      %v8292 = vunpack.c.l.b16 %v7664
      %v8293 = vunpack.c.h.b16 %v7664
      %v8294 = vunpack.c.l.b16 %v7665
      %v8295 = vunpack.c.h.b16 %v7665
      %v8296 = vunpack.c.l.b16 %v7666
      %v8297 = vunpack.c.h.b16 %v7666
      %v8298 = vunpack.c.l.b16 %v7667
      %v8299 = vunpack.c.h.b16 %v7667
      %v8300 = vunpack.c.l.b16 %v7668
      %v8301 = vunpack.c.h.b16 %v7668
      %v8302 = vunpack.c.l.b16 %v7669
      %v8303 = vunpack.c.h.b16 %v7669
      %v8304 = vunpack.c.l.b16 %v7670
      %v8305 = vunpack.c.h.b16 %v7670
      %v8306 = vunpack.c.l.b16 %v7671
      %v8307 = vunpack.c.h.b16 %v7671
      %v8308 = vunpack.c.l.b16 %v7672
      %v8309 = vunpack.c.h.b16 %v7672
      %v8310 = vunpack.c.l.b16 %v7673
      %v8311 = vunpack.c.h.b16 %v7673
      %v8312 = vunpack.c.l.b16 %v7674
      %v8313 = vunpack.c.h.b16 %v7674
      %v8314 = vunpack.c.l.b16 %v7675
      %v8315 = vunpack.c.h.b16 %v7675
      %v8316 = vunpack.c.l.b16 %v7676
      %v8317 = vunpack.c.h.b16 %v7676
      %v8318 = vunpack.c.l.b16 %v7677
      %v8319 = vunpack.c.h.b16 %v7677
      %v8320 = vunpack.c.l.b16 %v7678
      %v8321 = vunpack.c.h.b16 %v7678
      %v8322 = vunpack.c.l.b16 %v7679
      %v8323 = vunpack.c.h.b16 %v7679
      %v8324 = vunpack.c.l.b16 %v7680
      %v8325 = vunpack.c.h.b16 %v7680
      %v8326 = vunpack.c.l.b16 %v7681
      %v8327 = vunpack.c.h.b16 %v7681
      %v8328 = vunpack.c.l.b16 %v7682
      %v8329 = vunpack.c.h.b16 %v7682
      %v8330 = vunpack.c.l.b16 %v7683
      %v8331 = vunpack.c.h.b16 %v7683
      %v8332 = vpack.c.b16 %v7918, %v7900
      %v8333 = vpack.c.b16 %v7919, %v7901
      %v8334 = vpack.c.b16 %v7920, %v7902
      %v8335 = vpack.c.b16 %v7921, %v7903
      %v8336 = vpack.c.b16 %v7922, %v7904
      %v8337 = vpack.c.b16 %v7923, %v7905
      %v8338 = vpack.c.b16 %v7924, %v7906
      %v8339 = vpack.c.b16 %v7925, %v7907
      %v8340 = vpack.c.b16 %v7926, %v7908
      %v8341 = vpack.c.b16 %v7927, %v7909
      %v8342 = vpack.c.b16 %v7928, %v7910
      %v8343 = vpack.c.b16 %v7929, %v7911
      %v8344 = vpack.c.b16 %v7930, %v7912
      %v8345 = vpack.c.b16 %v7931, %v7913
      %v8346 = vpack.c.b16 %v7932, %v7914
      %v8347 = vpack.c.b16 %v7933, %v7915
      %v8348 = vpack.c.b16 %v7934, %v7916
      %v8349 = vpack.c.b16 %v7935, %v7917
      %v8350 = vpack.c.b16 %v7954, %v7936
      %v8351 = vpack.c.b16 %v7955, %v7937
      %v8352 = vpack.c.b16 %v7956, %v7938
      %v8353 = vpack.c.b16 %v7957, %v7939
      %v8354 = vpack.c.b16 %v7958, %v7940
      %v8355 = vpack.c.b16 %v7959, %v7941
      %v8356 = vpack.c.b16 %v7960, %v7942
      %v8357 = vpack.c.b16 %v7961, %v7943
      %v8358 = vpack.c.b16 %v7962, %v7944
      %v8359 = vpack.c.b16 %v7963, %v7945
      %v8360 = vpack.c.b16 %v7964, %v7946
      %v8361 = vpack.c.b16 %v7965, %v7947
      %v8362 = vpack.c.b16 %v7966, %v7948
      %v8363 = vpack.c.b16 %v7967, %v7949
      %v8364 = vpack.c.b16 %v7968, %v7950
      %v8365 = vpack.c.b16 %v7969, %v7951
      %v8366 = vpack.c.b16 %v7970, %v7952
      %v8367 = vpack.c.b16 %v7971, %v7953
      %v8368 = vpack.c.b16 %v7990, %v7972
      %v8369 = vpack.c.b16 %v7991, %v7973
      %v8370 = vpack.c.b16 %v7992, %v7974
      %v8371 = vpack.c.b16 %v7993, %v7975
      %v8372 = vpack.c.b16 %v7994, %v7976
      %v8373 = vpack.c.b16 %v7995, %v7977
      %v8374 = vpack.c.b16 %v7996, %v7978
      %v8375 = vpack.c.b16 %v7997, %v7979
      %v8376 = vpack.c.b16 %v7998, %v7980
      %v8377 = vpack.c.b16 %v7999, %v7981
      %v8378 = vpack.c.b16 %v8000, %v7982
      %v8379 = vpack.c.b16 %v8001, %v7983
      %v8380 = vpack.c.b16 %v8002, %v7984
      %v8381 = vpack.c.b16 %v8003, %v7985
      %v8382 = vpack.c.b16 %v8004, %v7986
      %v8383 = vpack.c.b16 %v8005, %v7987
      %v8384 = vpack.c.b16 %v8006, %v7988
      %v8385 = vpack.c.b16 %v8007, %v7989
      %v8386 = vpack.c.b16 %v8026, %v8008
      %v8387 = vpack.c.b16 %v8027, %v8009
      %v8388 = vpack.c.b16 %v8028, %v8010
      %v8389 = vpack.c.b16 %v8029, %v8011
      %v8390 = vpack.c.b16 %v8030, %v8012
      %v8391 = vpack.c.b16 %v8031, %v8013
      %v8392 = vpack.c.b16 %v8032, %v8014
      %v8393 = vpack.c.b16 %v8033, %v8015
      %v8394 = vpack.c.b16 %v8034, %v8016
      %v8395 = vpack.c.b16 %v8035, %v8017
      %v8396 = vpack.c.b16 %v8036, %v8018
      %v8397 = vpack.c.b16 %v8037, %v8019
      %v8398 = vpack.c.b16 %v8038, %v8020
      %v8399 = vpack.c.b16 %v8039, %v8021
      %v8400 = vpack.c.b16 %v8040, %v8022
      %v8401 = vpack.c.b16 %v8041, %v8023
      %v8402 = vpack.c.b16 %v8042, %v8024
      %v8403 = vpack.c.b16 %v8043, %v8025
      %v8404 = vpack.c.b16 %v8062, %v8044
      %v8405 = vpack.c.b16 %v8063, %v8045
      %v8406 = vpack.c.b16 %v8064, %v8046
      %v8407 = vpack.c.b16 %v8065, %v8047
      %v8408 = vpack.c.b16 %v8066, %v8048
      %v8409 = vpack.c.b16 %v8067, %v8049
      %v8410 = vpack.c.b16 %v8068, %v8050
      %v8411 = vpack.c.b16 %v8069, %v8051
      %v8412 = vpack.c.b16 %v8070, %v8052
      %v8413 = vpack.c.b16 %v8071, %v8053
      %v8414 = vpack.c.b16 %v8072, %v8054
      %v8415 = vpack.c.b16 %v8073, %v8055
      %v8416 = vpack.c.b16 %v8074, %v8056
      %v8417 = vpack.c.b16 %v8075, %v8057
      %v8418 = vpack.c.b16 %v8076, %v8058
      %v8419 = vpack.c.b16 %v8077, %v8059
      %v8420 = vpack.c.b16 %v8078, %v8060
      %v8421 = vpack.c.b16 %v8079, %v8061
      %v8422 = vpack.c.b16 %v8098, %v8080
      %v8423 = vpack.c.b16 %v8099, %v8081
      %v8424 = vpack.c.b16 %v8100, %v8082
      %v8425 = vpack.c.b16 %v8101, %v8083
      %v8426 = vpack.c.b16 %v8102, %v8084
      %v8427 = vpack.c.b16 %v8103, %v8085
      %v8428 = vpack.c.b16 %v8104, %v8086
      %v8429 = vpack.c.b16 %v8105, %v8087
      %v8430 = vpack.c.b16 %v8106, %v8088
      %v8431 = vpack.c.b16 %v8107, %v8089
      %v8432 = vpack.c.b16 %v8108, %v8090
      %v8433 = vpack.c.b16 %v8109, %v8091
      %v8434 = vpack.c.b16 %v8110, %v8092
      %v8435 = vpack.c.b16 %v8111, %v8093
      %v8436 = vpack.c.b16 %v8112, %v8094
      %v8437 = vpack.c.b16 %v8113, %v8095
      %v8438 = vpack.c.b16 %v8114, %v8096
      %v8439 = vpack.c.b16 %v8115, %v8097
      %v8440 = vpack.c.b16 %v8134, %v8116
      %v8441 = vpack.c.b16 %v8135, %v8117
      %v8442 = vpack.c.b16 %v8136, %v8118
      %v8443 = vpack.c.b16 %v8137, %v8119
      %v8444 = vpack.c.b16 %v8138, %v8120
      %v8445 = vpack.c.b16 %v8139, %v8121
      %v8446 = vpack.c.b16 %v8140, %v8122
      %v8447 = vpack.c.b16 %v8141, %v8123
      %v8448 = vpack.c.b16 %v8142, %v8124
      %v8449 = vpack.c.b16 %v8143, %v8125
      %v8450 = vpack.c.b16 %v8144, %v8126
      %v8451 = vpack.c.b16 %v8145, %v8127
      %v8452 = vpack.c.b16 %v8146, %v8128
      %v8453 = vpack.c.b16 %v8147, %v8129
      %v8454 = vpack.c.b16 %v8148, %v8130
      %v8455 = vpack.c.b16 %v8149, %v8131
      %v8456 = vpack.c.b16 %v8150, %v8132
      %v8457 = vpack.c.b16 %v8151, %v8133
      %v8458 = vpack.c.b16 %v8170, %v8152
      %v8459 = vpack.c.b16 %v8171, %v8153
      %v8460 = vpack.c.b16 %v8172, %v8154
      %v8461 = vpack.c.b16 %v8173, %v8155
      %v8462 = vpack.c.b16 %v8174, %v8156
      %v8463 = vpack.c.b16 %v8175, %v8157
      %v8464 = vpack.c.b16 %v8176, %v8158
      %v8465 = vpack.c.b16 %v8177, %v8159
      %v8466 = vpack.c.b16 %v8178, %v8160
      %v8467 = vpack.c.b16 %v8179, %v8161
      %v8468 = vpack.c.b16 %v8180, %v8162
      %v8469 = vpack.c.b16 %v8181, %v8163
      %v8470 = vpack.c.b16 %v8182, %v8164
      %v8471 = vpack.c.b16 %v8183, %v8165
      %v8472 = vpack.c.b16 %v8184, %v8166
      %v8473 = vpack.c.b16 %v8185, %v8167
      %v8474 = vpack.c.b16 %v8186, %v8168
      %v8475 = vpack.c.b16 %v8187, %v8169
      %v8476 = vpack.c.b16 %v8206, %v8188
      %v8477 = vpack.c.b16 %v8207, %v8189
      %v8478 = vpack.c.b16 %v8208, %v8190
      %v8479 = vpack.c.b16 %v8209, %v8191
      %v8480 = vpack.c.b16 %v8210, %v8192
      %v8481 = vpack.c.b16 %v8211, %v8193
      %v8482 = vpack.c.b16 %v8212, %v8194
      %v8483 = vpack.c.b16 %v8213, %v8195
      %v8484 = vpack.c.b16 %v8214, %v8196
      %v8485 = vpack.c.b16 %v8215, %v8197
      %v8486 = vpack.c.b16 %v8216, %v8198
      %v8487 = vpack.c.b16 %v8217, %v8199
      %v8488 = vpack.c.b16 %v8218, %v8200
      %v8489 = vpack.c.b16 %v8219, %v8201
      %v8490 = vpack.c.b16 %v8220, %v8202
      %v8491 = vpack.c.b16 %v8221, %v8203
      %v8492 = vpack.c.b16 %v8222, %v8204
      %v8493 = vpack.c.b16 %v8223, %v8205
      %v8494 = vpack.c.b16 %v8242, %v8224
      %v8495 = vpack.c.b16 %v8243, %v8225
      %v8496 = vpack.c.b16 %v8244, %v8226
      %v8497 = vpack.c.b16 %v8245, %v8227
      %v8498 = vpack.c.b16 %v8246, %v8228
      %v8499 = vpack.c.b16 %v8247, %v8229
      %v8500 = vpack.c.b16 %v8248, %v8230
      %v8501 = vpack.c.b16 %v8249, %v8231
      %v8502 = vpack.c.b16 %v8250, %v8232
      %v8503 = vpack.c.b16 %v8251, %v8233
      %v8504 = vpack.c.b16 %v8252, %v8234
      %v8505 = vpack.c.b16 %v8253, %v8235
      %v8506 = vpack.c.b16 %v8254, %v8236
      %v8507 = vpack.c.b16 %v8255, %v8237
      %v8508 = vpack.c.b16 %v8256, %v8238
      %v8509 = vpack.c.b16 %v8257, %v8239
      %v8510 = vpack.c.b16 %v8258, %v8240
      %v8511 = vpack.c.b16 %v8259, %v8241
      %v8512 = vpack.c.b16 %v8278, %v8260
      %v8513 = vpack.c.b16 %v8279, %v8261
      %v8514 = vpack.c.b16 %v8280, %v8262
      %v8515 = vpack.c.b16 %v8281, %v8263
      %v8516 = vpack.c.b16 %v8282, %v8264
      %v8517 = vpack.c.b16 %v8283, %v8265
      %v8518 = vpack.c.b16 %v8284, %v8266
      %v8519 = vpack.c.b16 %v8285, %v8267
      %v8520 = vpack.c.b16 %v8286, %v8268
      %v8521 = vpack.c.b16 %v8287, %v8269
      %v8522 = vpack.c.b16 %v8288, %v8270
      %v8523 = vpack.c.b16 %v8289, %v8271
      %v8524 = vpack.c.b16 %v8290, %v8272
      %v8525 = vpack.c.b16 %v8291, %v8273
      %v8526 = vpack.c.b16 %v8292, %v8274
      %v8527 = vpack.c.b16 %v8293, %v8275
      %v8528 = vpack.c.b16 %v8294, %v8276
      %v8529 = vpack.c.b16 %v8295, %v8277
      %v8530 = vpack.c.b16 %v8314, %v8296
      %v8531 = vpack.c.b16 %v8315, %v8297
      %v8532 = vpack.c.b16 %v8316, %v8298
      %v8533 = vpack.c.b16 %v8317, %v8299
      %v8534 = vpack.c.b16 %v8318, %v8300
      %v8535 = vpack.c.b16 %v8319, %v8301
      %v8536 = vpack.c.b16 %v8320, %v8302
      %v8537 = vpack.c.b16 %v8321, %v8303
      %v8538 = vpack.c.b16 %v8322, %v8304
      %v8539 = vpack.c.b16 %v8323, %v8305
      %v8540 = vpack.c.b16 %v8324, %v8306
      %v8541 = vpack.c.b16 %v8325, %v8307
      %v8542 = vpack.c.b16 %v8326, %v8308
      %v8543 = vpack.c.b16 %v8327, %v8309
      %v8544 = vpack.c.b16 %v8328, %v8310
      %v8545 = vpack.c.b16 %v8329, %v8311
      %v8546 = vpack.c.b16 %v8330, %v8312
      %v8547 = vpack.c.b16 %v8331, %v8313
      %8764 = vmatprep.subr.bf16.mxu0 0
      %8765 = vmatpush1.bf16.msra.mxu0 %v7324
      %8766 = vmatprep.subr.bf16.mxu0 0
      %8767 = vmatpush1.bf16.msra.mxu0 %v7325
      %8768 = vmatprep.subr.bf16.mxu0 0
      %8769 = vmatpush1.bf16.msra.mxu0 %v7326
      %8770 = vmatprep.subr.bf16.mxu0 0
      %8771 = vmatpush1.bf16.msra.mxu0 %v7327
      %8772 = vmatprep.subr.bf16.mxu0 0
      %8773 = vmatpush1.bf16.msra.mxu0 %v7328
      %8774 = vmatprep.subr.bf16.mxu0 0
      %8775 = vmatpush1.bf16.msra.mxu0 %v7329
      %8776 = vmatprep.subr.bf16.mxu0 0
      %8777 = vmatpush1.bf16.msra.mxu0 %v7330
      %8778 = vmatprep.subr.bf16.mxu0 0
      %8779 = vmatpush1.bf16.msra.mxu0 %v7331
      %8780 = vmatprep.subr.bf16.mxu0 0
      %8781 = vmatpush1.bf16.msra.mxu0 %v7332
      %8782 = vmatprep.subr.bf16.mxu0 0
      %8783 = vmatpush1.bf16.msra.mxu0 %v7333
      %8784 = vmatprep.subr.bf16.mxu0 0
      %8785 = vmatpush1.bf16.msra.mxu0 %v7334
      %8786 = vmatprep.subr.bf16.mxu0 0
      %8787 = vmatpush1.bf16.msra.mxu0 %v7335
      %8788 = vmatprep.subr.bf16.mxu0 0
      %8789 = vmatpush1.bf16.msra.mxu0 %v7336
      %8790 = vmatprep.subr.bf16.mxu0 0
      %8791 = vmatpush1.bf16.msra.mxu0 %v7337
      %8792 = vmatprep.subr.bf16.mxu0 0
      %8793 = vmatpush1.bf16.msra.mxu0 %v7338
      %8794 = vmatprep.subr.bf16.mxu0 0
      %8795 = vmatpush1.bf16.msra.mxu0 %v7339
      %8796 = vmatprep.mubr.bf16.mxu0 %v8333
      %8797 = vmatmul.mubr.bf16.gmra.mrb[0].mxu0 %v8332
      %v8798 = vpop.f32.mrb[0].mxu0
      %v8799 = vadd.f32 0.0, %v8798
      %v8800 = vpop.f32.mrb[0].mxu0
      %v8801 = vpop.f32.mrb[0].mxu0
      %v8802 = vadd.f32 0.0, %v8801
      %v8803 = vpop.f32.mrb[0].mxu0
      %8804 = vmatprep.mubr.bf16.mxu0 %v8351
      %8805 = vmatmul.mubr.bf16.gmra.mrb[0].mxu0 %v8350
      %v8806 = vpop.f32.mrb[0].mxu0
      %v8807 = vadd.f32 0.0, %v8806
      %v8808 = vpop.f32.mrb[0].mxu0
      %v8809 = vpop.f32.mrb[0].mxu0
      %v8810 = vadd.f32 0.0, %v8809
      %v8811 = vpop.f32.mrb[0].mxu0
      %8812 = vmatprep.mubr.bf16.mxu0 %v8369
      %8813 = vmatmul.mubr.bf16.gmra.mrb[0].mxu0 %v8368
      %v8814 = vpop.f32.mrb[0].mxu0
      %v8815 = vadd.f32 0.0, %v8814
      %v8816 = vpop.f32.mrb[0].mxu0
      %v8817 = vpop.f32.mrb[0].mxu0
      %v8818 = vadd.f32 0.0, %v8817
      %v8819 = vpop.f32.mrb[0].mxu0
      %8820 = vmatprep.mubr.bf16.mxu0 %v8387
      %8821 = vmatmul.mubr.bf16.gmra.mrb[0].mxu0 %v8386
      %v8822 = vpop.f32.mrb[0].mxu0
      %v8823 = vadd.f32 0.0, %v8822
      %v8824 = vpop.f32.mrb[0].mxu0
      %v8825 = vpop.f32.mrb[0].mxu0
      %v8826 = vadd.f32 0.0, %v8825
      %v8827 = vpop.f32.mrb[0].mxu0
      %8828 = vmatprep.mubr.bf16.mxu0 %v8405
      %8829 = vmatmul.mubr.bf16.gmra.mrb[0].mxu0 %v8404
      %v8830 = vpop.f32.mrb[0].mxu0
      %v8831 = vadd.f32 0.0, %v8830
      %v8832 = vpop.f32.mrb[0].mxu0
      %v8833 = vpop.f32.mrb[0].mxu0
      %v8834 = vadd.f32 0.0, %v8833
      %v8835 = vpop.f32.mrb[0].mxu0
      %8836 = vmatprep.mubr.bf16.mxu0 %v8423
      %8837 = vmatmul.mubr.bf16.gmra.mrb[0].mxu0 %v8422
      %v8838 = vpop.f32.mrb[0].mxu0
      %v8839 = vadd.f32 0.0, %v8838
      %v8840 = vpop.f32.mrb[0].mxu0
      %v8841 = vpop.f32.mrb[0].mxu0
      %v8842 = vadd.f32 0.0, %v8841
      %v8843 = vpop.f32.mrb[0].mxu0
      %8844 = vmatprep.mubr.bf16.mxu0 %v8441
      %8845 = vmatmul.mubr.bf16.gmra.mrb[0].mxu0 %v8440
      %v8846 = vpop.f32.mrb[0].mxu0
      %v8847 = vadd.f32 0.0, %v8846
      %v8848 = vpop.f32.mrb[0].mxu0
      %v8849 = vpop.f32.mrb[0].mxu0
      %v8850 = vadd.f32 0.0, %v8849
      %v8851 = vpop.f32.mrb[0].mxu0
      %8852 = vmatprep.mubr.bf16.mxu0 %v8459
      %8853 = vmatmul.mubr.bf16.gmra.mrb[0].mxu0 %v8458
      %v8854 = vpop.f32.mrb[0].mxu0
      %v8855 = vadd.f32 0.0, %v8854
      %v8856 = vpop.f32.mrb[0].mxu0
      %v8857 = vpop.f32.mrb[0].mxu0
      %v8858 = vadd.f32 0.0, %v8857
      %v8859 = vpop.f32.mrb[0].mxu0
      %8860 = vmatprep.mubr.bf16.mxu0 %v8477
      %8861 = vmatmul.mubr.bf16.gmra.mrb[0].mxu0 %v8476
      %v8862 = vpop.f32.mrb[0].mxu0
      %v8863 = vadd.f32 0.0, %v8862
      %v8864 = vpop.f32.mrb[0].mxu0
      %v8865 = vpop.f32.mrb[0].mxu0
      %v8866 = vadd.f32 0.0, %v8865
      %v8867 = vpop.f32.mrb[0].mxu0
      %8868 = vmatprep.mubr.bf16.mxu0 %v8495
      %8869 = vmatmul.mubr.bf16.gmra.mrb[0].mxu0 %v8494
      %v8870 = vpop.f32.mrb[0].mxu0
      %v8871 = vadd.f32 0.0, %v8870
      %v8872 = vpop.f32.mrb[0].mxu0
      %v8873 = vpop.f32.mrb[0].mxu0
      %v8874 = vadd.f32 0.0, %v8873
      %v8875 = vpop.f32.mrb[0].mxu0
      %8876 = vmatprep.mubr.bf16.mxu0 %v8513
      %8877 = vmatmul.mubr.bf16.gmra.mrb[0].mxu0 %v8512
      %v8878 = vpop.f32.mrb[0].mxu0
      %v8879 = vadd.f32 0.0, %v8878
      %v8880 = vpop.f32.mrb[0].mxu0
      %v8881 = vpop.f32.mrb[0].mxu0
      %v8882 = vadd.f32 0.0, %v8881
      %v8883 = vpop.f32.mrb[0].mxu0
      %8884 = vmatprep.mubr.bf16.mxu0 %v8531
      %8885 = vmatmul.mubr.bf16.gmra.mrb[0].mxu0 %v8530
      %v8886 = vpop.f32.mrb[0].mxu0
      %v8887 = vadd.f32 0.0, %v8886
      %v8888 = vpop.f32.mrb[0].mxu0
      %v8889 = vpop.f32.mrb[0].mxu0
      %v8890 = vadd.f32 0.0, %v8889
      %v8891 = vpop.f32.mrb[0].mxu0
      %8892 = vdwg.mxu0
      %8893 = vmatprep.subr.bf16.mxu0 0
      %8894 = vmatpush1.bf16.msra.mxu0 %v7340
      %8895 = vmatprep.subr.bf16.mxu0 0
      %8896 = vmatpush1.bf16.msra.mxu0 %v7341
      %8897 = vmatprep.subr.bf16.mxu0 0
      %8898 = vmatpush1.bf16.msra.mxu0 %v7342
      %8899 = vmatprep.subr.bf16.mxu0 0
      %8900 = vmatpush1.bf16.msra.mxu0 %v7343
      %8901 = vmatprep.subr.bf16.mxu0 0
      %8902 = vmatpush1.bf16.msra.mxu0 %v7344
      %8903 = vmatprep.subr.bf16.mxu0 0
      %8904 = vmatpush1.bf16.msra.mxu0 %v7345
      %8905 = vmatprep.subr.bf16.mxu0 0
      %8906 = vmatpush1.bf16.msra.mxu0 %v7346
      %8907 = vmatprep.subr.bf16.mxu0 0
      %8908 = vmatpush1.bf16.msra.mxu0 %v7347
      %8909 = vmatprep.subr.bf16.mxu0 0
      %8910 = vmatpush1.bf16.msra.mxu0 %v7348
      %8911 = vmatprep.subr.bf16.mxu0 0
      %8912 = vmatpush1.bf16.msra.mxu0 %v7349
      %8913 = vmatprep.subr.bf16.mxu0 0
      %8914 = vmatpush1.bf16.msra.mxu0 %v7350
      %8915 = vmatprep.subr.bf16.mxu0 0
      %8916 = vmatpush1.bf16.msra.mxu0 %v7351
      %8917 = vmatprep.subr.bf16.mxu0 0
      %8918 = vmatpush1.bf16.msra.mxu0 %v7352
      %8919 = vmatprep.subr.bf16.mxu0 0
      %8920 = vmatpush1.bf16.msra.mxu0 %v7353
      %8921 = vmatprep.subr.bf16.mxu0 0
      %8922 = vmatpush1.bf16.msra.mxu0 %v7354
      %8923 = vmatprep.subr.bf16.mxu0 0
      %8924 = vmatpush1.bf16.msra.mxu0 %v7355
      %8925 = vmatprep.mubr.bf16.mxu0 %v8335
      %8926 = vmatmul.mubr.bf16.gmra.mrb[0].mxu0 %v8334
      %v8927 = vpop.f32.mrb[0].mxu0
      %v8928 = vadd.f32 %v8799, %v8927
      %v8929 = vpop.f32.mrb[0].mxu0
      %v8930 = vpop.f32.mrb[0].mxu0
      %v8931 = vadd.f32 %v8802, %v8930
      %v8932 = vpop.f32.mrb[0].mxu0
      %8933 = vmatprep.mubr.bf16.mxu0 %v8353
      %8934 = vmatmul.mubr.bf16.gmra.mrb[0].mxu0 %v8352
      %v8935 = vpop.f32.mrb[0].mxu0
      %v8936 = vadd.f32 %v8807, %v8935
      %v8937 = vpop.f32.mrb[0].mxu0
      %v8938 = vpop.f32.mrb[0].mxu0
      %v8939 = vadd.f32 %v8810, %v8938
      %v8940 = vpop.f32.mrb[0].mxu0
      %8941 = vmatprep.mubr.bf16.mxu0 %v8371
      %8942 = vmatmul.mubr.bf16.gmra.mrb[0].mxu0 %v8370
      %v8943 = vpop.f32.mrb[0].mxu0
      %v8944 = vadd.f32 %v8815, %v8943
      %v8945 = vpop.f32.mrb[0].mxu0
      %v8946 = vpop.f32.mrb[0].mxu0
      %v8947 = vadd.f32 %v8818, %v8946
      %v8948 = vpop.f32.mrb[0].mxu0
      %8949 = vmatprep.mubr.bf16.mxu0 %v8389
      %8950 = vmatmul.mubr.bf16.gmra.mrb[0].mxu0 %v8388
      %v8951 = vpop.f32.mrb[0].mxu0
      %v8952 = vadd.f32 %v8823, %v8951
      %v8953 = vpop.f32.mrb[0].mxu0
      %v8954 = vpop.f32.mrb[0].mxu0
      %v8955 = vadd.f32 %v8826, %v8954
      %v8956 = vpop.f32.mrb[0].mxu0
      %8957 = vmatprep.mubr.bf16.mxu0 %v8407
      %8958 = vmatmul.mubr.bf16.gmra.mrb[0].mxu0 %v8406
      %v8959 = vpop.f32.mrb[0].mxu0
      %v8960 = vadd.f32 %v8831, %v8959
      %v8961 = vpop.f32.mrb[0].mxu0
      %v8962 = vpop.f32.mrb[0].mxu0
      %v8963 = vadd.f32 %v8834, %v8962
      %v8964 = vpop.f32.mrb[0].mxu0
      %8965 = vmatprep.mubr.bf16.mxu0 %v8425
      %8966 = vmatmul.mubr.bf16.gmra.mrb[0].mxu0 %v8424
      %v8967 = vpop.f32.mrb[0].mxu0
      %v8968 = vadd.f32 %v8839, %v8967
      %v8969 = vpop.f32.mrb[0].mxu0
      %v8970 = vpop.f32.mrb[0].mxu0
      %v8971 = vadd.f32 %v8842, %v8970
      %v8972 = vpop.f32.mrb[0].mxu0
      %8973 = vmatprep.mubr.bf16.mxu0 %v8443
      %8974 = vmatmul.mubr.bf16.gmra.mrb[0].mxu0 %v8442
      %v8975 = vpop.f32.mrb[0].mxu0
      %v8976 = vadd.f32 %v8847, %v8975
      %v8977 = vpop.f32.mrb[0].mxu0
      %v8978 = vpop.f32.mrb[0].mxu0
      %v8979 = vadd.f32 %v8850, %v8978
      %v8980 = vpop.f32.mrb[0].mxu0
      %8981 = vmatprep.mubr.bf16.mxu0 %v8461
      %8982 = vmatmul.mubr.bf16.gmra.mrb[0].mxu0 %v8460
      %v8983 = vpop.f32.mrb[0].mxu0
      %v8984 = vadd.f32 %v8855, %v8983
      %v8985 = vpop.f32.mrb[0].mxu0
      %v8986 = vpop.f32.mrb[0].mxu0
      %v8987 = vadd.f32 %v8858, %v8986
      %v8988 = vpop.f32.mrb[0].mxu0
      %8989 = vmatprep.mubr.bf16.mxu0 %v8479
      %8990 = vmatmul.mubr.bf16.gmra.mrb[0].mxu0 %v8478
      %v8991 = vpop.f32.mrb[0].mxu0
      %v8992 = vadd.f32 %v8863, %v8991
      %v8993 = vpop.f32.mrb[0].mxu0
      %v8994 = vpop.f32.mrb[0].mxu0
      %v8995 = vadd.f32 %v8866, %v8994
      %v8996 = vpop.f32.mrb[0].mxu0
      %8997 = vmatprep.mubr.bf16.mxu0 %v8497
      %8998 = vmatmul.mubr.bf16.gmra.mrb[0].mxu0 %v8496
      %v8999 = vpop.f32.mrb[0].mxu0
      %v9000 = vadd.f32 %v8871, %v8999
      %v9001 = vpop.f32.mrb[0].mxu0
      %v9002 = vpop.f32.mrb[0].mxu0
      %v9003 = vadd.f32 %v8874, %v9002
      %v9004 = vpop.f32.mrb[0].mxu0
      %9005 = vmatprep.mubr.bf16.mxu0 %v8515
      %9006 = vmatmul.mubr.bf16.gmra.mrb[0].mxu0 %v8514
      %v9007 = vpop.f32.mrb[0].mxu0
      %v9008 = vadd.f32 %v8879, %v9007
      %v9009 = vpop.f32.mrb[0].mxu0
      %v9010 = vpop.f32.mrb[0].mxu0
      %v9011 = vadd.f32 %v8882, %v9010
      %v9012 = vpop.f32.mrb[0].mxu0
      %9013 = vmatprep.mubr.bf16.mxu0 %v8533
      %9014 = vmatmul.mubr.bf16.gmra.mrb[0].mxu0 %v8532
      %v9015 = vpop.f32.mrb[0].mxu0
      %v9016 = vadd.f32 %v8887, %v9015
      %v9017 = vpop.f32.mrb[0].mxu0
      %v9018 = vpop.f32.mrb[0].mxu0
      %v9019 = vadd.f32 %v8890, %v9018
      %v9020 = vpop.f32.mrb[0].mxu0
      %9021 = vdwg.mxu0
      %9022 = vmatprep.subr.bf16.mxu0 0
      %9023 = vmatpush1.bf16.msra.mxu0 %v7356
      %9024 = vmatprep.subr.bf16.mxu0 0
      %9025 = vmatpush1.bf16.msra.mxu0 %v7357
      %9026 = vmatprep.subr.bf16.mxu0 0
      %9027 = vmatpush1.bf16.msra.mxu0 %v7358
      %9028 = vmatprep.subr.bf16.mxu0 0
      %9029 = vmatpush1.bf16.msra.mxu0 %v7359
      %9030 = vmatprep.subr.bf16.mxu0 0
      %9031 = vmatpush1.bf16.msra.mxu0 %v7360
      %9032 = vmatprep.subr.bf16.mxu0 0
      %9033 = vmatpush1.bf16.msra.mxu0 %v7361
      %9034 = vmatprep.subr.bf16.mxu0 0
      %9035 = vmatpush1.bf16.msra.mxu0 %v7362
      %9036 = vmatprep.subr.bf16.mxu0 0
      %9037 = vmatpush1.bf16.msra.mxu0 %v7363
      %9038 = vmatprep.subr.bf16.mxu0 0
      %9039 = vmatpush1.bf16.msra.mxu0 %v7364
      %9040 = vmatprep.subr.bf16.mxu0 0
      %9041 = vmatpush1.bf16.msra.mxu0 %v7365
      %9042 = vmatprep.subr.bf16.mxu0 0
      %9043 = vmatpush1.bf16.msra.mxu0 %v7366
      %9044 = vmatprep.subr.bf16.mxu0 0
      %9045 = vmatpush1.bf16.msra.mxu0 %v7367
      %9046 = vmatprep.subr.bf16.mxu0 0
      %9047 = vmatpush1.bf16.msra.mxu0 %v7368
      %9048 = vmatprep.subr.bf16.mxu0 0
      %9049 = vmatpush1.bf16.msra.mxu0 %v7369
      %9050 = vmatprep.subr.bf16.mxu0 0
      %9051 = vmatpush1.bf16.msra.mxu0 %v7370
      %9052 = vmatprep.subr.bf16.mxu0 0
      %9053 = vmatpush1.bf16.msra.mxu0 %v7371
      %9054 = vmatprep.mubr.bf16.mxu0 %v8337
      %9055 = vmatmul.mubr.bf16.gmra.mrb[0].mxu0 %v8336
      %v9056 = vpop.f32.mrb[0].mxu0
      %v9057 = vadd.f32 %v8928, %v9056
      %v9058 = vpop.f32.mrb[0].mxu0
      %v9059 = vpop.f32.mrb[0].mxu0
      %v9060 = vadd.f32 %v8931, %v9059
      %v9061 = vpop.f32.mrb[0].mxu0
      %9062 = vmatprep.mubr.bf16.mxu0 %v8355
      %9063 = vmatmul.mubr.bf16.gmra.mrb[0].mxu0 %v8354
      %v9064 = vpop.f32.mrb[0].mxu0
      %v9065 = vadd.f32 %v8936, %v9064
      %v9066 = vpop.f32.mrb[0].mxu0
      %v9067 = vpop.f32.mrb[0].mxu0
      %v9068 = vadd.f32 %v8939, %v9067
      %v9069 = vpop.f32.mrb[0].mxu0
      %9070 = vmatprep.mubr.bf16.mxu0 %v8373
      %9071 = vmatmul.mubr.bf16.gmra.mrb[0].mxu0 %v8372
      %v9072 = vpop.f32.mrb[0].mxu0
      %v9073 = vadd.f32 %v8944, %v9072
      %v9074 = vpop.f32.mrb[0].mxu0
      %v9075 = vpop.f32.mrb[0].mxu0
      %v9076 = vadd.f32 %v8947, %v9075
      %v9077 = vpop.f32.mrb[0].mxu0
      %9078 = vmatprep.mubr.bf16.mxu0 %v8391
      %9079 = vmatmul.mubr.bf16.gmra.mrb[0].mxu0 %v8390
      %v9080 = vpop.f32.mrb[0].mxu0
      %v9081 = vadd.f32 %v8952, %v9080
      %v9082 = vpop.f32.mrb[0].mxu0
      %v9083 = vpop.f32.mrb[0].mxu0
      %v9084 = vadd.f32 %v8955, %v9083
      %v9085 = vpop.f32.mrb[0].mxu0
      %9086 = vmatprep.mubr.bf16.mxu0 %v8409
      %9087 = vmatmul.mubr.bf16.gmra.mrb[0].mxu0 %v8408
      %v9088 = vpop.f32.mrb[0].mxu0
      %v9089 = vadd.f32 %v8960, %v9088
      %v9090 = vpop.f32.mrb[0].mxu0
      %v9091 = vpop.f32.mrb[0].mxu0
      %v9092 = vadd.f32 %v8963, %v9091
      %v9093 = vpop.f32.mrb[0].mxu0
      %9094 = vmatprep.mubr.bf16.mxu0 %v8427
      %9095 = vmatmul.mubr.bf16.gmra.mrb[0].mxu0 %v8426
      %v9096 = vpop.f32.mrb[0].mxu0
      %v9097 = vadd.f32 %v8968, %v9096
      %v9098 = vpop.f32.mrb[0].mxu0
      %v9099 = vpop.f32.mrb[0].mxu0
      %v9100 = vadd.f32 %v8971, %v9099
      %v9101 = vpop.f32.mrb[0].mxu0
      %9102 = vmatprep.mubr.bf16.mxu0 %v8445
      %9103 = vmatmul.mubr.bf16.gmra.mrb[0].mxu0 %v8444
      %v9104 = vpop.f32.mrb[0].mxu0
      %v9105 = vadd.f32 %v8976, %v9104
      %v9106 = vpop.f32.mrb[0].mxu0
      %v9107 = vpop.f32.mrb[0].mxu0
      %v9108 = vadd.f32 %v8979, %v9107
      %v9109 = vpop.f32.mrb[0].mxu0
      %9110 = vmatprep.mubr.bf16.mxu0 %v8463
      %9111 = vmatmul.mubr.bf16.gmra.mrb[0].mxu0 %v8462
      %v9112 = vpop.f32.mrb[0].mxu0
      %v9113 = vadd.f32 %v8984, %v9112
      %v9114 = vpop.f32.mrb[0].mxu0
      %v9115 = vpop.f32.mrb[0].mxu0
      %v9116 = vadd.f32 %v8987, %v9115
      %v9117 = vpop.f32.mrb[0].mxu0
      %9118 = vmatprep.mubr.bf16.mxu0 %v8481
      %9119 = vmatmul.mubr.bf16.gmra.mrb[0].mxu0 %v8480
      %v9120 = vpop.f32.mrb[0].mxu0
      %v9121 = vadd.f32 %v8992, %v9120
      %v9122 = vpop.f32.mrb[0].mxu0
      %v9123 = vpop.f32.mrb[0].mxu0
      %v9124 = vadd.f32 %v8995, %v9123
      %v9125 = vpop.f32.mrb[0].mxu0
      %9126 = vmatprep.mubr.bf16.mxu0 %v8499
      %9127 = vmatmul.mubr.bf16.gmra.mrb[0].mxu0 %v8498
      %v9128 = vpop.f32.mrb[0].mxu0
      %v9129 = vadd.f32 %v9000, %v9128
      %v9130 = vpop.f32.mrb[0].mxu0
      %v9131 = vpop.f32.mrb[0].mxu0
      %v9132 = vadd.f32 %v9003, %v9131
      %v9133 = vpop.f32.mrb[0].mxu0
      %9134 = vmatprep.mubr.bf16.mxu0 %v8517
      %9135 = vmatmul.mubr.bf16.gmra.mrb[0].mxu0 %v8516
      %v9136 = vpop.f32.mrb[0].mxu0
      %v9137 = vadd.f32 %v9008, %v9136
      %v9138 = vpop.f32.mrb[0].mxu0
      %v9139 = vpop.f32.mrb[0].mxu0
      %v9140 = vadd.f32 %v9011, %v9139
      %v9141 = vpop.f32.mrb[0].mxu0
      %9142 = vmatprep.mubr.bf16.mxu0 %v8535
      %9143 = vmatmul.mubr.bf16.gmra.mrb[0].mxu0 %v8534
      %v9144 = vpop.f32.mrb[0].mxu0
      %v9145 = vadd.f32 %v9016, %v9144
      %v9146 = vpop.f32.mrb[0].mxu0
      %v9147 = vpop.f32.mrb[0].mxu0
      %v9148 = vadd.f32 %v9019, %v9147
      %v9149 = vpop.f32.mrb[0].mxu0
      %9150 = vdwg.mxu0
      %9151 = vmatprep.subr.bf16.mxu0 0
      %9152 = vmatpush1.bf16.msra.mxu0 %v7372
      %9153 = vmatprep.subr.bf16.mxu0 0
      %9154 = vmatpush1.bf16.msra.mxu0 %v7373
      %9155 = vmatprep.subr.bf16.mxu0 0
      %9156 = vmatpush1.bf16.msra.mxu0 %v7374
      %9157 = vmatprep.subr.bf16.mxu0 0
      %9158 = vmatpush1.bf16.msra.mxu0 %v7375
      %9159 = vmatprep.subr.bf16.mxu0 0
      %9160 = vmatpush1.bf16.msra.mxu0 %v7376
      %9161 = vmatprep.subr.bf16.mxu0 0
      %9162 = vmatpush1.bf16.msra.mxu0 %v7377
      %9163 = vmatprep.subr.bf16.mxu0 0
      %9164 = vmatpush1.bf16.msra.mxu0 %v7378
      %9165 = vmatprep.subr.bf16.mxu0 0
      %9166 = vmatpush1.bf16.msra.mxu0 %v7379
      %9167 = vmatprep.subr.bf16.mxu0 0
      %9168 = vmatpush1.bf16.msra.mxu0 %v7380
      %9169 = vmatprep.subr.bf16.mxu0 0
      %9170 = vmatpush1.bf16.msra.mxu0 %v7381
      %9171 = vmatprep.subr.bf16.mxu0 0
      %9172 = vmatpush1.bf16.msra.mxu0 %v7382
      %9173 = vmatprep.subr.bf16.mxu0 0
      %9174 = vmatpush1.bf16.msra.mxu0 %v7383
      %9175 = vmatprep.subr.bf16.mxu0 0
      %9176 = vmatpush1.bf16.msra.mxu0 %v7384
      %9177 = vmatprep.subr.bf16.mxu0 0
      %9178 = vmatpush1.bf16.msra.mxu0 %v7385
      %9179 = vmatprep.subr.bf16.mxu0 0
      %9180 = vmatpush1.bf16.msra.mxu0 %v7386
      %9181 = vmatprep.subr.bf16.mxu0 0
      %9182 = vmatpush1.bf16.msra.mxu0 %v7387
      %9183 = vmatprep.mubr.bf16.mxu0 %v8339
      %9184 = vmatmul.mubr.bf16.gmra.mrb[0].mxu0 %v8338
      %v9185 = vpop.f32.mrb[0].mxu0
      %v9186 = vadd.f32 %v9057, %v9185
      %v9187 = vpop.f32.mrb[0].mxu0
      %v9188 = vpop.f32.mrb[0].mxu0
      %v9189 = vadd.f32 %v9060, %v9188
      %v9190 = vpop.f32.mrb[0].mxu0
      %9191 = vmatprep.mubr.bf16.mxu0 %v8357
      %9192 = vmatmul.mubr.bf16.gmra.mrb[0].mxu0 %v8356
      %v9193 = vpop.f32.mrb[0].mxu0
      %v9194 = vadd.f32 %v9065, %v9193
      %v9195 = vpop.f32.mrb[0].mxu0
      %v9196 = vpop.f32.mrb[0].mxu0
      %v9197 = vadd.f32 %v9068, %v9196
      %v9198 = vpop.f32.mrb[0].mxu0
      %9199 = vmatprep.mubr.bf16.mxu0 %v8375
      %9200 = vmatmul.mubr.bf16.gmra.mrb[0].mxu0 %v8374
      %v9201 = vpop.f32.mrb[0].mxu0
      %v9202 = vadd.f32 %v9073, %v9201
      %v9203 = vpop.f32.mrb[0].mxu0
      %v9204 = vpop.f32.mrb[0].mxu0
      %v9205 = vadd.f32 %v9076, %v9204
      %v9206 = vpop.f32.mrb[0].mxu0
      %9207 = vmatprep.mubr.bf16.mxu0 %v8393
      %9208 = vmatmul.mubr.bf16.gmra.mrb[0].mxu0 %v8392
      %v9209 = vpop.f32.mrb[0].mxu0
      %v9210 = vadd.f32 %v9081, %v9209
      %v9211 = vpop.f32.mrb[0].mxu0
      %v9212 = vpop.f32.mrb[0].mxu0
      %v9213 = vadd.f32 %v9084, %v9212
      %v9214 = vpop.f32.mrb[0].mxu0
      %9215 = vmatprep.mubr.bf16.mxu0 %v8411
      %9216 = vmatmul.mubr.bf16.gmra.mrb[0].mxu0 %v8410
      %v9217 = vpop.f32.mrb[0].mxu0
      %v9218 = vadd.f32 %v9089, %v9217
      %v9219 = vpop.f32.mrb[0].mxu0
      %v9220 = vpop.f32.mrb[0].mxu0
      %v9221 = vadd.f32 %v9092, %v9220
      %v9222 = vpop.f32.mrb[0].mxu0
      %9223 = vmatprep.mubr.bf16.mxu0 %v8429
      %9224 = vmatmul.mubr.bf16.gmra.mrb[0].mxu0 %v8428
      %v9225 = vpop.f32.mrb[0].mxu0
      %v9226 = vadd.f32 %v9097, %v9225
      %v9227 = vpop.f32.mrb[0].mxu0
      %v9228 = vpop.f32.mrb[0].mxu0
      %v9229 = vadd.f32 %v9100, %v9228
      %v9230 = vpop.f32.mrb[0].mxu0
      %9231 = vmatprep.mubr.bf16.mxu0 %v8447
      %9232 = vmatmul.mubr.bf16.gmra.mrb[0].mxu0 %v8446
      %v9233 = vpop.f32.mrb[0].mxu0
      %v9234 = vadd.f32 %v9105, %v9233
      %v9235 = vpop.f32.mrb[0].mxu0
      %v9236 = vpop.f32.mrb[0].mxu0
      %v9237 = vadd.f32 %v9108, %v9236
      %v9238 = vpop.f32.mrb[0].mxu0
      %9239 = vmatprep.mubr.bf16.mxu0 %v8465
      %9240 = vmatmul.mubr.bf16.gmra.mrb[0].mxu0 %v8464
      %v9241 = vpop.f32.mrb[0].mxu0
      %v9242 = vadd.f32 %v9113, %v9241
      %v9243 = vpop.f32.mrb[0].mxu0
      %v9244 = vpop.f32.mrb[0].mxu0
      %v9245 = vadd.f32 %v9116, %v9244
      %v9246 = vpop.f32.mrb[0].mxu0
      %9247 = vmatprep.mubr.bf16.mxu0 %v8483
      %9248 = vmatmul.mubr.bf16.gmra.mrb[0].mxu0 %v8482
      %v9249 = vpop.f32.mrb[0].mxu0
      %v9250 = vadd.f32 %v9121, %v9249
      %v9251 = vpop.f32.mrb[0].mxu0
      %v9252 = vpop.f32.mrb[0].mxu0
      %v9253 = vadd.f32 %v9124, %v9252
      %v9254 = vpop.f32.mrb[0].mxu0
      %9255 = vmatprep.mubr.bf16.mxu0 %v8501
      %9256 = vmatmul.mubr.bf16.gmra.mrb[0].mxu0 %v8500
      %v9257 = vpop.f32.mrb[0].mxu0
      %v9258 = vadd.f32 %v9129, %v9257
      %v9259 = vpop.f32.mrb[0].mxu0
      %v9260 = vpop.f32.mrb[0].mxu0
      %v9261 = vadd.f32 %v9132, %v9260
      %v9262 = vpop.f32.mrb[0].mxu0
      %9263 = vmatprep.mubr.bf16.mxu0 %v8519
      %9264 = vmatmul.mubr.bf16.gmra.mrb[0].mxu0 %v8518
      %v9265 = vpop.f32.mrb[0].mxu0
      %v9266 = vadd.f32 %v9137, %v9265
      %v9267 = vpop.f32.mrb[0].mxu0
      %v9268 = vpop.f32.mrb[0].mxu0
      %v9269 = vadd.f32 %v9140, %v9268
      %v9270 = vpop.f32.mrb[0].mxu0
      %9271 = vmatprep.mubr.bf16.mxu0 %v8537
      %9272 = vmatmul.mubr.bf16.gmra.mrb[0].mxu0 %v8536
      %v9273 = vpop.f32.mrb[0].mxu0
      %v9274 = vadd.f32 %v9145, %v9273
      %v9275 = vpop.f32.mrb[0].mxu0
      %v9276 = vpop.f32.mrb[0].mxu0
      %v9277 = vadd.f32 %v9148, %v9276
      %v9278 = vpop.f32.mrb[0].mxu0
      %9279 = vdwg.mxu0
      %9280 = vmatprep.subr.bf16.mxu0 0
      %9281 = vmatpush1.bf16.msra.mxu0 %v7388
      %9282 = vmatprep.subr.bf16.mxu0 0
      %9283 = vmatpush1.bf16.msra.mxu0 %v7389
      %9284 = vmatprep.subr.bf16.mxu0 0
      %9285 = vmatpush1.bf16.msra.mxu0 %v7390
      %9286 = vmatprep.subr.bf16.mxu0 0
      %9287 = vmatpush1.bf16.msra.mxu0 %v7391
      %9288 = vmatprep.subr.bf16.mxu0 0
      %9289 = vmatpush1.bf16.msra.mxu0 %v7392
      %9290 = vmatprep.subr.bf16.mxu0 0
      %9291 = vmatpush1.bf16.msra.mxu0 %v7393
      %9292 = vmatprep.subr.bf16.mxu0 0
      %9293 = vmatpush1.bf16.msra.mxu0 %v7394
      %9294 = vmatprep.subr.bf16.mxu0 0
      %9295 = vmatpush1.bf16.msra.mxu0 %v7395
      %9296 = vmatprep.subr.bf16.mxu0 0
      %9297 = vmatpush1.bf16.msra.mxu0 %v7396
      %9298 = vmatprep.subr.bf16.mxu0 0
      %9299 = vmatpush1.bf16.msra.mxu0 %v7397
      %9300 = vmatprep.subr.bf16.mxu0 0
      %9301 = vmatpush1.bf16.msra.mxu0 %v7398
      %9302 = vmatprep.subr.bf16.mxu0 0
      %9303 = vmatpush1.bf16.msra.mxu0 %v7399
      %9304 = vmatprep.subr.bf16.mxu0 0
      %9305 = vmatpush1.bf16.msra.mxu0 %v7400
      %9306 = vmatprep.subr.bf16.mxu0 0
      %9307 = vmatpush1.bf16.msra.mxu0 %v7401
      %9308 = vmatprep.subr.bf16.mxu0 0
      %9309 = vmatpush1.bf16.msra.mxu0 %v7402
      %9310 = vmatprep.subr.bf16.mxu0 0
      %9311 = vmatpush1.bf16.msra.mxu0 %v7403
      %9312 = vmatprep.mubr.bf16.mxu0 %v8341
      %9313 = vmatmul.mubr.bf16.gmra.mrb[0].mxu0 %v8340
      %v9314 = vpop.f32.mrb[0].mxu0
      %v9315 = vadd.f32 %v9186, %v9314
      %v9316 = vpop.f32.mrb[0].mxu0
      %v9317 = vpop.f32.mrb[0].mxu0
      %v9318 = vadd.f32 %v9189, %v9317
      %v9319 = vpop.f32.mrb[0].mxu0
      %9320 = vmatprep.mubr.bf16.mxu0 %v8359
      %9321 = vmatmul.mubr.bf16.gmra.mrb[0].mxu0 %v8358
      %v9322 = vpop.f32.mrb[0].mxu0
      %v9323 = vadd.f32 %v9194, %v9322
      %v9324 = vpop.f32.mrb[0].mxu0
      %v9325 = vpop.f32.mrb[0].mxu0
      %v9326 = vadd.f32 %v9197, %v9325
      %v9327 = vpop.f32.mrb[0].mxu0
      %9328 = vmatprep.mubr.bf16.mxu0 %v8377
      %9329 = vmatmul.mubr.bf16.gmra.mrb[0].mxu0 %v8376
      %v9330 = vpop.f32.mrb[0].mxu0
      %v9331 = vadd.f32 %v9202, %v9330
      %v9332 = vpop.f32.mrb[0].mxu0
      %v9333 = vpop.f32.mrb[0].mxu0
      %v9334 = vadd.f32 %v9205, %v9333
      %v9335 = vpop.f32.mrb[0].mxu0
      %9336 = vmatprep.mubr.bf16.mxu0 %v8395
      %9337 = vmatmul.mubr.bf16.gmra.mrb[0].mxu0 %v8394
      %v9338 = vpop.f32.mrb[0].mxu0
      %v9339 = vadd.f32 %v9210, %v9338
      %v9340 = vpop.f32.mrb[0].mxu0
      %v9341 = vpop.f32.mrb[0].mxu0
      %v9342 = vadd.f32 %v9213, %v9341
      %v9343 = vpop.f32.mrb[0].mxu0
      %9344 = vmatprep.mubr.bf16.mxu0 %v8413
      %9345 = vmatmul.mubr.bf16.gmra.mrb[0].mxu0 %v8412
      %v9346 = vpop.f32.mrb[0].mxu0
      %v9347 = vadd.f32 %v9218, %v9346
      %v9348 = vpop.f32.mrb[0].mxu0
      %v9349 = vpop.f32.mrb[0].mxu0
      %v9350 = vadd.f32 %v9221, %v9349
      %v9351 = vpop.f32.mrb[0].mxu0
      %9352 = vmatprep.mubr.bf16.mxu0 %v8431
      %9353 = vmatmul.mubr.bf16.gmra.mrb[0].mxu0 %v8430
      %v9354 = vpop.f32.mrb[0].mxu0
      %v9355 = vadd.f32 %v9226, %v9354
      %v9356 = vpop.f32.mrb[0].mxu0
      %v9357 = vpop.f32.mrb[0].mxu0
      %v9358 = vadd.f32 %v9229, %v9357
      %v9359 = vpop.f32.mrb[0].mxu0
      %9360 = vmatprep.mubr.bf16.mxu0 %v8449
      %9361 = vmatmul.mubr.bf16.gmra.mrb[0].mxu0 %v8448
      %v9362 = vpop.f32.mrb[0].mxu0
      %v9363 = vadd.f32 %v9234, %v9362
      %v9364 = vpop.f32.mrb[0].mxu0
      %v9365 = vpop.f32.mrb[0].mxu0
      %v9366 = vadd.f32 %v9237, %v9365
      %v9367 = vpop.f32.mrb[0].mxu0
      %9368 = vmatprep.mubr.bf16.mxu0 %v8467
      %9369 = vmatmul.mubr.bf16.gmra.mrb[0].mxu0 %v8466
      %v9370 = vpop.f32.mrb[0].mxu0
      %v9371 = vadd.f32 %v9242, %v9370
      %v9372 = vpop.f32.mrb[0].mxu0
      %v9373 = vpop.f32.mrb[0].mxu0
      %v9374 = vadd.f32 %v9245, %v9373
      %v9375 = vpop.f32.mrb[0].mxu0
      %9376 = vmatprep.mubr.bf16.mxu0 %v8485
      %9377 = vmatmul.mubr.bf16.gmra.mrb[0].mxu0 %v8484
      %v9378 = vpop.f32.mrb[0].mxu0
      %v9379 = vadd.f32 %v9250, %v9378
      %v9380 = vpop.f32.mrb[0].mxu0
      %v9381 = vpop.f32.mrb[0].mxu0
      %v9382 = vadd.f32 %v9253, %v9381
      %v9383 = vpop.f32.mrb[0].mxu0
      %9384 = vmatprep.mubr.bf16.mxu0 %v8503
      %9385 = vmatmul.mubr.bf16.gmra.mrb[0].mxu0 %v8502
      %v9386 = vpop.f32.mrb[0].mxu0
      %v9387 = vadd.f32 %v9258, %v9386
      %v9388 = vpop.f32.mrb[0].mxu0
      %v9389 = vpop.f32.mrb[0].mxu0
      %v9390 = vadd.f32 %v9261, %v9389
      %v9391 = vpop.f32.mrb[0].mxu0
      %9392 = vmatprep.mubr.bf16.mxu0 %v8521
      %9393 = vmatmul.mubr.bf16.gmra.mrb[0].mxu0 %v8520
      %v9394 = vpop.f32.mrb[0].mxu0
      %v9395 = vadd.f32 %v9266, %v9394
      %v9396 = vpop.f32.mrb[0].mxu0
      %v9397 = vpop.f32.mrb[0].mxu0
      %v9398 = vadd.f32 %v9269, %v9397
      %v9399 = vpop.f32.mrb[0].mxu0
      %9400 = vmatprep.mubr.bf16.mxu0 %v8539
      %9401 = vmatmul.mubr.bf16.gmra.mrb[0].mxu0 %v8538
      %v9402 = vpop.f32.mrb[0].mxu0
      %v9403 = vadd.f32 %v9274, %v9402
      %v9404 = vpop.f32.mrb[0].mxu0
      %v9405 = vpop.f32.mrb[0].mxu0
      %v9406 = vadd.f32 %v9277, %v9405
      %v9407 = vpop.f32.mrb[0].mxu0
      %9408 = vdwg.mxu0
      %9409 = vmatprep.subr.bf16.mxu0 0
      %9410 = vmatpush1.bf16.msra.mxu0 %v7404
      %9411 = vmatprep.subr.bf16.mxu0 0
      %9412 = vmatpush1.bf16.msra.mxu0 %v7405
      %9413 = vmatprep.subr.bf16.mxu0 0
      %9414 = vmatpush1.bf16.msra.mxu0 %v7406
      %9415 = vmatprep.subr.bf16.mxu0 0
      %9416 = vmatpush1.bf16.msra.mxu0 %v7407
      %9417 = vmatprep.subr.bf16.mxu0 0
      %9418 = vmatpush1.bf16.msra.mxu0 %v7408
      %9419 = vmatprep.subr.bf16.mxu0 0
      %9420 = vmatpush1.bf16.msra.mxu0 %v7409
      %9421 = vmatprep.subr.bf16.mxu0 0
      %9422 = vmatpush1.bf16.msra.mxu0 %v7410
      %9423 = vmatprep.subr.bf16.mxu0 0
      %9424 = vmatpush1.bf16.msra.mxu0 %v7411
      %9425 = vmatprep.subr.bf16.mxu0 0
      %9426 = vmatpush1.bf16.msra.mxu0 %v7412
      %9427 = vmatprep.subr.bf16.mxu0 0
      %9428 = vmatpush1.bf16.msra.mxu0 %v7413
      %9429 = vmatprep.subr.bf16.mxu0 0
      %9430 = vmatpush1.bf16.msra.mxu0 %v7414
      %9431 = vmatprep.subr.bf16.mxu0 0
      %9432 = vmatpush1.bf16.msra.mxu0 %v7415
      %9433 = vmatprep.subr.bf16.mxu0 0
      %9434 = vmatpush1.bf16.msra.mxu0 %v7416
      %9435 = vmatprep.subr.bf16.mxu0 0
      %9436 = vmatpush1.bf16.msra.mxu0 %v7417
      %9437 = vmatprep.subr.bf16.mxu0 0
      %9438 = vmatpush1.bf16.msra.mxu0 %v7418
      %9439 = vmatprep.subr.bf16.mxu0 0
      %9440 = vmatpush1.bf16.msra.mxu0 %v7419
      %9441 = vmatprep.mubr.bf16.mxu0 %v8343
      %9442 = vmatmul.mubr.bf16.gmra.mrb[0].mxu0 %v8342
      %v9443 = vpop.f32.mrb[0].mxu0
      %v9444 = vadd.f32 %v9315, %v9443
      %v9445 = vpop.f32.mrb[0].mxu0
      %v9446 = vpop.f32.mrb[0].mxu0
      %v9447 = vadd.f32 %v9318, %v9446
      %v9448 = vpop.f32.mrb[0].mxu0
      %9449 = vmatprep.mubr.bf16.mxu0 %v8361
      %9450 = vmatmul.mubr.bf16.gmra.mrb[0].mxu0 %v8360
      %v9451 = vpop.f32.mrb[0].mxu0
      %v9452 = vadd.f32 %v9323, %v9451
      %v9453 = vpop.f32.mrb[0].mxu0
      %v9454 = vpop.f32.mrb[0].mxu0
      %v9455 = vadd.f32 %v9326, %v9454
      %v9456 = vpop.f32.mrb[0].mxu0
      %9457 = vmatprep.mubr.bf16.mxu0 %v8379
      %9458 = vmatmul.mubr.bf16.gmra.mrb[0].mxu0 %v8378
      %v9459 = vpop.f32.mrb[0].mxu0
      %v9460 = vadd.f32 %v9331, %v9459
      %v9461 = vpop.f32.mrb[0].mxu0
      %v9462 = vpop.f32.mrb[0].mxu0
      %v9463 = vadd.f32 %v9334, %v9462
      %v9464 = vpop.f32.mrb[0].mxu0
      %9465 = vmatprep.mubr.bf16.mxu0 %v8397
      %9466 = vmatmul.mubr.bf16.gmra.mrb[0].mxu0 %v8396
      %v9467 = vpop.f32.mrb[0].mxu0
      %v9468 = vadd.f32 %v9339, %v9467
      %v9469 = vpop.f32.mrb[0].mxu0
      %v9470 = vpop.f32.mrb[0].mxu0
      %v9471 = vadd.f32 %v9342, %v9470
      %v9472 = vpop.f32.mrb[0].mxu0
      %9473 = vmatprep.mubr.bf16.mxu0 %v8415
      %9474 = vmatmul.mubr.bf16.gmra.mrb[0].mxu0 %v8414
      %v9475 = vpop.f32.mrb[0].mxu0
      %v9476 = vadd.f32 %v9347, %v9475
      %v9477 = vpop.f32.mrb[0].mxu0
      %v9478 = vpop.f32.mrb[0].mxu0
      %v9479 = vadd.f32 %v9350, %v9478
      %v9480 = vpop.f32.mrb[0].mxu0
      %9481 = vmatprep.mubr.bf16.mxu0 %v8433
      %9482 = vmatmul.mubr.bf16.gmra.mrb[0].mxu0 %v8432
      %v9483 = vpop.f32.mrb[0].mxu0
      %v9484 = vadd.f32 %v9355, %v9483
      %v9485 = vpop.f32.mrb[0].mxu0
      %v9486 = vpop.f32.mrb[0].mxu0
      %v9487 = vadd.f32 %v9358, %v9486
      %v9488 = vpop.f32.mrb[0].mxu0
      %9489 = vmatprep.mubr.bf16.mxu0 %v8451
      %9490 = vmatmul.mubr.bf16.gmra.mrb[0].mxu0 %v8450
      %v9491 = vpop.f32.mrb[0].mxu0
      %v9492 = vadd.f32 %v9363, %v9491
      %v9493 = vpop.f32.mrb[0].mxu0
      %v9494 = vpop.f32.mrb[0].mxu0
      %v9495 = vadd.f32 %v9366, %v9494
      %v9496 = vpop.f32.mrb[0].mxu0
      %9497 = vmatprep.mubr.bf16.mxu0 %v8469
      %9498 = vmatmul.mubr.bf16.gmra.mrb[0].mxu0 %v8468
      %v9499 = vpop.f32.mrb[0].mxu0
      %v9500 = vadd.f32 %v9371, %v9499
      %v9501 = vpop.f32.mrb[0].mxu0
      %v9502 = vpop.f32.mrb[0].mxu0
      %v9503 = vadd.f32 %v9374, %v9502
      %v9504 = vpop.f32.mrb[0].mxu0
      %9505 = vmatprep.mubr.bf16.mxu0 %v8487
      %9506 = vmatmul.mubr.bf16.gmra.mrb[0].mxu0 %v8486
      %v9507 = vpop.f32.mrb[0].mxu0
      %v9508 = vadd.f32 %v9379, %v9507
      %v9509 = vpop.f32.mrb[0].mxu0
      %v9510 = vpop.f32.mrb[0].mxu0
      %v9511 = vadd.f32 %v9382, %v9510
      %v9512 = vpop.f32.mrb[0].mxu0
      %9513 = vmatprep.mubr.bf16.mxu0 %v8505
      %9514 = vmatmul.mubr.bf16.gmra.mrb[0].mxu0 %v8504
      %v9515 = vpop.f32.mrb[0].mxu0
      %v9516 = vadd.f32 %v9387, %v9515
      %v9517 = vpop.f32.mrb[0].mxu0
      %v9518 = vpop.f32.mrb[0].mxu0
      %v9519 = vadd.f32 %v9390, %v9518
      %v9520 = vpop.f32.mrb[0].mxu0
      %9521 = vmatprep.mubr.bf16.mxu0 %v8523
      %9522 = vmatmul.mubr.bf16.gmra.mrb[0].mxu0 %v8522
      %v9523 = vpop.f32.mrb[0].mxu0
      %v9524 = vadd.f32 %v9395, %v9523
      %v9525 = vpop.f32.mrb[0].mxu0
      %v9526 = vpop.f32.mrb[0].mxu0
      %v9527 = vadd.f32 %v9398, %v9526
      %v9528 = vpop.f32.mrb[0].mxu0
      %9529 = vmatprep.mubr.bf16.mxu0 %v8541
      %9530 = vmatmul.mubr.bf16.gmra.mrb[0].mxu0 %v8540
      %v9531 = vpop.f32.mrb[0].mxu0
      %v9532 = vadd.f32 %v9403, %v9531
      %v9533 = vpop.f32.mrb[0].mxu0
      %v9534 = vpop.f32.mrb[0].mxu0
      %v9535 = vadd.f32 %v9406, %v9534
      %v9536 = vpop.f32.mrb[0].mxu0
      %9537 = vdwg.mxu0
      %9538 = vmatprep.subr.bf16.mxu0 0
      %9539 = vmatpush1.bf16.msra.mxu0 %v7420
      %9540 = vmatprep.subr.bf16.mxu0 0
      %9541 = vmatpush1.bf16.msra.mxu0 %v7421
      %9542 = vmatprep.subr.bf16.mxu0 0
      %9543 = vmatpush1.bf16.msra.mxu0 %v7422
      %9544 = vmatprep.subr.bf16.mxu0 0
      %9545 = vmatpush1.bf16.msra.mxu0 %v7423
      %9546 = vmatprep.subr.bf16.mxu0 0
      %9547 = vmatpush1.bf16.msra.mxu0 %v7424
      %9548 = vmatprep.subr.bf16.mxu0 0
      %9549 = vmatpush1.bf16.msra.mxu0 %v7425
      %9550 = vmatprep.subr.bf16.mxu0 0
      %9551 = vmatpush1.bf16.msra.mxu0 %v7426
      %9552 = vmatprep.subr.bf16.mxu0 0
      %9553 = vmatpush1.bf16.msra.mxu0 %v7427
      %9554 = vmatprep.subr.bf16.mxu0 0
      %9555 = vmatpush1.bf16.msra.mxu0 %v7428
      %9556 = vmatprep.subr.bf16.mxu0 0
      %9557 = vmatpush1.bf16.msra.mxu0 %v7429
      %9558 = vmatprep.subr.bf16.mxu0 0
      %9559 = vmatpush1.bf16.msra.mxu0 %v7430
      %9560 = vmatprep.subr.bf16.mxu0 0
      %9561 = vmatpush1.bf16.msra.mxu0 %v7431
      %9562 = vmatprep.subr.bf16.mxu0 0
      %9563 = vmatpush1.bf16.msra.mxu0 %v7432
      %9564 = vmatprep.subr.bf16.mxu0 0
      %9565 = vmatpush1.bf16.msra.mxu0 %v7433
      %9566 = vmatprep.subr.bf16.mxu0 0
      %9567 = vmatpush1.bf16.msra.mxu0 %v7434
      %9568 = vmatprep.subr.bf16.mxu0 0
      %9569 = vmatpush1.bf16.msra.mxu0 %v7435
      %9570 = vmatprep.mubr.bf16.mxu0 %v8345
      %9571 = vmatmul.mubr.bf16.gmra.mrb[0].mxu0 %v8344
      %v9572 = vpop.f32.mrb[0].mxu0
      %v9573 = vadd.f32 %v9444, %v9572
      %v9574 = vpop.f32.mrb[0].mxu0
      %v9575 = vpop.f32.mrb[0].mxu0
      %v9576 = vadd.f32 %v9447, %v9575
      %v9577 = vpop.f32.mrb[0].mxu0
      %9578 = vmatprep.mubr.bf16.mxu0 %v8363
      %9579 = vmatmul.mubr.bf16.gmra.mrb[0].mxu0 %v8362
      %v9580 = vpop.f32.mrb[0].mxu0
      %v9581 = vadd.f32 %v9452, %v9580
      %v9582 = vpop.f32.mrb[0].mxu0
      %v9583 = vpop.f32.mrb[0].mxu0
      %v9584 = vadd.f32 %v9455, %v9583
      %v9585 = vpop.f32.mrb[0].mxu0
      %9586 = vmatprep.mubr.bf16.mxu0 %v8381
      %9587 = vmatmul.mubr.bf16.gmra.mrb[0].mxu0 %v8380
      %v9588 = vpop.f32.mrb[0].mxu0
      %v9589 = vadd.f32 %v9460, %v9588
      %v9590 = vpop.f32.mrb[0].mxu0
      %v9591 = vpop.f32.mrb[0].mxu0
      %v9592 = vadd.f32 %v9463, %v9591
      %v9593 = vpop.f32.mrb[0].mxu0
      %9594 = vmatprep.mubr.bf16.mxu0 %v8399
      %9595 = vmatmul.mubr.bf16.gmra.mrb[0].mxu0 %v8398
      %v9596 = vpop.f32.mrb[0].mxu0
      %v9597 = vadd.f32 %v9468, %v9596
      %v9598 = vpop.f32.mrb[0].mxu0
      %v9599 = vpop.f32.mrb[0].mxu0
      %v9600 = vadd.f32 %v9471, %v9599
      %v9601 = vpop.f32.mrb[0].mxu0
      %9602 = vmatprep.mubr.bf16.mxu0 %v8417
      %9603 = vmatmul.mubr.bf16.gmra.mrb[0].mxu0 %v8416
      %v9604 = vpop.f32.mrb[0].mxu0
      %v9605 = vadd.f32 %v9476, %v9604
      %v9606 = vpop.f32.mrb[0].mxu0
      %v9607 = vpop.f32.mrb[0].mxu0
      %v9608 = vadd.f32 %v9479, %v9607
      %v9609 = vpop.f32.mrb[0].mxu0
      %9610 = vmatprep.mubr.bf16.mxu0 %v8435
      %9611 = vmatmul.mubr.bf16.gmra.mrb[0].mxu0 %v8434
      %v9612 = vpop.f32.mrb[0].mxu0
      %v9613 = vadd.f32 %v9484, %v9612
      %v9614 = vpop.f32.mrb[0].mxu0
      %v9615 = vpop.f32.mrb[0].mxu0
      %v9616 = vadd.f32 %v9487, %v9615
      %v9617 = vpop.f32.mrb[0].mxu0
      %9618 = vmatprep.mubr.bf16.mxu0 %v8453
      %9619 = vmatmul.mubr.bf16.gmra.mrb[0].mxu0 %v8452
      %v9620 = vpop.f32.mrb[0].mxu0
      %v9621 = vadd.f32 %v9492, %v9620
      %v9622 = vpop.f32.mrb[0].mxu0
      %v9623 = vpop.f32.mrb[0].mxu0
      %v9624 = vadd.f32 %v9495, %v9623
      %v9625 = vpop.f32.mrb[0].mxu0
      %9626 = vmatprep.mubr.bf16.mxu0 %v8471
      %9627 = vmatmul.mubr.bf16.gmra.mrb[0].mxu0 %v8470
      %v9628 = vpop.f32.mrb[0].mxu0
      %v9629 = vadd.f32 %v9500, %v9628
      %v9630 = vpop.f32.mrb[0].mxu0
      %v9631 = vpop.f32.mrb[0].mxu0
      %v9632 = vadd.f32 %v9503, %v9631
      %v9633 = vpop.f32.mrb[0].mxu0
      %9634 = vmatprep.mubr.bf16.mxu0 %v8489
      %9635 = vmatmul.mubr.bf16.gmra.mrb[0].mxu0 %v8488
      %v9636 = vpop.f32.mrb[0].mxu0
      %v9637 = vadd.f32 %v9508, %v9636
      %v9638 = vpop.f32.mrb[0].mxu0
      %v9639 = vpop.f32.mrb[0].mxu0
      %v9640 = vadd.f32 %v9511, %v9639
      %v9641 = vpop.f32.mrb[0].mxu0
      %9642 = vmatprep.mubr.bf16.mxu0 %v8507
      %9643 = vmatmul.mubr.bf16.gmra.mrb[0].mxu0 %v8506
      %v9644 = vpop.f32.mrb[0].mxu0
      %v9645 = vadd.f32 %v9516, %v9644
      %v9646 = vpop.f32.mrb[0].mxu0
      %v9647 = vpop.f32.mrb[0].mxu0
      %v9648 = vadd.f32 %v9519, %v9647
      %v9649 = vpop.f32.mrb[0].mxu0
      %9650 = vmatprep.mubr.bf16.mxu0 %v8525
      %9651 = vmatmul.mubr.bf16.gmra.mrb[0].mxu0 %v8524
      %v9652 = vpop.f32.mrb[0].mxu0
      %v9653 = vadd.f32 %v9524, %v9652
      %v9654 = vpop.f32.mrb[0].mxu0
      %v9655 = vpop.f32.mrb[0].mxu0
      %v9656 = vadd.f32 %v9527, %v9655
      %v9657 = vpop.f32.mrb[0].mxu0
      %9658 = vmatprep.mubr.bf16.mxu0 %v8543
      %9659 = vmatmul.mubr.bf16.gmra.mrb[0].mxu0 %v8542
      %v9660 = vpop.f32.mrb[0].mxu0
      %v9661 = vadd.f32 %v9532, %v9660
      %v9662 = vpop.f32.mrb[0].mxu0
      %v9663 = vpop.f32.mrb[0].mxu0
      %v9664 = vadd.f32 %v9535, %v9663
      %v9665 = vpop.f32.mrb[0].mxu0
      %9666 = vdwg.mxu0
      %9667 = vmatprep.subr.bf16.mxu0 0
      %9668 = vmatpush1.bf16.msra.mxu0 %v7436
      %9669 = vmatprep.subr.bf16.mxu0 0
      %9670 = vmatpush1.bf16.msra.mxu0 %v7437
      %9671 = vmatprep.subr.bf16.mxu0 0
      %9672 = vmatpush1.bf16.msra.mxu0 %v7438
      %9673 = vmatprep.subr.bf16.mxu0 0
      %9674 = vmatpush1.bf16.msra.mxu0 %v7439
      %9675 = vmatprep.subr.bf16.mxu0 0
      %9676 = vmatpush1.bf16.msra.mxu0 %v7440
      %9677 = vmatprep.subr.bf16.mxu0 0
      %9678 = vmatpush1.bf16.msra.mxu0 %v7441
      %9679 = vmatprep.subr.bf16.mxu0 0
      %9680 = vmatpush1.bf16.msra.mxu0 %v7442
      %9681 = vmatprep.subr.bf16.mxu0 0
      %9682 = vmatpush1.bf16.msra.mxu0 %v7443
      %9683 = vmatprep.subr.bf16.mxu0 0
      %9684 = vmatpush1.bf16.msra.mxu0 %v7444
      %9685 = vmatprep.subr.bf16.mxu0 0
      %9686 = vmatpush1.bf16.msra.mxu0 %v7445
      %9687 = vmatprep.subr.bf16.mxu0 0
      %9688 = vmatpush1.bf16.msra.mxu0 %v7446
      %9689 = vmatprep.subr.bf16.mxu0 0
      %9690 = vmatpush1.bf16.msra.mxu0 %v7447
      %9691 = vmatprep.subr.bf16.mxu0 0
      %9692 = vmatpush1.bf16.msra.mxu0 %v7448
      %9693 = vmatprep.subr.bf16.mxu0 0
      %9694 = vmatpush1.bf16.msra.mxu0 %v7449
      %9695 = vmatprep.subr.bf16.mxu0 0
      %9696 = vmatpush1.bf16.msra.mxu0 %v7450
      %9697 = vmatprep.subr.bf16.mxu0 0
      %9698 = vmatpush1.bf16.msra.mxu0 %v7451
      %9699 = vmatprep.mubr.bf16.mxu0 %v8347
      %9700 = vmatmul.mubr.bf16.gmra.mrb[0].mxu0 %v8346
      %v9701 = vpop.f32.mrb[0].mxu0
      %v9702 = vadd.f32 %v9573, %v9701
      %v9703 = vpop.f32.mrb[0].mxu0
      %v9704 = vpop.f32.mrb[0].mxu0
      %v9705 = vadd.f32 %v9576, %v9704
      %v9706 = vpop.f32.mrb[0].mxu0
      %9707 = vmatprep.mubr.bf16.mxu0 %v8365
      %9708 = vmatmul.mubr.bf16.gmra.mrb[0].mxu0 %v8364
      %v9709 = vpop.f32.mrb[0].mxu0
      %v9710 = vadd.f32 %v9581, %v9709
      %v9711 = vpop.f32.mrb[0].mxu0
      %v9712 = vpop.f32.mrb[0].mxu0
      %v9713 = vadd.f32 %v9584, %v9712
      %v9714 = vpop.f32.mrb[0].mxu0
      %9715 = vmatprep.mubr.bf16.mxu0 %v8383
      %9716 = vmatmul.mubr.bf16.gmra.mrb[0].mxu0 %v8382
      %v9717 = vpop.f32.mrb[0].mxu0
      %v9718 = vadd.f32 %v9589, %v9717
      %v9719 = vpop.f32.mrb[0].mxu0
      %v9720 = vpop.f32.mrb[0].mxu0
      %v9721 = vadd.f32 %v9592, %v9720
      %v9722 = vpop.f32.mrb[0].mxu0
      %9723 = vmatprep.mubr.bf16.mxu0 %v8401
      %9724 = vmatmul.mubr.bf16.gmra.mrb[0].mxu0 %v8400
      %v9725 = vpop.f32.mrb[0].mxu0
      %v9726 = vadd.f32 %v9597, %v9725
      %v9727 = vpop.f32.mrb[0].mxu0
      %v9728 = vpop.f32.mrb[0].mxu0
      %v9729 = vadd.f32 %v9600, %v9728
      %v9730 = vpop.f32.mrb[0].mxu0
      %9731 = vmatprep.mubr.bf16.mxu0 %v8419
      %9732 = vmatmul.mubr.bf16.gmra.mrb[0].mxu0 %v8418
      %v9733 = vpop.f32.mrb[0].mxu0
      %v9734 = vadd.f32 %v9605, %v9733
      %v9735 = vpop.f32.mrb[0].mxu0
      %v9736 = vpop.f32.mrb[0].mxu0
      %v9737 = vadd.f32 %v9608, %v9736
      %v9738 = vpop.f32.mrb[0].mxu0
      %9739 = vmatprep.mubr.bf16.mxu0 %v8437
      %9740 = vmatmul.mubr.bf16.gmra.mrb[0].mxu0 %v8436
      %v9741 = vpop.f32.mrb[0].mxu0
      %v9742 = vadd.f32 %v9613, %v9741
      %v9743 = vpop.f32.mrb[0].mxu0
      %v9744 = vpop.f32.mrb[0].mxu0
      %v9745 = vadd.f32 %v9616, %v9744
      %v9746 = vpop.f32.mrb[0].mxu0
      %9747 = vmatprep.mubr.bf16.mxu0 %v8455
      %9748 = vmatmul.mubr.bf16.gmra.mrb[0].mxu0 %v8454
      %v9749 = vpop.f32.mrb[0].mxu0
      %v9750 = vadd.f32 %v9621, %v9749
      %v9751 = vpop.f32.mrb[0].mxu0
      %v9752 = vpop.f32.mrb[0].mxu0
      %v9753 = vadd.f32 %v9624, %v9752
      %v9754 = vpop.f32.mrb[0].mxu0
      %9755 = vmatprep.mubr.bf16.mxu0 %v8473
      %9756 = vmatmul.mubr.bf16.gmra.mrb[0].mxu0 %v8472
      %v9757 = vpop.f32.mrb[0].mxu0
      %v9758 = vadd.f32 %v9629, %v9757
      %v9759 = vpop.f32.mrb[0].mxu0
      %v9760 = vpop.f32.mrb[0].mxu0
      %v9761 = vadd.f32 %v9632, %v9760
      %v9762 = vpop.f32.mrb[0].mxu0
      %9763 = vmatprep.mubr.bf16.mxu0 %v8491
      %9764 = vmatmul.mubr.bf16.gmra.mrb[0].mxu0 %v8490
      %v9765 = vpop.f32.mrb[0].mxu0
      %v9766 = vadd.f32 %v9637, %v9765
      %v9767 = vpop.f32.mrb[0].mxu0
      %v9768 = vpop.f32.mrb[0].mxu0
      %v9769 = vadd.f32 %v9640, %v9768
      %v9770 = vpop.f32.mrb[0].mxu0
      %9771 = vmatprep.mubr.bf16.mxu0 %v8509
      %9772 = vmatmul.mubr.bf16.gmra.mrb[0].mxu0 %v8508
      %v9773 = vpop.f32.mrb[0].mxu0
      %v9774 = vadd.f32 %v9645, %v9773
      %v9775 = vpop.f32.mrb[0].mxu0
      %v9776 = vpop.f32.mrb[0].mxu0
      %v9777 = vadd.f32 %v9648, %v9776
      %v9778 = vpop.f32.mrb[0].mxu0
      %9779 = vmatprep.mubr.bf16.mxu0 %v8527
      %9780 = vmatmul.mubr.bf16.gmra.mrb[0].mxu0 %v8526
      %v9781 = vpop.f32.mrb[0].mxu0
      %v9782 = vadd.f32 %v9653, %v9781
      %v9783 = vpop.f32.mrb[0].mxu0
      %v9784 = vpop.f32.mrb[0].mxu0
      %v9785 = vadd.f32 %v9656, %v9784
      %v9786 = vpop.f32.mrb[0].mxu0
      %9787 = vmatprep.mubr.bf16.mxu0 %v8545
      %9788 = vmatmul.mubr.bf16.gmra.mrb[0].mxu0 %v8544
      %v9789 = vpop.f32.mrb[0].mxu0
      %v9790 = vadd.f32 %v9661, %v9789
      %v9791 = vpop.f32.mrb[0].mxu0
      %v9792 = vpop.f32.mrb[0].mxu0
      %v9793 = vadd.f32 %v9664, %v9792
      %v9794 = vpop.f32.mrb[0].mxu0
      %9795 = vdwg.mxu0
      %9796 = vmatprep.subr.bf16.mxu0 0
      %9797 = vmatpush1.bf16.msra.mxu0 %v7452
      %9798 = vmatprep.subr.bf16.mxu0 0
      %9799 = vmatpush1.bf16.msra.mxu0 %v7453
      %9800 = vmatprep.subr.bf16.mxu0 0
      %9801 = vmatpush1.bf16.msra.mxu0 %v7454
      %9802 = vmatprep.subr.bf16.mxu0 0
      %9803 = vmatpush1.bf16.msra.mxu0 %v7455
      %9804 = vmatprep.subr.bf16.mxu0 0
      %9805 = vmatpush1.bf16.msra.mxu0 %v7456
      %9806 = vmatprep.subr.bf16.mxu0 0
      %9807 = vmatpush1.bf16.msra.mxu0 %v7457
      %9808 = vmatprep.subr.bf16.mxu0 0
      %9809 = vmatpush1.bf16.msra.mxu0 %v7458
      %9810 = vmatprep.subr.bf16.mxu0 0
      %9811 = vmatpush1.bf16.msra.mxu0 %v7459
      %9812 = vmatprep.subr.bf16.mxu0 0
      %9813 = vmatpush1.bf16.msra.mxu0 %v7460
      %9814 = vmatprep.subr.bf16.mxu0 0
      %9815 = vmatpush1.bf16.msra.mxu0 %v7461
      %9816 = vmatprep.subr.bf16.mxu0 0
      %9817 = vmatpush1.bf16.msra.mxu0 %v7462
      %9818 = vmatprep.subr.bf16.mxu0 0
      %9819 = vmatpush1.bf16.msra.mxu0 %v7463
      %9820 = vmatprep.subr.bf16.mxu0 0
      %9821 = vmatpush1.bf16.msra.mxu0 %v7464
      %9822 = vmatprep.subr.bf16.mxu0 0
      %9823 = vmatpush1.bf16.msra.mxu0 %v7465
      %9824 = vmatprep.subr.bf16.mxu0 0
      %9825 = vmatpush1.bf16.msra.mxu0 %v7466
      %9826 = vmatprep.subr.bf16.mxu0 0
      %9827 = vmatpush1.bf16.msra.mxu0 %v7467
      %9828 = vmatprep.mubr.bf16.mxu0 %v8349
      %9829 = vmatmul.mubr.bf16.gmra.mrb[0].mxu0 %v8348
      %v9830 = vpop.f32.mrb[0].mxu0
      %v9831 = vadd.f32 %v9702, %v9830
      %v9832 = vpop.f32.mrb[0].mxu0
      %v9833 = vpop.f32.mrb[0].mxu0
      %v9834 = vadd.f32 %v9705, %v9833
      %v9835 = vpop.f32.mrb[0].mxu0
      %9836 = vmatprep.mubr.bf16.mxu0 %v8367
      %9837 = vmatmul.mubr.bf16.gmra.mrb[0].mxu0 %v8366
      %v9838 = vpop.f32.mrb[0].mxu0
      %v9839 = vadd.f32 %v9710, %v9838
      %v9840 = vpop.f32.mrb[0].mxu0
      %v9841 = vpop.f32.mrb[0].mxu0
      %v9842 = vadd.f32 %v9713, %v9841
      %v9843 = vpop.f32.mrb[0].mxu0
      %9844 = vmatprep.mubr.bf16.mxu0 %v8385
      %9845 = vmatmul.mubr.bf16.gmra.mrb[0].mxu0 %v8384
      %v9846 = vpop.f32.mrb[0].mxu0
      %v9847 = vadd.f32 %v9718, %v9846
      %v9848 = vpop.f32.mrb[0].mxu0
      %v9849 = vpop.f32.mrb[0].mxu0
      %v9850 = vadd.f32 %v9721, %v9849
      %v9851 = vpop.f32.mrb[0].mxu0
      %9852 = vmatprep.mubr.bf16.mxu0 %v8403
      %9853 = vmatmul.mubr.bf16.gmra.mrb[0].mxu0 %v8402
      %v9854 = vpop.f32.mrb[0].mxu0
      %v9855 = vadd.f32 %v9726, %v9854
      %v9856 = vpop.f32.mrb[0].mxu0
      %v9857 = vpop.f32.mrb[0].mxu0
      %v9858 = vadd.f32 %v9729, %v9857
      %v9859 = vpop.f32.mrb[0].mxu0
      %9860 = vmatprep.mubr.bf16.mxu0 %v8421
      %9861 = vmatmul.mubr.bf16.gmra.mrb[0].mxu0 %v8420
      %v9862 = vpop.f32.mrb[0].mxu0
      %v9863 = vadd.f32 %v9734, %v9862
      %v9864 = vpop.f32.mrb[0].mxu0
      %v9865 = vpop.f32.mrb[0].mxu0
      %v9866 = vadd.f32 %v9737, %v9865
      %v9867 = vpop.f32.mrb[0].mxu0
      %9868 = vmatprep.mubr.bf16.mxu0 %v8439
      %9869 = vmatmul.mubr.bf16.gmra.mrb[0].mxu0 %v8438
      %v9870 = vpop.f32.mrb[0].mxu0
      %v9871 = vadd.f32 %v9742, %v9870
      %v9872 = vpop.f32.mrb[0].mxu0
      %v9873 = vpop.f32.mrb[0].mxu0
      %v9874 = vadd.f32 %v9745, %v9873
      %v9875 = vpop.f32.mrb[0].mxu0
      %9876 = vmatprep.mubr.bf16.mxu0 %v8457
      %9877 = vmatmul.mubr.bf16.gmra.mrb[0].mxu0 %v8456
      %v9878 = vpop.f32.mrb[0].mxu0
      %v9879 = vadd.f32 %v9750, %v9878
      %v9880 = vpop.f32.mrb[0].mxu0
      %v9881 = vpop.f32.mrb[0].mxu0
      %v9882 = vadd.f32 %v9753, %v9881
      %v9883 = vpop.f32.mrb[0].mxu0
      %9884 = vmatprep.mubr.bf16.mxu0 %v8475
      %9885 = vmatmul.mubr.bf16.gmra.mrb[0].mxu0 %v8474
      %v9886 = vpop.f32.mrb[0].mxu0
      %v9887 = vadd.f32 %v9758, %v9886
      %v9888 = vpop.f32.mrb[0].mxu0
      %v9889 = vpop.f32.mrb[0].mxu0
      %v9890 = vadd.f32 %v9761, %v9889
      %v9891 = vpop.f32.mrb[0].mxu0
      %9892 = vmatprep.mubr.bf16.mxu0 %v8493
      %9893 = vmatmul.mubr.bf16.gmra.mrb[0].mxu0 %v8492
      %v9894 = vpop.f32.mrb[0].mxu0
      %v9895 = vadd.f32 %v9766, %v9894
      %v9896 = vpop.f32.mrb[0].mxu0
      %v9897 = vpop.f32.mrb[0].mxu0
      %v9898 = vadd.f32 %v9769, %v9897
      %v9899 = vpop.f32.mrb[0].mxu0
      %9900 = vmatprep.mubr.bf16.mxu0 %v8511
      %9901 = vmatmul.mubr.bf16.gmra.mrb[0].mxu0 %v8510
      %v9902 = vpop.f32.mrb[0].mxu0
      %v9903 = vadd.f32 %v9774, %v9902
      %v9904 = vpop.f32.mrb[0].mxu0
      %v9905 = vpop.f32.mrb[0].mxu0
      %v9906 = vadd.f32 %v9777, %v9905
      %v9907 = vpop.f32.mrb[0].mxu0
      %9908 = vmatprep.mubr.bf16.mxu0 %v8529
      %9909 = vmatmul.mubr.bf16.gmra.mrb[0].mxu0 %v8528
      %v9910 = vpop.f32.mrb[0].mxu0
      %v9911 = vadd.f32 %v9782, %v9910
      %v9912 = vpop.f32.mrb[0].mxu0
      %v9913 = vpop.f32.mrb[0].mxu0
      %v9914 = vadd.f32 %v9785, %v9913
      %v9915 = vpop.f32.mrb[0].mxu0
      %9916 = vmatprep.mubr.bf16.mxu0 %v8547
      %9917 = vmatmul.mubr.bf16.gmra.mrb[0].mxu0 %v8546
      %v9918 = vpop.f32.mrb[0].mxu0
      %v9919 = vadd.f32 %v9790, %v9918
      %v9920 = vpop.f32.mrb[0].mxu0
      %v9921 = vpop.f32.mrb[0].mxu0
      %v9922 = vadd.f32 %v9793, %v9921
      %v9923 = vpop.f32.mrb[0].mxu0
      %9924 = vdwg.mxu0
      %vm9925 = vcmask 400384
      %v9926 = vsel %vm9925, %v9831, 0.0
      %9927 = vadd.xlane.f32.xlu0 %v9926
      %v9928 = vpop.xlane.xlu0 %9927
      %v9929 = vsel %vm9925, %v9834, 0.0
      %9930 = vadd.xlane.f32.xlu0 %v9929
      %v9931 = vpop.xlane.xlu0 %9930
      %v9932 = vsel %vm9925, %v9839, 0.0
      %9933 = vadd.xlane.f32.xlu0 %v9932
      %v9934 = vpop.xlane.xlu0 %9933
      %v9935 = vsel %vm9925, %v9842, 0.0
      %9936 = vadd.xlane.f32.xlu0 %v9935
      %v9937 = vpop.xlane.xlu0 %9936
      %v9938 = vsel %vm9925, %v9847, 0.0
      %9939 = vadd.xlane.f32.xlu0 %v9938
      %v9940 = vpop.xlane.xlu0 %9939
      %v9941 = vsel %vm9925, %v9850, 0.0
      %9942 = vadd.xlane.f32.xlu0 %v9941
      %v9943 = vpop.xlane.xlu0 %9942
      %v9944 = vsel %vm9925, %v9855, 0.0
      %9945 = vadd.xlane.f32.xlu0 %v9944
      %v9946 = vpop.xlane.xlu0 %9945
      %v9947 = vsel %vm9925, %v9858, 0.0
      %9948 = vadd.xlane.f32.xlu0 %v9947
      %v9949 = vpop.xlane.xlu0 %9948
      %v9950 = vsel %vm9925, %v9863, 0.0
      %9951 = vadd.xlane.f32.xlu0 %v9950
      %v9952 = vpop.xlane.xlu0 %9951
      %v9953 = vsel %vm9925, %v9866, 0.0
      %9954 = vadd.xlane.f32.xlu0 %v9953
      %v9955 = vpop.xlane.xlu0 %9954
      %v9956 = vsel %vm9925, %v9871, 0.0
      %9957 = vadd.xlane.f32.xlu0 %v9956
      %v9958 = vpop.xlane.xlu0 %9957
      %v9959 = vsel %vm9925, %v9874, 0.0
      %9960 = vadd.xlane.f32.xlu0 %v9959
      %v9961 = vpop.xlane.xlu0 %9960
      %v9962 = vsel %vm9925, %v9879, 0.0
      %9963 = vadd.xlane.f32.xlu0 %v9962
      %v9964 = vpop.xlane.xlu0 %9963
      %v9965 = vsel %vm9925, %v9882, 0.0
      %9966 = vadd.xlane.f32.xlu0 %v9965
      %v9967 = vpop.xlane.xlu0 %9966
      %v9968 = vsel %vm9925, %v9887, 0.0
      %9969 = vadd.xlane.f32.xlu0 %v9968
      %v9970 = vpop.xlane.xlu0 %9969
      %v9971 = vsel %vm9925, %v9890, 0.0
      %9972 = vadd.xlane.f32.xlu0 %v9971
      %v9973 = vpop.xlane.xlu0 %9972
      %v9974 = vsel %vm9925, %v9895, 0.0
      %9975 = vadd.xlane.f32.xlu0 %v9974
      %v9976 = vpop.xlane.xlu0 %9975
      %v9977 = vsel %vm9925, %v9898, 0.0
      %9978 = vadd.xlane.f32.xlu0 %v9977
      %v9979 = vpop.xlane.xlu0 %9978
      %v9980 = vsel %vm9925, %v9903, 0.0
      %9981 = vadd.xlane.f32.xlu0 %v9980
      %v9982 = vpop.xlane.xlu0 %9981
      %v9983 = vsel %vm9925, %v9906, 0.0
      %9984 = vadd.xlane.f32.xlu0 %v9983
      %v9985 = vpop.xlane.xlu0 %9984
      %v9986 = vsel %vm9925, %v9911, 0.0
      %9987 = vadd.xlane.f32.xlu0 %v9986
      %v9988 = vpop.xlane.xlu0 %9987
      %v9989 = vsel %vm9925, %v9914, 0.0
      %9990 = vadd.xlane.f32.xlu0 %v9989
      %v9991 = vpop.xlane.xlu0 %9990
      %v9992 = vsel %vm9925, %v9919, 0.0
      %9993 = vadd.xlane.f32.xlu0 %v9992
      %v9994 = vpop.xlane.xlu0 %9993
      %v9995 = vsel %vm9925, %v9922, 0.0
      %9996 = vadd.xlane.f32.xlu0 %v9995
      %v9997 = vpop.xlane.xlu0 %9996
      %v9998 = vrcp.pop 49.0
      %v9999 = vmul.f32 %v9928, %v9998
      %v10000 = vmul.f32 %v9931, %v9998
      %v10001 = vmul.f32 %v9934, %v9998
      %v10002 = vmul.f32 %v9937, %v9998
      %v10003 = vmul.f32 %v9940, %v9998
      %v10004 = vmul.f32 %v9943, %v9998
      %v10005 = vmul.f32 %v9946, %v9998
      %v10006 = vmul.f32 %v9949, %v9998
      %v10007 = vmul.f32 %v9952, %v9998
      %v10008 = vmul.f32 %v9955, %v9998
      %v10009 = vmul.f32 %v9958, %v9998
      %v10010 = vmul.f32 %v9961, %v9998
      %v10011 = vmul.f32 %v9964, %v9998
      %v10012 = vmul.f32 %v9967, %v9998
      %v10013 = vmul.f32 %v9970, %v9998
      %v10014 = vmul.f32 %v9973, %v9998
      %v10015 = vmul.f32 %v9976, %v9998
      %v10016 = vmul.f32 %v9979, %v9998
      %v10017 = vmul.f32 %v9982, %v9998
      %v10018 = vmul.f32 %v9985, %v9998
      %v10019 = vmul.f32 %v9988, %v9998
      %v10020 = vmul.f32 %v9991, %v9998
      %v10021 = vmul.f32 %v9994, %v9998
      %v10022 = vmul.f32 %v9997, %v9998
      %v10023 = vsub.f32 %v9831, %v9999
      %v10024 = vsub.f32 %v9834, %v10000
      %v10025 = vsub.f32 %v9839, %v10001
      %v10026 = vsub.f32 %v9842, %v10002
      %v10027 = vsub.f32 %v9847, %v10003
      %v10028 = vsub.f32 %v9850, %v10004
      %v10029 = vsub.f32 %v9855, %v10005
      %v10030 = vsub.f32 %v9858, %v10006
      %v10031 = vsub.f32 %v9863, %v10007
      %v10032 = vsub.f32 %v9866, %v10008
      %v10033 = vsub.f32 %v9871, %v10009
      %v10034 = vsub.f32 %v9874, %v10010
      %v10035 = vsub.f32 %v9879, %v10011
      %v10036 = vsub.f32 %v9882, %v10012
      %v10037 = vsub.f32 %v9887, %v10013
      %v10038 = vsub.f32 %v9890, %v10014
      %v10039 = vsub.f32 %v9895, %v10015
      %v10040 = vsub.f32 %v9898, %v10016
      %v10041 = vsub.f32 %v9903, %v10017
      %v10042 = vsub.f32 %v9906, %v10018
      %v10043 = vsub.f32 %v9911, %v10019
      %v10044 = vsub.f32 %v9914, %v10020
      %v10045 = vsub.f32 %v9919, %v10021
      %v10046 = vsub.f32 %v9922, %v10022
      %v10047 = vmul.f32 %v10023, %v10023
      %v10048 = vmul.f32 %v10024, %v10024
      %v10049 = vmul.f32 %v10025, %v10025
      %v10050 = vmul.f32 %v10026, %v10026
      %v10051 = vmul.f32 %v10027, %v10027
      %v10052 = vmul.f32 %v10028, %v10028
      %v10053 = vmul.f32 %v10029, %v10029
      %v10054 = vmul.f32 %v10030, %v10030
      %v10055 = vmul.f32 %v10031, %v10031
      %v10056 = vmul.f32 %v10032, %v10032
      %v10057 = vmul.f32 %v10033, %v10033
      %v10058 = vmul.f32 %v10034, %v10034
      %v10059 = vmul.f32 %v10035, %v10035
      %v10060 = vmul.f32 %v10036, %v10036
      %v10061 = vmul.f32 %v10037, %v10037
      %v10062 = vmul.f32 %v10038, %v10038
      %v10063 = vmul.f32 %v10039, %v10039
      %v10064 = vmul.f32 %v10040, %v10040
      %v10065 = vmul.f32 %v10041, %v10041
      %v10066 = vmul.f32 %v10042, %v10042
      %v10067 = vmul.f32 %v10043, %v10043
      %v10068 = vmul.f32 %v10044, %v10044
      %v10069 = vmul.f32 %v10045, %v10045
      %v10070 = vmul.f32 %v10046, %v10046
      %v10071 = vsel %vm9925, %v10047, 0.0
      %10072 = vadd.xlane.f32.xlu0 %v10071
      %v10073 = vpop.xlane.xlu0 %10072
      %v10074 = vsel %vm9925, %v10048, 0.0
      %10075 = vadd.xlane.f32.xlu0 %v10074
      %v10076 = vpop.xlane.xlu0 %10075
      %v10077 = vsel %vm9925, %v10049, 0.0
      %10078 = vadd.xlane.f32.xlu0 %v10077
      %v10079 = vpop.xlane.xlu0 %10078
      %v10080 = vsel %vm9925, %v10050, 0.0
      %10081 = vadd.xlane.f32.xlu0 %v10080
      %v10082 = vpop.xlane.xlu0 %10081
      %v10083 = vsel %vm9925, %v10051, 0.0
      %10084 = vadd.xlane.f32.xlu0 %v10083
      %v10085 = vpop.xlane.xlu0 %10084
      %v10086 = vsel %vm9925, %v10052, 0.0
      %10087 = vadd.xlane.f32.xlu0 %v10086
      %v10088 = vpop.xlane.xlu0 %10087
      %v10089 = vsel %vm9925, %v10053, 0.0
      %10090 = vadd.xlane.f32.xlu0 %v10089
      %v10091 = vpop.xlane.xlu0 %10090
      %v10092 = vsel %vm9925, %v10054, 0.0
      %10093 = vadd.xlane.f32.xlu0 %v10092
      %v10094 = vpop.xlane.xlu0 %10093
      %v10095 = vsel %vm9925, %v10055, 0.0
      %10096 = vadd.xlane.f32.xlu0 %v10095
      %v10097 = vpop.xlane.xlu0 %10096
      %v10098 = vsel %vm9925, %v10056, 0.0
      %10099 = vadd.xlane.f32.xlu0 %v10098
      %v10100 = vpop.xlane.xlu0 %10099
      %v10101 = vsel %vm9925, %v10057, 0.0
      %10102 = vadd.xlane.f32.xlu0 %v10101
      %v10103 = vpop.xlane.xlu0 %10102
      %v10104 = vsel %vm9925, %v10058, 0.0
      %10105 = vadd.xlane.f32.xlu0 %v10104
      %v10106 = vpop.xlane.xlu0 %10105
      %v10107 = vsel %vm9925, %v10059, 0.0
      %10108 = vadd.xlane.f32.xlu0 %v10107
      %v10109 = vpop.xlane.xlu0 %10108
      %v10110 = vsel %vm9925, %v10060, 0.0
      %10111 = vadd.xlane.f32.xlu0 %v10110
      %v10112 = vpop.xlane.xlu0 %10111
      %v10113 = vsel %vm9925, %v10061, 0.0
      %10114 = vadd.xlane.f32.xlu0 %v10113
      %v10115 = vpop.xlane.xlu0 %10114
      %v10116 = vsel %vm9925, %v10062, 0.0
      %10117 = vadd.xlane.f32.xlu0 %v10116
      %v10118 = vpop.xlane.xlu0 %10117
      %v10119 = vsel %vm9925, %v10063, 0.0
      %10120 = vadd.xlane.f32.xlu0 %v10119
      %v10121 = vpop.xlane.xlu0 %10120
      %v10122 = vsel %vm9925, %v10064, 0.0
      %10123 = vadd.xlane.f32.xlu0 %v10122
      %v10124 = vpop.xlane.xlu0 %10123
      %v10125 = vsel %vm9925, %v10065, 0.0
      %10126 = vadd.xlane.f32.xlu0 %v10125
      %v10127 = vpop.xlane.xlu0 %10126
      %v10128 = vsel %vm9925, %v10066, 0.0
      %10129 = vadd.xlane.f32.xlu0 %v10128
      %v10130 = vpop.xlane.xlu0 %10129
      %v10131 = vsel %vm9925, %v10067, 0.0
      %10132 = vadd.xlane.f32.xlu0 %v10131
      %v10133 = vpop.xlane.xlu0 %10132
      %v10134 = vsel %vm9925, %v10068, 0.0
      %10135 = vadd.xlane.f32.xlu0 %v10134
      %v10136 = vpop.xlane.xlu0 %10135
      %v10137 = vsel %vm9925, %v10069, 0.0
      %10138 = vadd.xlane.f32.xlu0 %v10137
      %v10139 = vpop.xlane.xlu0 %10138
      %v10140 = vsel %vm9925, %v10070, 0.0
      %10141 = vadd.xlane.f32.xlu0 %v10140
      %v10142 = vpop.xlane.xlu0 %10141
      %v10143 = vmul.f32 %v10073, %v9998
      %v10144 = vmul.f32 %v10076, %v9998
      %v10145 = vmul.f32 %v10079, %v9998
      %v10146 = vmul.f32 %v10082, %v9998
      %v10147 = vmul.f32 %v10085, %v9998
      %v10148 = vmul.f32 %v10088, %v9998
      %v10149 = vmul.f32 %v10091, %v9998
      %v10150 = vmul.f32 %v10094, %v9998
      %v10151 = vmul.f32 %v10097, %v9998
      %v10152 = vmul.f32 %v10100, %v9998
      %v10153 = vmul.f32 %v10103, %v9998
      %v10154 = vmul.f32 %v10106, %v9998
      %v10155 = vmul.f32 %v10109, %v9998
      %v10156 = vmul.f32 %v10112, %v9998
      %v10157 = vmul.f32 %v10115, %v9998
      %v10158 = vmul.f32 %v10118, %v9998
      %v10159 = vmul.f32 %v10121, %v9998
      %v10160 = vmul.f32 %v10124, %v9998
      %v10161 = vmul.f32 %v10127, %v9998
      %v10162 = vmul.f32 %v10130, %v9998
      %v10163 = vmul.f32 %v10133, %v9998
      %v10164 = vmul.f32 %v10136, %v9998
      %v10165 = vmul.f32 %v10139, %v9998
      %v10166 = vmul.f32 %v10142, %v9998
      %v10167 = vld [vmem:[%s315] sm:$0xff]
      %v10168 = vld [vmem:[%s315 + $0x8] sm:$0xff]
      %v10169 = vld [vmem:[%s315 + $0x10] sm:$0xff]
      %v10170 = vld [vmem:[%s315 + $0x18] sm:$0xff]
      %v10171 = vld [vmem:[%s315 + $0x20] sm:$0xff]
      %v10172 = vld [vmem:[%s315 + $0x28] sm:$0xff]
      %v10173 = vld [vmem:[%s315 + $0x30] sm:$0xff]
      %v10174 = vld [vmem:[%s315 + $0x38] sm:$0xff]
      %v10175 = vld [vmem:[%s315 + $0x40] sm:$0xff]
      %v10176 = vld [vmem:[%s315 + $0x48] sm:$0xff]
      %v10177 = vld [vmem:[%s315 + $0x50] sm:$0xff]
      %v10178 = vld [vmem:[%s315 + $0x58] sm:$0xff]
      %v10179 = vld [vmem:[%s315 + $0x60] sm:$0xff]
      %v10180 = vld [vmem:[%s315 + $0x68] sm:$0xff]
      %v10181 = vld [vmem:[%s315 + $0x70] sm:$0xff]
      %v10182 = vld [vmem:[%s315 + $0x78] sm:$0xff]
      %v10183 = vld [vmem:[%s315 + $0x80] sm:$0xff]
      %v10184 = vld [vmem:[%s315 + $0x88] sm:$0xff]
      %v10185 = vld [vmem:[%s315 + $0x90] sm:$0xff]
      %v10186 = vld [vmem:[%s315 + $0x98] sm:$0xff]
      %v10187 = vld [vmem:[%s315 + $0xa0] sm:$0xff]
      %v10188 = vld [vmem:[%s315 + $0xa8] sm:$0xff]
      %v10189 = vld [vmem:[%s315 + $0xb0] sm:$0xff]
      %v10190 = vld [vmem:[%s315 + $0xb8] sm:$0xff]
      %v10191 = vadd.f32 %v10143, 0.001
      %v10192 = vadd.f32 %v10144, 0.001
      %v10193 = vadd.f32 %v10145, 0.001
      %v10194 = vadd.f32 %v10146, 0.001
      %v10195 = vadd.f32 %v10147, 0.001
      %v10196 = vadd.f32 %v10148, 0.001
      %v10197 = vadd.f32 %v10149, 0.001
      %v10198 = vadd.f32 %v10150, 0.001
      %v10199 = vadd.f32 %v10151, 0.001
      %v10200 = vadd.f32 %v10152, 0.001
      %v10201 = vadd.f32 %v10153, 0.001
      %v10202 = vadd.f32 %v10154, 0.001
      %v10203 = vadd.f32 %v10155, 0.001
      %v10204 = vadd.f32 %v10156, 0.001
      %v10205 = vadd.f32 %v10157, 0.001
      %v10206 = vadd.f32 %v10158, 0.001
      %v10207 = vadd.f32 %v10159, 0.001
      %v10208 = vadd.f32 %v10160, 0.001
      %v10209 = vadd.f32 %v10161, 0.001
      %v10210 = vadd.f32 %v10162, 0.001
      %v10211 = vadd.f32 %v10163, 0.001
      %v10212 = vadd.f32 %v10164, 0.001
      %v10213 = vadd.f32 %v10165, 0.001
      %v10214 = vadd.f32 %v10166, 0.001
      %v10215 = vrsqrt.pop %v10191
      %v10216 = vrsqrt.pop %v10192
      %v10217 = vrsqrt.pop %v10193
      %v10218 = vrsqrt.pop %v10194
      %v10219 = vrsqrt.pop %v10195
      %v10220 = vrsqrt.pop %v10196
      %v10221 = vrsqrt.pop %v10197
      %v10222 = vrsqrt.pop %v10198
      %v10223 = vrsqrt.pop %v10199
      %v10224 = vrsqrt.pop %v10200
      %v10225 = vrsqrt.pop %v10201
      %v10226 = vrsqrt.pop %v10202
      %v10227 = vrsqrt.pop %v10203
      %v10228 = vrsqrt.pop %v10204
      %v10229 = vrsqrt.pop %v10205
      %v10230 = vrsqrt.pop %v10206
      %v10231 = vrsqrt.pop %v10207
      %v10232 = vrsqrt.pop %v10208
      %v10233 = vrsqrt.pop %v10209
      %v10234 = vrsqrt.pop %v10210
      %v10235 = vrsqrt.pop %v10211
      %v10236 = vrsqrt.pop %v10212
      %v10237 = vrsqrt.pop %v10213
      %v10238 = vrsqrt.pop %v10214
      %v10239 = vmul.f32 %v10167, %v10215
      %v10240 = vmul.f32 %v10168, %v10216
      %v10241 = vmul.f32 %v10169, %v10217
      %v10242 = vmul.f32 %v10170, %v10218
      %v10243 = vmul.f32 %v10171, %v10219
      %v10244 = vmul.f32 %v10172, %v10220
      %v10245 = vmul.f32 %v10173, %v10221
      %v10246 = vmul.f32 %v10174, %v10222
      %v10247 = vmul.f32 %v10175, %v10223
      %v10248 = vmul.f32 %v10176, %v10224
      %v10249 = vmul.f32 %v10177, %v10225
      %v10250 = vmul.f32 %v10178, %v10226
      %v10251 = vmul.f32 %v10179, %v10227
      %v10252 = vmul.f32 %v10180, %v10228
      %v10253 = vmul.f32 %v10181, %v10229
      %v10254 = vmul.f32 %v10182, %v10230
      %v10255 = vmul.f32 %v10183, %v10231
      %v10256 = vmul.f32 %v10184, %v10232
      %v10257 = vmul.f32 %v10185, %v10233
      %v10258 = vmul.f32 %v10186, %v10234
      %v10259 = vmul.f32 %v10187, %v10235
      %v10260 = vmul.f32 %v10188, %v10236
      %v10261 = vmul.f32 %v10189, %v10237
      %v10262 = vmul.f32 %v10190, %v10238
      %10264 = vset.pattern.permute.xlu0 0
      %10265 = vperm.xlu0 %10264, %v10239
      %v10266 = vpop.permute.xlu0 %10265
      %10269 = vset.pattern.permute.xlu0 0
      %10270 = vperm.xlu0 %10269, %v10240
      %v10271 = vpop.permute.xlu0 %10270
      %10274 = vset.pattern.permute.xlu0 0
      %10275 = vperm.xlu0 %10274, %v10241
      %v10276 = vpop.permute.xlu0 %10275
      %10279 = vset.pattern.permute.xlu0 0
      %10280 = vperm.xlu0 %10279, %v10242
      %v10281 = vpop.permute.xlu0 %10280
      %10284 = vset.pattern.permute.xlu0 0
      %10285 = vperm.xlu0 %10284, %v10243
      %v10286 = vpop.permute.xlu0 %10285
      %10289 = vset.pattern.permute.xlu0 0
      %10290 = vperm.xlu0 %10289, %v10244
      %v10291 = vpop.permute.xlu0 %10290
      %10294 = vset.pattern.permute.xlu0 0
      %10295 = vperm.xlu0 %10294, %v10245
      %v10296 = vpop.permute.xlu0 %10295
      %10299 = vset.pattern.permute.xlu0 0
      %10300 = vperm.xlu0 %10299, %v10246
      %v10301 = vpop.permute.xlu0 %10300
      %10304 = vset.pattern.permute.xlu0 0
      %10305 = vperm.xlu0 %10304, %v10247
      %v10306 = vpop.permute.xlu0 %10305
      %10309 = vset.pattern.permute.xlu0 0
      %10310 = vperm.xlu0 %10309, %v10248
      %v10311 = vpop.permute.xlu0 %10310
      %10314 = vset.pattern.permute.xlu0 0
      %10315 = vperm.xlu0 %10314, %v10249
      %v10316 = vpop.permute.xlu0 %10315
      %10319 = vset.pattern.permute.xlu0 0
      %10320 = vperm.xlu0 %10319, %v10250
      %v10321 = vpop.permute.xlu0 %10320
      %10324 = vset.pattern.permute.xlu0 0
      %10325 = vperm.xlu0 %10324, %v10251
      %v10326 = vpop.permute.xlu0 %10325
      %10329 = vset.pattern.permute.xlu0 0
      %10330 = vperm.xlu0 %10329, %v10252
      %v10331 = vpop.permute.xlu0 %10330
      %10334 = vset.pattern.permute.xlu0 0
      %10335 = vperm.xlu0 %10334, %v10253
      %v10336 = vpop.permute.xlu0 %10335
      %10339 = vset.pattern.permute.xlu0 0
      %10340 = vperm.xlu0 %10339, %v10254
      %v10341 = vpop.permute.xlu0 %10340
      %10344 = vset.pattern.permute.xlu0 0
      %10345 = vperm.xlu0 %10344, %v10255
      %v10346 = vpop.permute.xlu0 %10345
      %10349 = vset.pattern.permute.xlu0 0
      %10350 = vperm.xlu0 %10349, %v10256
      %v10351 = vpop.permute.xlu0 %10350
      %10354 = vset.pattern.permute.xlu0 0
      %10355 = vperm.xlu0 %10354, %v10257
      %v10356 = vpop.permute.xlu0 %10355
      %10359 = vset.pattern.permute.xlu0 0
      %10360 = vperm.xlu0 %10359, %v10258
      %v10361 = vpop.permute.xlu0 %10360
      %10364 = vset.pattern.permute.xlu0 0
      %10365 = vperm.xlu0 %10364, %v10259
      %v10366 = vpop.permute.xlu0 %10365
      %10369 = vset.pattern.permute.xlu0 0
      %10370 = vperm.xlu0 %10369, %v10260
      %v10371 = vpop.permute.xlu0 %10370
      %10374 = vset.pattern.permute.xlu0 0
      %10375 = vperm.xlu0 %10374, %v10261
      %v10376 = vpop.permute.xlu0 %10375
      %10379 = vset.pattern.permute.xlu0 0
      %10380 = vperm.xlu0 %10379, %v10262
      %v10381 = vpop.permute.xlu0 %10380
      %v10383 = vmul.f32 %v10023, %v10266
      %v10384 = vmul.f32 %v10024, %v10271
      %v10385 = vmul.f32 %v10025, %v10276
      %v10386 = vmul.f32 %v10026, %v10281
      %v10387 = vmul.f32 %v10027, %v10286
      %v10388 = vmul.f32 %v10028, %v10291
      %v10389 = vmul.f32 %v10029, %v10296
      %v10390 = vmul.f32 %v10030, %v10301
      %v10391 = vmul.f32 %v10031, %v10306
      %v10392 = vmul.f32 %v10032, %v10311
      %v10393 = vmul.f32 %v10033, %v10316
      %v10394 = vmul.f32 %v10034, %v10321
      %v10395 = vmul.f32 %v10035, %v10326
      %v10396 = vmul.f32 %v10036, %v10331
      %v10397 = vmul.f32 %v10037, %v10336
      %v10398 = vmul.f32 %v10038, %v10341
      %v10399 = vmul.f32 %v10039, %v10346
      %v10400 = vmul.f32 %v10040, %v10351
      %v10401 = vmul.f32 %v10041, %v10356
      %v10402 = vmul.f32 %v10042, %v10361
      %v10403 = vmul.f32 %v10043, %v10366
      %v10404 = vmul.f32 %v10044, %v10371
      %v10405 = vmul.f32 %v10045, %v10376
      %v10406 = vmul.f32 %v10046, %v10381
      %v10407 = vld [vmem:[%s321] sm:$0xff]
      %v10408 = vld [vmem:[%s321 + $0x8] sm:$0xff]
      %v10409 = vld [vmem:[%s321 + $0x10] sm:$0xff]
      %v10410 = vld [vmem:[%s321 + $0x18] sm:$0xff]
      %v10411 = vld [vmem:[%s321 + $0x20] sm:$0xff]
      %v10412 = vld [vmem:[%s321 + $0x28] sm:$0xff]
      %v10413 = vld [vmem:[%s321 + $0x30] sm:$0xff]
      %v10414 = vld [vmem:[%s321 + $0x38] sm:$0xff]
      %v10415 = vld [vmem:[%s321 + $0x40] sm:$0xff]
      %v10416 = vld [vmem:[%s321 + $0x48] sm:$0xff]
      %v10417 = vld [vmem:[%s321 + $0x50] sm:$0xff]
      %v10418 = vld [vmem:[%s321 + $0x58] sm:$0xff]
      %v10419 = vld [vmem:[%s321 + $0x60] sm:$0xff]
      %v10420 = vld [vmem:[%s321 + $0x68] sm:$0xff]
      %v10421 = vld [vmem:[%s321 + $0x70] sm:$0xff]
      %v10422 = vld [vmem:[%s321 + $0x78] sm:$0xff]
      %v10423 = vld [vmem:[%s321 + $0x80] sm:$0xff]
      %v10424 = vld [vmem:[%s321 + $0x88] sm:$0xff]
      %v10425 = vld [vmem:[%s321 + $0x90] sm:$0xff]
      %v10426 = vld [vmem:[%s321 + $0x98] sm:$0xff]
      %v10427 = vld [vmem:[%s321 + $0xa0] sm:$0xff]
      %v10428 = vld [vmem:[%s321 + $0xa8] sm:$0xff]
      %v10429 = vld [vmem:[%s321 + $0xb0] sm:$0xff]
      %v10430 = vld [vmem:[%s321 + $0xb8] sm:$0xff]
      %10432 = vset.pattern.permute.xlu0 0
      %10433 = vperm.xlu0 %10432, %v10407
      %v10434 = vpop.permute.xlu0 %10433
      %10437 = vset.pattern.permute.xlu0 0
      %10438 = vperm.xlu0 %10437, %v10408
      %v10439 = vpop.permute.xlu0 %10438
      %10442 = vset.pattern.permute.xlu0 0
      %10443 = vperm.xlu0 %10442, %v10409
      %v10444 = vpop.permute.xlu0 %10443
      %10447 = vset.pattern.permute.xlu0 0
      %10448 = vperm.xlu0 %10447, %v10410
      %v10449 = vpop.permute.xlu0 %10448
      %10452 = vset.pattern.permute.xlu0 0
      %10453 = vperm.xlu0 %10452, %v10411
      %v10454 = vpop.permute.xlu0 %10453
      %10457 = vset.pattern.permute.xlu0 0
      %10458 = vperm.xlu0 %10457, %v10412
      %v10459 = vpop.permute.xlu0 %10458
      %10462 = vset.pattern.permute.xlu0 0
      %10463 = vperm.xlu0 %10462, %v10413
      %v10464 = vpop.permute.xlu0 %10463
      %10467 = vset.pattern.permute.xlu0 0
      %10468 = vperm.xlu0 %10467, %v10414
      %v10469 = vpop.permute.xlu0 %10468
      %10472 = vset.pattern.permute.xlu0 0
      %10473 = vperm.xlu0 %10472, %v10415
      %v10474 = vpop.permute.xlu0 %10473
      %10477 = vset.pattern.permute.xlu0 0
      %10478 = vperm.xlu0 %10477, %v10416
      %v10479 = vpop.permute.xlu0 %10478
      %10482 = vset.pattern.permute.xlu0 0
      %10483 = vperm.xlu0 %10482, %v10417
      %v10484 = vpop.permute.xlu0 %10483
      %10487 = vset.pattern.permute.xlu0 0
      %10488 = vperm.xlu0 %10487, %v10418
      %v10489 = vpop.permute.xlu0 %10488
      %10492 = vset.pattern.permute.xlu0 0
      %10493 = vperm.xlu0 %10492, %v10419
      %v10494 = vpop.permute.xlu0 %10493
      %10497 = vset.pattern.permute.xlu0 0
      %10498 = vperm.xlu0 %10497, %v10420
      %v10499 = vpop.permute.xlu0 %10498
      %10502 = vset.pattern.permute.xlu0 0
      %10503 = vperm.xlu0 %10502, %v10421
      %v10504 = vpop.permute.xlu0 %10503
      %10507 = vset.pattern.permute.xlu0 0
      %10508 = vperm.xlu0 %10507, %v10422
      %v10509 = vpop.permute.xlu0 %10508
      %10512 = vset.pattern.permute.xlu0 0
      %10513 = vperm.xlu0 %10512, %v10423
      %v10514 = vpop.permute.xlu0 %10513
      %10517 = vset.pattern.permute.xlu0 0
      %10518 = vperm.xlu0 %10517, %v10424
      %v10519 = vpop.permute.xlu0 %10518
      %10522 = vset.pattern.permute.xlu0 0
      %10523 = vperm.xlu0 %10522, %v10425
      %v10524 = vpop.permute.xlu0 %10523
      %10527 = vset.pattern.permute.xlu0 0
      %10528 = vperm.xlu0 %10527, %v10426
      %v10529 = vpop.permute.xlu0 %10528
      %10532 = vset.pattern.permute.xlu0 0
      %10533 = vperm.xlu0 %10532, %v10427
      %v10534 = vpop.permute.xlu0 %10533
      %10537 = vset.pattern.permute.xlu0 0
      %10538 = vperm.xlu0 %10537, %v10428
      %v10539 = vpop.permute.xlu0 %10538
      %10542 = vset.pattern.permute.xlu0 0
      %10543 = vperm.xlu0 %10542, %v10429
      %v10544 = vpop.permute.xlu0 %10543
      %10547 = vset.pattern.permute.xlu0 0
      %10548 = vperm.xlu0 %10547, %v10430
      %v10549 = vpop.permute.xlu0 %10548
      %v10551 = vadd.f32 %v10383, %v10434
      %v10552 = vadd.f32 %v10384, %v10439
      %v10553 = vadd.f32 %v10385, %v10444
      %v10554 = vadd.f32 %v10386, %v10449
      %v10555 = vadd.f32 %v10387, %v10454
      %v10556 = vadd.f32 %v10388, %v10459
      %v10557 = vadd.f32 %v10389, %v10464
      %v10558 = vadd.f32 %v10390, %v10469
      %v10559 = vadd.f32 %v10391, %v10474
      %v10560 = vadd.f32 %v10392, %v10479
      %v10561 = vadd.f32 %v10393, %v10484
      %v10562 = vadd.f32 %v10394, %v10489
      %v10563 = vadd.f32 %v10395, %v10494
      %v10564 = vadd.f32 %v10396, %v10499
      %v10565 = vadd.f32 %v10397, %v10504
      %v10566 = vadd.f32 %v10398, %v10509
      %v10567 = vadd.f32 %v10399, %v10514
      %v10568 = vadd.f32 %v10400, %v10519
      %v10569 = vadd.f32 %v10401, %v10524
      %v10570 = vadd.f32 %v10402, %v10529
      %v10571 = vadd.f32 %v10403, %v10534
      %v10572 = vadd.f32 %v10404, %v10539
      %v10573 = vadd.f32 %v10405, %v10544
      %v10574 = vadd.f32 %v10406, %v10549
      %10575 = vst.msk [vmem:[%s327] sm:$0xff] %vm9925, %v10551
      %10576 = vst.msk [vmem:[%s327 + $0x8] sm:$0xff] %vm9925, %v10552
      %10577 = vst.msk [vmem:[%s327 + $0x10] sm:$0xff] %vm9925, %v10553
      %10578 = vst.msk [vmem:[%s327 + $0x18] sm:$0xff] %vm9925, %v10554
      %10579 = vst.msk [vmem:[%s327 + $0x20] sm:$0xff] %vm9925, %v10555
      %10580 = vst.msk [vmem:[%s327 + $0x28] sm:$0xff] %vm9925, %v10556
      %10581 = vst.msk [vmem:[%s327 + $0x30] sm:$0xff] %vm9925, %v10557
      %10582 = vst.msk [vmem:[%s327 + $0x38] sm:$0xff] %vm9925, %v10558
      %10583 = vst.msk [vmem:[%s327 + $0x40] sm:$0xff] %vm9925, %v10559
      %10584 = vst.msk [vmem:[%s327 + $0x48] sm:$0xff] %vm9925, %v10560
      %10585 = vst.msk [vmem:[%s327 + $0x50] sm:$0xff] %vm9925, %v10561
      %10586 = vst.msk [vmem:[%s327 + $0x58] sm:$0xff] %vm9925, %v10562
      %10587 = vst.msk [vmem:[%s327 + $0x60] sm:$0xff] %vm9925, %v10563
      %10588 = vst.msk [vmem:[%s327 + $0x68] sm:$0xff] %vm9925, %v10564
      %10589 = vst.msk [vmem:[%s327 + $0x70] sm:$0xff] %vm9925, %v10565
      %10590 = vst.msk [vmem:[%s327 + $0x78] sm:$0xff] %vm9925, %v10566
      %10591 = vst.msk [vmem:[%s327 + $0x80] sm:$0xff] %vm9925, %v10567
      %10592 = vst.msk [vmem:[%s327 + $0x88] sm:$0xff] %vm9925, %v10568
      %10593 = vst.msk [vmem:[%s327 + $0x90] sm:$0xff] %vm9925, %v10569
      %10594 = vst.msk [vmem:[%s327 + $0x98] sm:$0xff] %vm9925, %v10570
      %10595 = vst.msk [vmem:[%s327 + $0xa0] sm:$0xff] %vm9925, %v10571
      %10596 = vst.msk [vmem:[%s327 + $0xa8] sm:$0xff] %vm9925, %v10572
      %10597 = vst.msk [vmem:[%s327 + $0xb0] sm:$0xff] %vm9925, %v10573
      %10598 = vst.msk [vmem:[%s327 + $0xb8] sm:$0xff] %vm9925, %v10574
      %s10599 = smul.u32 24, %s18
      %p10600 = scmp.lt.s32.totalorder %s10599, 47
      %s10601 = scalar_select %p10600, %s10599, 47
      %s10602 = smul.addr %s10601, 8
      %s10603 = scalar_lea.vmem %s7, %s10602
      // Predicated region
      $region49: #{forward.1} parent=47 // pred_check
        %p10604 = pneg %p198
      $region50: #{forward.1} parent=47 // pred_check_branch
        %10606 = sbr.rel (%p10604) target = $region52
      $region51: #{forward.1} parent=47 // pred_region
        %s10607 = smul.u32 24, %s18
      $region52: #{forward.1} parent=47 // pred_fallthru
        _
    $region48: #{forward.1} parent=5 // pred_fallthru
      _
    %p10608 = scmp.le.s32.totalorder 2, %s13
    // Predicated region
    $region53: #{forward.1} parent=5 // pred_check
      %p10609 = pneg %p10608
    $region54: #{forward.1} parent=5 // pred_check_branch
      %10611 = sbr.rel (%p10609) target = $region56
    $region55: #{forward.1} parent=5 // pred_region
      %s10612 = ssub.s32 %s13, 2
      // Predicated region
      $region57: #{forward.1} parent=55 // pred_check
        %p10613 = pneg %p204
      $region58: #{forward.1} parent=55 // pred_check_branch
        %10615 = sbr.rel (%p10613) target = $region60
      $region59: #{forward.1} parent=55 // pred_region
        %s10616 = smul.u32 24, %s19
        %p10617 = scmp.lt.s32.totalorder %s10616, 47
        %s10618 = scalar_select %p10617, %s10616, 47
        %s10619 = smul.addr %s10618, 8
        %s10620 = scalar_lea.vmem %s7, %s10619
      $region60: #{forward.1} parent=55 // pred_fallthru
        _
    $region56: #{forward.1} parent=5 // pred_fallthru
      _
  $region6: #{forward.1} parent=0 // loop_footer
    %s17 = sadd.s32 1, %s13
  $region7: #{forward.1} parent=0 // loop_footer_branch
    %12 = sbr.rel target = $region3
  $region8: #{forward.1} parent=0 // loop_exit
    _

</llo_original>
